<compile_context>
chip_gen: v6e
topology: v6e:2x2x1
jax: 0.10.0
libtpu: 0.0.40
codegen_flags: <defaults>
</compile_context>

<pallas_src>
import functools

import numpy as np

import jax
import jax.numpy as jnp
from jax.experimental import pallas as pl
from jax.experimental.pallas import tpu as pltpu

LEAKY_SLOPE = 0.2
BN_EPS = 1e-5
KSIZE = 4  # every block is a 4x4 / stride 2 / pad 1 conv


# ------------------------------ fused kernel -------------------------------

def _disc_fused_kernel(*refs, dims, n, apply_sigmoid):
    """Whole Discriminator forward in one kernel invocation.

    refs layout (inputs, then the single output):
      x                                     (n*H0, W0*Cin0)
      [RN_l, B_l]           for l in 0..4   (4, n*Ho, n*H), (4, W*Cin, Wo*Cout)
      bias0_row                             (1, Wo0*Cout0)
      [gamma, beta, Ffold, Fbcast]  for l in 1..4
      Vfull, Sfold                          predict weights / per-sample fold
      out                                   (n, 1)
    Activations stay in the lane-dense (N*H, W*C) layout the whole time.
    """
    nl = len(dims)
    it = iter(refs)
    x_ref = next(it)
    conv_refs = [(next(it), next(it)) for _ in range(nl)]
    bias0_ref = next(it)
    bn_refs = [(next(it), next(it), next(it), next(it)) for _ in range(nl - 1)]
    v_ref = next(it)
    sfold_ref = next(it)
    out_ref = next(it)

    y = x_ref[...]
    for l in range(nl):
        h_in, w_in, _, _ = dims[l]
        h_out, w_out = h_in // 2, w_in // 2
        rn_ref, b_ref = conv_refs[l]

        # conv:  acc[(n,i),(j,o)] = sum_kh  RN_kh @ (Y @ B_kh)
        acc = None
        for kh in range(KSIZE):
            t = jnp.dot(y, b_ref[kh], preferred_element_type=jnp.float32)
            term = jnp.dot(rn_ref[kh], t, preferred_element_type=jnp.float32)
            acc = term if acc is None else acc + term

        if l == 0:
            acc = acc + bias0_ref[...]                 # only layer 0 has bias
        else:
            gamma_ref, beta_ref, ffold_ref, fbcast_ref = bn_refs[l - 1]
            m = float(n * h_out * w_out)
            # one-pass batch statistics (sum & sum of squares) per channel
            srow = jnp.sum(acc, axis=0, keepdims=True)          # (1, Wo*C)
            ssrow = jnp.sum(acc * acc, axis=0, keepdims=True)   # (1, Wo*C)
            s_c = jnp.dot(srow, ffold_ref[...],
                          preferred_element_type=jnp.float32)   # (1, C)
            ss_c = jnp.dot(ssrow, ffold_ref[...],
                           preferred_element_type=jnp.float32)  # (1, C)
            mean = s_c * (1.0 / m)
            var = ss_c * (1.0 / m) - mean * mean                # biased var
            inv_std = jax.lax.rsqrt(var + BN_EPS)
            scale = gamma_ref[...] * inv_std                    # (1, C)
            shift = beta_ref[...] - mean * scale                # (1, C)
            scale_row = jnp.dot(scale, fbcast_ref[...],
                                preferred_element_type=jnp.float32)
            shift_row = jnp.dot(shift, fbcast_ref[...],
                                preferred_element_type=jnp.float32)
            acc = acc * scale_row + shift_row

        y = jnp.where(acc > 0, acc, LEAKY_SLOPE * acc)          # LeakyReLU

    # predict conv (kernel == remaining spatial map, no bias) as a per-sample
    # weighted reduction (VPU multiply + lane reduce), then sigmoid epilogue.
    r = jnp.sum(y * v_ref[...], axis=1, keepdims=True)          # (n*H_last, 1)
    o = jnp.dot(sfold_ref[...], r, preferred_element_type=jnp.float32)  # (n, 1)
    if apply_sigmoid:
        o = 1.0 / (1.0 + jnp.exp(-o))
    out_ref[...] = o


# ------------------------ parameter preprocessing ---------------------------

def prepare_fused_params(params, image_size, n):
    """Precompute (once) the constant operands of the fused kernel.

    With activations stored as Y[(n,h), (w,c)]:
      B_kh[(w,c),(j,o)]   = sum_kw [w == 2j+kw-1] * W_conv[o,c,kh,kw]
      RN_kh[(n,i),(n',h)] = [n==n'] * [h == 2i+kh-1]
    so that conv(Y) = sum_kh RN_kh @ (Y @ B_kh) in the same layout.
    """
    _, h0, w0 = image_size
    dims_meta = []
    conv_ops = []
    bn_ops = []
    bias0_row = None
    in_c = 3
    curr_h, curr_w = h0, w0
    for l, (wconv, bias) in enumerate(params["convs"]):
        out_c = int(wconv.shape[0])
        ho, wo = curr_h // 2, curr_w // 2
        dims_meta.append((curr_h, curr_w, in_c, out_c))

        rsel = np.zeros((KSIZE, ho, curr_h), np.float32)
        qsel = np.zeros((KSIZE, wo, curr_w), np.float32)
        for k in range(KSIZE):
            for i in range(ho):
                h = 2 * i + k - 1
                if 0 <= h < curr_h:
                    rsel[k, i, h] = 1.0
            for j in range(wo):
                w = 2 * j + k - 1
                if 0 <= w < curr_w:
                    qsel[k, j, w] = 1.0
        rn = np.stack([np.kron(np.eye(n, dtype=np.float32), rsel[k])
                       for k in range(KSIZE)], axis=0)           # (4, n*ho, n*H)
        wnp = np.asarray(wconv, np.float32)                      # (Cout,Cin,4,4)
        band = np.einsum("qjw,ocpq->pwcjo", qsel, wnp)           # exact 0/1 select
        band = np.ascontiguousarray(
            band.reshape(KSIZE, curr_w * in_c, wo * out_c))
        conv_ops.append((jnp.asarray(rn), jnp.asarray(band)))

        if l == 0:
            bias0_row = jnp.tile(bias, wo)[None, :]              # (1, wo*out_c)
        else:
            g, beta = params["bns"][l]
            ffold = np.kron(np.ones((wo, 1), np.float32),
                            np.eye(out_c, dtype=np.float32))     # (wo*C, C)
            fbcast = np.ascontiguousarray(ffold.T)               # (C, wo*C)
            bn_ops.append((g[None, :], beta[None, :],
                           jnp.asarray(ffold), jnp.asarray(fbcast)))

        in_c = out_c
        curr_h, curr_w = ho, wo

    # predict conv weight (1, C_last, curr_h, curr_w), no bias.
    wp = np.asarray(params["predict"], np.float32)[0]            # (C, H4, W4)
    v = np.ascontiguousarray(
        np.transpose(wp, (1, 2, 0)).reshape(curr_h, curr_w * in_c))
    vfull = np.tile(v, (n, 1))                                   # (n*H4, W4*C)
    sfold = np.kron(np.eye(n, dtype=np.float32),
                    np.ones((1, curr_h), np.float32))            # (n, n*H4)

    operands = []
    for rn, band in conv_ops:
        operands += [rn, band]
    operands.append(bias0_row)
    for item in bn_ops:
        operands += list(item)
    operands += [jnp.asarray(vfull), jnp.asarray(sfold)]
    return {"dims": tuple(dims_meta), "operands": operands}


def build_forward(dims, n, *, is_critic=False):
    kernel = functools.partial(_disc_fused_kernel, dims=tuple(dims), n=n,
                               apply_sigmoid=not is_critic)

    @jax.jit
    def forward(x_nchw, operands):
        nb, c_in, h, w = x_nchw.shape
        # NCHW -> lane-dense (N*H, W*C) slab expected by the kernel.
        xr = jnp.transpose(x_nchw.astype(jnp.float32), (0, 2, 3, 1))
        xr = xr.reshape(nb * h, w * c_in)
        out = pl.pallas_call(
            kernel,
            out_shape=jax.ShapeDtypeStruct((n, 1), jnp.float32),
            compiler_params=pltpu.CompilerParams(
                vmem_limit_bytes=32 * 1024 * 1024),
        )(xr, *operands)
        return jnp.squeeze(out)                        # matches torch .squeeze()

    return forward


# --------------------------- synthetic parameters ---------------------------

def init_params(key, image_size, filter_dim=8):
    """Deterministic synthetic parameters matching the PyTorch module shapes."""
    _, h, w = image_size
    chans = [filter_dim, filter_dim * 2, filter_dim * 4, filter_dim * 8,
             filter_dim * 16]
    keys = jax.random.split(key, 16)
    params = {"convs": [], "bns": [], "predict": None}
    ki = 0
    in_c = 3
    curr_h, curr_w = h, w
    for i, out_c in enumerate(chans):
        wconv = 0.02 * jax.random.normal(keys[ki], (out_c, in_c, 4, 4),
                                         jnp.float32)
        ki += 1
        if i == 0:
            bias = 0.01 * jax.random.normal(keys[ki], (out_c,), jnp.float32)
            ki += 1
        else:
            bias = None                               # bias only when i == 0
        params["convs"].append((wconv, bias))
        if i > 0:
            g = 1.0 + 0.02 * jax.random.normal(keys[ki], (out_c,), jnp.float32)
            ki += 1
            beta = 0.01 * jax.random.normal(keys[ki], (out_c,), jnp.float32)
            ki += 1
            params["bns"].append((g, beta))
        else:
            params["bns"].append(None)
        in_c = out_c
        curr_h //= 2
        curr_w //= 2
    # predict: Conv2d(chans[-1], 1, (curr_h, curr_w), 1, 0, bias=False)
    params["predict"] = 0.02 * jax.random.normal(
        keys[ki], (1, chans[-1], curr_h, curr_w), jnp.float32)
    return params


# ---------------------------- pure-JAX reference ----------------------------

def reference_forward(params, x_nchw, *, is_critic=False):
    x = x_nchw.astype(jnp.float32)
    dn = ("NCHW", "OIHW", "NCHW")
    for i, (wconv, bias) in enumerate(params["convs"]):
        x = jax.lax.conv_general_dilated(
            x, wconv, (2, 2), ((1, 1), (1, 1)), dimension_numbers=dn,
            precision=jax.lax.Precision.HIGHEST)
        if i == 0:
            x = x + bias.reshape(1, -1, 1, 1)
        else:
            g, beta = params["bns"][i]
            mean = jnp.mean(x, axis=(0, 2, 3), keepdims=True)
            var = jnp.mean((x - mean) ** 2, axis=(0, 2, 3), keepdims=True)
            x = ((x - mean) * jax.lax.rsqrt(var + BN_EPS)
                 * g.reshape(1, -1, 1, 1) + beta.reshape(1, -1, 1, 1))
        x = jnp.where(x > 0, x, LEAKY_SLOPE * x)
    x = jax.lax.conv_general_dilated(
        x, params["predict"], (1, 1), ((0, 0), (0, 0)), dimension_numbers=dn,
        precision=jax.lax.Precision.HIGHEST)
    x = x.reshape(x.shape[0], -1).squeeze()
    if not is_critic:
        x = jax.nn.sigmoid(x)
    return x


# ----------------------------------- main -----------------------------------

if __name__ == "__main__":
    key = jax.random.PRNGKey(0)
    kp, kx = jax.random.split(key)

    image_size = (3, 32, 32)       # 32 -> 16 -> 8 -> 4 -> 2 -> 1
    batch = 2
    filter_dim = 8                 # channels = [8, 16, 32, 64, 128]

    params = init_params(kp, image_size, filter_dim=filter_dim)
    x = jax.random.normal(kx, (batch,) + image_size, jnp.float32)   # NCHW

    fused = prepare_fused_params(params, image_size, batch)
    forward = build_forward(fused["dims"], batch, is_critic=False)

    out = forward(x, fused["operands"])
    out = jax.block_until_ready(out)

    ref = reference_forward(params, x, is_critic=False)
    assert out.shape == ref.shape == (batch,), (out.shape, ref.shape)
    err = float(jnp.max(jnp.abs(out - ref)))
    # 4x tighter than before; still leaves headroom for MXU-pass accumulation
    # differences vs. the HIGHEST-precision XLA conv across 5 layers + BN.
    assert err < 5e-3, (err, out, ref)
    print("KERNEL_OK")
</pallas_src>

<mosaic_0001>
module attributes {stable_mosaic.version = 11 : i64} {
  func.func @_disc_fused_kernel(%arg0: memref<64x96xf32, #tpu.memory_space<vmem>>, %arg1: memref<4x32x64xf32, #tpu.memory_space<vmem>>, %arg2: memref<4x96x128xf32, #tpu.memory_space<vmem>>, %arg3: memref<4x16x32xf32, #tpu.memory_space<vmem>>, %arg4: memref<4x128x128xf32, #tpu.memory_space<vmem>>, %arg5: memref<4x8x16xf32, #tpu.memory_space<vmem>>, %arg6: memref<4x128x128xf32, #tpu.memory_space<vmem>>, %arg7: memref<4x4x8xf32, #tpu.memory_space<vmem>>, %arg8: memref<4x128x128xf32, #tpu.memory_space<vmem>>, %arg9: memref<4x2x4xf32, #tpu.memory_space<vmem>>, %arg10: memref<4x128x128xf32, #tpu.memory_space<vmem>>, %arg11: memref<1x128xf32, #tpu.memory_space<vmem>>, %arg12: memref<1x16xf32, #tpu.memory_space<vmem>>, %arg13: memref<1x16xf32, #tpu.memory_space<vmem>>, %arg14: memref<128x16xf32, #tpu.memory_space<vmem>>, %arg15: memref<16x128xf32, #tpu.memory_space<vmem>>, %arg16: memref<1x32xf32, #tpu.memory_space<vmem>>, %arg17: memref<1x32xf32, #tpu.memory_space<vmem>>, %arg18: memref<128x32xf32, #tpu.memory_space<vmem>>, %arg19: memref<32x128xf32, #tpu.memory_space<vmem>>, %arg20: memref<1x64xf32, #tpu.memory_space<vmem>>, %arg21: memref<1x64xf32, #tpu.memory_space<vmem>>, %arg22: memref<128x64xf32, #tpu.memory_space<vmem>>, %arg23: memref<64x128xf32, #tpu.memory_space<vmem>>, %arg24: memref<1x128xf32, #tpu.memory_space<vmem>>, %arg25: memref<1x128xf32, #tpu.memory_space<vmem>>, %arg26: memref<128x128xf32, #tpu.memory_space<vmem>>, %arg27: memref<128x128xf32, #tpu.memory_space<vmem>>, %arg28: memref<2x128xf32, #tpu.memory_space<vmem>>, %arg29: memref<2x2xf32, #tpu.memory_space<vmem>>, %arg30: memref<2x1xf32, #tpu.memory_space<vmem>>) attributes {dimension_semantics = [], scalar_prefetch = 0 : i64, scratch_operands = 0 : i64, tpu.core_type = #tpu.core_type<tc>} {
    %c0 = arith.constant 0 : index
    %c0_0 = arith.constant 0 : index
    %0 = vector.load %arg0[%c0, %c0_0] : memref<64x96xf32, #tpu.memory_space<vmem>>, vector<64x96xf32>
    %c0_1 = arith.constant 0 : index
    %c0_2 = arith.constant 0 : index
    %c0_3 = arith.constant 0 : index
    %1 = vector.load %arg2[%c0_1, %c0_2, %c0_3] : memref<4x96x128xf32, #tpu.memory_space<vmem>>, vector<1x96x128xf32>
    %2 = vector.shape_cast %1 : vector<1x96x128xf32> to vector<96x128xf32>
    %cst = arith.constant dense<0.000000e+00> : vector<64x128xf32>
    %3 = tpu.matmul %0, %2, %cst {dimension_numbers = #tpu.dot_dimension_numbers<[1], [0], [0], [1], [0, 0, 1, 1], [], []>} : vector<64x96xf32>, vector<96x128xf32>, vector<64x128xf32> -> vector<64x128xf32>
    %c0_4 = arith.constant 0 : index
    %c0_5 = arith.constant 0 : index
    %c0_6 = arith.constant 0 : index
    %4 = vector.load %arg1[%c0_4, %c0_5, %c0_6] : memref<4x32x64xf32, #tpu.memory_space<vmem>>, vector<1x32x64xf32>
    %5 = vector.shape_cast %4 : vector<1x32x64xf32> to vector<32x64xf32>
    %cst_7 = arith.constant dense<0.000000e+00> : vector<32x128xf32>
    %6 = tpu.matmul %5, %3, %cst_7 {dimension_numbers = #tpu.dot_dimension_numbers<[1], [0], [0], [1], [0, 0, 1, 1], [], []>} : vector<32x64xf32>, vector<64x128xf32>, vector<32x128xf32> -> vector<32x128xf32>
    %c1 = arith.constant 1 : index
    %c0_8 = arith.constant 0 : index
    %c0_9 = arith.constant 0 : index
    %7 = vector.load %arg2[%c1, %c0_8, %c0_9] : memref<4x96x128xf32, #tpu.memory_space<vmem>>, vector<1x96x128xf32>
    %8 = vector.shape_cast %7 : vector<1x96x128xf32> to vector<96x128xf32>
    %cst_10 = arith.constant dense<0.000000e+00> : vector<64x128xf32>
    %9 = tpu.matmul %0, %8, %cst_10 {dimension_numbers = #tpu.dot_dimension_numbers<[1], [0], [0], [1], [0, 0, 1, 1], [], []>} : vector<64x96xf32>, vector<96x128xf32>, vector<64x128xf32> -> vector<64x128xf32>
    %c1_11 = arith.constant 1 : index
    %c0_12 = arith.constant 0 : index
    %c0_13 = arith.constant 0 : index
    %10 = vector.load %arg1[%c1_11, %c0_12, %c0_13] : memref<4x32x64xf32, #tpu.memory_space<vmem>>, vector<1x32x64xf32>
    %11 = vector.shape_cast %10 : vector<1x32x64xf32> to vector<32x64xf32>
    %cst_14 = arith.constant dense<0.000000e+00> : vector<32x128xf32>
    %12 = tpu.matmul %11, %9, %cst_14 {dimension_numbers = #tpu.dot_dimension_numbers<[1], [0], [0], [1], [0, 0, 1, 1], [], []>} : vector<32x64xf32>, vector<64x128xf32>, vector<32x128xf32> -> vector<32x128xf32>
    %13 = arith.addf %6, %12 : vector<32x128xf32>
    %c2 = arith.constant 2 : index
    %c0_15 = arith.constant 0 : index
    %c0_16 = arith.constant 0 : index
    %14 = vector.load %arg2[%c2, %c0_15, %c0_16] : memref<4x96x128xf32, #tpu.memory_space<vmem>>, vector<1x96x128xf32>
    %15 = vector.shape_cast %14 : vector<1x96x128xf32> to vector<96x128xf32>
    %cst_17 = arith.constant dense<0.000000e+00> : vector<64x128xf32>
    %16 = tpu.matmul %0, %15, %cst_17 {dimension_numbers = #tpu.dot_dimension_numbers<[1], [0], [0], [1], [0, 0, 1, 1], [], []>} : vector<64x96xf32>, vector<96x128xf32>, vector<64x128xf32> -> vector<64x128xf32>
    %c2_18 = arith.constant 2 : index
    %c0_19 = arith.constant 0 : index
    %c0_20 = arith.constant 0 : index
    %17 = vector.load %arg1[%c2_18, %c0_19, %c0_20] : memref<4x32x64xf32, #tpu.memory_space<vmem>>, vector<1x32x64xf32>
    %18 = vector.shape_cast %17 : vector<1x32x64xf32> to vector<32x64xf32>
    %cst_21 = arith.constant dense<0.000000e+00> : vector<32x128xf32>
    %19 = tpu.matmul %18, %16, %cst_21 {dimension_numbers = #tpu.dot_dimension_numbers<[1], [0], [0], [1], [0, 0, 1, 1], [], []>} : vector<32x64xf32>, vector<64x128xf32>, vector<32x128xf32> -> vector<32x128xf32>
    %20 = arith.addf %13, %19 : vector<32x128xf32>
    %c3 = arith.constant 3 : index
    %c0_22 = arith.constant 0 : index
    %c0_23 = arith.constant 0 : index
    %21 = vector.load %arg2[%c3, %c0_22, %c0_23] : memref<4x96x128xf32, #tpu.memory_space<vmem>>, vector<1x96x128xf32>
    %22 = vector.shape_cast %21 : vector<1x96x128xf32> to vector<96x128xf32>
    %cst_24 = arith.constant dense<0.000000e+00> : vector<64x128xf32>
    %23 = tpu.matmul %0, %22, %cst_24 {dimension_numbers = #tpu.dot_dimension_numbers<[1], [0], [0], [1], [0, 0, 1, 1], [], []>} : vector<64x96xf32>, vector<96x128xf32>, vector<64x128xf32> -> vector<64x128xf32>
    %c3_25 = arith.constant 3 : index
    %c0_26 = arith.constant 0 : index
    %c0_27 = arith.constant 0 : index
    %24 = vector.load %arg1[%c3_25, %c0_26, %c0_27] : memref<4x32x64xf32, #tpu.memory_space<vmem>>, vector<1x32x64xf32>
    %25 = vector.shape_cast %24 : vector<1x32x64xf32> to vector<32x64xf32>
    %cst_28 = arith.constant dense<0.000000e+00> : vector<32x128xf32>
    %26 = tpu.matmul %25, %23, %cst_28 {dimension_numbers = #tpu.dot_dimension_numbers<[1], [0], [0], [1], [0, 0, 1, 1], [], []>} : vector<32x64xf32>, vector<64x128xf32>, vector<32x128xf32> -> vector<32x128xf32>
    %27 = arith.addf %20, %26 : vector<32x128xf32>
    %c0_29 = arith.constant 0 : index
    %c0_30 = arith.constant 0 : index
    %28 = vector.load %arg11[%c0_29, %c0_30] : memref<1x128xf32, #tpu.memory_space<vmem>>, vector<1x128xf32>
    %29 = vector.broadcast %28 : vector<1x128xf32> to vector<32x128xf32>
    %30 = arith.addf %27, %29 : vector<32x128xf32>
    %cst_31 = arith.constant 0.000000e+00 : f32
    %31 = vector.broadcast %cst_31 : f32 to vector<32x128xf32>
    %32 = arith.cmpf ogt, %30, %31 : vector<32x128xf32>
    %cst_32 = arith.constant 2.000000e-01 : f32
    %33 = vector.broadcast %cst_32 : f32 to vector<32x128xf32>
    %34 = arith.mulf %33, %30 : vector<32x128xf32>
    %35 = arith.select %32, %30, %34 : vector<32x128xi1>, vector<32x128xf32>
    %c0_33 = arith.constant 0 : index
    %c0_34 = arith.constant 0 : index
    %c0_35 = arith.constant 0 : index
    %36 = vector.load %arg4[%c0_33, %c0_34, %c0_35] : memref<4x128x128xf32, #tpu.memory_space<vmem>>, vector<1x128x128xf32>
    %37 = vector.shape_cast %36 : vector<1x128x128xf32> to vector<128x128xf32>
    %cst_36 = arith.constant dense<0.000000e+00> : vector<32x128xf32>
    %38 = tpu.matmul %35, %37, %cst_36 {dimension_numbers = #tpu.dot_dimension_numbers<[1], [0], [0], [1], [0, 0, 1, 1], [], []>} : vector<32x128xf32>, vector<128x128xf32>, vector<32x128xf32> -> vector<32x128xf32>
    %c0_37 = arith.constant 0 : index
    %c0_38 = arith.constant 0 : index
    %c0_39 = arith.constant 0 : index
    %39 = vector.load %arg3[%c0_37, %c0_38, %c0_39] : memref<4x16x32xf32, #tpu.memory_space<vmem>>, vector<1x16x32xf32>
    %40 = vector.shape_cast %39 : vector<1x16x32xf32> to vector<16x32xf32>
    %cst_40 = arith.constant dense<0.000000e+00> : vector<16x128xf32>
    %41 = tpu.matmul %40, %38, %cst_40 {dimension_numbers = #tpu.dot_dimension_numbers<[1], [0], [0], [1], [0, 0, 1, 1], [], []>} : vector<16x32xf32>, vector<32x128xf32>, vector<16x128xf32> -> vector<16x128xf32>
    %c1_41 = arith.constant 1 : index
    %c0_42 = arith.constant 0 : index
    %c0_43 = arith.constant 0 : index
    %42 = vector.load %arg4[%c1_41, %c0_42, %c0_43] : memref<4x128x128xf32, #tpu.memory_space<vmem>>, vector<1x128x128xf32>
    %43 = vector.shape_cast %42 : vector<1x128x128xf32> to vector<128x128xf32>
    %cst_44 = arith.constant dense<0.000000e+00> : vector<32x128xf32>
    %44 = tpu.matmul %35, %43, %cst_44 {dimension_numbers = #tpu.dot_dimension_numbers<[1], [0], [0], [1], [0, 0, 1, 1], [], []>} : vector<32x128xf32>, vector<128x128xf32>, vector<32x128xf32> -> vector<32x128xf32>
    %c1_45 = arith.constant 1 : index
    %c0_46 = arith.constant 0 : index
    %c0_47 = arith.constant 0 : index
    %45 = vector.load %arg3[%c1_45, %c0_46, %c0_47] : memref<4x16x32xf32, #tpu.memory_space<vmem>>, vector<1x16x32xf32>
    %46 = vector.shape_cast %45 : vector<1x16x32xf32> to vector<16x32xf32>
    %cst_48 = arith.constant dense<0.000000e+00> : vector<16x128xf32>
    %47 = tpu.matmul %46, %44, %cst_48 {dimension_numbers = #tpu.dot_dimension_numbers<[1], [0], [0], [1], [0, 0, 1, 1], [], []>} : vector<16x32xf32>, vector<32x128xf32>, vector<16x128xf32> -> vector<16x128xf32>
    %48 = arith.addf %41, %47 : vector<16x128xf32>
    %c2_49 = arith.constant 2 : index
    %c0_50 = arith.constant 0 : index
    %c0_51 = arith.constant 0 : index
    %49 = vector.load %arg4[%c2_49, %c0_50, %c0_51] : memref<4x128x128xf32, #tpu.memory_space<vmem>>, vector<1x128x128xf32>
    %50 = vector.shape_cast %49 : vector<1x128x128xf32> to vector<128x128xf32>
    %cst_52 = arith.constant dense<0.000000e+00> : vector<32x128xf32>
    %51 = tpu.matmul %35, %50, %cst_52 {dimension_numbers = #tpu.dot_dimension_numbers<[1], [0], [0], [1], [0, 0, 1, 1], [], []>} : vector<32x128xf32>, vector<128x128xf32>, vector<32x128xf32> -> vector<32x128xf32>
    %c2_53 = arith.constant 2 : index
    %c0_54 = arith.constant 0 : index
    %c0_55 = arith.constant 0 : index
    %52 = vector.load %arg3[%c2_53, %c0_54, %c0_55] : memref<4x16x32xf32, #tpu.memory_space<vmem>>, vector<1x16x32xf32>
    %53 = vector.shape_cast %52 : vector<1x16x32xf32> to vector<16x32xf32>
    %cst_56 = arith.constant dense<0.000000e+00> : vector<16x128xf32>
    %54 = tpu.matmul %53, %51, %cst_56 {dimension_numbers = #tpu.dot_dimension_numbers<[1], [0], [0], [1], [0, 0, 1, 1], [], []>} : vector<16x32xf32>, vector<32x128xf32>, vector<16x128xf32> -> vector<16x128xf32>
    %55 = arith.addf %48, %54 : vector<16x128xf32>
    %c3_57 = arith.constant 3 : index
    %c0_58 = arith.constant 0 : index
    %c0_59 = arith.constant 0 : index
    %56 = vector.load %arg4[%c3_57, %c0_58, %c0_59] : memref<4x128x128xf32, #tpu.memory_space<vmem>>, vector<1x128x128xf32>
    %57 = vector.shape_cast %56 : vector<1x128x128xf32> to vector<128x128xf32>
    %cst_60 = arith.constant dense<0.000000e+00> : vector<32x128xf32>
    %58 = tpu.matmul %35, %57, %cst_60 {dimension_numbers = #tpu.dot_dimension_numbers<[1], [0], [0], [1], [0, 0, 1, 1], [], []>} : vector<32x128xf32>, vector<128x128xf32>, vector<32x128xf32> -> vector<32x128xf32>
    %c3_61 = arith.constant 3 : index
    %c0_62 = arith.constant 0 : index
    %c0_63 = arith.constant 0 : index
    %59 = vector.load %arg3[%c3_61, %c0_62, %c0_63] : memref<4x16x32xf32, #tpu.memory_space<vmem>>, vector<1x16x32xf32>
    %60 = vector.shape_cast %59 : vector<1x16x32xf32> to vector<16x32xf32>
    %cst_64 = arith.constant dense<0.000000e+00> : vector<16x128xf32>
    %61 = tpu.matmul %60, %58, %cst_64 {dimension_numbers = #tpu.dot_dimension_numbers<[1], [0], [0], [1], [0, 0, 1, 1], [], []>} : vector<16x32xf32>, vector<32x128xf32>, vector<16x128xf32> -> vector<16x128xf32>
    %62 = arith.addf %55, %61 : vector<16x128xf32>
    %cst_65 = arith.constant dense<0.000000e+00> : vector<128xf32>
    %63 = vector.multi_reduction <add>, %62, %cst_65 [0] : vector<16x128xf32> to vector<128xf32>
    %64 = vector.shape_cast %63 : vector<128xf32> to vector<1x128xf32>
    %65 = arith.mulf %62, %62 : vector<16x128xf32>
    %cst_66 = arith.constant dense<0.000000e+00> : vector<128xf32>
    %66 = vector.multi_reduction <add>, %65, %cst_66 [0] : vector<16x128xf32> to vector<128xf32>
    %67 = vector.shape_cast %66 : vector<128xf32> to vector<1x128xf32>
    %c0_67 = arith.constant 0 : index
    %c0_68 = arith.constant 0 : index
    %68 = vector.load %arg14[%c0_67, %c0_68] : memref<128x16xf32, #tpu.memory_space<vmem>>, vector<128x16xf32>
    %cst_69 = arith.constant dense<0.000000e+00> : vector<1x16xf32>
    %69 = tpu.matmul %64, %68, %cst_69 {dimension_numbers = #tpu.dot_dimension_numbers<[1], [0], [0], [1], [0, 0, 1, 1], [], []>} : vector<1x128xf32>, vector<128x16xf32>, vector<1x16xf32> -> vector<1x16xf32>
    %c0_70 = arith.constant 0 : index
    %c0_71 = arith.constant 0 : index
    %70 = vector.load %arg14[%c0_70, %c0_71] : memref<128x16xf32, #tpu.memory_space<vmem>>, vector<128x16xf32>
    %cst_72 = arith.constant dense<0.000000e+00> : vector<1x16xf32>
    %71 = tpu.matmul %67, %70, %cst_72 {dimension_numbers = #tpu.dot_dimension_numbers<[1], [0], [0], [1], [0, 0, 1, 1], [], []>} : vector<1x128xf32>, vector<128x16xf32>, vector<1x16xf32> -> vector<1x16xf32>
    %cst_73 = arith.constant 7.812500e-03 : f32
    %72 = vector.broadcast %cst_73 : f32 to vector<1x16xf32>
    %73 = arith.mulf %69, %72 : vector<1x16xf32>
    %cst_74 = arith.constant 7.812500e-03 : f32
    %74 = vector.broadcast %cst_74 : f32 to vector<1x16xf32>
    %75 = arith.mulf %71, %74 : vector<1x16xf32>
    %76 = arith.mulf %73, %73 : vector<1x16xf32>
    %77 = arith.subf %75, %76 : vector<1x16xf32>
    %cst_75 = arith.constant 9.99999974E-6 : f32
    %78 = vector.broadcast %cst_75 : f32 to vector<1x16xf32>
    %79 = arith.addf %77, %78 : vector<1x16xf32>
    %80 = math.rsqrt %79 : vector<1x16xf32>
    %c0_76 = arith.constant 0 : index
    %c0_77 = arith.constant 0 : index
    %81 = vector.load %arg12[%c0_76, %c0_77] : memref<1x16xf32, #tpu.memory_space<vmem>>, vector<1x16xf32>
    %82 = arith.mulf %81, %80 : vector<1x16xf32>
    %c0_78 = arith.constant 0 : index
    %c0_79 = arith.constant 0 : index
    %83 = vector.load %arg13[%c0_78, %c0_79] : memref<1x16xf32, #tpu.memory_space<vmem>>, vector<1x16xf32>
    %84 = arith.mulf %73, %82 : vector<1x16xf32>
    %85 = arith.subf %83, %84 : vector<1x16xf32>
    %c0_80 = arith.constant 0 : index
    %c0_81 = arith.constant 0 : index
    %86 = vector.load %arg15[%c0_80, %c0_81] : memref<16x128xf32, #tpu.memory_space<vmem>>, vector<16x128xf32>
    %cst_82 = arith.constant dense<0.000000e+00> : vector<1x128xf32>
    %87 = tpu.matmul %82, %86, %cst_82 {dimension_numbers = #tpu.dot_dimension_numbers<[1], [0], [0], [1], [0, 0, 1, 1], [], []>} : vector<1x16xf32>, vector<16x128xf32>, vector<1x128xf32> -> vector<1x128xf32>
    %c0_83 = arith.constant 0 : index
    %c0_84 = arith.constant 0 : index
    %88 = vector.load %arg15[%c0_83, %c0_84] : memref<16x128xf32, #tpu.memory_space<vmem>>, vector<16x128xf32>
    %cst_85 = arith.constant dense<0.000000e+00> : vector<1x128xf32>
    %89 = tpu.matmul %85, %88, %cst_85 {dimension_numbers = #tpu.dot_dimension_numbers<[1], [0], [0], [1], [0, 0, 1, 1], [], []>} : vector<1x16xf32>, vector<16x128xf32>, vector<1x128xf32> -> vector<1x128xf32>
    %90 = vector.broadcast %87 : vector<1x128xf32> to vector<16x128xf32>
    %91 = arith.mulf %62, %90 : vector<16x128xf32>
    %92 = vector.broadcast %89 : vector<1x128xf32> to vector<16x128xf32>
    %93 = arith.addf %91, %92 : vector<16x128xf32>
    %cst_86 = arith.constant 0.000000e+00 : f32
    %94 = vector.broadcast %cst_86 : f32 to vector<16x128xf32>
    %95 = arith.cmpf ogt, %93, %94 : vector<16x128xf32>
    %cst_87 = arith.constant 2.000000e-01 : f32
    %96 = vector.broadcast %cst_87 : f32 to vector<16x128xf32>
    %97 = arith.mulf %96, %93 : vector<16x128xf32>
    %98 = arith.select %95, %93, %97 : vector<16x128xi1>, vector<16x128xf32>
    %c0_88 = arith.constant 0 : index
    %c0_89 = arith.constant 0 : index
    %c0_90 = arith.constant 0 : index
    %99 = vector.load %arg6[%c0_88, %c0_89, %c0_90] : memref<4x128x128xf32, #tpu.memory_space<vmem>>, vector<1x128x128xf32>
    %100 = vector.shape_cast %99 : vector<1x128x128xf32> to vector<128x128xf32>
    %cst_91 = arith.constant dense<0.000000e+00> : vector<16x128xf32>
    %101 = tpu.matmul %98, %100, %cst_91 {dimension_numbers = #tpu.dot_dimension_numbers<[1], [0], [0], [1], [0, 0, 1, 1], [], []>} : vector<16x128xf32>, vector<128x128xf32>, vector<16x128xf32> -> vector<16x128xf32>
    %c0_92 = arith.constant 0 : index
    %c0_93 = arith.constant 0 : index
    %c0_94 = arith.constant 0 : index
    %102 = vector.load %arg5[%c0_92, %c0_93, %c0_94] : memref<4x8x16xf32, #tpu.memory_space<vmem>>, vector<1x8x16xf32>
    %103 = vector.shape_cast %102 : vector<1x8x16xf32> to vector<8x16xf32>
    %cst_95 = arith.constant dense<0.000000e+00> : vector<8x128xf32>
    %104 = tpu.matmul %103, %101, %cst_95 {dimension_numbers = #tpu.dot_dimension_numbers<[1], [0], [0], [1], [0, 0, 1, 1], [], []>} : vector<8x16xf32>, vector<16x128xf32>, vector<8x128xf32> -> vector<8x128xf32>
    %c1_96 = arith.constant 1 : index
    %c0_97 = arith.constant 0 : index
    %c0_98 = arith.constant 0 : index
    %105 = vector.load %arg6[%c1_96, %c0_97, %c0_98] : memref<4x128x128xf32, #tpu.memory_space<vmem>>, vector<1x128x128xf32>
    %106 = vector.shape_cast %105 : vector<1x128x128xf32> to vector<128x128xf32>
    %cst_99 = arith.constant dense<0.000000e+00> : vector<16x128xf32>
    %107 = tpu.matmul %98, %106, %cst_99 {dimension_numbers = #tpu.dot_dimension_numbers<[1], [0], [0], [1], [0, 0, 1, 1], [], []>} : vector<16x128xf32>, vector<128x128xf32>, vector<16x128xf32> -> vector<16x128xf32>
    %c1_100 = arith.constant 1 : index
    %c0_101 = arith.constant 0 : index
    %c0_102 = arith.constant 0 : index
    %108 = vector.load %arg5[%c1_100, %c0_101, %c0_102] : memref<4x8x16xf32, #tpu.memory_space<vmem>>, vector<1x8x16xf32>
    %109 = vector.shape_cast %108 : vector<1x8x16xf32> to vector<8x16xf32>
    %cst_103 = arith.constant dense<0.000000e+00> : vector<8x128xf32>
    %110 = tpu.matmul %109, %107, %cst_103 {dimension_numbers = #tpu.dot_dimension_numbers<[1], [0], [0], [1], [0, 0, 1, 1], [], []>} : vector<8x16xf32>, vector<16x128xf32>, vector<8x128xf32> -> vector<8x128xf32>
    %111 = arith.addf %104, %110 : vector<8x128xf32>
    %c2_104 = arith.constant 2 : index
    %c0_105 = arith.constant 0 : index
    %c0_106 = arith.constant 0 : index
    %112 = vector.load %arg6[%c2_104, %c0_105, %c0_106] : memref<4x128x128xf32, #tpu.memory_space<vmem>>, vector<1x128x128xf32>
    %113 = vector.shape_cast %112 : vector<1x128x128xf32> to vector<128x128xf32>
    %cst_107 = arith.constant dense<0.000000e+00> : vector<16x128xf32>
    %114 = tpu.matmul %98, %113, %cst_107 {dimension_numbers = #tpu.dot_dimension_numbers<[1], [0], [0], [1], [0, 0, 1, 1], [], []>} : vector<16x128xf32>, vector<128x128xf32>, vector<16x128xf32> -> vector<16x128xf32>
    %c2_108 = arith.constant 2 : index
    %c0_109 = arith.constant 0 : index
    %c0_110 = arith.constant 0 : index
    %115 = vector.load %arg5[%c2_108, %c0_109, %c0_110] : memref<4x8x16xf32, #tpu.memory_space<vmem>>, vector<1x8x16xf32>
    %116 = vector.shape_cast %115 : vector<1x8x16xf32> to vector<8x16xf32>
    %cst_111 = arith.constant dense<0.000000e+00> : vector<8x128xf32>
    %117 = tpu.matmul %116, %114, %cst_111 {dimension_numbers = #tpu.dot_dimension_numbers<[1], [0], [0], [1], [0, 0, 1, 1], [], []>} : vector<8x16xf32>, vector<16x128xf32>, vector<8x128xf32> -> vector<8x128xf32>
    %118 = arith.addf %111, %117 : vector<8x128xf32>
    %c3_112 = arith.constant 3 : index
    %c0_113 = arith.constant 0 : index
    %c0_114 = arith.constant 0 : index
    %119 = vector.load %arg6[%c3_112, %c0_113, %c0_114] : memref<4x128x128xf32, #tpu.memory_space<vmem>>, vector<1x128x128xf32>
    %120 = vector.shape_cast %119 : vector<1x128x128xf32> to vector<128x128xf32>
    %cst_115 = arith.constant dense<0.000000e+00> : vector<16x128xf32>
    %121 = tpu.matmul %98, %120, %cst_115 {dimension_numbers = #tpu.dot_dimension_numbers<[1], [0], [0], [1], [0, 0, 1, 1], [], []>} : vector<16x128xf32>, vector<128x128xf32>, vector<16x128xf32> -> vector<16x128xf32>
    %c3_116 = arith.constant 3 : index
    %c0_117 = arith.constant 0 : index
    %c0_118 = arith.constant 0 : index
    %122 = vector.load %arg5[%c3_116, %c0_117, %c0_118] : memref<4x8x16xf32, #tpu.memory_space<vmem>>, vector<1x8x16xf32>
    %123 = vector.shape_cast %122 : vector<1x8x16xf32> to vector<8x16xf32>
    %cst_119 = arith.constant dense<0.000000e+00> : vector<8x128xf32>
    %124 = tpu.matmul %123, %121, %cst_119 {dimension_numbers = #tpu.dot_dimension_numbers<[1], [0], [0], [1], [0, 0, 1, 1], [], []>} : vector<8x16xf32>, vector<16x128xf32>, vector<8x128xf32> -> vector<8x128xf32>
    %125 = arith.addf %118, %124 : vector<8x128xf32>
    %cst_120 = arith.constant dense<0.000000e+00> : vector<128xf32>
    %126 = vector.multi_reduction <add>, %125, %cst_120 [0] : vector<8x128xf32> to vector<128xf32>
    %127 = vector.shape_cast %126 : vector<128xf32> to vector<1x128xf32>
    %128 = arith.mulf %125, %125 : vector<8x128xf32>
    %cst_121 = arith.constant dense<0.000000e+00> : vector<128xf32>
    %129 = vector.multi_reduction <add>, %128, %cst_121 [0] : vector<8x128xf32> to vector<128xf32>
    %130 = vector.shape_cast %129 : vector<128xf32> to vector<1x128xf32>
    %c0_122 = arith.constant 0 : index
    %c0_123 = arith.constant 0 : index
    %131 = vector.load %arg18[%c0_122, %c0_123] : memref<128x32xf32, #tpu.memory_space<vmem>>, vector<128x32xf32>
    %cst_124 = arith.constant dense<0.000000e+00> : vector<1x32xf32>
    %132 = tpu.matmul %127, %131, %cst_124 {dimension_numbers = #tpu.dot_dimension_numbers<[1], [0], [0], [1], [0, 0, 1, 1], [], []>} : vector<1x128xf32>, vector<128x32xf32>, vector<1x32xf32> -> vector<1x32xf32>
    %c0_125 = arith.constant 0 : index
    %c0_126 = arith.constant 0 : index
    %133 = vector.load %arg18[%c0_125, %c0_126] : memref<128x32xf32, #tpu.memory_space<vmem>>, vector<128x32xf32>
    %cst_127 = arith.constant dense<0.000000e+00> : vector<1x32xf32>
    %134 = tpu.matmul %130, %133, %cst_127 {dimension_numbers = #tpu.dot_dimension_numbers<[1], [0], [0], [1], [0, 0, 1, 1], [], []>} : vector<1x128xf32>, vector<128x32xf32>, vector<1x32xf32> -> vector<1x32xf32>
    %cst_128 = arith.constant 3.125000e-02 : f32
    %135 = vector.broadcast %cst_128 : f32 to vector<1x32xf32>
    %136 = arith.mulf %132, %135 : vector<1x32xf32>
    %cst_129 = arith.constant 3.125000e-02 : f32
    %137 = vector.broadcast %cst_129 : f32 to vector<1x32xf32>
    %138 = arith.mulf %134, %137 : vector<1x32xf32>
    %139 = arith.mulf %136, %136 : vector<1x32xf32>
    %140 = arith.subf %138, %139 : vector<1x32xf32>
    %cst_130 = arith.constant 9.99999974E-6 : f32
    %141 = vector.broadcast %cst_130 : f32 to vector<1x32xf32>
    %142 = arith.addf %140, %141 : vector<1x32xf32>
    %143 = math.rsqrt %142 : vector<1x32xf32>
    %c0_131 = arith.constant 0 : index
    %c0_132 = arith.constant 0 : index
    %144 = vector.load %arg16[%c0_131, %c0_132] : memref<1x32xf32, #tpu.memory_space<vmem>>, vector<1x32xf32>
    %145 = arith.mulf %144, %143 : vector<1x32xf32>
    %c0_133 = arith.constant 0 : index
    %c0_134 = arith.constant 0 : index
    %146 = vector.load %arg17[%c0_133, %c0_134] : memref<1x32xf32, #tpu.memory_space<vmem>>, vector<1x32xf32>
    %147 = arith.mulf %136, %145 : vector<1x32xf32>
    %148 = arith.subf %146, %147 : vector<1x32xf32>
    %c0_135 = arith.constant 0 : index
    %c0_136 = arith.constant 0 : index
    %149 = vector.load %arg19[%c0_135, %c0_136] : memref<32x128xf32, #tpu.memory_space<vmem>>, vector<32x128xf32>
    %cst_137 = arith.constant dense<0.000000e+00> : vector<1x128xf32>
    %150 = tpu.matmul %145, %149, %cst_137 {dimension_numbers = #tpu.dot_dimension_numbers<[1], [0], [0], [1], [0, 0, 1, 1], [], []>} : vector<1x32xf32>, vector<32x128xf32>, vector<1x128xf32> -> vector<1x128xf32>
    %c0_138 = arith.constant 0 : index
    %c0_139 = arith.constant 0 : index
    %151 = vector.load %arg19[%c0_138, %c0_139] : memref<32x128xf32, #tpu.memory_space<vmem>>, vector<32x128xf32>
    %cst_140 = arith.constant dense<0.000000e+00> : vector<1x128xf32>
    %152 = tpu.matmul %148, %151, %cst_140 {dimension_numbers = #tpu.dot_dimension_numbers<[1], [0], [0], [1], [0, 0, 1, 1], [], []>} : vector<1x32xf32>, vector<32x128xf32>, vector<1x128xf32> -> vector<1x128xf32>
    %153 = vector.broadcast %150 : vector<1x128xf32> to vector<8x128xf32>
    %154 = arith.mulf %125, %153 : vector<8x128xf32>
    %155 = vector.broadcast %152 : vector<1x128xf32> to vector<8x128xf32>
    %156 = arith.addf %154, %155 : vector<8x128xf32>
    %cst_141 = arith.constant 0.000000e+00 : f32
    %157 = vector.broadcast %cst_141 : f32 to vector<8x128xf32>
    %158 = arith.cmpf ogt, %156, %157 : vector<8x128xf32>
    %cst_142 = arith.constant 2.000000e-01 : f32
    %159 = vector.broadcast %cst_142 : f32 to vector<8x128xf32>
    %160 = arith.mulf %159, %156 : vector<8x128xf32>
    %161 = arith.select %158, %156, %160 : vector<8x128xi1>, vector<8x128xf32>
    %c0_143 = arith.constant 0 : index
    %c0_144 = arith.constant 0 : index
    %c0_145 = arith.constant 0 : index
    %162 = vector.load %arg8[%c0_143, %c0_144, %c0_145] : memref<4x128x128xf32, #tpu.memory_space<vmem>>, vector<1x128x128xf32>
    %163 = vector.shape_cast %162 : vector<1x128x128xf32> to vector<128x128xf32>
    %cst_146 = arith.constant dense<0.000000e+00> : vector<8x128xf32>
    %164 = tpu.matmul %161, %163, %cst_146 {dimension_numbers = #tpu.dot_dimension_numbers<[1], [0], [0], [1], [0, 0, 1, 1], [], []>} : vector<8x128xf32>, vector<128x128xf32>, vector<8x128xf32> -> vector<8x128xf32>
    %c0_147 = arith.constant 0 : index
    %c0_148 = arith.constant 0 : index
    %c0_149 = arith.constant 0 : index
    %165 = vector.load %arg7[%c0_147, %c0_148, %c0_149] : memref<4x4x8xf32, #tpu.memory_space<vmem>>, vector<1x4x8xf32>
    %166 = vector.shape_cast %165 : vector<1x4x8xf32> to vector<4x8xf32>
    %cst_150 = arith.constant dense<0.000000e+00> : vector<4x128xf32>
    %167 = tpu.matmul %166, %164, %cst_150 {dimension_numbers = #tpu.dot_dimension_numbers<[1], [0], [0], [1], [0, 0, 1, 1], [], []>} : vector<4x8xf32>, vector<8x128xf32>, vector<4x128xf32> -> vector<4x128xf32>
    %c1_151 = arith.constant 1 : index
    %c0_152 = arith.constant 0 : index
    %c0_153 = arith.constant 0 : index
    %168 = vector.load %arg8[%c1_151, %c0_152, %c0_153] : memref<4x128x128xf32, #tpu.memory_space<vmem>>, vector<1x128x128xf32>
    %169 = vector.shape_cast %168 : vector<1x128x128xf32> to vector<128x128xf32>
    %cst_154 = arith.constant dense<0.000000e+00> : vector<8x128xf32>
    %170 = tpu.matmul %161, %169, %cst_154 {dimension_numbers = #tpu.dot_dimension_numbers<[1], [0], [0], [1], [0, 0, 1, 1], [], []>} : vector<8x128xf32>, vector<128x128xf32>, vector<8x128xf32> -> vector<8x128xf32>
    %c1_155 = arith.constant 1 : index
    %c0_156 = arith.constant 0 : index
    %c0_157 = arith.constant 0 : index
    %171 = vector.load %arg7[%c1_155, %c0_156, %c0_157] : memref<4x4x8xf32, #tpu.memory_space<vmem>>, vector<1x4x8xf32>
    %172 = vector.shape_cast %171 : vector<1x4x8xf32> to vector<4x8xf32>
    %cst_158 = arith.constant dense<0.000000e+00> : vector<4x128xf32>
    %173 = tpu.matmul %172, %170, %cst_158 {dimension_numbers = #tpu.dot_dimension_numbers<[1], [0], [0], [1], [0, 0, 1, 1], [], []>} : vector<4x8xf32>, vector<8x128xf32>, vector<4x128xf32> -> vector<4x128xf32>
    %174 = arith.addf %167, %173 : vector<4x128xf32>
    %c2_159 = arith.constant 2 : index
    %c0_160 = arith.constant 0 : index
    %c0_161 = arith.constant 0 : index
    %175 = vector.load %arg8[%c2_159, %c0_160, %c0_161] : memref<4x128x128xf32, #tpu.memory_space<vmem>>, vector<1x128x128xf32>
    %176 = vector.shape_cast %175 : vector<1x128x128xf32> to vector<128x128xf32>
    %cst_162 = arith.constant dense<0.000000e+00> : vector<8x128xf32>
    %177 = tpu.matmul %161, %176, %cst_162 {dimension_numbers = #tpu.dot_dimension_numbers<[1], [0], [0], [1], [0, 0, 1, 1], [], []>} : vector<8x128xf32>, vector<128x128xf32>, vector<8x128xf32> -> vector<8x128xf32>
    %c2_163 = arith.constant 2 : index
    %c0_164 = arith.constant 0 : index
    %c0_165 = arith.constant 0 : index
    %178 = vector.load %arg7[%c2_163, %c0_164, %c0_165] : memref<4x4x8xf32, #tpu.memory_space<vmem>>, vector<1x4x8xf32>
    %179 = vector.shape_cast %178 : vector<1x4x8xf32> to vector<4x8xf32>
    %cst_166 = arith.constant dense<0.000000e+00> : vector<4x128xf32>
    %180 = tpu.matmul %179, %177, %cst_166 {dimension_numbers = #tpu.dot_dimension_numbers<[1], [0], [0], [1], [0, 0, 1, 1], [], []>} : vector<4x8xf32>, vector<8x128xf32>, vector<4x128xf32> -> vector<4x128xf32>
    %181 = arith.addf %174, %180 : vector<4x128xf32>
    %c3_167 = arith.constant 3 : index
    %c0_168 = arith.constant 0 : index
    %c0_169 = arith.constant 0 : index
    %182 = vector.load %arg8[%c3_167, %c0_168, %c0_169] : memref<4x128x128xf32, #tpu.memory_space<vmem>>, vector<1x128x128xf32>
    %183 = vector.shape_cast %182 : vector<1x128x128xf32> to vector<128x128xf32>
    %cst_170 = arith.constant dense<0.000000e+00> : vector<8x128xf32>
    %184 = tpu.matmul %161, %183, %cst_170 {dimension_numbers = #tpu.dot_dimension_numbers<[1], [0], [0], [1], [0, 0, 1, 1], [], []>} : vector<8x128xf32>, vector<128x128xf32>, vector<8x128xf32> -> vector<8x128xf32>
    %c3_171 = arith.constant 3 : index
    %c0_172 = arith.constant 0 : index
    %c0_173 = arith.constant 0 : index
    %185 = vector.load %arg7[%c3_171, %c0_172, %c0_173] : memref<4x4x8xf32, #tpu.memory_space<vmem>>, vector<1x4x8xf32>
    %186 = vector.shape_cast %185 : vector<1x4x8xf32> to vector<4x8xf32>
    %cst_174 = arith.constant dense<0.000000e+00> : vector<4x128xf32>
    %187 = tpu.matmul %186, %184, %cst_174 {dimension_numbers = #tpu.dot_dimension_numbers<[1], [0], [0], [1], [0, 0, 1, 1], [], []>} : vector<4x8xf32>, vector<8x128xf32>, vector<4x128xf32> -> vector<4x128xf32>
    %188 = arith.addf %181, %187 : vector<4x128xf32>
    %cst_175 = arith.constant dense<0.000000e+00> : vector<128xf32>
    %189 = vector.multi_reduction <add>, %188, %cst_175 [0] : vector<4x128xf32> to vector<128xf32>
    %190 = vector.shape_cast %189 : vector<128xf32> to vector<1x128xf32>
    %191 = arith.mulf %188, %188 : vector<4x128xf32>
    %cst_176 = arith.constant dense<0.000000e+00> : vector<128xf32>
    %192 = vector.multi_reduction <add>, %191, %cst_176 [0] : vector<4x128xf32> to vector<128xf32>
    %193 = vector.shape_cast %192 : vector<128xf32> to vector<1x128xf32>
    %c0_177 = arith.constant 0 : index
    %c0_178 = arith.constant 0 : index
    %194 = vector.load %arg22[%c0_177, %c0_178] : memref<128x64xf32, #tpu.memory_space<vmem>>, vector<128x64xf32>
    %cst_179 = arith.constant dense<0.000000e+00> : vector<1x64xf32>
    %195 = tpu.matmul %190, %194, %cst_179 {dimension_numbers = #tpu.dot_dimension_numbers<[1], [0], [0], [1], [0, 0, 1, 1], [], []>} : vector<1x128xf32>, vector<128x64xf32>, vector<1x64xf32> -> vector<1x64xf32>
    %c0_180 = arith.constant 0 : index
    %c0_181 = arith.constant 0 : index
    %196 = vector.load %arg22[%c0_180, %c0_181] : memref<128x64xf32, #tpu.memory_space<vmem>>, vector<128x64xf32>
    %cst_182 = arith.constant dense<0.000000e+00> : vector<1x64xf32>
    %197 = tpu.matmul %193, %196, %cst_182 {dimension_numbers = #tpu.dot_dimension_numbers<[1], [0], [0], [1], [0, 0, 1, 1], [], []>} : vector<1x128xf32>, vector<128x64xf32>, vector<1x64xf32> -> vector<1x64xf32>
    %cst_183 = arith.constant 1.250000e-01 : f32
    %198 = vector.broadcast %cst_183 : f32 to vector<1x64xf32>
    %199 = arith.mulf %195, %198 : vector<1x64xf32>
    %cst_184 = arith.constant 1.250000e-01 : f32
    %200 = vector.broadcast %cst_184 : f32 to vector<1x64xf32>
    %201 = arith.mulf %197, %200 : vector<1x64xf32>
    %202 = arith.mulf %199, %199 : vector<1x64xf32>
    %203 = arith.subf %201, %202 : vector<1x64xf32>
    %cst_185 = arith.constant 9.99999974E-6 : f32
    %204 = vector.broadcast %cst_185 : f32 to vector<1x64xf32>
    %205 = arith.addf %203, %204 : vector<1x64xf32>
    %206 = math.rsqrt %205 : vector<1x64xf32>
    %c0_186 = arith.constant 0 : index
    %c0_187 = arith.constant 0 : index
    %207 = vector.load %arg20[%c0_186, %c0_187] : memref<1x64xf32, #tpu.memory_space<vmem>>, vector<1x64xf32>
    %208 = arith.mulf %207, %206 : vector<1x64xf32>
    %c0_188 = arith.constant 0 : index
    %c0_189 = arith.constant 0 : index
    %209 = vector.load %arg21[%c0_188, %c0_189] : memref<1x64xf32, #tpu.memory_space<vmem>>, vector<1x64xf32>
    %210 = arith.mulf %199, %208 : vector<1x64xf32>
    %211 = arith.subf %209, %210 : vector<1x64xf32>
    %c0_190 = arith.constant 0 : index
    %c0_191 = arith.constant 0 : index
    %212 = vector.load %arg23[%c0_190, %c0_191] : memref<64x128xf32, #tpu.memory_space<vmem>>, vector<64x128xf32>
    %cst_192 = arith.constant dense<0.000000e+00> : vector<1x128xf32>
    %213 = tpu.matmul %208, %212, %cst_192 {dimension_numbers = #tpu.dot_dimension_numbers<[1], [0], [0], [1], [0, 0, 1, 1], [], []>} : vector<1x64xf32>, vector<64x128xf32>, vector<1x128xf32> -> vector<1x128xf32>
    %c0_193 = arith.constant 0 : index
    %c0_194 = arith.constant 0 : index
    %214 = vector.load %arg23[%c0_193, %c0_194] : memref<64x128xf32, #tpu.memory_space<vmem>>, vector<64x128xf32>
    %cst_195 = arith.constant dense<0.000000e+00> : vector<1x128xf32>
    %215 = tpu.matmul %211, %214, %cst_195 {dimension_numbers = #tpu.dot_dimension_numbers<[1], [0], [0], [1], [0, 0, 1, 1], [], []>} : vector<1x64xf32>, vector<64x128xf32>, vector<1x128xf32> -> vector<1x128xf32>
    %216 = vector.broadcast %213 : vector<1x128xf32> to vector<4x128xf32>
    %217 = arith.mulf %188, %216 : vector<4x128xf32>
    %218 = vector.broadcast %215 : vector<1x128xf32> to vector<4x128xf32>
    %219 = arith.addf %217, %218 : vector<4x128xf32>
    %cst_196 = arith.constant 0.000000e+00 : f32
    %220 = vector.broadcast %cst_196 : f32 to vector<4x128xf32>
    %221 = arith.cmpf ogt, %219, %220 : vector<4x128xf32>
    %cst_197 = arith.constant 2.000000e-01 : f32
    %222 = vector.broadcast %cst_197 : f32 to vector<4x128xf32>
    %223 = arith.mulf %222, %219 : vector<4x128xf32>
    %224 = arith.select %221, %219, %223 : vector<4x128xi1>, vector<4x128xf32>
    %c0_198 = arith.constant 0 : index
    %c0_199 = arith.constant 0 : index
    %c0_200 = arith.constant 0 : index
    %225 = vector.load %arg10[%c0_198, %c0_199, %c0_200] : memref<4x128x128xf32, #tpu.memory_space<vmem>>, vector<1x128x128xf32>
    %226 = vector.shape_cast %225 : vector<1x128x128xf32> to vector<128x128xf32>
    %cst_201 = arith.constant dense<0.000000e+00> : vector<4x128xf32>
    %227 = tpu.matmul %224, %226, %cst_201 {dimension_numbers = #tpu.dot_dimension_numbers<[1], [0], [0], [1], [0, 0, 1, 1], [], []>} : vector<4x128xf32>, vector<128x128xf32>, vector<4x128xf32> -> vector<4x128xf32>
    %c0_202 = arith.constant 0 : index
    %c0_203 = arith.constant 0 : index
    %c0_204 = arith.constant 0 : index
    %228 = vector.load %arg9[%c0_202, %c0_203, %c0_204] : memref<4x2x4xf32, #tpu.memory_space<vmem>>, vector<1x2x4xf32>
    %229 = vector.shape_cast %228 : vector<1x2x4xf32> to vector<2x4xf32>
    %cst_205 = arith.constant dense<0.000000e+00> : vector<2x128xf32>
    %230 = tpu.matmul %229, %227, %cst_205 {dimension_numbers = #tpu.dot_dimension_numbers<[1], [0], [0], [1], [0, 0, 1, 1], [], []>} : vector<2x4xf32>, vector<4x128xf32>, vector<2x128xf32> -> vector<2x128xf32>
    %c1_206 = arith.constant 1 : index
    %c0_207 = arith.constant 0 : index
    %c0_208 = arith.constant 0 : index
    %231 = vector.load %arg10[%c1_206, %c0_207, %c0_208] : memref<4x128x128xf32, #tpu.memory_space<vmem>>, vector<1x128x128xf32>
    %232 = vector.shape_cast %231 : vector<1x128x128xf32> to vector<128x128xf32>
    %cst_209 = arith.constant dense<0.000000e+00> : vector<4x128xf32>
    %233 = tpu.matmul %224, %232, %cst_209 {dimension_numbers = #tpu.dot_dimension_numbers<[1], [0], [0], [1], [0, 0, 1, 1], [], []>} : vector<4x128xf32>, vector<128x128xf32>, vector<4x128xf32> -> vector<4x128xf32>
    %c1_210 = arith.constant 1 : index
    %c0_211 = arith.constant 0 : index
    %c0_212 = arith.constant 0 : index
    %234 = vector.load %arg9[%c1_210, %c0_211, %c0_212] : memref<4x2x4xf32, #tpu.memory_space<vmem>>, vector<1x2x4xf32>
    %235 = vector.shape_cast %234 : vector<1x2x4xf32> to vector<2x4xf32>
    %cst_213 = arith.constant dense<0.000000e+00> : vector<2x128xf32>
    %236 = tpu.matmul %235, %233, %cst_213 {dimension_numbers = #tpu.dot_dimension_numbers<[1], [0], [0], [1], [0, 0, 1, 1], [], []>} : vector<2x4xf32>, vector<4x128xf32>, vector<2x128xf32> -> vector<2x128xf32>
    %237 = arith.addf %230, %236 : vector<2x128xf32>
    %c2_214 = arith.constant 2 : index
    %c0_215 = arith.constant 0 : index
    %c0_216 = arith.constant 0 : index
    %238 = vector.load %arg10[%c2_214, %c0_215, %c0_216] : memref<4x128x128xf32, #tpu.memory_space<vmem>>, vector<1x128x128xf32>
    %239 = vector.shape_cast %238 : vector<1x128x128xf32> to vector<128x128xf32>
    %cst_217 = arith.constant dense<0.000000e+00> : vector<4x128xf32>
    %240 = tpu.matmul %224, %239, %cst_217 {dimension_numbers = #tpu.dot_dimension_numbers<[1], [0], [0], [1], [0, 0, 1, 1], [], []>} : vector<4x128xf32>, vector<128x128xf32>, vector<4x128xf32> -> vector<4x128xf32>
    %c2_218 = arith.constant 2 : index
    %c0_219 = arith.constant 0 : index
    %c0_220 = arith.constant 0 : index
    %241 = vector.load %arg9[%c2_218, %c0_219, %c0_220] : memref<4x2x4xf32, #tpu.memory_space<vmem>>, vector<1x2x4xf32>
    %242 = vector.shape_cast %241 : vector<1x2x4xf32> to vector<2x4xf32>
    %cst_221 = arith.constant dense<0.000000e+00> : vector<2x128xf32>
    %243 = tpu.matmul %242, %240, %cst_221 {dimension_numbers = #tpu.dot_dimension_numbers<[1], [0], [0], [1], [0, 0, 1, 1], [], []>} : vector<2x4xf32>, vector<4x128xf32>, vector<2x128xf32> -> vector<2x128xf32>
    %244 = arith.addf %237, %243 : vector<2x128xf32>
    %c3_222 = arith.constant 3 : index
    %c0_223 = arith.constant 0 : index
    %c0_224 = arith.constant 0 : index
    %245 = vector.load %arg10[%c3_222, %c0_223, %c0_224] : memref<4x128x128xf32, #tpu.memory_space<vmem>>, vector<1x128x128xf32>
    %246 = vector.shape_cast %245 : vector<1x128x128xf32> to vector<128x128xf32>
    %cst_225 = arith.constant dense<0.000000e+00> : vector<4x128xf32>
    %247 = tpu.matmul %224, %246, %cst_225 {dimension_numbers = #tpu.dot_dimension_numbers<[1], [0], [0], [1], [0, 0, 1, 1], [], []>} : vector<4x128xf32>, vector<128x128xf32>, vector<4x128xf32> -> vector<4x128xf32>
    %c3_226 = arith.constant 3 : index
    %c0_227 = arith.constant 0 : index
    %c0_228 = arith.constant 0 : index
    %248 = vector.load %arg9[%c3_226, %c0_227, %c0_228] : memref<4x2x4xf32, #tpu.memory_space<vmem>>, vector<1x2x4xf32>
    %249 = vector.shape_cast %248 : vector<1x2x4xf32> to vector<2x4xf32>
    %cst_229 = arith.constant dense<0.000000e+00> : vector<2x128xf32>
    %250 = tpu.matmul %249, %247, %cst_229 {dimension_numbers = #tpu.dot_dimension_numbers<[1], [0], [0], [1], [0, 0, 1, 1], [], []>} : vector<2x4xf32>, vector<4x128xf32>, vector<2x128xf32> -> vector<2x128xf32>
    %251 = arith.addf %244, %250 : vector<2x128xf32>
    %cst_230 = arith.constant dense<0.000000e+00> : vector<128xf32>
    %252 = vector.multi_reduction <add>, %251, %cst_230 [0] : vector<2x128xf32> to vector<128xf32>
    %253 = vector.shape_cast %252 : vector<128xf32> to vector<1x128xf32>
    %254 = arith.mulf %251, %251 : vector<2x128xf32>
    %cst_231 = arith.constant dense<0.000000e+00> : vector<128xf32>
    %255 = vector.multi_reduction <add>, %254, %cst_231 [0] : vector<2x128xf32> to vector<128xf32>
    %256 = vector.shape_cast %255 : vector<128xf32> to vector<1x128xf32>
    %c0_232 = arith.constant 0 : index
    %c0_233 = arith.constant 0 : index
    %257 = vector.load %arg26[%c0_232, %c0_233] : memref<128x128xf32, #tpu.memory_space<vmem>>, vector<128x128xf32>
    %cst_234 = arith.constant dense<0.000000e+00> : vector<1x128xf32>
    %258 = tpu.matmul %253, %257, %cst_234 {dimension_numbers = #tpu.dot_dimension_numbers<[1], [0], [0], [1], [0, 0, 1, 1], [], []>} : vector<1x128xf32>, vector<128x128xf32>, vector<1x128xf32> -> vector<1x128xf32>
    %c0_235 = arith.constant 0 : index
    %c0_236 = arith.constant 0 : index
    %259 = vector.load %arg26[%c0_235, %c0_236] : memref<128x128xf32, #tpu.memory_space<vmem>>, vector<128x128xf32>
    %cst_237 = arith.constant dense<0.000000e+00> : vector<1x128xf32>
    %260 = tpu.matmul %256, %259, %cst_237 {dimension_numbers = #tpu.dot_dimension_numbers<[1], [0], [0], [1], [0, 0, 1, 1], [], []>} : vector<1x128xf32>, vector<128x128xf32>, vector<1x128xf32> -> vector<1x128xf32>
    %cst_238 = arith.constant 5.000000e-01 : f32
    %261 = vector.broadcast %cst_238 : f32 to vector<1x128xf32>
    %262 = arith.mulf %258, %261 : vector<1x128xf32>
    %cst_239 = arith.constant 5.000000e-01 : f32
    %263 = vector.broadcast %cst_239 : f32 to vector<1x128xf32>
    %264 = arith.mulf %260, %263 : vector<1x128xf32>
    %265 = arith.mulf %262, %262 : vector<1x128xf32>
    %266 = arith.subf %264, %265 : vector<1x128xf32>
    %cst_240 = arith.constant 9.99999974E-6 : f32
    %267 = vector.broadcast %cst_240 : f32 to vector<1x128xf32>
    %268 = arith.addf %266, %267 : vector<1x128xf32>
    %269 = math.rsqrt %268 : vector<1x128xf32>
    %c0_241 = arith.constant 0 : index
    %c0_242 = arith.constant 0 : index
    %270 = vector.load %arg24[%c0_241, %c0_242] : memref<1x128xf32, #tpu.memory_space<vmem>>, vector<1x128xf32>
    %271 = arith.mulf %270, %269 : vector<1x128xf32>
    %c0_243 = arith.constant 0 : index
    %c0_244 = arith.constant 0 : index
    %272 = vector.load %arg25[%c0_243, %c0_244] : memref<1x128xf32, #tpu.memory_space<vmem>>, vector<1x128xf32>
    %273 = arith.mulf %262, %271 : vector<1x128xf32>
    %274 = arith.subf %272, %273 : vector<1x128xf32>
    %c0_245 = arith.constant 0 : index
    %c0_246 = arith.constant 0 : index
    %275 = vector.load %arg27[%c0_245, %c0_246] : memref<128x128xf32, #tpu.memory_space<vmem>>, vector<128x128xf32>
    %cst_247 = arith.constant dense<0.000000e+00> : vector<1x128xf32>
    %276 = tpu.matmul %271, %275, %cst_247 {dimension_numbers = #tpu.dot_dimension_numbers<[1], [0], [0], [1], [0, 0, 1, 1], [], []>} : vector<1x128xf32>, vector<128x128xf32>, vector<1x128xf32> -> vector<1x128xf32>
    %c0_248 = arith.constant 0 : index
    %c0_249 = arith.constant 0 : index
    %277 = vector.load %arg27[%c0_248, %c0_249] : memref<128x128xf32, #tpu.memory_space<vmem>>, vector<128x128xf32>
    %cst_250 = arith.constant dense<0.000000e+00> : vector<1x128xf32>
    %278 = tpu.matmul %274, %277, %cst_250 {dimension_numbers = #tpu.dot_dimension_numbers<[1], [0], [0], [1], [0, 0, 1, 1], [], []>} : vector<1x128xf32>, vector<128x128xf32>, vector<1x128xf32> -> vector<1x128xf32>
    %279 = vector.broadcast %276 : vector<1x128xf32> to vector<2x128xf32>
    %280 = arith.mulf %251, %279 : vector<2x128xf32>
    %281 = vector.broadcast %278 : vector<1x128xf32> to vector<2x128xf32>
    %282 = arith.addf %280, %281 : vector<2x128xf32>
    %cst_251 = arith.constant 0.000000e+00 : f32
    %283 = vector.broadcast %cst_251 : f32 to vector<2x128xf32>
    %284 = arith.cmpf ogt, %282, %283 : vector<2x128xf32>
    %cst_252 = arith.constant 2.000000e-01 : f32
    %285 = vector.broadcast %cst_252 : f32 to vector<2x128xf32>
    %286 = arith.mulf %285, %282 : vector<2x128xf32>
    %287 = arith.select %284, %282, %286 : vector<2x128xi1>, vector<2x128xf32>
    %c0_253 = arith.constant 0 : index
    %c0_254 = arith.constant 0 : index
    %288 = vector.load %arg28[%c0_253, %c0_254] : memref<2x128xf32, #tpu.memory_space<vmem>>, vector<2x128xf32>
    %289 = arith.mulf %287, %288 : vector<2x128xf32>
    %cst_255 = arith.constant dense<0.000000e+00> : vector<2xf32>
    %290 = vector.multi_reduction <add>, %289, %cst_255 [1] : vector<2x128xf32> to vector<2xf32>
    %291 = vector.shape_cast %290 : vector<2xf32> to vector<2x1xf32>
    %c0_256 = arith.constant 0 : index
    %c0_257 = arith.constant 0 : index
    %292 = vector.load %arg29[%c0_256, %c0_257] : memref<2x2xf32, #tpu.memory_space<vmem>>, vector<2x2xf32>
    %cst_258 = arith.constant dense<0.000000e+00> : vector<2x1xf32>
    %293 = tpu.matmul %292, %291, %cst_258 {dimension_numbers = #tpu.dot_dimension_numbers<[1], [0], [0], [1], [0, 0, 1, 1], [], []>} : vector<2x2xf32>, vector<2x1xf32>, vector<2x1xf32> -> vector<2x1xf32>
    %cst_259 = arith.constant 0.000000e+00 : f32
    %294 = vector.broadcast %cst_259 : f32 to vector<2x1xf32>
    %295 = arith.subf %294, %293 : vector<2x1xf32>
    %296 = math.exp %295 : vector<2x1xf32>
    %cst_260 = arith.constant 1.000000e+00 : f32
    %297 = vector.broadcast %cst_260 : f32 to vector<2x1xf32>
    %298 = arith.addf %297, %296 : vector<2x1xf32>
    %cst_261 = arith.constant 1.000000e+00 : f32
    %299 = vector.broadcast %cst_261 : f32 to vector<2x1xf32>
    %300 = arith.divf %299, %298 : vector<2x1xf32>
    %c0_262 = arith.constant 0 : index
    %c0_263 = arith.constant 0 : index
    %301 = vector.load %arg30[%c0_262, %c0_263] : memref<2x1xf32, #tpu.memory_space<vmem>>, vector<2x1xf32>
    tpu.vector_store %arg30[%c0_262, %c0_263], %300 {strides = array<i32>} : memref<2x1xf32, #tpu.memory_space<vmem>>, vector<2x1xf32>,
    return
  }
}

</mosaic_0001>

<llo_original>
// kernel: forward.1
$region0: #{forward.1}
  #allocation0 [shape = 'u32[]', space=smem, size = 0x4, offset = 0x4, fixed_abs, tag = 'smem constant byte address 0x4 - core index']
  #allocation1 [shape = 'u32[144,128]{1,0:T(1,128)}', space=vmem, size = 0x12000, scoped, tag = 'internal scratch']
  %s0 = inlined_call_operand.smem [shape: u32[31], index: -1, kind: input, shape index: {}]
  %s1 = sld [smem:[%s0]]
  %s2 = scalar_lea.smem %s0, 1
  %s3 = sld [smem:[%s2]]
  %s4 = scalar_lea.smem %s0, 2
  %s5 = sld [smem:[%s4]]
  %s6 = scalar_lea.smem %s0, 3
  %s7 = sld [smem:[%s6]]
  %s8 = scalar_lea.smem %s0, 4
  %s9 = sld [smem:[%s8]]
  %s10 = scalar_lea.smem %s0, 5
  %s11 = sld [smem:[%s10]]
  %s12 = scalar_lea.smem %s0, 6
  %s13 = sld [smem:[%s12]]
  %s14 = scalar_lea.smem %s0, 7
  %s15 = sld [smem:[%s14]]
  %s16 = scalar_lea.smem %s0, 8
  %s17 = sld [smem:[%s16]]
  %s18 = scalar_lea.smem %s0, 9
  %s19 = sld [smem:[%s18]]
  %s20 = scalar_lea.smem %s0, 10
  %s21 = sld [smem:[%s20]]
  %s22 = scalar_lea.smem %s0, 11
  %s23 = sld [smem:[%s22]]
  %s24 = scalar_lea.smem %s0, 12
  %s25 = sld [smem:[%s24]]
  %s26 = scalar_lea.smem %s0, 13
  %s27 = sld [smem:[%s26]]
  %s28 = scalar_lea.smem %s0, 14
  %s29 = sld [smem:[%s28]]
  %s30 = scalar_lea.smem %s0, 15
  %s31 = sld [smem:[%s30]]
  %s32 = scalar_lea.smem %s0, 16
  %s33 = sld [smem:[%s32]]
  %s34 = scalar_lea.smem %s0, 17
  %s35 = sld [smem:[%s34]]
  %s36 = scalar_lea.smem %s0, 18
  %s37 = sld [smem:[%s36]]
  %s38 = scalar_lea.smem %s0, 19
  %s39 = sld [smem:[%s38]]
  %s40 = scalar_lea.smem %s0, 20
  %s41 = sld [smem:[%s40]]
  %s42 = scalar_lea.smem %s0, 21
  %s43 = sld [smem:[%s42]]
  %s44 = scalar_lea.smem %s0, 22
  %s45 = sld [smem:[%s44]]
  %s46 = scalar_lea.smem %s0, 23
  %s47 = sld [smem:[%s46]]
  %s48 = scalar_lea.smem %s0, 24
  %s49 = sld [smem:[%s48]]
  %s50 = scalar_lea.smem %s0, 25
  %s51 = sld [smem:[%s50]]
  %s52 = scalar_lea.smem %s0, 26
  %s53 = sld [smem:[%s52]]
  %s54 = scalar_lea.smem %s0, 27
  %s55 = sld [smem:[%s54]]
  %s56 = scalar_lea.smem %s0, 28
  %s57 = sld [smem:[%s56]]
  %s58 = scalar_lea.smem %s0, 29
  %s59 = sld [smem:[%s58]]
  %s60 = scalar_lea.smem %s0, 30
  %s61 = sld [smem:[%s60]]
  %s62 = sld [smem:[#allocation0]]
  $region202: #{forward.1} parent=0
    _
  %s64 = ssub.s32 1, %s62
  %s65 = scalar_select 0, %s64, %s62
  $region1: #{forward.1} parent=0
    #allocation2 [shape = 'u8[196608]{0}', space=vmem, size = 0x30000, scoped, tag = 'input window, operand 2, single buffered']
    #allocation3 [shape = 's32[1]{0}', space=sflag, size = 0x4, scoped, tag = 'scoped memory for forward.1']
    #allocation4 [shape = 'u8[32768]{0}', space=vmem, size = 0x8000, scoped, tag = 'input window, operand 3, single buffered']
    #allocation5 [shape = 's32[1]{0}', space=sflag, size = 0x4, scoped, tag = 'scoped memory for forward.1']
    #allocation6 [shape = 'u8[16384]{0}', space=vmem, size = 0x4000, scoped, tag = 'input window, operand 5, single buffered']
    #allocation7 [shape = 'u8[8192]{0}', space=vmem, size = 0x2000, scoped, tag = 'input window, operand 7, single buffered']
    #allocation8 [shape = 's32[1]{0}', space=sflag, size = 0x4, scoped, tag = 'scoped memory for forward.1']
    #allocation9 [shape = 'u8[262144]{0}', space=vmem, size = 0x40000, scoped, tag = 'input window, operand 8, single buffered']
    #allocation10 [shape = 'u8[4096]{0}', space=vmem, size = 0x1000, scoped, tag = 'input window, operand 9, single buffered']
    #allocation11 [shape = 's32[1]{0}', space=sflag, size = 0x4, scoped, tag = 'scoped memory for forward.1']
    #allocation12 [shape = 'u8[262144]{0}', space=vmem, size = 0x40000, scoped, tag = 'input window, operand 10, single buffered']
    #allocation13 [shape = 'u8[512]{0}', space=vmem, size = 0x400, scoped, tag = 'input window, operand 13, single buffered']
    #allocation14 [shape = 's32[1]{0}', space=sflag, size = 0x4, scoped, tag = 'scoped memory for forward.1']
    #allocation15 [shape = 'u8[8192]{0}', space=vmem, size = 0x2000, scoped, tag = 'input window, operand 15, single buffered']
    #allocation16 [shape = 'u8[512]{0}', space=vmem, size = 0x400, scoped, tag = 'input window, operand 16, single buffered']
    #allocation17 [shape = 's32[1]{0}', space=sflag, size = 0x4, scoped, tag = 'scoped memory for forward.1']
    #allocation18 [shape = 'u8[512]{0}', space=vmem, size = 0x400, scoped, tag = 'input window, operand 17, single buffered']
    #allocation19 [shape = 'u8[16384]{0}', space=vmem, size = 0x4000, scoped, tag = 'input window, operand 19, single buffered']
    #allocation20 [shape = 's32[1]{0}', space=sflag, size = 0x4, scoped, tag = 'scoped memory for forward.1']
    #allocation21 [shape = 'u8[512]{0}', space=vmem, size = 0x400, scoped, tag = 'input window, operand 20, single buffered']
    #allocation22 [shape = 'u8[512]{0}', space=vmem, size = 0x400, scoped, tag = 'input window, operand 21, single buffered']
    #allocation23 [shape = 's32[1]{0}', space=sflag, size = 0x4, scoped, tag = 'scoped memory for forward.1']
    #allocation24 [shape = 'u8[32768]{0}', space=vmem, size = 0x8000, scoped, tag = 'input window, operand 23, single buffered']
    #allocation25 [shape = 'u8[512]{0}', space=vmem, size = 0x400, scoped, tag = 'input window, operand 24, single buffered']
    #allocation26 [shape = 's32[1]{0}', space=sflag, size = 0x4, scoped, tag = 'scoped memory for forward.1']
    #allocation27 [shape = 'u8[512]{0}', space=vmem, size = 0x400, scoped, tag = 'input window, operand 25, single buffered']
    #allocation28 [shape = 'u8[65536]{0}', space=vmem, size = 0x10000, scoped, tag = 'input window, operand 27, single buffered']
    #allocation29 [shape = 's32[1]{0}', space=sflag, size = 0x4, scoped, tag = 'scoped memory for forward.1']
    %66 = vsyncpa [#allocation3], 0
    %67 = vsyncpa [#allocation5], 0
    %68 = vsyncpa [#allocation8], 0
    %69 = vsyncpa [#allocation11], 0
    %70 = vsyncpa [#allocation14], 0
    %71 = vsyncpa [#allocation17], 0
    %72 = vsyncpa [#allocation20], 0
    %73 = vsyncpa [#allocation23], 0
    %74 = vsyncpa [#allocation26], 0
    %75 = vsyncpa [#allocation29], 0
    // Predicated region
    $region2: #{forward.1} parent=1 // pred_check
      _
    $region3: #{forward.1} parent=1 // pred_check_branch
      %77 = sbr.rel (0) target = $region5
    $region4: #{forward.1} parent=1 // pred_region
      _
    $region5: #{forward.1} parent=1 // pred_fallthru
      _
    // Predicated region
    $region6: #{forward.1} parent=1 // pred_check
      _
    $region7: #{forward.1} parent=1 // pred_check_branch
      %79 = sbr.rel (0) target = $region9
    $region8: #{forward.1} parent=1 // pred_region
      _
    $region9: #{forward.1} parent=1 // pred_fallthru
      _
    // Predicated region
    $region10: #{forward.1} parent=1 // pred_check
      _
    $region11: #{forward.1} parent=1 // pred_check_branch
      %81 = sbr.rel (0) target = $region13
    $region12: #{forward.1} parent=1 // pred_region
      %s83 = ssub.s32 6144, 6144
      %84 = vsyncadd [#allocation3], %s83
      %s85 = sshll.u32 [#allocation2], 4
      %s86 = int_to_ptr.vmem [resolvable:$true] %s85
      %91 = dma.hbm_to_vmem [thread:$0]  %s5, 6144, %s86, [#allocation3], 128, 128, 8
    $region13: #{forward.1} parent=1 // pred_fallthru
      _
    // Predicated region
    $region14: #{forward.1} parent=1 // pred_check
      _
    $region15: #{forward.1} parent=1 // pred_check_branch
      %93 = sbr.rel (0) target = $region17
    $region16: #{forward.1} parent=1 // pred_region
      %s95 = ssub.s32 1024, 1024
      %96 = vsyncadd [#allocation5], %s95
      %s97 = sshll.u32 [#allocation4], 4
      %s98 = int_to_ptr.vmem [resolvable:$true] %s97
      %103 = dma.hbm_to_vmem [thread:$0]  %s7, 1024, %s98, [#allocation5], 128, 128, 8
    $region17: #{forward.1} parent=1 // pred_fallthru
      _
    // Predicated region
    $region18: #{forward.1} parent=1 // pred_check
      _
    $region19: #{forward.1} parent=1 // pred_check_branch
      %105 = sbr.rel (0) target = $region21
    $region20: #{forward.1} parent=1 // pred_region
      _
    $region21: #{forward.1} parent=1 // pred_fallthru
      _
    // Predicated region
    $region22: #{forward.1} parent=1 // pred_check
      _
    $region23: #{forward.1} parent=1 // pred_check_branch
      %107 = sbr.rel (0) target = $region25
    $region24: #{forward.1} parent=1 // pred_region
      %s109 = ssub.s32 512, 512
      %110 = vsyncadd [#allocation5], %s109
      %s111 = sshll.u32 [#allocation6], 4
      %s112 = int_to_ptr.vmem [resolvable:$true] %s111
      %117 = dma.hbm_to_vmem [thread:$0]  %s11, 512, %s112, [#allocation5], 128, 128, 8
    $region25: #{forward.1} parent=1 // pred_fallthru
      _
    // Predicated region
    $region26: #{forward.1} parent=1 // pred_check
      _
    $region27: #{forward.1} parent=1 // pred_check_branch
      %119 = sbr.rel (0) target = $region29
    $region28: #{forward.1} parent=1 // pred_region
      _
    $region29: #{forward.1} parent=1 // pred_fallthru
      _
    // Predicated region
    $region30: #{forward.1} parent=1 // pred_check
      _
    $region31: #{forward.1} parent=1 // pred_check_branch
      %121 = sbr.rel (0) target = $region33
    $region32: #{forward.1} parent=1 // pred_region
      %s123 = ssub.s32 256, 256
      %124 = vsyncadd [#allocation8], %s123
      %s125 = sshll.u32 [#allocation7], 4
      %s126 = int_to_ptr.vmem [resolvable:$true] %s125
      %131 = dma.hbm_to_vmem [thread:$0]  %s15, 256, %s126, [#allocation8], 64, 64, 4
    $region33: #{forward.1} parent=1 // pred_fallthru
      _
    // Predicated region
    $region34: #{forward.1} parent=1 // pred_check
      _
    $region35: #{forward.1} parent=1 // pred_check_branch
      %133 = sbr.rel (0) target = $region37
    $region36: #{forward.1} parent=1 // pred_region
      %s135 = ssub.s32 8192, 8192
      %136 = vsyncadd [#allocation8], %s135
      %s137 = sshll.u32 [#allocation9], 4
      %s138 = int_to_ptr.vmem [resolvable:$true] %s137
      %143 = dma.hbm_to_vmem [thread:$0]  %s17, 8192, %s138, [#allocation8], 128, 128, 8
    $region37: #{forward.1} parent=1 // pred_fallthru
      _
    // Predicated region
    $region38: #{forward.1} parent=1 // pred_check
      _
    $region39: #{forward.1} parent=1 // pred_check_branch
      %145 = sbr.rel (0) target = $region41
    $region40: #{forward.1} parent=1 // pred_region
      %s147 = ssub.s32 128, 128
      %148 = vsyncadd [#allocation11], %s147
      %s149 = sshll.u32 [#allocation10], 4
      %s150 = int_to_ptr.vmem [resolvable:$true] %s149
      %155 = dma.hbm_to_vmem [thread:$0]  %s19, 128, %s150, [#allocation11], 32, 32, 2
    $region41: #{forward.1} parent=1 // pred_fallthru
      _
    // Predicated region
    $region42: #{forward.1} parent=1 // pred_check
      _
    $region43: #{forward.1} parent=1 // pred_check_branch
      %157 = sbr.rel (0) target = $region45
    $region44: #{forward.1} parent=1 // pred_region
      %s159 = ssub.s32 8192, 8192
      %160 = vsyncadd [#allocation11], %s159
      %s161 = sshll.u32 [#allocation12], 4
      %s162 = int_to_ptr.vmem [resolvable:$true] %s161
      %167 = dma.hbm_to_vmem [thread:$0]  %s21, 8192, %s162, [#allocation11], 128, 128, 8
    $region45: #{forward.1} parent=1 // pred_fallthru
      _
    // Predicated region
    $region46: #{forward.1} parent=1 // pred_check
      _
    $region47: #{forward.1} parent=1 // pred_check_branch
      %169 = sbr.rel (0) target = $region49
    $region48: #{forward.1} parent=1 // pred_region
      _
    $region49: #{forward.1} parent=1 // pred_fallthru
      _
    // Predicated region
    $region50: #{forward.1} parent=1 // pred_check
      _
    $region51: #{forward.1} parent=1 // pred_check_branch
      %171 = sbr.rel (0) target = $region53
    $region52: #{forward.1} parent=1 // pred_region
      _
    $region53: #{forward.1} parent=1 // pred_fallthru
      _
    // Predicated region
    $region54: #{forward.1} parent=1 // pred_check
      _
    $region55: #{forward.1} parent=1 // pred_check_branch
      %173 = sbr.rel (0) target = $region57
    $region56: #{forward.1} parent=1 // pred_region
      %s175 = ssub.s32 16, 16
      %176 = vsyncadd [#allocation14], %s175
      %s178 = sshll.u32 [#allocation13], 4
      %s179 = int_to_ptr.vmem [resolvable:$true] %s178
      %181 = dma.hbm_to_vmem [thread:$0]  %s27, 16, %s179, [#allocation14]
    $region57: #{forward.1} parent=1 // pred_fallthru
      _
    // Predicated region
    $region58: #{forward.1} parent=1 // pred_check
      _
    $region59: #{forward.1} parent=1 // pred_check_branch
      %183 = sbr.rel (0) target = $region61
    $region60: #{forward.1} parent=1 // pred_region
      _
    $region61: #{forward.1} parent=1 // pred_fallthru
      _
    // Predicated region
    $region62: #{forward.1} parent=1 // pred_check
      _
    $region63: #{forward.1} parent=1 // pred_check_branch
      %185 = sbr.rel (0) target = $region65
    $region64: #{forward.1} parent=1 // pred_region
      %s187 = ssub.s32 256, 256
      %188 = vsyncadd [#allocation14], %s187
      %s189 = sshll.u32 [#allocation15], 4
      %s190 = int_to_ptr.vmem [resolvable:$true] %s189
      %195 = dma.hbm_to_vmem [thread:$0]  %s31, 256, %s190, [#allocation14], 128, 128, 8
    $region65: #{forward.1} parent=1 // pred_fallthru
      _
    // Predicated region
    $region66: #{forward.1} parent=1 // pred_check
      _
    $region67: #{forward.1} parent=1 // pred_check_branch
      %197 = sbr.rel (0) target = $region69
    $region68: #{forward.1} parent=1 // pred_region
      %s199 = ssub.s32 16, 16
      %200 = vsyncadd [#allocation17], %s199
      %s202 = sshll.u32 [#allocation16], 4
      %s203 = int_to_ptr.vmem [resolvable:$true] %s202
      %205 = dma.hbm_to_vmem [thread:$0]  %s33, 16, %s203, [#allocation17]
    $region69: #{forward.1} parent=1 // pred_fallthru
      _
    // Predicated region
    $region70: #{forward.1} parent=1 // pred_check
      _
    $region71: #{forward.1} parent=1 // pred_check_branch
      %207 = sbr.rel (0) target = $region73
    $region72: #{forward.1} parent=1 // pred_region
      %s209 = ssub.s32 16, 16
      %210 = vsyncadd [#allocation17], %s209
      %s212 = sshll.u32 [#allocation18], 4
      %s213 = int_to_ptr.vmem [resolvable:$true] %s212
      %215 = dma.hbm_to_vmem [thread:$0]  %s35, 16, %s213, [#allocation17]
    $region73: #{forward.1} parent=1 // pred_fallthru
      _
    // Predicated region
    $region74: #{forward.1} parent=1 // pred_check
      _
    $region75: #{forward.1} parent=1 // pred_check_branch
      %217 = sbr.rel (0) target = $region77
    $region76: #{forward.1} parent=1 // pred_region
      _
    $region77: #{forward.1} parent=1 // pred_fallthru
      _
    // Predicated region
    $region78: #{forward.1} parent=1 // pred_check
      _
    $region79: #{forward.1} parent=1 // pred_check_branch
      %219 = sbr.rel (0) target = $region81
    $region80: #{forward.1} parent=1 // pred_region
      %s221 = ssub.s32 512, 512
      %222 = vsyncadd [#allocation20], %s221
      %s223 = sshll.u32 [#allocation19], 4
      %s224 = int_to_ptr.vmem [resolvable:$true] %s223
      %229 = dma.hbm_to_vmem [thread:$0]  %s39, 512, %s224, [#allocation20], 128, 128, 8
    $region81: #{forward.1} parent=1 // pred_fallthru
      _
    // Predicated region
    $region82: #{forward.1} parent=1 // pred_check
      _
    $region83: #{forward.1} parent=1 // pred_check_branch
      %231 = sbr.rel (0) target = $region85
    $region84: #{forward.1} parent=1 // pred_region
      %s233 = ssub.s32 16, 16
      %234 = vsyncadd [#allocation20], %s233
      %s236 = sshll.u32 [#allocation21], 4
      %s237 = int_to_ptr.vmem [resolvable:$true] %s236
      %239 = dma.hbm_to_vmem [thread:$0]  %s41, 16, %s237, [#allocation20]
    $region85: #{forward.1} parent=1 // pred_fallthru
      _
    // Predicated region
    $region86: #{forward.1} parent=1 // pred_check
      _
    $region87: #{forward.1} parent=1 // pred_check_branch
      %241 = sbr.rel (0) target = $region89
    $region88: #{forward.1} parent=1 // pred_region
      %s243 = ssub.s32 16, 16
      %244 = vsyncadd [#allocation23], %s243
      %s246 = sshll.u32 [#allocation22], 4
      %s247 = int_to_ptr.vmem [resolvable:$true] %s246
      %249 = dma.hbm_to_vmem [thread:$0]  %s43, 16, %s247, [#allocation23]
    $region89: #{forward.1} parent=1 // pred_fallthru
      _
    // Predicated region
    $region90: #{forward.1} parent=1 // pred_check
      _
    $region91: #{forward.1} parent=1 // pred_check_branch
      %251 = sbr.rel (0) target = $region93
    $region92: #{forward.1} parent=1 // pred_region
      _
    $region93: #{forward.1} parent=1 // pred_fallthru
      _
    // Predicated region
    $region94: #{forward.1} parent=1 // pred_check
      _
    $region95: #{forward.1} parent=1 // pred_check_branch
      %253 = sbr.rel (0) target = $region97
    $region96: #{forward.1} parent=1 // pred_region
      %s255 = ssub.s32 1024, 1024
      %256 = vsyncadd [#allocation23], %s255
      %s257 = sshll.u32 [#allocation24], 4
      %s258 = int_to_ptr.vmem [resolvable:$true] %s257
      %263 = dma.hbm_to_vmem [thread:$0]  %s47, 1024, %s258, [#allocation23], 128, 128, 8
    $region97: #{forward.1} parent=1 // pred_fallthru
      _
    // Predicated region
    $region98: #{forward.1} parent=1 // pred_check
      _
    $region99: #{forward.1} parent=1 // pred_check_branch
      %265 = sbr.rel (0) target = $region101
    $region100: #{forward.1} parent=1 // pred_region
      %s267 = ssub.s32 16, 16
      %268 = vsyncadd [#allocation26], %s267
      %s270 = sshll.u32 [#allocation25], 4
      %s271 = int_to_ptr.vmem [resolvable:$true] %s270
      %273 = dma.hbm_to_vmem [thread:$0]  %s49, 16, %s271, [#allocation26]
    $region101: #{forward.1} parent=1 // pred_fallthru
      _
    // Predicated region
    $region102: #{forward.1} parent=1 // pred_check
      _
    $region103: #{forward.1} parent=1 // pred_check_branch
      %275 = sbr.rel (0) target = $region105
    $region104: #{forward.1} parent=1 // pred_region
      %s277 = ssub.s32 16, 16
      %278 = vsyncadd [#allocation26], %s277
      %s280 = sshll.u32 [#allocation27], 4
      %s281 = int_to_ptr.vmem [resolvable:$true] %s280
      %283 = dma.hbm_to_vmem [thread:$0]  %s51, 16, %s281, [#allocation26]
    $region105: #{forward.1} parent=1 // pred_fallthru
      _
    // Predicated region
    $region106: #{forward.1} parent=1 // pred_check
      _
    $region107: #{forward.1} parent=1 // pred_check_branch
      %285 = sbr.rel (0) target = $region109
    $region108: #{forward.1} parent=1 // pred_region
      _
    $region109: #{forward.1} parent=1 // pred_fallthru
      _
    // Predicated region
    $region110: #{forward.1} parent=1 // pred_check
      _
    $region111: #{forward.1} parent=1 // pred_check_branch
      %287 = sbr.rel (0) target = $region113
    $region112: #{forward.1} parent=1 // pred_region
      %s289 = ssub.s32 2048, 2048
      %290 = vsyncadd [#allocation29], %s289
      %s291 = sshll.u32 [#allocation28], 4
      %s292 = int_to_ptr.vmem [resolvable:$true] %s291
      %297 = dma.hbm_to_vmem [thread:$0]  %s55, 2048, %s292, [#allocation29], 128, 128, 8
    $region113: #{forward.1} parent=1 // pred_fallthru
      _
    // Predicated region
    $region114: #{forward.1} parent=1 // pred_check
      _
    $region115: #{forward.1} parent=1 // pred_check_branch
      %299 = sbr.rel (0) target = $region117
    $region116: #{forward.1} parent=1 // pred_region
      _
    $region117: #{forward.1} parent=1 // pred_fallthru
      _
    // Predicated region
    $region118: #{forward.1} parent=1 // pred_check
      _
    $region119: #{forward.1} parent=1 // pred_check_branch
      %301 = sbr.rel (0) target = $region121
    $region120: #{forward.1} parent=1 // pred_region
      _
    $region121: #{forward.1} parent=1 // pred_fallthru
      _
    // Predicated region
    $region122: #{forward.1} parent=1 // pred_check
      _
    $region123: #{forward.1} parent=1 // pred_check_branch
      %303 = sbr.rel (0) target = $region125
    $region124: #{forward.1} parent=1 // pred_region
      %304 = dma.done [#allocation3], 6144
    $region125: #{forward.1} parent=1 // pred_fallthru
      _
    // Predicated region
    $region126: #{forward.1} parent=1 // pred_check
      _
    $region127: #{forward.1} parent=1 // pred_check_branch
      %306 = sbr.rel (0) target = $region129
    $region128: #{forward.1} parent=1 // pred_region
      %307 = dma.done [#allocation5], 1024
    $region129: #{forward.1} parent=1 // pred_fallthru
      _
    // Predicated region
    $region130: #{forward.1} parent=1 // pred_check
      _
    $region131: #{forward.1} parent=1 // pred_check_branch
      %309 = sbr.rel (0) target = $region133
    $region132: #{forward.1} parent=1 // pred_region
      %310 = dma.done [#allocation5], 512
    $region133: #{forward.1} parent=1 // pred_fallthru
      _
    // Predicated region
    $region134: #{forward.1} parent=1 // pred_check
      _
    $region135: #{forward.1} parent=1 // pred_check_branch
      %312 = sbr.rel (0) target = $region137
    $region136: #{forward.1} parent=1 // pred_region
      %313 = dma.done [#allocation8], 256
    $region137: #{forward.1} parent=1 // pred_fallthru
      _
    // Predicated region
    $region138: #{forward.1} parent=1 // pred_check
      _
    $region139: #{forward.1} parent=1 // pred_check_branch
      %315 = sbr.rel (0) target = $region141
    $region140: #{forward.1} parent=1 // pred_region
      %316 = dma.done [#allocation8], 8192
    $region141: #{forward.1} parent=1 // pred_fallthru
      _
    // Predicated region
    $region142: #{forward.1} parent=1 // pred_check
      _
    $region143: #{forward.1} parent=1 // pred_check_branch
      %318 = sbr.rel (0) target = $region145
    $region144: #{forward.1} parent=1 // pred_region
      %319 = dma.done [#allocation11], 128
    $region145: #{forward.1} parent=1 // pred_fallthru
      _
    // Predicated region
    $region146: #{forward.1} parent=1 // pred_check
      _
    $region147: #{forward.1} parent=1 // pred_check_branch
      %321 = sbr.rel (0) target = $region149
    $region148: #{forward.1} parent=1 // pred_region
      %322 = dma.done [#allocation11], 8192
    $region149: #{forward.1} parent=1 // pred_fallthru
      _
    // Predicated region
    $region150: #{forward.1} parent=1 // pred_check
      _
    $region151: #{forward.1} parent=1 // pred_check_branch
      %324 = sbr.rel (0) target = $region153
    $region152: #{forward.1} parent=1 // pred_region
      %325 = dma.done [#allocation14], 16
    $region153: #{forward.1} parent=1 // pred_fallthru
      _
    // Predicated region
    $region154: #{forward.1} parent=1 // pred_check
      _
    $region155: #{forward.1} parent=1 // pred_check_branch
      %327 = sbr.rel (0) target = $region157
    $region156: #{forward.1} parent=1 // pred_region
      %328 = dma.done [#allocation14], 256
    $region157: #{forward.1} parent=1 // pred_fallthru
      _
    // Predicated region
    $region158: #{forward.1} parent=1 // pred_check
      _
    $region159: #{forward.1} parent=1 // pred_check_branch
      %330 = sbr.rel (0) target = $region161
    $region160: #{forward.1} parent=1 // pred_region
      %331 = dma.done [#allocation17], 16
    $region161: #{forward.1} parent=1 // pred_fallthru
      _
    // Predicated region
    $region162: #{forward.1} parent=1 // pred_check
      _
    $region163: #{forward.1} parent=1 // pred_check_branch
      %333 = sbr.rel (0) target = $region165
    $region164: #{forward.1} parent=1 // pred_region
      %334 = dma.done [#allocation17], 16
    $region165: #{forward.1} parent=1 // pred_fallthru
      _
    // Predicated region
    $region166: #{forward.1} parent=1 // pred_check
      _
    $region167: #{forward.1} parent=1 // pred_check_branch
      %336 = sbr.rel (0) target = $region169
    $region168: #{forward.1} parent=1 // pred_region
      %337 = dma.done [#allocation20], 512
    $region169: #{forward.1} parent=1 // pred_fallthru
      _
    // Predicated region
    $region170: #{forward.1} parent=1 // pred_check
      _
    $region171: #{forward.1} parent=1 // pred_check_branch
      %339 = sbr.rel (0) target = $region173
    $region172: #{forward.1} parent=1 // pred_region
      %340 = dma.done [#allocation20], 16
    $region173: #{forward.1} parent=1 // pred_fallthru
      _
    // Predicated region
    $region174: #{forward.1} parent=1 // pred_check
      _
    $region175: #{forward.1} parent=1 // pred_check_branch
      %342 = sbr.rel (0) target = $region177
    $region176: #{forward.1} parent=1 // pred_region
      %343 = dma.done [#allocation23], 16
    $region177: #{forward.1} parent=1 // pred_fallthru
      _
    // Predicated region
    $region178: #{forward.1} parent=1 // pred_check
      _
    $region179: #{forward.1} parent=1 // pred_check_branch
      %345 = sbr.rel (0) target = $region181
    $region180: #{forward.1} parent=1 // pred_region
      %346 = dma.done [#allocation23], 1024
    $region181: #{forward.1} parent=1 // pred_fallthru
      _
    // Predicated region
    $region182: #{forward.1} parent=1 // pred_check
      _
    $region183: #{forward.1} parent=1 // pred_check_branch
      %348 = sbr.rel (0) target = $region185
    $region184: #{forward.1} parent=1 // pred_region
      %349 = dma.done [#allocation26], 16
    $region185: #{forward.1} parent=1 // pred_fallthru
      _
    // Predicated region
    $region186: #{forward.1} parent=1 // pred_check
      _
    $region187: #{forward.1} parent=1 // pred_check_branch
      %351 = sbr.rel (0) target = $region189
    $region188: #{forward.1} parent=1 // pred_region
      %352 = dma.done [#allocation26], 16
    $region189: #{forward.1} parent=1 // pred_fallthru
      _
    // Predicated region
    $region190: #{forward.1} parent=1 // pred_check
      _
    $region191: #{forward.1} parent=1 // pred_check_branch
      %354 = sbr.rel (0) target = $region193
    $region192: #{forward.1} parent=1 // pred_region
      %355 = dma.done [#allocation29], 2048
    $region193: #{forward.1} parent=1 // pred_fallthru
      _
    %v356 = vld [vmem:[%s1] sm:$0xff]
    %v357 = vld [vmem:[%s1 + $0x8] sm:$0xff]
    %v358 = vld [vmem:[%s1 + $0x10] sm:$0xff]
    %v359 = vld [vmem:[%s1 + $0x18] sm:$0xff]
    %v360 = vld [vmem:[%s1 + $0x20] sm:$0xff]
    %v361 = vld [vmem:[%s1 + $0x28] sm:$0xff]
    %v362 = vld [vmem:[%s1 + $0x30] sm:$0xff]
    %v363 = vld [vmem:[%s1 + $0x38] sm:$0xff]
    %v364 = vld [vmem:[#allocation2] sm:$0xff]
    %v365 = vld [vmem:[#allocation2 + $0x8] sm:$0xff]
    %v366 = vld [vmem:[#allocation2 + $0x10] sm:$0xff]
    %v367 = vld [vmem:[#allocation2 + $0x18] sm:$0xff]
    %v368 = vld [vmem:[#allocation2 + $0x20] sm:$0xff]
    %v369 = vld [vmem:[#allocation2 + $0x28] sm:$0xff]
    %v370 = vld [vmem:[#allocation2 + $0x30] sm:$0xff]
    %v371 = vld [vmem:[#allocation2 + $0x38] sm:$0xff]
    %v372 = vld [vmem:[#allocation2 + $0x40] sm:$0xff]
    %v373 = vld [vmem:[#allocation2 + $0x48] sm:$0xff]
    %v374 = vld [vmem:[#allocation2 + $0x50] sm:$0xff]
    %v375 = vld [vmem:[#allocation2 + $0x58] sm:$0xff]
    %vm376 = vcmask 785408
    %v378 = vsel %vm376, %v356, 0
    %v381 = vsel %vm376, %v357, 0
    %v384 = vsel %vm376, %v358, 0
    %v387 = vsel %vm376, %v359, 0
    %v390 = vsel %vm376, %v360, 0
    %v393 = vsel %vm376, %v361, 0
    %v396 = vsel %vm376, %v362, 0
    %v399 = vsel %vm376, %v363, 0
    %401 = vmatprep.subr.mxu0 0.0
    %402 = vmatpush1.msra.mxu0 0.0
    %403 = vmatprep.subr.mxu0 0.0
    %404 = vmatpush1.msra.mxu0 0.0
    %405 = vmatprep.subr.mxu0 0.0
    %406 = vmatpush1.msra.mxu0 0.0
    %407 = vmatprep.subr.mxu0 0.0
    %408 = vmatpush1.msra.mxu0 0.0
    %409 = vmatprep.subr.mxu0 0.0
    %410 = vmatpush1.msra.mxu0 %v375
    %411 = vmatprep.subr.mxu0 0.0
    %412 = vmatpush1.msra.mxu0 %v374
    %413 = vmatprep.subr.mxu0 0.0
    %414 = vmatpush1.msra.mxu0 %v373
    %415 = vmatprep.subr.mxu0 0.0
    %416 = vmatpush1.msra.mxu0 %v372
    %417 = vmatprep.subr.mxu0 0.0
    %418 = vmatpush1.msra.mxu0 %v371
    %419 = vmatprep.subr.mxu0 0.0
    %420 = vmatpush1.msra.mxu0 %v370
    %421 = vmatprep.subr.mxu0 0.0
    %422 = vmatpush1.msra.mxu0 %v369
    %423 = vmatprep.subr.mxu0 0.0
    %424 = vmatpush1.msra.mxu0 %v368
    %425 = vmatprep.subr.mxu0 0.0
    %426 = vmatpush1.msra.mxu0 %v367
    %427 = vmatprep.subr.mxu0 0.0
    %428 = vmatpush1.msra.mxu0 %v366
    %429 = vmatprep.subr.mxu0 0.0
    %430 = vmatpush1.msra.mxu0 %v365
    %431 = vmatprep.subr.mxu0 0.0
    %432 = vmatpush1.msra.mxu0 %v364
    %433 = vmatprep.subr.mxu0 0.0
    %434 = vmatpush2.msra.mxu0 0.0
    %435 = vmatprep.subr.mxu0 0.0
    %436 = vmatpush2.msra.mxu0 0.0
    %437 = vmatprep.subr.mxu0 0.0
    %438 = vmatpush2.msra.mxu0 0.0
    %439 = vmatprep.subr.mxu0 0.0
    %440 = vmatpush2.msra.mxu0 0.0
    %441 = vmatprep.subr.mxu0 0.0
    %442 = vmatpush2.msra.mxu0 0.0
    %443 = vmatprep.subr.mxu0 0.0
    %444 = vmatpush2.msra.mxu0 0.0
    %445 = vmatprep.subr.mxu0 0.0
    %446 = vmatpush2.msra.mxu0 0.0
    %447 = vmatprep.subr.mxu0 0.0
    %448 = vmatpush2.msra.mxu0 0.0
    %449 = vmatprep.subr.mxu0 0.0
    %450 = vmatpush2.msra.mxu0 0.0
    %451 = vmatprep.subr.mxu0 0.0
    %452 = vmatpush2.msra.mxu0 0.0
    %453 = vmatprep.subr.mxu0 0.0
    %454 = vmatpush2.msra.mxu0 0.0
    %455 = vmatprep.subr.mxu0 0.0
    %456 = vmatpush2.msra.mxu0 0.0
    %457 = vmatprep.subr.mxu0 0.0
    %458 = vmatpush2.msra.mxu0 0.0
    %459 = vmatprep.subr.mxu0 0.0
    %460 = vmatpush2.msra.mxu0 0.0
    %461 = vmatprep.subr.mxu0 0.0
    %462 = vmatpush2.msra.mxu0 0.0
    %463 = vmatprep.subr.mxu0 0.0
    %464 = vmatpush2.msra.mxu0 0.0
    %465 = vmatprep.mubr.f32.mxu0 0.0
    %466 = vmatmul.mubr.f32.gmra.mxu0 %v378
    %v467 = vpop.f32.mrf.mxu0
    %v468 = vadd.f32 0.0, %v467
    %v469 = vpop.f32.mrf.mxu0
    %470 = vmatprep.mubr.f32.mxu0 0.0
    %471 = vmatmul.mubr.f32.gmra.mxu0 %v381
    %v472 = vpop.f32.mrf.mxu0
    %v473 = vadd.f32 0.0, %v472
    %v474 = vpop.f32.mrf.mxu0
    %475 = vmatprep.mubr.f32.mxu0 0.0
    %476 = vmatmul.mubr.f32.gmra.mxu0 %v384
    %v477 = vpop.f32.mrf.mxu0
    %v478 = vadd.f32 0.0, %v477
    %v479 = vpop.f32.mrf.mxu0
    %480 = vmatprep.mubr.f32.mxu0 0.0
    %481 = vmatmul.mubr.f32.gmra.mxu0 %v387
    %v482 = vpop.f32.mrf.mxu0
    %v483 = vadd.f32 0.0, %v482
    %v484 = vpop.f32.mrf.mxu0
    %485 = vmatprep.mubr.f32.mxu0 0.0
    %486 = vmatmul.mubr.f32.gmra.mxu0 %v390
    %v487 = vpop.f32.mrf.mxu0
    %v488 = vadd.f32 0.0, %v487
    %v489 = vpop.f32.mrf.mxu0
    %490 = vmatprep.mubr.f32.mxu0 0.0
    %491 = vmatmul.mubr.f32.gmra.mxu0 %v393
    %v492 = vpop.f32.mrf.mxu0
    %v493 = vadd.f32 0.0, %v492
    %v494 = vpop.f32.mrf.mxu0
    %495 = vmatprep.mubr.f32.mxu0 0.0
    %496 = vmatmul.mubr.f32.gmra.mxu0 %v396
    %v497 = vpop.f32.mrf.mxu0
    %v498 = vadd.f32 0.0, %v497
    %v499 = vpop.f32.mrf.mxu0
    %500 = vmatprep.mubr.f32.mxu0 0.0
    %501 = vmatmul.mubr.f32.gmra.mxu0 %v399
    %v502 = vpop.f32.mrf.mxu0
    %v503 = vadd.f32 0.0, %v502
    %v504 = vpop.f32.mrf.mxu0
    %505 = vdwg.mxu0
    %v506 = vld [vmem:[%s3] sm:$0xff]
    %v507 = vld [vmem:[%s3 + $0x8] sm:$0xff]
    %v508 = vld [vmem:[%s3 + $0x10] sm:$0xff]
    %v509 = vld [vmem:[%s3 + $0x18] sm:$0xff]
    %s510 = scalar_lea.vmem [#allocation2], 96
    %v511 = vld [vmem:[%s510] sm:$0xff]
    %v512 = vld [vmem:[%s510 + $0x8] sm:$0xff]
    %v513 = vld [vmem:[%s510 + $0x10] sm:$0xff]
    %v514 = vld [vmem:[%s510 + $0x18] sm:$0xff]
    %v515 = vld [vmem:[%s510 + $0x20] sm:$0xff]
    %v516 = vld [vmem:[%s510 + $0x28] sm:$0xff]
    %v517 = vld [vmem:[%s510 + $0x30] sm:$0xff]
    %v518 = vld [vmem:[%s510 + $0x38] sm:$0xff]
    %v519 = vld [vmem:[%s510 + $0x40] sm:$0xff]
    %v520 = vld [vmem:[%s510 + $0x48] sm:$0xff]
    %v521 = vld [vmem:[%s510 + $0x50] sm:$0xff]
    %v522 = vld [vmem:[%s510 + $0x58] sm:$0xff]
    %523 = vmatprep.subr.mxu0 0.0
    %524 = vmatpush1.msra.mxu0 0.0
    %525 = vmatprep.subr.mxu0 0.0
    %526 = vmatpush1.msra.mxu0 0.0
    %527 = vmatprep.subr.mxu0 0.0
    %528 = vmatpush1.msra.mxu0 0.0
    %529 = vmatprep.subr.mxu0 0.0
    %530 = vmatpush1.msra.mxu0 0.0
    %531 = vmatprep.subr.mxu0 0.0
    %532 = vmatpush1.msra.mxu0 %v522
    %533 = vmatprep.subr.mxu0 0.0
    %534 = vmatpush1.msra.mxu0 %v521
    %535 = vmatprep.subr.mxu0 0.0
    %536 = vmatpush1.msra.mxu0 %v520
    %537 = vmatprep.subr.mxu0 0.0
    %538 = vmatpush1.msra.mxu0 %v519
    %539 = vmatprep.subr.mxu0 0.0
    %540 = vmatpush1.msra.mxu0 %v518
    %541 = vmatprep.subr.mxu0 0.0
    %542 = vmatpush1.msra.mxu0 %v517
    %543 = vmatprep.subr.mxu0 0.0
    %544 = vmatpush1.msra.mxu0 %v516
    %545 = vmatprep.subr.mxu0 0.0
    %546 = vmatpush1.msra.mxu0 %v515
    %547 = vmatprep.subr.mxu0 0.0
    %548 = vmatpush1.msra.mxu0 %v514
    %549 = vmatprep.subr.mxu0 0.0
    %550 = vmatpush1.msra.mxu0 %v513
    %551 = vmatprep.subr.mxu0 0.0
    %552 = vmatpush1.msra.mxu0 %v512
    %553 = vmatprep.subr.mxu0 0.0
    %554 = vmatpush1.msra.mxu0 %v511
    %555 = vmatprep.subr.mxu0 0.0
    %556 = vmatpush2.msra.mxu0 0.0
    %557 = vmatprep.subr.mxu0 0.0
    %558 = vmatpush2.msra.mxu0 0.0
    %559 = vmatprep.subr.mxu0 0.0
    %560 = vmatpush2.msra.mxu0 0.0
    %561 = vmatprep.subr.mxu0 0.0
    %562 = vmatpush2.msra.mxu0 0.0
    %563 = vmatprep.subr.mxu0 0.0
    %564 = vmatpush2.msra.mxu0 0.0
    %565 = vmatprep.subr.mxu0 0.0
    %566 = vmatpush2.msra.mxu0 0.0
    %567 = vmatprep.subr.mxu0 0.0
    %568 = vmatpush2.msra.mxu0 0.0
    %569 = vmatprep.subr.mxu0 0.0
    %570 = vmatpush2.msra.mxu0 0.0
    %571 = vmatprep.subr.mxu0 0.0
    %572 = vmatpush2.msra.mxu0 0.0
    %573 = vmatprep.subr.mxu0 0.0
    %574 = vmatpush2.msra.mxu0 0.0
    %575 = vmatprep.subr.mxu0 0.0
    %576 = vmatpush2.msra.mxu0 0.0
    %577 = vmatprep.subr.mxu0 0.0
    %578 = vmatpush2.msra.mxu0 0.0
    %579 = vmatprep.subr.mxu0 0.0
    %580 = vmatpush2.msra.mxu0 0.0
    %581 = vmatprep.subr.mxu0 0.0
    %582 = vmatpush2.msra.mxu0 0.0
    %583 = vmatprep.subr.mxu0 0.0
    %584 = vmatpush2.msra.mxu0 0.0
    %585 = vmatprep.subr.mxu0 0.0
    %586 = vmatpush2.msra.mxu0 0.0
    %587 = vmatprep.mubr.f32.mxu0 0.0
    %588 = vmatmul.mubr.f32.gmra.mxu0 %v378
    %v589 = vpop.f32.mrf.mxu0
    %v590 = vadd.f32 0.0, %v589
    %v591 = vpop.f32.mrf.mxu0
    %592 = vmatprep.mubr.f32.mxu0 0.0
    %593 = vmatmul.mubr.f32.gmra.mxu0 %v381
    %v594 = vpop.f32.mrf.mxu0
    %v595 = vadd.f32 0.0, %v594
    %v596 = vpop.f32.mrf.mxu0
    %597 = vmatprep.mubr.f32.mxu0 0.0
    %598 = vmatmul.mubr.f32.gmra.mxu0 %v384
    %v599 = vpop.f32.mrf.mxu0
    %v600 = vadd.f32 0.0, %v599
    %v601 = vpop.f32.mrf.mxu0
    %602 = vmatprep.mubr.f32.mxu0 0.0
    %603 = vmatmul.mubr.f32.gmra.mxu0 %v387
    %v604 = vpop.f32.mrf.mxu0
    %v605 = vadd.f32 0.0, %v604
    %v606 = vpop.f32.mrf.mxu0
    %607 = vmatprep.mubr.f32.mxu0 0.0
    %608 = vmatmul.mubr.f32.gmra.mxu0 %v390
    %v609 = vpop.f32.mrf.mxu0
    %v610 = vadd.f32 0.0, %v609
    %v611 = vpop.f32.mrf.mxu0
    %612 = vmatprep.mubr.f32.mxu0 0.0
    %613 = vmatmul.mubr.f32.gmra.mxu0 %v393
    %v614 = vpop.f32.mrf.mxu0
    %v615 = vadd.f32 0.0, %v614
    %v616 = vpop.f32.mrf.mxu0
    %617 = vmatprep.mubr.f32.mxu0 0.0
    %618 = vmatmul.mubr.f32.gmra.mxu0 %v396
    %v619 = vpop.f32.mrf.mxu0
    %v620 = vadd.f32 0.0, %v619
    %v621 = vpop.f32.mrf.mxu0
    %622 = vmatprep.mubr.f32.mxu0 0.0
    %623 = vmatmul.mubr.f32.gmra.mxu0 %v399
    %v624 = vpop.f32.mrf.mxu0
    %v625 = vadd.f32 0.0, %v624
    %v626 = vpop.f32.mrf.mxu0
    %627 = vdwg.mxu0
    %s628 = scalar_lea.vmem %s3, 32
    %v629 = vld [vmem:[%s628] sm:$0xff]
    %v630 = vld [vmem:[%s628 + $0x8] sm:$0xff]
    %v631 = vld [vmem:[%s628 + $0x10] sm:$0xff]
    %v632 = vld [vmem:[%s628 + $0x18] sm:$0xff]
    %vm633 = vcmask 523264
    %v635 = vsel %vm633, %v629, 0
    %v638 = vsel %vm633, %v630, 0
    %v641 = vsel %vm633, %v631, 0
    %v644 = vsel %vm633, %v632, 0
    %646 = vmatprep.subr.mxu0 0.0
    %647 = vmatpush1.msra.mxu0 0.0
    %648 = vmatprep.subr.mxu0 0.0
    %649 = vmatpush1.msra.mxu0 0.0
    %650 = vmatprep.subr.mxu0 0.0
    %651 = vmatpush1.msra.mxu0 0.0
    %652 = vmatprep.subr.mxu0 0.0
    %653 = vmatpush1.msra.mxu0 0.0
    %654 = vmatprep.subr.mxu0 0.0
    %655 = vmatpush1.msra.mxu0 0.0
    %656 = vmatprep.subr.mxu0 0.0
    %657 = vmatpush1.msra.mxu0 0.0
    %658 = vmatprep.subr.mxu0 0.0
    %659 = vmatpush1.msra.mxu0 0.0
    %660 = vmatprep.subr.mxu0 0.0
    %661 = vmatpush1.msra.mxu0 0.0
    %662 = vmatprep.subr.mxu0 0.0
    %663 = vmatpush1.msra.mxu0 %v625
    %664 = vmatprep.subr.mxu0 0.0
    %665 = vmatpush1.msra.mxu0 %v620
    %666 = vmatprep.subr.mxu0 0.0
    %667 = vmatpush1.msra.mxu0 %v615
    %668 = vmatprep.subr.mxu0 0.0
    %669 = vmatpush1.msra.mxu0 %v610
    %670 = vmatprep.subr.mxu0 0.0
    %671 = vmatpush1.msra.mxu0 %v605
    %672 = vmatprep.subr.mxu0 0.0
    %673 = vmatpush1.msra.mxu0 %v600
    %674 = vmatprep.subr.mxu0 0.0
    %675 = vmatpush1.msra.mxu0 %v595
    %676 = vmatprep.subr.mxu0 0.0
    %677 = vmatpush1.msra.mxu0 %v590
    %678 = vmatprep.subr.mxu0 0.0
    %679 = vmatpush2.msra.mxu0 0.0
    %680 = vmatprep.subr.mxu0 0.0
    %681 = vmatpush2.msra.mxu0 0.0
    %682 = vmatprep.subr.mxu0 0.0
    %683 = vmatpush2.msra.mxu0 0.0
    %684 = vmatprep.subr.mxu0 0.0
    %685 = vmatpush2.msra.mxu0 0.0
    %686 = vmatprep.subr.mxu0 0.0
    %687 = vmatpush2.msra.mxu0 0.0
    %688 = vmatprep.subr.mxu0 0.0
    %689 = vmatpush2.msra.mxu0 0.0
    %690 = vmatprep.subr.mxu0 0.0
    %691 = vmatpush2.msra.mxu0 0.0
    %692 = vmatprep.subr.mxu0 0.0
    %693 = vmatpush2.msra.mxu0 0.0
    %694 = vmatprep.subr.mxu0 0.0
    %695 = vmatpush2.msra.mxu0 0.0
    %696 = vmatprep.subr.mxu0 0.0
    %697 = vmatpush2.msra.mxu0 0.0
    %698 = vmatprep.subr.mxu0 0.0
    %699 = vmatpush2.msra.mxu0 0.0
    %700 = vmatprep.subr.mxu0 0.0
    %701 = vmatpush2.msra.mxu0 0.0
    %702 = vmatprep.subr.mxu0 0.0
    %703 = vmatpush2.msra.mxu0 0.0
    %704 = vmatprep.subr.mxu0 0.0
    %705 = vmatpush2.msra.mxu0 0.0
    %706 = vmatprep.subr.mxu0 0.0
    %707 = vmatpush2.msra.mxu0 0.0
    %708 = vmatprep.subr.mxu0 0.0
    %709 = vmatpush2.msra.mxu0 0.0
    %710 = vmatprep.mubr.f32.mxu0 0.0
    %711 = vmatmul.mubr.f32.gmra.mxu0 %v635
    %v712 = vpop.f32.mrf.mxu0
    %v713 = vadd.f32 0.0, %v712
    %v714 = vpop.f32.mrf.mxu0
    %715 = vmatprep.mubr.f32.mxu0 0.0
    %716 = vmatmul.mubr.f32.gmra.mxu0 %v638
    %v717 = vpop.f32.mrf.mxu0
    %v718 = vadd.f32 0.0, %v717
    %v719 = vpop.f32.mrf.mxu0
    %720 = vmatprep.mubr.f32.mxu0 0.0
    %721 = vmatmul.mubr.f32.gmra.mxu0 %v641
    %v722 = vpop.f32.mrf.mxu0
    %v723 = vadd.f32 0.0, %v722
    %v724 = vpop.f32.mrf.mxu0
    %725 = vmatprep.mubr.f32.mxu0 0.0
    %726 = vmatmul.mubr.f32.gmra.mxu0 %v644
    %v727 = vpop.f32.mrf.mxu0
    %v728 = vadd.f32 0.0, %v727
    %v729 = vpop.f32.mrf.mxu0
    %730 = vdwg.mxu0
    %v732 = vsel %vm633, %v506, 0
    %v735 = vsel %vm633, %v507, 0
    %v738 = vsel %vm633, %v508, 0
    %v741 = vsel %vm633, %v509, 0
    %743 = vmatprep.subr.mxu0 0.0
    %744 = vmatpush1.msra.mxu0 0.0
    %745 = vmatprep.subr.mxu0 0.0
    %746 = vmatpush1.msra.mxu0 0.0
    %747 = vmatprep.subr.mxu0 0.0
    %748 = vmatpush1.msra.mxu0 0.0
    %749 = vmatprep.subr.mxu0 0.0
    %750 = vmatpush1.msra.mxu0 0.0
    %751 = vmatprep.subr.mxu0 0.0
    %752 = vmatpush1.msra.mxu0 0.0
    %753 = vmatprep.subr.mxu0 0.0
    %754 = vmatpush1.msra.mxu0 0.0
    %755 = vmatprep.subr.mxu0 0.0
    %756 = vmatpush1.msra.mxu0 0.0
    %757 = vmatprep.subr.mxu0 0.0
    %758 = vmatpush1.msra.mxu0 0.0
    %759 = vmatprep.subr.mxu0 0.0
    %760 = vmatpush1.msra.mxu0 %v503
    %761 = vmatprep.subr.mxu0 0.0
    %762 = vmatpush1.msra.mxu0 %v498
    %763 = vmatprep.subr.mxu0 0.0
    %764 = vmatpush1.msra.mxu0 %v493
    %765 = vmatprep.subr.mxu0 0.0
    %766 = vmatpush1.msra.mxu0 %v488
    %767 = vmatprep.subr.mxu0 0.0
    %768 = vmatpush1.msra.mxu0 %v483
    %769 = vmatprep.subr.mxu0 0.0
    %770 = vmatpush1.msra.mxu0 %v478
    %771 = vmatprep.subr.mxu0 0.0
    %772 = vmatpush1.msra.mxu0 %v473
    %773 = vmatprep.subr.mxu0 0.0
    %774 = vmatpush1.msra.mxu0 %v468
    %775 = vmatprep.subr.mxu0 0.0
    %776 = vmatpush2.msra.mxu0 0.0
    %777 = vmatprep.subr.mxu0 0.0
    %778 = vmatpush2.msra.mxu0 0.0
    %779 = vmatprep.subr.mxu0 0.0
    %780 = vmatpush2.msra.mxu0 0.0
    %781 = vmatprep.subr.mxu0 0.0
    %782 = vmatpush2.msra.mxu0 0.0
    %783 = vmatprep.subr.mxu0 0.0
    %784 = vmatpush2.msra.mxu0 0.0
    %785 = vmatprep.subr.mxu0 0.0
    %786 = vmatpush2.msra.mxu0 0.0
    %787 = vmatprep.subr.mxu0 0.0
    %788 = vmatpush2.msra.mxu0 0.0
    %789 = vmatprep.subr.mxu0 0.0
    %790 = vmatpush2.msra.mxu0 0.0
    %791 = vmatprep.subr.mxu0 0.0
    %792 = vmatpush2.msra.mxu0 0.0
    %793 = vmatprep.subr.mxu0 0.0
    %794 = vmatpush2.msra.mxu0 0.0
    %795 = vmatprep.subr.mxu0 0.0
    %796 = vmatpush2.msra.mxu0 0.0
    %797 = vmatprep.subr.mxu0 0.0
    %798 = vmatpush2.msra.mxu0 0.0
    %799 = vmatprep.subr.mxu0 0.0
    %800 = vmatpush2.msra.mxu0 0.0
    %801 = vmatprep.subr.mxu0 0.0
    %802 = vmatpush2.msra.mxu0 0.0
    %803 = vmatprep.subr.mxu0 0.0
    %804 = vmatpush2.msra.mxu0 0.0
    %805 = vmatprep.subr.mxu0 0.0
    %806 = vmatpush2.msra.mxu0 0.0
    %807 = vmatprep.mubr.f32.mxu0 0.0
    %808 = vmatmul.mubr.f32.gmra.mxu0 %v732
    %v809 = vpop.f32.mrf.mxu0
    %v810 = vadd.f32 %v713, %v809
    %v811 = vpop.f32.mrf.mxu0
    %812 = vmatprep.mubr.f32.mxu0 0.0
    %813 = vmatmul.mubr.f32.gmra.mxu0 %v735
    %v814 = vpop.f32.mrf.mxu0
    %v815 = vadd.f32 %v718, %v814
    %v816 = vpop.f32.mrf.mxu0
    %817 = vmatprep.mubr.f32.mxu0 0.0
    %818 = vmatmul.mubr.f32.gmra.mxu0 %v738
    %v819 = vpop.f32.mrf.mxu0
    %v820 = vadd.f32 %v723, %v819
    %v821 = vpop.f32.mrf.mxu0
    %822 = vmatprep.mubr.f32.mxu0 0.0
    %823 = vmatmul.mubr.f32.gmra.mxu0 %v741
    %v824 = vpop.f32.mrf.mxu0
    %v825 = vadd.f32 %v728, %v824
    %v826 = vpop.f32.mrf.mxu0
    %827 = vdwg.mxu0
    %s828 = scalar_lea.vmem [#allocation2], 192
    %v829 = vld [vmem:[%s828] sm:$0xff]
    %v830 = vld [vmem:[%s828 + $0x8] sm:$0xff]
    %v831 = vld [vmem:[%s828 + $0x10] sm:$0xff]
    %v832 = vld [vmem:[%s828 + $0x18] sm:$0xff]
    %v833 = vld [vmem:[%s828 + $0x20] sm:$0xff]
    %v834 = vld [vmem:[%s828 + $0x28] sm:$0xff]
    %v835 = vld [vmem:[%s828 + $0x30] sm:$0xff]
    %v836 = vld [vmem:[%s828 + $0x38] sm:$0xff]
    %v837 = vld [vmem:[%s828 + $0x40] sm:$0xff]
    %v838 = vld [vmem:[%s828 + $0x48] sm:$0xff]
    %v839 = vld [vmem:[%s828 + $0x50] sm:$0xff]
    %v840 = vld [vmem:[%s828 + $0x58] sm:$0xff]
    %841 = vmatprep.subr.mxu0 0.0
    %842 = vmatpush1.msra.mxu0 0.0
    %843 = vmatprep.subr.mxu0 0.0
    %844 = vmatpush1.msra.mxu0 0.0
    %845 = vmatprep.subr.mxu0 0.0
    %846 = vmatpush1.msra.mxu0 0.0
    %847 = vmatprep.subr.mxu0 0.0
    %848 = vmatpush1.msra.mxu0 0.0
    %849 = vmatprep.subr.mxu0 0.0
    %850 = vmatpush1.msra.mxu0 %v840
    %851 = vmatprep.subr.mxu0 0.0
    %852 = vmatpush1.msra.mxu0 %v839
    %853 = vmatprep.subr.mxu0 0.0
    %854 = vmatpush1.msra.mxu0 %v838
    %855 = vmatprep.subr.mxu0 0.0
    %856 = vmatpush1.msra.mxu0 %v837
    %857 = vmatprep.subr.mxu0 0.0
    %858 = vmatpush1.msra.mxu0 %v836
    %859 = vmatprep.subr.mxu0 0.0
    %860 = vmatpush1.msra.mxu0 %v835
    %861 = vmatprep.subr.mxu0 0.0
    %862 = vmatpush1.msra.mxu0 %v834
    %863 = vmatprep.subr.mxu0 0.0
    %864 = vmatpush1.msra.mxu0 %v833
    %865 = vmatprep.subr.mxu0 0.0
    %866 = vmatpush1.msra.mxu0 %v832
    %867 = vmatprep.subr.mxu0 0.0
    %868 = vmatpush1.msra.mxu0 %v831
    %869 = vmatprep.subr.mxu0 0.0
    %870 = vmatpush1.msra.mxu0 %v830
    %871 = vmatprep.subr.mxu0 0.0
    %872 = vmatpush1.msra.mxu0 %v829
    %873 = vmatprep.subr.mxu0 0.0
    %874 = vmatpush2.msra.mxu0 0.0
    %875 = vmatprep.subr.mxu0 0.0
    %876 = vmatpush2.msra.mxu0 0.0
    %877 = vmatprep.subr.mxu0 0.0
    %878 = vmatpush2.msra.mxu0 0.0
    %879 = vmatprep.subr.mxu0 0.0
    %880 = vmatpush2.msra.mxu0 0.0
    %881 = vmatprep.subr.mxu0 0.0
    %882 = vmatpush2.msra.mxu0 0.0
    %883 = vmatprep.subr.mxu0 0.0
    %884 = vmatpush2.msra.mxu0 0.0
    %885 = vmatprep.subr.mxu0 0.0
    %886 = vmatpush2.msra.mxu0 0.0
    %887 = vmatprep.subr.mxu0 0.0
    %888 = vmatpush2.msra.mxu0 0.0
    %889 = vmatprep.subr.mxu0 0.0
    %890 = vmatpush2.msra.mxu0 0.0
    %891 = vmatprep.subr.mxu0 0.0
    %892 = vmatpush2.msra.mxu0 0.0
    %893 = vmatprep.subr.mxu0 0.0
    %894 = vmatpush2.msra.mxu0 0.0
    %895 = vmatprep.subr.mxu0 0.0
    %896 = vmatpush2.msra.mxu0 0.0
    %897 = vmatprep.subr.mxu0 0.0
    %898 = vmatpush2.msra.mxu0 0.0
    %899 = vmatprep.subr.mxu0 0.0
    %900 = vmatpush2.msra.mxu0 0.0
    %901 = vmatprep.subr.mxu0 0.0
    %902 = vmatpush2.msra.mxu0 0.0
    %903 = vmatprep.subr.mxu0 0.0
    %904 = vmatpush2.msra.mxu0 0.0
    %905 = vmatprep.mubr.f32.mxu0 0.0
    %906 = vmatmul.mubr.f32.gmra.mxu0 %v378
    %v907 = vpop.f32.mrf.mxu0
    %v908 = vadd.f32 0.0, %v907
    %v909 = vpop.f32.mrf.mxu0
    %910 = vmatprep.mubr.f32.mxu0 0.0
    %911 = vmatmul.mubr.f32.gmra.mxu0 %v381
    %v912 = vpop.f32.mrf.mxu0
    %v913 = vadd.f32 0.0, %v912
    %v914 = vpop.f32.mrf.mxu0
    %915 = vmatprep.mubr.f32.mxu0 0.0
    %916 = vmatmul.mubr.f32.gmra.mxu0 %v384
    %v917 = vpop.f32.mrf.mxu0
    %v918 = vadd.f32 0.0, %v917
    %v919 = vpop.f32.mrf.mxu0
    %920 = vmatprep.mubr.f32.mxu0 0.0
    %921 = vmatmul.mubr.f32.gmra.mxu0 %v387
    %v922 = vpop.f32.mrf.mxu0
    %v923 = vadd.f32 0.0, %v922
    %v924 = vpop.f32.mrf.mxu0
    %925 = vmatprep.mubr.f32.mxu0 0.0
    %926 = vmatmul.mubr.f32.gmra.mxu0 %v390
    %v927 = vpop.f32.mrf.mxu0
    %v928 = vadd.f32 0.0, %v927
    %v929 = vpop.f32.mrf.mxu0
    %930 = vmatprep.mubr.f32.mxu0 0.0
    %931 = vmatmul.mubr.f32.gmra.mxu0 %v393
    %v932 = vpop.f32.mrf.mxu0
    %v933 = vadd.f32 0.0, %v932
    %v934 = vpop.f32.mrf.mxu0
    %935 = vmatprep.mubr.f32.mxu0 0.0
    %936 = vmatmul.mubr.f32.gmra.mxu0 %v396
    %v937 = vpop.f32.mrf.mxu0
    %v938 = vadd.f32 0.0, %v937
    %v939 = vpop.f32.mrf.mxu0
    %940 = vmatprep.mubr.f32.mxu0 0.0
    %941 = vmatmul.mubr.f32.gmra.mxu0 %v399
    %v942 = vpop.f32.mrf.mxu0
    %v943 = vadd.f32 0.0, %v942
    %v944 = vpop.f32.mrf.mxu0
    %945 = vdwg.mxu0
    %s946 = scalar_lea.vmem %s3, 64
    %v947 = vld [vmem:[%s946] sm:$0xff]
    %v948 = vld [vmem:[%s946 + $0x8] sm:$0xff]
    %v949 = vld [vmem:[%s946 + $0x10] sm:$0xff]
    %v950 = vld [vmem:[%s946 + $0x18] sm:$0xff]
    %v952 = vsel %vm633, %v947, 0
    %v955 = vsel %vm633, %v948, 0
    %v958 = vsel %vm633, %v949, 0
    %v961 = vsel %vm633, %v950, 0
    %963 = vmatprep.subr.mxu0 0.0
    %964 = vmatpush1.msra.mxu0 0.0
    %965 = vmatprep.subr.mxu0 0.0
    %966 = vmatpush1.msra.mxu0 0.0
    %967 = vmatprep.subr.mxu0 0.0
    %968 = vmatpush1.msra.mxu0 0.0
    %969 = vmatprep.subr.mxu0 0.0
    %970 = vmatpush1.msra.mxu0 0.0
    %971 = vmatprep.subr.mxu0 0.0
    %972 = vmatpush1.msra.mxu0 0.0
    %973 = vmatprep.subr.mxu0 0.0
    %974 = vmatpush1.msra.mxu0 0.0
    %975 = vmatprep.subr.mxu0 0.0
    %976 = vmatpush1.msra.mxu0 0.0
    %977 = vmatprep.subr.mxu0 0.0
    %978 = vmatpush1.msra.mxu0 0.0
    %979 = vmatprep.subr.mxu0 0.0
    %980 = vmatpush1.msra.mxu0 %v943
    %981 = vmatprep.subr.mxu0 0.0
    %982 = vmatpush1.msra.mxu0 %v938
    %983 = vmatprep.subr.mxu0 0.0
    %984 = vmatpush1.msra.mxu0 %v933
    %985 = vmatprep.subr.mxu0 0.0
    %986 = vmatpush1.msra.mxu0 %v928
    %987 = vmatprep.subr.mxu0 0.0
    %988 = vmatpush1.msra.mxu0 %v923
    %989 = vmatprep.subr.mxu0 0.0
    %990 = vmatpush1.msra.mxu0 %v918
    %991 = vmatprep.subr.mxu0 0.0
    %992 = vmatpush1.msra.mxu0 %v913
    %993 = vmatprep.subr.mxu0 0.0
    %994 = vmatpush1.msra.mxu0 %v908
    %995 = vmatprep.subr.mxu0 0.0
    %996 = vmatpush2.msra.mxu0 0.0
    %997 = vmatprep.subr.mxu0 0.0
    %998 = vmatpush2.msra.mxu0 0.0
    %999 = vmatprep.subr.mxu0 0.0
    %1000 = vmatpush2.msra.mxu0 0.0
    %1001 = vmatprep.subr.mxu0 0.0
    %1002 = vmatpush2.msra.mxu0 0.0
    %1003 = vmatprep.subr.mxu0 0.0
    %1004 = vmatpush2.msra.mxu0 0.0
    %1005 = vmatprep.subr.mxu0 0.0
    %1006 = vmatpush2.msra.mxu0 0.0
    %1007 = vmatprep.subr.mxu0 0.0
    %1008 = vmatpush2.msra.mxu0 0.0
    %1009 = vmatprep.subr.mxu0 0.0
    %1010 = vmatpush2.msra.mxu0 0.0
    %1011 = vmatprep.subr.mxu0 0.0
    %1012 = vmatpush2.msra.mxu0 0.0
    %1013 = vmatprep.subr.mxu0 0.0
    %1014 = vmatpush2.msra.mxu0 0.0
    %1015 = vmatprep.subr.mxu0 0.0
    %1016 = vmatpush2.msra.mxu0 0.0
    %1017 = vmatprep.subr.mxu0 0.0
    %1018 = vmatpush2.msra.mxu0 0.0
    %1019 = vmatprep.subr.mxu0 0.0
    %1020 = vmatpush2.msra.mxu0 0.0
    %1021 = vmatprep.subr.mxu0 0.0
    %1022 = vmatpush2.msra.mxu0 0.0
    %1023 = vmatprep.subr.mxu0 0.0
    %1024 = vmatpush2.msra.mxu0 0.0
    %1025 = vmatprep.subr.mxu0 0.0
    %1026 = vmatpush2.msra.mxu0 0.0
    %1027 = vmatprep.mubr.f32.mxu0 0.0
    %1028 = vmatmul.mubr.f32.gmra.mxu0 %v952
    %v1029 = vpop.f32.mrf.mxu0
    %v1030 = vadd.f32 0.0, %v1029
    %v1031 = vpop.f32.mrf.mxu0
    %1032 = vmatprep.mubr.f32.mxu0 0.0
    %1033 = vmatmul.mubr.f32.gmra.mxu0 %v955
    %v1034 = vpop.f32.mrf.mxu0
    %v1035 = vadd.f32 0.0, %v1034
    %v1036 = vpop.f32.mrf.mxu0
    %1037 = vmatprep.mubr.f32.mxu0 0.0
    %1038 = vmatmul.mubr.f32.gmra.mxu0 %v958
    %v1039 = vpop.f32.mrf.mxu0
    %v1040 = vadd.f32 0.0, %v1039
    %v1041 = vpop.f32.mrf.mxu0
    %1042 = vmatprep.mubr.f32.mxu0 0.0
    %1043 = vmatmul.mubr.f32.gmra.mxu0 %v961
    %v1044 = vpop.f32.mrf.mxu0
    %v1045 = vadd.f32 0.0, %v1044
    %v1046 = vpop.f32.mrf.mxu0
    %1047 = vdwg.mxu0
    %v1048 = vadd.f32 %v810, %v1030
    %v1049 = vadd.f32 %v815, %v1035
    %v1050 = vadd.f32 %v820, %v1040
    %v1051 = vadd.f32 %v825, %v1045
    %s1052 = scalar_lea.vmem [#allocation2], 288
    %v1053 = vld [vmem:[%s1052] sm:$0xff]
    %v1054 = vld [vmem:[%s1052 + $0x8] sm:$0xff]
    %v1055 = vld [vmem:[%s1052 + $0x10] sm:$0xff]
    %v1056 = vld [vmem:[%s1052 + $0x18] sm:$0xff]
    %v1057 = vld [vmem:[%s1052 + $0x20] sm:$0xff]
    %v1058 = vld [vmem:[%s1052 + $0x28] sm:$0xff]
    %v1059 = vld [vmem:[%s1052 + $0x30] sm:$0xff]
    %v1060 = vld [vmem:[%s1052 + $0x38] sm:$0xff]
    %v1061 = vld [vmem:[%s1052 + $0x40] sm:$0xff]
    %v1062 = vld [vmem:[%s1052 + $0x48] sm:$0xff]
    %v1063 = vld [vmem:[%s1052 + $0x50] sm:$0xff]
    %v1064 = vld [vmem:[%s1052 + $0x58] sm:$0xff]
    %1065 = vmatprep.subr.mxu0 0.0
    %1066 = vmatpush1.msra.mxu0 0.0
    %1067 = vmatprep.subr.mxu0 0.0
    %1068 = vmatpush1.msra.mxu0 0.0
    %1069 = vmatprep.subr.mxu0 0.0
    %1070 = vmatpush1.msra.mxu0 0.0
    %1071 = vmatprep.subr.mxu0 0.0
    %1072 = vmatpush1.msra.mxu0 0.0
    %1073 = vmatprep.subr.mxu0 0.0
    %1074 = vmatpush1.msra.mxu0 %v1064
    %1075 = vmatprep.subr.mxu0 0.0
    %1076 = vmatpush1.msra.mxu0 %v1063
    %1077 = vmatprep.subr.mxu0 0.0
    %1078 = vmatpush1.msra.mxu0 %v1062
    %1079 = vmatprep.subr.mxu0 0.0
    %1080 = vmatpush1.msra.mxu0 %v1061
    %1081 = vmatprep.subr.mxu0 0.0
    %1082 = vmatpush1.msra.mxu0 %v1060
    %1083 = vmatprep.subr.mxu0 0.0
    %1084 = vmatpush1.msra.mxu0 %v1059
    %1085 = vmatprep.subr.mxu0 0.0
    %1086 = vmatpush1.msra.mxu0 %v1058
    %1087 = vmatprep.subr.mxu0 0.0
    %1088 = vmatpush1.msra.mxu0 %v1057
    %1089 = vmatprep.subr.mxu0 0.0
    %1090 = vmatpush1.msra.mxu0 %v1056
    %1091 = vmatprep.subr.mxu0 0.0
    %1092 = vmatpush1.msra.mxu0 %v1055
    %1093 = vmatprep.subr.mxu0 0.0
    %1094 = vmatpush1.msra.mxu0 %v1054
    %1095 = vmatprep.subr.mxu0 0.0
    %1096 = vmatpush1.msra.mxu0 %v1053
    %1097 = vmatprep.subr.mxu0 0.0
    %1098 = vmatpush2.msra.mxu0 0.0
    %1099 = vmatprep.subr.mxu0 0.0
    %1100 = vmatpush2.msra.mxu0 0.0
    %1101 = vmatprep.subr.mxu0 0.0
    %1102 = vmatpush2.msra.mxu0 0.0
    %1103 = vmatprep.subr.mxu0 0.0
    %1104 = vmatpush2.msra.mxu0 0.0
    %1105 = vmatprep.subr.mxu0 0.0
    %1106 = vmatpush2.msra.mxu0 0.0
    %1107 = vmatprep.subr.mxu0 0.0
    %1108 = vmatpush2.msra.mxu0 0.0
    %1109 = vmatprep.subr.mxu0 0.0
    %1110 = vmatpush2.msra.mxu0 0.0
    %1111 = vmatprep.subr.mxu0 0.0
    %1112 = vmatpush2.msra.mxu0 0.0
    %1113 = vmatprep.subr.mxu0 0.0
    %1114 = vmatpush2.msra.mxu0 0.0
    %1115 = vmatprep.subr.mxu0 0.0
    %1116 = vmatpush2.msra.mxu0 0.0
    %1117 = vmatprep.subr.mxu0 0.0
    %1118 = vmatpush2.msra.mxu0 0.0
    %1119 = vmatprep.subr.mxu0 0.0
    %1120 = vmatpush2.msra.mxu0 0.0
    %1121 = vmatprep.subr.mxu0 0.0
    %1122 = vmatpush2.msra.mxu0 0.0
    %1123 = vmatprep.subr.mxu0 0.0
    %1124 = vmatpush2.msra.mxu0 0.0
    %1125 = vmatprep.subr.mxu0 0.0
    %1126 = vmatpush2.msra.mxu0 0.0
    %1127 = vmatprep.subr.mxu0 0.0
    %1128 = vmatpush2.msra.mxu0 0.0
    %1129 = vmatprep.mubr.f32.mxu0 0.0
    %1130 = vmatmul.mubr.f32.gmra.mxu0 %v378
    %v1131 = vpop.f32.mrf.mxu0
    %v1132 = vadd.f32 0.0, %v1131
    %v1133 = vpop.f32.mrf.mxu0
    %1134 = vmatprep.mubr.f32.mxu0 0.0
    %1135 = vmatmul.mubr.f32.gmra.mxu0 %v381
    %v1136 = vpop.f32.mrf.mxu0
    %v1137 = vadd.f32 0.0, %v1136
    %v1138 = vpop.f32.mrf.mxu0
    %1139 = vmatprep.mubr.f32.mxu0 0.0
    %1140 = vmatmul.mubr.f32.gmra.mxu0 %v384
    %v1141 = vpop.f32.mrf.mxu0
    %v1142 = vadd.f32 0.0, %v1141
    %v1143 = vpop.f32.mrf.mxu0
    %1144 = vmatprep.mubr.f32.mxu0 0.0
    %1145 = vmatmul.mubr.f32.gmra.mxu0 %v387
    %v1146 = vpop.f32.mrf.mxu0
    %v1147 = vadd.f32 0.0, %v1146
    %v1148 = vpop.f32.mrf.mxu0
    %1149 = vmatprep.mubr.f32.mxu0 0.0
    %1150 = vmatmul.mubr.f32.gmra.mxu0 %v390
    %v1151 = vpop.f32.mrf.mxu0
    %v1152 = vadd.f32 0.0, %v1151
    %v1153 = vpop.f32.mrf.mxu0
    %1154 = vmatprep.mubr.f32.mxu0 0.0
    %1155 = vmatmul.mubr.f32.gmra.mxu0 %v393
    %v1156 = vpop.f32.mrf.mxu0
    %v1157 = vadd.f32 0.0, %v1156
    %v1158 = vpop.f32.mrf.mxu0
    %1159 = vmatprep.mubr.f32.mxu0 0.0
    %1160 = vmatmul.mubr.f32.gmra.mxu0 %v396
    %v1161 = vpop.f32.mrf.mxu0
    %v1162 = vadd.f32 0.0, %v1161
    %v1163 = vpop.f32.mrf.mxu0
    %1164 = vmatprep.mubr.f32.mxu0 0.0
    %1165 = vmatmul.mubr.f32.gmra.mxu0 %v399
    %v1166 = vpop.f32.mrf.mxu0
    %v1167 = vadd.f32 0.0, %v1166
    %v1168 = vpop.f32.mrf.mxu0
    %1169 = vdwg.mxu0
    %s1170 = scalar_lea.vmem %s3, 96
    %v1171 = vld [vmem:[%s1170] sm:$0xff]
    %v1172 = vld [vmem:[%s1170 + $0x8] sm:$0xff]
    %v1173 = vld [vmem:[%s1170 + $0x10] sm:$0xff]
    %v1174 = vld [vmem:[%s1170 + $0x18] sm:$0xff]
    %v1176 = vsel %vm633, %v1171, 0
    %v1179 = vsel %vm633, %v1172, 0
    %v1182 = vsel %vm633, %v1173, 0
    %v1185 = vsel %vm633, %v1174, 0
    %1187 = vmatprep.subr.mxu0 0.0
    %1188 = vmatpush1.msra.mxu0 0.0
    %1189 = vmatprep.subr.mxu0 0.0
    %1190 = vmatpush1.msra.mxu0 0.0
    %1191 = vmatprep.subr.mxu0 0.0
    %1192 = vmatpush1.msra.mxu0 0.0
    %1193 = vmatprep.subr.mxu0 0.0
    %1194 = vmatpush1.msra.mxu0 0.0
    %1195 = vmatprep.subr.mxu0 0.0
    %1196 = vmatpush1.msra.mxu0 0.0
    %1197 = vmatprep.subr.mxu0 0.0
    %1198 = vmatpush1.msra.mxu0 0.0
    %1199 = vmatprep.subr.mxu0 0.0
    %1200 = vmatpush1.msra.mxu0 0.0
    %1201 = vmatprep.subr.mxu0 0.0
    %1202 = vmatpush1.msra.mxu0 0.0
    %1203 = vmatprep.subr.mxu0 0.0
    %1204 = vmatpush1.msra.mxu0 %v1167
    %1205 = vmatprep.subr.mxu0 0.0
    %1206 = vmatpush1.msra.mxu0 %v1162
    %1207 = vmatprep.subr.mxu0 0.0
    %1208 = vmatpush1.msra.mxu0 %v1157
    %1209 = vmatprep.subr.mxu0 0.0
    %1210 = vmatpush1.msra.mxu0 %v1152
    %1211 = vmatprep.subr.mxu0 0.0
    %1212 = vmatpush1.msra.mxu0 %v1147
    %1213 = vmatprep.subr.mxu0 0.0
    %1214 = vmatpush1.msra.mxu0 %v1142
    %1215 = vmatprep.subr.mxu0 0.0
    %1216 = vmatpush1.msra.mxu0 %v1137
    %1217 = vmatprep.subr.mxu0 0.0
    %1218 = vmatpush1.msra.mxu0 %v1132
    %1219 = vmatprep.subr.mxu0 0.0
    %1220 = vmatpush2.msra.mxu0 0.0
    %1221 = vmatprep.subr.mxu0 0.0
    %1222 = vmatpush2.msra.mxu0 0.0
    %1223 = vmatprep.subr.mxu0 0.0
    %1224 = vmatpush2.msra.mxu0 0.0
    %1225 = vmatprep.subr.mxu0 0.0
    %1226 = vmatpush2.msra.mxu0 0.0
    %1227 = vmatprep.subr.mxu0 0.0
    %1228 = vmatpush2.msra.mxu0 0.0
    %1229 = vmatprep.subr.mxu0 0.0
    %1230 = vmatpush2.msra.mxu0 0.0
    %1231 = vmatprep.subr.mxu0 0.0
    %1232 = vmatpush2.msra.mxu0 0.0
    %1233 = vmatprep.subr.mxu0 0.0
    %1234 = vmatpush2.msra.mxu0 0.0
    %1235 = vmatprep.subr.mxu0 0.0
    %1236 = vmatpush2.msra.mxu0 0.0
    %1237 = vmatprep.subr.mxu0 0.0
    %1238 = vmatpush2.msra.mxu0 0.0
    %1239 = vmatprep.subr.mxu0 0.0
    %1240 = vmatpush2.msra.mxu0 0.0
    %1241 = vmatprep.subr.mxu0 0.0
    %1242 = vmatpush2.msra.mxu0 0.0
    %1243 = vmatprep.subr.mxu0 0.0
    %1244 = vmatpush2.msra.mxu0 0.0
    %1245 = vmatprep.subr.mxu0 0.0
    %1246 = vmatpush2.msra.mxu0 0.0
    %1247 = vmatprep.subr.mxu0 0.0
    %1248 = vmatpush2.msra.mxu0 0.0
    %1249 = vmatprep.subr.mxu0 0.0
    %1250 = vmatpush2.msra.mxu0 0.0
    %1251 = vmatprep.mubr.f32.mxu0 0.0
    %1252 = vmatmul.mubr.f32.gmra.mxu0 %v1176
    %v1253 = vpop.f32.mrf.mxu0
    %v1254 = vadd.f32 0.0, %v1253
    %v1255 = vpop.f32.mrf.mxu0
    %1256 = vmatprep.mubr.f32.mxu0 0.0
    %1257 = vmatmul.mubr.f32.gmra.mxu0 %v1179
    %v1258 = vpop.f32.mrf.mxu0
    %v1259 = vadd.f32 0.0, %v1258
    %v1260 = vpop.f32.mrf.mxu0
    %1261 = vmatprep.mubr.f32.mxu0 0.0
    %1262 = vmatmul.mubr.f32.gmra.mxu0 %v1182
    %v1263 = vpop.f32.mrf.mxu0
    %v1264 = vadd.f32 0.0, %v1263
    %v1265 = vpop.f32.mrf.mxu0
    %1266 = vmatprep.mubr.f32.mxu0 0.0
    %1267 = vmatmul.mubr.f32.gmra.mxu0 %v1185
    %v1268 = vpop.f32.mrf.mxu0
    %v1269 = vadd.f32 0.0, %v1268
    %v1270 = vpop.f32.mrf.mxu0
    %1271 = vdwg.mxu0
    %v1272 = vadd.f32 %v1048, %v1254
    %v1273 = vadd.f32 %v1049, %v1259
    %v1274 = vadd.f32 %v1050, %v1264
    %v1275 = vadd.f32 %v1051, %v1269
    %v1276 = vld [vmem:[%s23] sm:$0x1]
    %v1278 = vlaneseq
    %v1279 = vshrl.u32 %v1278, 7
    %v1280 = vsub.s32 0, %v1279
    %v1281 = vrot.slane %v1276, %v1280
    %v1283 = vadd.f32 %v1272, %v1281
    %v1284 = vadd.f32 %v1273, %v1281
    %v1285 = vadd.f32 %v1274, %v1281
    %v1286 = vadd.f32 %v1275, %v1281
    %vm1287 = vcmp.gt.f32.partialorder %v1283, 0.0
    %vm1288 = vcmp.gt.f32.partialorder %v1284, 0.0
    %vm1289 = vcmp.gt.f32.partialorder %v1285, 0.0
    %vm1290 = vcmp.gt.f32.partialorder %v1286, 0.0
    %v1291 = vmul.f32 %v1283, 0.2
    %v1292 = vmul.f32 %v1284, 0.2
    %v1293 = vmul.f32 %v1285, 0.2
    %v1294 = vmul.f32 %v1286, 0.2
    %v1295 = vsel %vm1287, %v1283, %v1291
    %v1296 = vsel %vm1288, %v1284, %v1292
    %v1297 = vsel %vm1289, %v1285, %v1293
    %v1298 = vsel %vm1290, %v1286, %v1294
    %v1299 = vld [vmem:[%s9] sm:$0xff]
    %v1300 = vld [vmem:[%s9 + $0x8] sm:$0xff]
    %v1301 = vld [vmem:[%s9 + $0x10] sm:$0xff]
    %v1302 = vld [vmem:[%s9 + $0x18] sm:$0xff]
    %v1303 = vld [vmem:[%s9 + $0x20] sm:$0xff]
    %v1304 = vld [vmem:[%s9 + $0x28] sm:$0xff]
    %v1305 = vld [vmem:[%s9 + $0x30] sm:$0xff]
    %v1306 = vld [vmem:[%s9 + $0x38] sm:$0xff]
    %v1307 = vld [vmem:[%s9 + $0x40] sm:$0xff]
    %v1308 = vld [vmem:[%s9 + $0x48] sm:$0xff]
    %v1309 = vld [vmem:[%s9 + $0x50] sm:$0xff]
    %v1310 = vld [vmem:[%s9 + $0x58] sm:$0xff]
    %v1311 = vld [vmem:[%s9 + $0x60] sm:$0xff]
    %v1312 = vld [vmem:[%s9 + $0x68] sm:$0xff]
    %v1313 = vld [vmem:[%s9 + $0x70] sm:$0xff]
    %v1314 = vld [vmem:[%s9 + $0x78] sm:$0xff]
    %1315 = vmatprep.subr.mxu0 0.0
    %1316 = vmatpush1.msra.mxu0 %v1314
    %1317 = vmatprep.subr.mxu0 0.0
    %1318 = vmatpush1.msra.mxu0 %v1313
    %1319 = vmatprep.subr.mxu0 0.0
    %1320 = vmatpush1.msra.mxu0 %v1312
    %1321 = vmatprep.subr.mxu0 0.0
    %1322 = vmatpush1.msra.mxu0 %v1311
    %1323 = vmatprep.subr.mxu0 0.0
    %1324 = vmatpush1.msra.mxu0 %v1310
    %1325 = vmatprep.subr.mxu0 0.0
    %1326 = vmatpush1.msra.mxu0 %v1309
    %1327 = vmatprep.subr.mxu0 0.0
    %1328 = vmatpush1.msra.mxu0 %v1308
    %1329 = vmatprep.subr.mxu0 0.0
    %1330 = vmatpush1.msra.mxu0 %v1307
    %1331 = vmatprep.subr.mxu0 0.0
    %1332 = vmatpush1.msra.mxu0 %v1306
    %1333 = vmatprep.subr.mxu0 0.0
    %1334 = vmatpush1.msra.mxu0 %v1305
    %1335 = vmatprep.subr.mxu0 0.0
    %1336 = vmatpush1.msra.mxu0 %v1304
    %1337 = vmatprep.subr.mxu0 0.0
    %1338 = vmatpush1.msra.mxu0 %v1303
    %1339 = vmatprep.subr.mxu0 0.0
    %1340 = vmatpush1.msra.mxu0 %v1302
    %1341 = vmatprep.subr.mxu0 0.0
    %1342 = vmatpush1.msra.mxu0 %v1301
    %1343 = vmatprep.subr.mxu0 0.0
    %1344 = vmatpush1.msra.mxu0 %v1300
    %1345 = vmatprep.subr.mxu0 0.0
    %1346 = vmatpush1.msra.mxu0 %v1299
    %1347 = vmatprep.subr.mxu0 0.0
    %1348 = vmatpush2.msra.mxu0 0.0
    %1349 = vmatprep.subr.mxu0 0.0
    %1350 = vmatpush2.msra.mxu0 0.0
    %1351 = vmatprep.subr.mxu0 0.0
    %1352 = vmatpush2.msra.mxu0 0.0
    %1353 = vmatprep.subr.mxu0 0.0
    %1354 = vmatpush2.msra.mxu0 0.0
    %1355 = vmatprep.subr.mxu0 0.0
    %1356 = vmatpush2.msra.mxu0 0.0
    %1357 = vmatprep.subr.mxu0 0.0
    %1358 = vmatpush2.msra.mxu0 0.0
    %1359 = vmatprep.subr.mxu0 0.0
    %1360 = vmatpush2.msra.mxu0 0.0
    %1361 = vmatprep.subr.mxu0 0.0
    %1362 = vmatpush2.msra.mxu0 0.0
    %1363 = vmatprep.subr.mxu0 0.0
    %1364 = vmatpush2.msra.mxu0 0.0
    %1365 = vmatprep.subr.mxu0 0.0
    %1366 = vmatpush2.msra.mxu0 0.0
    %1367 = vmatprep.subr.mxu0 0.0
    %1368 = vmatpush2.msra.mxu0 0.0
    %1369 = vmatprep.subr.mxu0 0.0
    %1370 = vmatpush2.msra.mxu0 0.0
    %1371 = vmatprep.subr.mxu0 0.0
    %1372 = vmatpush2.msra.mxu0 0.0
    %1373 = vmatprep.subr.mxu0 0.0
    %1374 = vmatpush2.msra.mxu0 0.0
    %1375 = vmatprep.subr.mxu0 0.0
    %1376 = vmatpush2.msra.mxu0 0.0
    %1377 = vmatprep.subr.mxu0 0.0
    %1378 = vmatpush2.msra.mxu0 0.0
    %1379 = vmatprep.mubr.f32.mxu0 0.0
    %1380 = vmatmul.mubr.f32.gmra.mxu0 %v1295
    %v1381 = vpop.f32.mrf.mxu0
    %v1382 = vadd.f32 0.0, %v1381
    %v1383 = vpop.f32.mrf.mxu0
    %1384 = vmatprep.mubr.f32.mxu0 0.0
    %1385 = vmatmul.mubr.f32.gmra.mxu0 %v1296
    %v1386 = vpop.f32.mrf.mxu0
    %v1387 = vadd.f32 0.0, %v1386
    %v1388 = vpop.f32.mrf.mxu0
    %1389 = vmatprep.mubr.f32.mxu0 0.0
    %1390 = vmatmul.mubr.f32.gmra.mxu0 %v1297
    %v1391 = vpop.f32.mrf.mxu0
    %v1392 = vadd.f32 0.0, %v1391
    %v1393 = vpop.f32.mrf.mxu0
    %1394 = vmatprep.mubr.f32.mxu0 0.0
    %1395 = vmatmul.mubr.f32.gmra.mxu0 %v1298
    %v1396 = vpop.f32.mrf.mxu0
    %v1397 = vadd.f32 0.0, %v1396
    %v1398 = vpop.f32.mrf.mxu0
    %1399 = vdwg.mxu0
    %v1400 = vld [vmem:[#allocation4] sm:$0xff]
    %v1401 = vld [vmem:[#allocation4 + $0x8] sm:$0xff]
    %s1402 = scalar_lea.vmem %s9, 128
    %v1403 = vld [vmem:[%s1402] sm:$0xff]
    %v1404 = vld [vmem:[%s1402 + $0x8] sm:$0xff]
    %v1405 = vld [vmem:[%s1402 + $0x10] sm:$0xff]
    %v1406 = vld [vmem:[%s1402 + $0x18] sm:$0xff]
    %v1407 = vld [vmem:[%s1402 + $0x20] sm:$0xff]
    %v1408 = vld [vmem:[%s1402 + $0x28] sm:$0xff]
    %v1409 = vld [vmem:[%s1402 + $0x30] sm:$0xff]
    %v1410 = vld [vmem:[%s1402 + $0x38] sm:$0xff]
    %v1411 = vld [vmem:[%s1402 + $0x40] sm:$0xff]
    %v1412 = vld [vmem:[%s1402 + $0x48] sm:$0xff]
    %v1413 = vld [vmem:[%s1402 + $0x50] sm:$0xff]
    %v1414 = vld [vmem:[%s1402 + $0x58] sm:$0xff]
    %v1415 = vld [vmem:[%s1402 + $0x60] sm:$0xff]
    %v1416 = vld [vmem:[%s1402 + $0x68] sm:$0xff]
    %v1417 = vld [vmem:[%s1402 + $0x70] sm:$0xff]
    %v1418 = vld [vmem:[%s1402 + $0x78] sm:$0xff]
    %1419 = vmatprep.subr.mxu0 0.0
    %1420 = vmatpush1.msra.mxu0 %v1418
    %1421 = vmatprep.subr.mxu0 0.0
    %1422 = vmatpush1.msra.mxu0 %v1417
    %1423 = vmatprep.subr.mxu0 0.0
    %1424 = vmatpush1.msra.mxu0 %v1416
    %1425 = vmatprep.subr.mxu0 0.0
    %1426 = vmatpush1.msra.mxu0 %v1415
    %1427 = vmatprep.subr.mxu0 0.0
    %1428 = vmatpush1.msra.mxu0 %v1414
    %1429 = vmatprep.subr.mxu0 0.0
    %1430 = vmatpush1.msra.mxu0 %v1413
    %1431 = vmatprep.subr.mxu0 0.0
    %1432 = vmatpush1.msra.mxu0 %v1412
    %1433 = vmatprep.subr.mxu0 0.0
    %1434 = vmatpush1.msra.mxu0 %v1411
    %1435 = vmatprep.subr.mxu0 0.0
    %1436 = vmatpush1.msra.mxu0 %v1410
    %1437 = vmatprep.subr.mxu0 0.0
    %1438 = vmatpush1.msra.mxu0 %v1409
    %1439 = vmatprep.subr.mxu0 0.0
    %1440 = vmatpush1.msra.mxu0 %v1408
    %1441 = vmatprep.subr.mxu0 0.0
    %1442 = vmatpush1.msra.mxu0 %v1407
    %1443 = vmatprep.subr.mxu0 0.0
    %1444 = vmatpush1.msra.mxu0 %v1406
    %1445 = vmatprep.subr.mxu0 0.0
    %1446 = vmatpush1.msra.mxu0 %v1405
    %1447 = vmatprep.subr.mxu0 0.0
    %1448 = vmatpush1.msra.mxu0 %v1404
    %1449 = vmatprep.subr.mxu0 0.0
    %1450 = vmatpush1.msra.mxu0 %v1403
    %1451 = vmatprep.subr.mxu0 0.0
    %1452 = vmatpush2.msra.mxu0 0.0
    %1453 = vmatprep.subr.mxu0 0.0
    %1454 = vmatpush2.msra.mxu0 0.0
    %1455 = vmatprep.subr.mxu0 0.0
    %1456 = vmatpush2.msra.mxu0 0.0
    %1457 = vmatprep.subr.mxu0 0.0
    %1458 = vmatpush2.msra.mxu0 0.0
    %1459 = vmatprep.subr.mxu0 0.0
    %1460 = vmatpush2.msra.mxu0 0.0
    %1461 = vmatprep.subr.mxu0 0.0
    %1462 = vmatpush2.msra.mxu0 0.0
    %1463 = vmatprep.subr.mxu0 0.0
    %1464 = vmatpush2.msra.mxu0 0.0
    %1465 = vmatprep.subr.mxu0 0.0
    %1466 = vmatpush2.msra.mxu0 0.0
    %1467 = vmatprep.subr.mxu0 0.0
    %1468 = vmatpush2.msra.mxu0 0.0
    %1469 = vmatprep.subr.mxu0 0.0
    %1470 = vmatpush2.msra.mxu0 0.0
    %1471 = vmatprep.subr.mxu0 0.0
    %1472 = vmatpush2.msra.mxu0 0.0
    %1473 = vmatprep.subr.mxu0 0.0
    %1474 = vmatpush2.msra.mxu0 0.0
    %1475 = vmatprep.subr.mxu0 0.0
    %1476 = vmatpush2.msra.mxu0 0.0
    %1477 = vmatprep.subr.mxu0 0.0
    %1478 = vmatpush2.msra.mxu0 0.0
    %1479 = vmatprep.subr.mxu0 0.0
    %1480 = vmatpush2.msra.mxu0 0.0
    %1481 = vmatprep.subr.mxu0 0.0
    %1482 = vmatpush2.msra.mxu0 0.0
    %1483 = vmatprep.mubr.f32.mxu0 0.0
    %1484 = vmatmul.mubr.f32.gmra.mxu0 %v1295
    %v1485 = vpop.f32.mrf.mxu0
    %v1486 = vadd.f32 0.0, %v1485
    %v1487 = vpop.f32.mrf.mxu0
    %1488 = vmatprep.mubr.f32.mxu0 0.0
    %1489 = vmatmul.mubr.f32.gmra.mxu0 %v1296
    %v1490 = vpop.f32.mrf.mxu0
    %v1491 = vadd.f32 0.0, %v1490
    %v1492 = vpop.f32.mrf.mxu0
    %1493 = vmatprep.mubr.f32.mxu0 0.0
    %1494 = vmatmul.mubr.f32.gmra.mxu0 %v1297
    %v1495 = vpop.f32.mrf.mxu0
    %v1496 = vadd.f32 0.0, %v1495
    %v1497 = vpop.f32.mrf.mxu0
    %1498 = vmatprep.mubr.f32.mxu0 0.0
    %1499 = vmatmul.mubr.f32.gmra.mxu0 %v1298
    %v1500 = vpop.f32.mrf.mxu0
    %v1501 = vadd.f32 0.0, %v1500
    %v1502 = vpop.f32.mrf.mxu0
    %1503 = vdwg.mxu0
    %s1504 = scalar_lea.vmem [#allocation4], 16
    %v1505 = vld [vmem:[%s1504] sm:$0xff]
    %v1506 = vld [vmem:[%s1504 + $0x8] sm:$0xff]
    %vm1507 = vcmask 261120
    %v1509 = vsel %vm1507, %v1505, 0
    %v1512 = vsel %vm1507, %v1506, 0
    %1514 = vmatprep.subr.mxu0 0.0
    %1515 = vmatpush1.msra.mxu0 0.0
    %1516 = vmatprep.subr.mxu0 0.0
    %1517 = vmatpush1.msra.mxu0 0.0
    %1518 = vmatprep.subr.mxu0 0.0
    %1519 = vmatpush1.msra.mxu0 0.0
    %1520 = vmatprep.subr.mxu0 0.0
    %1521 = vmatpush1.msra.mxu0 0.0
    %1522 = vmatprep.subr.mxu0 0.0
    %1523 = vmatpush1.msra.mxu0 0.0
    %1524 = vmatprep.subr.mxu0 0.0
    %1525 = vmatpush1.msra.mxu0 0.0
    %1526 = vmatprep.subr.mxu0 0.0
    %1527 = vmatpush1.msra.mxu0 0.0
    %1528 = vmatprep.subr.mxu0 0.0
    %1529 = vmatpush1.msra.mxu0 0.0
    %1530 = vmatprep.subr.mxu0 0.0
    %1531 = vmatpush1.msra.mxu0 0.0
    %1532 = vmatprep.subr.mxu0 0.0
    %1533 = vmatpush1.msra.mxu0 0.0
    %1534 = vmatprep.subr.mxu0 0.0
    %1535 = vmatpush1.msra.mxu0 0.0
    %1536 = vmatprep.subr.mxu0 0.0
    %1537 = vmatpush1.msra.mxu0 0.0
    %1538 = vmatprep.subr.mxu0 0.0
    %1539 = vmatpush1.msra.mxu0 %v1501
    %1540 = vmatprep.subr.mxu0 0.0
    %1541 = vmatpush1.msra.mxu0 %v1496
    %1542 = vmatprep.subr.mxu0 0.0
    %1543 = vmatpush1.msra.mxu0 %v1491
    %1544 = vmatprep.subr.mxu0 0.0
    %1545 = vmatpush1.msra.mxu0 %v1486
    %1546 = vmatprep.subr.mxu0 0.0
    %1547 = vmatpush2.msra.mxu0 0.0
    %1548 = vmatprep.subr.mxu0 0.0
    %1549 = vmatpush2.msra.mxu0 0.0
    %1550 = vmatprep.subr.mxu0 0.0
    %1551 = vmatpush2.msra.mxu0 0.0
    %1552 = vmatprep.subr.mxu0 0.0
    %1553 = vmatpush2.msra.mxu0 0.0
    %1554 = vmatprep.subr.mxu0 0.0
    %1555 = vmatpush2.msra.mxu0 0.0
    %1556 = vmatprep.subr.mxu0 0.0
    %1557 = vmatpush2.msra.mxu0 0.0
    %1558 = vmatprep.subr.mxu0 0.0
    %1559 = vmatpush2.msra.mxu0 0.0
    %1560 = vmatprep.subr.mxu0 0.0
    %1561 = vmatpush2.msra.mxu0 0.0
    %1562 = vmatprep.subr.mxu0 0.0
    %1563 = vmatpush2.msra.mxu0 0.0
    %1564 = vmatprep.subr.mxu0 0.0
    %1565 = vmatpush2.msra.mxu0 0.0
    %1566 = vmatprep.subr.mxu0 0.0
    %1567 = vmatpush2.msra.mxu0 0.0
    %1568 = vmatprep.subr.mxu0 0.0
    %1569 = vmatpush2.msra.mxu0 0.0
    %1570 = vmatprep.subr.mxu0 0.0
    %1571 = vmatpush2.msra.mxu0 0.0
    %1572 = vmatprep.subr.mxu0 0.0
    %1573 = vmatpush2.msra.mxu0 0.0
    %1574 = vmatprep.subr.mxu0 0.0
    %1575 = vmatpush2.msra.mxu0 0.0
    %1576 = vmatprep.subr.mxu0 0.0
    %1577 = vmatpush2.msra.mxu0 0.0
    %1578 = vmatprep.mubr.f32.mxu0 0.0
    %1579 = vmatmul.mubr.f32.gmra.mxu0 %v1509
    %v1580 = vpop.f32.mrf.mxu0
    %v1581 = vadd.f32 0.0, %v1580
    %v1582 = vpop.f32.mrf.mxu0
    %1583 = vmatprep.mubr.f32.mxu0 0.0
    %1584 = vmatmul.mubr.f32.gmra.mxu0 %v1512
    %v1585 = vpop.f32.mrf.mxu0
    %v1586 = vadd.f32 0.0, %v1585
    %v1587 = vpop.f32.mrf.mxu0
    %1588 = vdwg.mxu0
    %v1590 = vsel %vm1507, %v1400, 0
    %v1593 = vsel %vm1507, %v1401, 0
    %1595 = vmatprep.subr.mxu0 0.0
    %1596 = vmatpush1.msra.mxu0 0.0
    %1597 = vmatprep.subr.mxu0 0.0
    %1598 = vmatpush1.msra.mxu0 0.0
    %1599 = vmatprep.subr.mxu0 0.0
    %1600 = vmatpush1.msra.mxu0 0.0
    %1601 = vmatprep.subr.mxu0 0.0
    %1602 = vmatpush1.msra.mxu0 0.0
    %1603 = vmatprep.subr.mxu0 0.0
    %1604 = vmatpush1.msra.mxu0 0.0
    %1605 = vmatprep.subr.mxu0 0.0
    %1606 = vmatpush1.msra.mxu0 0.0
    %1607 = vmatprep.subr.mxu0 0.0
    %1608 = vmatpush1.msra.mxu0 0.0
    %1609 = vmatprep.subr.mxu0 0.0
    %1610 = vmatpush1.msra.mxu0 0.0
    %1611 = vmatprep.subr.mxu0 0.0
    %1612 = vmatpush1.msra.mxu0 0.0
    %1613 = vmatprep.subr.mxu0 0.0
    %1614 = vmatpush1.msra.mxu0 0.0
    %1615 = vmatprep.subr.mxu0 0.0
    %1616 = vmatpush1.msra.mxu0 0.0
    %1617 = vmatprep.subr.mxu0 0.0
    %1618 = vmatpush1.msra.mxu0 0.0
    %1619 = vmatprep.subr.mxu0 0.0
    %1620 = vmatpush1.msra.mxu0 %v1397
    %1621 = vmatprep.subr.mxu0 0.0
    %1622 = vmatpush1.msra.mxu0 %v1392
    %1623 = vmatprep.subr.mxu0 0.0
    %1624 = vmatpush1.msra.mxu0 %v1387
    %1625 = vmatprep.subr.mxu0 0.0
    %1626 = vmatpush1.msra.mxu0 %v1382
    %1627 = vmatprep.subr.mxu0 0.0
    %1628 = vmatpush2.msra.mxu0 0.0
    %1629 = vmatprep.subr.mxu0 0.0
    %1630 = vmatpush2.msra.mxu0 0.0
    %1631 = vmatprep.subr.mxu0 0.0
    %1632 = vmatpush2.msra.mxu0 0.0
    %1633 = vmatprep.subr.mxu0 0.0
    %1634 = vmatpush2.msra.mxu0 0.0
    %1635 = vmatprep.subr.mxu0 0.0
    %1636 = vmatpush2.msra.mxu0 0.0
    %1637 = vmatprep.subr.mxu0 0.0
    %1638 = vmatpush2.msra.mxu0 0.0
    %1639 = vmatprep.subr.mxu0 0.0
    %1640 = vmatpush2.msra.mxu0 0.0
    %1641 = vmatprep.subr.mxu0 0.0
    %1642 = vmatpush2.msra.mxu0 0.0
    %1643 = vmatprep.subr.mxu0 0.0
    %1644 = vmatpush2.msra.mxu0 0.0
    %1645 = vmatprep.subr.mxu0 0.0
    %1646 = vmatpush2.msra.mxu0 0.0
    %1647 = vmatprep.subr.mxu0 0.0
    %1648 = vmatpush2.msra.mxu0 0.0
    %1649 = vmatprep.subr.mxu0 0.0
    %1650 = vmatpush2.msra.mxu0 0.0
    %1651 = vmatprep.subr.mxu0 0.0
    %1652 = vmatpush2.msra.mxu0 0.0
    %1653 = vmatprep.subr.mxu0 0.0
    %1654 = vmatpush2.msra.mxu0 0.0
    %1655 = vmatprep.subr.mxu0 0.0
    %1656 = vmatpush2.msra.mxu0 0.0
    %1657 = vmatprep.subr.mxu0 0.0
    %1658 = vmatpush2.msra.mxu0 0.0
    %1659 = vmatprep.mubr.f32.mxu0 0.0
    %1660 = vmatmul.mubr.f32.gmra.mxu0 %v1590
    %v1661 = vpop.f32.mrf.mxu0
    %v1662 = vadd.f32 %v1581, %v1661
    %v1663 = vpop.f32.mrf.mxu0
    %1664 = vmatprep.mubr.f32.mxu0 0.0
    %1665 = vmatmul.mubr.f32.gmra.mxu0 %v1593
    %v1666 = vpop.f32.mrf.mxu0
    %v1667 = vadd.f32 %v1586, %v1666
    %v1668 = vpop.f32.mrf.mxu0
    %1669 = vdwg.mxu0
    %s1670 = scalar_lea.vmem %s9, 256
    %v1671 = vld [vmem:[%s1670] sm:$0xff]
    %v1672 = vld [vmem:[%s1670 + $0x8] sm:$0xff]
    %v1673 = vld [vmem:[%s1670 + $0x10] sm:$0xff]
    %v1674 = vld [vmem:[%s1670 + $0x18] sm:$0xff]
    %v1675 = vld [vmem:[%s1670 + $0x20] sm:$0xff]
    %v1676 = vld [vmem:[%s1670 + $0x28] sm:$0xff]
    %v1677 = vld [vmem:[%s1670 + $0x30] sm:$0xff]
    %v1678 = vld [vmem:[%s1670 + $0x38] sm:$0xff]
    %v1679 = vld [vmem:[%s1670 + $0x40] sm:$0xff]
    %v1680 = vld [vmem:[%s1670 + $0x48] sm:$0xff]
    %v1681 = vld [vmem:[%s1670 + $0x50] sm:$0xff]
    %v1682 = vld [vmem:[%s1670 + $0x58] sm:$0xff]
    %v1683 = vld [vmem:[%s1670 + $0x60] sm:$0xff]
    %v1684 = vld [vmem:[%s1670 + $0x68] sm:$0xff]
    %v1685 = vld [vmem:[%s1670 + $0x70] sm:$0xff]
    %v1686 = vld [vmem:[%s1670 + $0x78] sm:$0xff]
    %1687 = vmatprep.subr.mxu0 0.0
    %1688 = vmatpush1.msra.mxu0 %v1686
    %1689 = vmatprep.subr.mxu0 0.0
    %1690 = vmatpush1.msra.mxu0 %v1685
    %1691 = vmatprep.subr.mxu0 0.0
    %1692 = vmatpush1.msra.mxu0 %v1684
    %1693 = vmatprep.subr.mxu0 0.0
    %1694 = vmatpush1.msra.mxu0 %v1683
    %1695 = vmatprep.subr.mxu0 0.0
    %1696 = vmatpush1.msra.mxu0 %v1682
    %1697 = vmatprep.subr.mxu0 0.0
    %1698 = vmatpush1.msra.mxu0 %v1681
    %1699 = vmatprep.subr.mxu0 0.0
    %1700 = vmatpush1.msra.mxu0 %v1680
    %1701 = vmatprep.subr.mxu0 0.0
    %1702 = vmatpush1.msra.mxu0 %v1679
    %1703 = vmatprep.subr.mxu0 0.0
    %1704 = vmatpush1.msra.mxu0 %v1678
    %1705 = vmatprep.subr.mxu0 0.0
    %1706 = vmatpush1.msra.mxu0 %v1677
    %1707 = vmatprep.subr.mxu0 0.0
    %1708 = vmatpush1.msra.mxu0 %v1676
    %1709 = vmatprep.subr.mxu0 0.0
    %1710 = vmatpush1.msra.mxu0 %v1675
    %1711 = vmatprep.subr.mxu0 0.0
    %1712 = vmatpush1.msra.mxu0 %v1674
    %1713 = vmatprep.subr.mxu0 0.0
    %1714 = vmatpush1.msra.mxu0 %v1673
    %1715 = vmatprep.subr.mxu0 0.0
    %1716 = vmatpush1.msra.mxu0 %v1672
    %1717 = vmatprep.subr.mxu0 0.0
    %1718 = vmatpush1.msra.mxu0 %v1671
    %1719 = vmatprep.subr.mxu0 0.0
    %1720 = vmatpush2.msra.mxu0 0.0
    %1721 = vmatprep.subr.mxu0 0.0
    %1722 = vmatpush2.msra.mxu0 0.0
    %1723 = vmatprep.subr.mxu0 0.0
    %1724 = vmatpush2.msra.mxu0 0.0
    %1725 = vmatprep.subr.mxu0 0.0
    %1726 = vmatpush2.msra.mxu0 0.0
    %1727 = vmatprep.subr.mxu0 0.0
    %1728 = vmatpush2.msra.mxu0 0.0
    %1729 = vmatprep.subr.mxu0 0.0
    %1730 = vmatpush2.msra.mxu0 0.0
    %1731 = vmatprep.subr.mxu0 0.0
    %1732 = vmatpush2.msra.mxu0 0.0
    %1733 = vmatprep.subr.mxu0 0.0
    %1734 = vmatpush2.msra.mxu0 0.0
    %1735 = vmatprep.subr.mxu0 0.0
    %1736 = vmatpush2.msra.mxu0 0.0
    %1737 = vmatprep.subr.mxu0 0.0
    %1738 = vmatpush2.msra.mxu0 0.0
    %1739 = vmatprep.subr.mxu0 0.0
    %1740 = vmatpush2.msra.mxu0 0.0
    %1741 = vmatprep.subr.mxu0 0.0
    %1742 = vmatpush2.msra.mxu0 0.0
    %1743 = vmatprep.subr.mxu0 0.0
    %1744 = vmatpush2.msra.mxu0 0.0
    %1745 = vmatprep.subr.mxu0 0.0
    %1746 = vmatpush2.msra.mxu0 0.0
    %1747 = vmatprep.subr.mxu0 0.0
    %1748 = vmatpush2.msra.mxu0 0.0
    %1749 = vmatprep.subr.mxu0 0.0
    %1750 = vmatpush2.msra.mxu0 0.0
    %1751 = vmatprep.mubr.f32.mxu0 0.0
    %1752 = vmatmul.mubr.f32.gmra.mxu0 %v1295
    %v1753 = vpop.f32.mrf.mxu0
    %v1754 = vadd.f32 0.0, %v1753
    %v1755 = vpop.f32.mrf.mxu0
    %1756 = vmatprep.mubr.f32.mxu0 0.0
    %1757 = vmatmul.mubr.f32.gmra.mxu0 %v1296
    %v1758 = vpop.f32.mrf.mxu0
    %v1759 = vadd.f32 0.0, %v1758
    %v1760 = vpop.f32.mrf.mxu0
    %1761 = vmatprep.mubr.f32.mxu0 0.0
    %1762 = vmatmul.mubr.f32.gmra.mxu0 %v1297
    %v1763 = vpop.f32.mrf.mxu0
    %v1764 = vadd.f32 0.0, %v1763
    %v1765 = vpop.f32.mrf.mxu0
    %1766 = vmatprep.mubr.f32.mxu0 0.0
    %1767 = vmatmul.mubr.f32.gmra.mxu0 %v1298
    %v1768 = vpop.f32.mrf.mxu0
    %v1769 = vadd.f32 0.0, %v1768
    %v1770 = vpop.f32.mrf.mxu0
    %1771 = vdwg.mxu0
    %s1772 = scalar_lea.vmem [#allocation4], 32
    %v1773 = vld [vmem:[%s1772] sm:$0xff]
    %v1774 = vld [vmem:[%s1772 + $0x8] sm:$0xff]
    %v1776 = vsel %vm1507, %v1773, 0
    %v1779 = vsel %vm1507, %v1774, 0
    %1781 = vmatprep.subr.mxu0 0.0
    %1782 = vmatpush1.msra.mxu0 0.0
    %1783 = vmatprep.subr.mxu0 0.0
    %1784 = vmatpush1.msra.mxu0 0.0
    %1785 = vmatprep.subr.mxu0 0.0
    %1786 = vmatpush1.msra.mxu0 0.0
    %1787 = vmatprep.subr.mxu0 0.0
    %1788 = vmatpush1.msra.mxu0 0.0
    %1789 = vmatprep.subr.mxu0 0.0
    %1790 = vmatpush1.msra.mxu0 0.0
    %1791 = vmatprep.subr.mxu0 0.0
    %1792 = vmatpush1.msra.mxu0 0.0
    %1793 = vmatprep.subr.mxu0 0.0
    %1794 = vmatpush1.msra.mxu0 0.0
    %1795 = vmatprep.subr.mxu0 0.0
    %1796 = vmatpush1.msra.mxu0 0.0
    %1797 = vmatprep.subr.mxu0 0.0
    %1798 = vmatpush1.msra.mxu0 0.0
    %1799 = vmatprep.subr.mxu0 0.0
    %1800 = vmatpush1.msra.mxu0 0.0
    %1801 = vmatprep.subr.mxu0 0.0
    %1802 = vmatpush1.msra.mxu0 0.0
    %1803 = vmatprep.subr.mxu0 0.0
    %1804 = vmatpush1.msra.mxu0 0.0
    %1805 = vmatprep.subr.mxu0 0.0
    %1806 = vmatpush1.msra.mxu0 %v1769
    %1807 = vmatprep.subr.mxu0 0.0
    %1808 = vmatpush1.msra.mxu0 %v1764
    %1809 = vmatprep.subr.mxu0 0.0
    %1810 = vmatpush1.msra.mxu0 %v1759
    %1811 = vmatprep.subr.mxu0 0.0
    %1812 = vmatpush1.msra.mxu0 %v1754
    %1813 = vmatprep.subr.mxu0 0.0
    %1814 = vmatpush2.msra.mxu0 0.0
    %1815 = vmatprep.subr.mxu0 0.0
    %1816 = vmatpush2.msra.mxu0 0.0
    %1817 = vmatprep.subr.mxu0 0.0
    %1818 = vmatpush2.msra.mxu0 0.0
    %1819 = vmatprep.subr.mxu0 0.0
    %1820 = vmatpush2.msra.mxu0 0.0
    %1821 = vmatprep.subr.mxu0 0.0
    %1822 = vmatpush2.msra.mxu0 0.0
    %1823 = vmatprep.subr.mxu0 0.0
    %1824 = vmatpush2.msra.mxu0 0.0
    %1825 = vmatprep.subr.mxu0 0.0
    %1826 = vmatpush2.msra.mxu0 0.0
    %1827 = vmatprep.subr.mxu0 0.0
    %1828 = vmatpush2.msra.mxu0 0.0
    %1829 = vmatprep.subr.mxu0 0.0
    %1830 = vmatpush2.msra.mxu0 0.0
    %1831 = vmatprep.subr.mxu0 0.0
    %1832 = vmatpush2.msra.mxu0 0.0
    %1833 = vmatprep.subr.mxu0 0.0
    %1834 = vmatpush2.msra.mxu0 0.0
    %1835 = vmatprep.subr.mxu0 0.0
    %1836 = vmatpush2.msra.mxu0 0.0
    %1837 = vmatprep.subr.mxu0 0.0
    %1838 = vmatpush2.msra.mxu0 0.0
    %1839 = vmatprep.subr.mxu0 0.0
    %1840 = vmatpush2.msra.mxu0 0.0
    %1841 = vmatprep.subr.mxu0 0.0
    %1842 = vmatpush2.msra.mxu0 0.0
    %1843 = vmatprep.subr.mxu0 0.0
    %1844 = vmatpush2.msra.mxu0 0.0
    %1845 = vmatprep.mubr.f32.mxu0 0.0
    %1846 = vmatmul.mubr.f32.gmra.mxu0 %v1776
    %v1847 = vpop.f32.mrf.mxu0
    %v1848 = vadd.f32 0.0, %v1847
    %v1849 = vpop.f32.mrf.mxu0
    %1850 = vmatprep.mubr.f32.mxu0 0.0
    %1851 = vmatmul.mubr.f32.gmra.mxu0 %v1779
    %v1852 = vpop.f32.mrf.mxu0
    %v1853 = vadd.f32 0.0, %v1852
    %v1854 = vpop.f32.mrf.mxu0
    %1855 = vdwg.mxu0
    %v1856 = vadd.f32 %v1662, %v1848
    %v1857 = vadd.f32 %v1667, %v1853
    %s1858 = scalar_lea.vmem %s9, 384
    %v1859 = vld [vmem:[%s1858] sm:$0xff]
    %v1860 = vld [vmem:[%s1858 + $0x8] sm:$0xff]
    %v1861 = vld [vmem:[%s1858 + $0x10] sm:$0xff]
    %v1862 = vld [vmem:[%s1858 + $0x18] sm:$0xff]
    %v1863 = vld [vmem:[%s1858 + $0x20] sm:$0xff]
    %v1864 = vld [vmem:[%s1858 + $0x28] sm:$0xff]
    %v1865 = vld [vmem:[%s1858 + $0x30] sm:$0xff]
    %v1866 = vld [vmem:[%s1858 + $0x38] sm:$0xff]
    %v1867 = vld [vmem:[%s1858 + $0x40] sm:$0xff]
    %v1868 = vld [vmem:[%s1858 + $0x48] sm:$0xff]
    %v1869 = vld [vmem:[%s1858 + $0x50] sm:$0xff]
    %v1870 = vld [vmem:[%s1858 + $0x58] sm:$0xff]
    %v1871 = vld [vmem:[%s1858 + $0x60] sm:$0xff]
    %v1872 = vld [vmem:[%s1858 + $0x68] sm:$0xff]
    %v1873 = vld [vmem:[%s1858 + $0x70] sm:$0xff]
    %v1874 = vld [vmem:[%s1858 + $0x78] sm:$0xff]
    %1875 = vmatprep.subr.mxu0 0.0
    %1876 = vmatpush1.msra.mxu0 %v1874
    %1877 = vmatprep.subr.mxu0 0.0
    %1878 = vmatpush1.msra.mxu0 %v1873
    %1879 = vmatprep.subr.mxu0 0.0
    %1880 = vmatpush1.msra.mxu0 %v1872
    %1881 = vmatprep.subr.mxu0 0.0
    %1882 = vmatpush1.msra.mxu0 %v1871
    %1883 = vmatprep.subr.mxu0 0.0
    %1884 = vmatpush1.msra.mxu0 %v1870
    %1885 = vmatprep.subr.mxu0 0.0
    %1886 = vmatpush1.msra.mxu0 %v1869
    %1887 = vmatprep.subr.mxu0 0.0
    %1888 = vmatpush1.msra.mxu0 %v1868
    %1889 = vmatprep.subr.mxu0 0.0
    %1890 = vmatpush1.msra.mxu0 %v1867
    %1891 = vmatprep.subr.mxu0 0.0
    %1892 = vmatpush1.msra.mxu0 %v1866
    %1893 = vmatprep.subr.mxu0 0.0
    %1894 = vmatpush1.msra.mxu0 %v1865
    %1895 = vmatprep.subr.mxu0 0.0
    %1896 = vmatpush1.msra.mxu0 %v1864
    %1897 = vmatprep.subr.mxu0 0.0
    %1898 = vmatpush1.msra.mxu0 %v1863
    %1899 = vmatprep.subr.mxu0 0.0
    %1900 = vmatpush1.msra.mxu0 %v1862
    %1901 = vmatprep.subr.mxu0 0.0
    %1902 = vmatpush1.msra.mxu0 %v1861
    %1903 = vmatprep.subr.mxu0 0.0
    %1904 = vmatpush1.msra.mxu0 %v1860
    %1905 = vmatprep.subr.mxu0 0.0
    %1906 = vmatpush1.msra.mxu0 %v1859
    %1907 = vmatprep.subr.mxu0 0.0
    %1908 = vmatpush2.msra.mxu0 0.0
    %1909 = vmatprep.subr.mxu0 0.0
    %1910 = vmatpush2.msra.mxu0 0.0
    %1911 = vmatprep.subr.mxu0 0.0
    %1912 = vmatpush2.msra.mxu0 0.0
    %1913 = vmatprep.subr.mxu0 0.0
    %1914 = vmatpush2.msra.mxu0 0.0
    %1915 = vmatprep.subr.mxu0 0.0
    %1916 = vmatpush2.msra.mxu0 0.0
    %1917 = vmatprep.subr.mxu0 0.0
    %1918 = vmatpush2.msra.mxu0 0.0
    %1919 = vmatprep.subr.mxu0 0.0
    %1920 = vmatpush2.msra.mxu0 0.0
    %1921 = vmatprep.subr.mxu0 0.0
    %1922 = vmatpush2.msra.mxu0 0.0
    %1923 = vmatprep.subr.mxu0 0.0
    %1924 = vmatpush2.msra.mxu0 0.0
    %1925 = vmatprep.subr.mxu0 0.0
    %1926 = vmatpush2.msra.mxu0 0.0
    %1927 = vmatprep.subr.mxu0 0.0
    %1928 = vmatpush2.msra.mxu0 0.0
    %1929 = vmatprep.subr.mxu0 0.0
    %1930 = vmatpush2.msra.mxu0 0.0
    %1931 = vmatprep.subr.mxu0 0.0
    %1932 = vmatpush2.msra.mxu0 0.0
    %1933 = vmatprep.subr.mxu0 0.0
    %1934 = vmatpush2.msra.mxu0 0.0
    %1935 = vmatprep.subr.mxu0 0.0
    %1936 = vmatpush2.msra.mxu0 0.0
    %1937 = vmatprep.subr.mxu0 0.0
    %1938 = vmatpush2.msra.mxu0 0.0
    %1939 = vmatprep.mubr.f32.mxu0 0.0
    %1940 = vmatmul.mubr.f32.gmra.mxu0 %v1295
    %v1941 = vpop.f32.mrf.mxu0
    %v1942 = vadd.f32 0.0, %v1941
    %v1943 = vpop.f32.mrf.mxu0
    %1944 = vmatprep.mubr.f32.mxu0 0.0
    %1945 = vmatmul.mubr.f32.gmra.mxu0 %v1296
    %v1946 = vpop.f32.mrf.mxu0
    %v1947 = vadd.f32 0.0, %v1946
    %v1948 = vpop.f32.mrf.mxu0
    %1949 = vmatprep.mubr.f32.mxu0 0.0
    %1950 = vmatmul.mubr.f32.gmra.mxu0 %v1297
    %v1951 = vpop.f32.mrf.mxu0
    %v1952 = vadd.f32 0.0, %v1951
    %v1953 = vpop.f32.mrf.mxu0
    %1954 = vmatprep.mubr.f32.mxu0 0.0
    %1955 = vmatmul.mubr.f32.gmra.mxu0 %v1298
    %v1956 = vpop.f32.mrf.mxu0
    %v1957 = vadd.f32 0.0, %v1956
    %v1958 = vpop.f32.mrf.mxu0
    %1959 = vdwg.mxu0
    %s1960 = scalar_lea.vmem [#allocation4], 48
    %v1961 = vld [vmem:[%s1960] sm:$0xff]
    %v1962 = vld [vmem:[%s1960 + $0x8] sm:$0xff]
    %v1964 = vsel %vm1507, %v1961, 0
    %v1967 = vsel %vm1507, %v1962, 0
    %1969 = vmatprep.subr.mxu0 0.0
    %1970 = vmatpush1.msra.mxu0 0.0
    %1971 = vmatprep.subr.mxu0 0.0
    %1972 = vmatpush1.msra.mxu0 0.0
    %1973 = vmatprep.subr.mxu0 0.0
    %1974 = vmatpush1.msra.mxu0 0.0
    %1975 = vmatprep.subr.mxu0 0.0
    %1976 = vmatpush1.msra.mxu0 0.0
    %1977 = vmatprep.subr.mxu0 0.0
    %1978 = vmatpush1.msra.mxu0 0.0
    %1979 = vmatprep.subr.mxu0 0.0
    %1980 = vmatpush1.msra.mxu0 0.0
    %1981 = vmatprep.subr.mxu0 0.0
    %1982 = vmatpush1.msra.mxu0 0.0
    %1983 = vmatprep.subr.mxu0 0.0
    %1984 = vmatpush1.msra.mxu0 0.0
    %1985 = vmatprep.subr.mxu0 0.0
    %1986 = vmatpush1.msra.mxu0 0.0
    %1987 = vmatprep.subr.mxu0 0.0
    %1988 = vmatpush1.msra.mxu0 0.0
    %1989 = vmatprep.subr.mxu0 0.0
    %1990 = vmatpush1.msra.mxu0 0.0
    %1991 = vmatprep.subr.mxu0 0.0
    %1992 = vmatpush1.msra.mxu0 0.0
    %1993 = vmatprep.subr.mxu0 0.0
    %1994 = vmatpush1.msra.mxu0 %v1957
    %1995 = vmatprep.subr.mxu0 0.0
    %1996 = vmatpush1.msra.mxu0 %v1952
    %1997 = vmatprep.subr.mxu0 0.0
    %1998 = vmatpush1.msra.mxu0 %v1947
    %1999 = vmatprep.subr.mxu0 0.0
    %2000 = vmatpush1.msra.mxu0 %v1942
    %2001 = vmatprep.subr.mxu0 0.0
    %2002 = vmatpush2.msra.mxu0 0.0
    %2003 = vmatprep.subr.mxu0 0.0
    %2004 = vmatpush2.msra.mxu0 0.0
    %2005 = vmatprep.subr.mxu0 0.0
    %2006 = vmatpush2.msra.mxu0 0.0
    %2007 = vmatprep.subr.mxu0 0.0
    %2008 = vmatpush2.msra.mxu0 0.0
    %2009 = vmatprep.subr.mxu0 0.0
    %2010 = vmatpush2.msra.mxu0 0.0
    %2011 = vmatprep.subr.mxu0 0.0
    %2012 = vmatpush2.msra.mxu0 0.0
    %2013 = vmatprep.subr.mxu0 0.0
    %2014 = vmatpush2.msra.mxu0 0.0
    %2015 = vmatprep.subr.mxu0 0.0
    %2016 = vmatpush2.msra.mxu0 0.0
    %2017 = vmatprep.subr.mxu0 0.0
    %2018 = vmatpush2.msra.mxu0 0.0
    %2019 = vmatprep.subr.mxu0 0.0
    %2020 = vmatpush2.msra.mxu0 0.0
    %2021 = vmatprep.subr.mxu0 0.0
    %2022 = vmatpush2.msra.mxu0 0.0
    %2023 = vmatprep.subr.mxu0 0.0
    %2024 = vmatpush2.msra.mxu0 0.0
    %2025 = vmatprep.subr.mxu0 0.0
    %2026 = vmatpush2.msra.mxu0 0.0
    %2027 = vmatprep.subr.mxu0 0.0
    %2028 = vmatpush2.msra.mxu0 0.0
    %2029 = vmatprep.subr.mxu0 0.0
    %2030 = vmatpush2.msra.mxu0 0.0
    %2031 = vmatprep.subr.mxu0 0.0
    %2032 = vmatpush2.msra.mxu0 0.0
    %2033 = vmatprep.mubr.f32.mxu0 0.0
    %2034 = vmatmul.mubr.f32.gmra.mxu0 %v1964
    %v2035 = vpop.f32.mrf.mxu0
    %v2036 = vadd.f32 0.0, %v2035
    %v2037 = vpop.f32.mrf.mxu0
    %2038 = vmatprep.mubr.f32.mxu0 0.0
    %2039 = vmatmul.mubr.f32.gmra.mxu0 %v1967
    %v2040 = vpop.f32.mrf.mxu0
    %v2041 = vadd.f32 0.0, %v2040
    %v2042 = vpop.f32.mrf.mxu0
    %2043 = vdwg.mxu0
    %v2044 = vadd.f32 %v1856, %v2036
    %v2045 = vadd.f32 %v1857, %v2041
    %v2046 = vadd.f32 %v2044, %v2045
    %v2047 = vrot.slane %v2046, 4
    %v2048 = vadd.f32 %v2046, %v2047
    %v2049 = vrot.slane %v2048, 2
    %v2050 = vadd.f32 %v2048, %v2049
    %v2051 = vrot.slane %v2050, 1
    %v2052 = vadd.f32 %v2050, %v2051
    %v2053 = vmul.f32 %v2044, %v2044
    %v2054 = vmul.f32 %v2045, %v2045
    %v2055 = vadd.f32 %v2053, %v2054
    %v2056 = vrot.slane %v2055, 4
    %v2057 = vadd.f32 %v2055, %v2056
    %v2058 = vrot.slane %v2057, 2
    %v2059 = vadd.f32 %v2057, %v2058
    %v2060 = vrot.slane %v2059, 1
    %v2061 = vadd.f32 %v2059, %v2060
    %v2062 = vld [vmem:[%s29] sm:$0xff]
    %v2063 = vld [vmem:[%s29 + $0x8] sm:$0xff]
    %v2064 = vld [vmem:[%s29 + $0x10] sm:$0xff]
    %v2065 = vld [vmem:[%s29 + $0x18] sm:$0xff]
    %v2066 = vld [vmem:[%s29 + $0x20] sm:$0xff]
    %v2067 = vld [vmem:[%s29 + $0x28] sm:$0xff]
    %v2068 = vld [vmem:[%s29 + $0x30] sm:$0xff]
    %v2069 = vld [vmem:[%s29 + $0x38] sm:$0xff]
    %v2070 = vld [vmem:[%s29 + $0x40] sm:$0xff]
    %v2071 = vld [vmem:[%s29 + $0x48] sm:$0xff]
    %v2072 = vld [vmem:[%s29 + $0x50] sm:$0xff]
    %v2073 = vld [vmem:[%s29 + $0x58] sm:$0xff]
    %v2074 = vld [vmem:[%s29 + $0x60] sm:$0xff]
    %v2075 = vld [vmem:[%s29 + $0x68] sm:$0xff]
    %v2076 = vld [vmem:[%s29 + $0x70] sm:$0xff]
    %v2077 = vld [vmem:[%s29 + $0x78] sm:$0xff]
    %2078 = vmatprep.subr.mxu0 0.0
    %2079 = vmatpush1.msra.mxu0 %v2077
    %2080 = vmatprep.subr.mxu0 0.0
    %2081 = vmatpush1.msra.mxu0 %v2076
    %2082 = vmatprep.subr.mxu0 0.0
    %2083 = vmatpush1.msra.mxu0 %v2075
    %2084 = vmatprep.subr.mxu0 0.0
    %2085 = vmatpush1.msra.mxu0 %v2074
    %2086 = vmatprep.subr.mxu0 0.0
    %2087 = vmatpush1.msra.mxu0 %v2073
    %2088 = vmatprep.subr.mxu0 0.0
    %2089 = vmatpush1.msra.mxu0 %v2072
    %2090 = vmatprep.subr.mxu0 0.0
    %2091 = vmatpush1.msra.mxu0 %v2071
    %2092 = vmatprep.subr.mxu0 0.0
    %2093 = vmatpush1.msra.mxu0 %v2070
    %2094 = vmatprep.subr.mxu0 0.0
    %2095 = vmatpush1.msra.mxu0 %v2069
    %2096 = vmatprep.subr.mxu0 0.0
    %2097 = vmatpush1.msra.mxu0 %v2068
    %2098 = vmatprep.subr.mxu0 0.0
    %2099 = vmatpush1.msra.mxu0 %v2067
    %2100 = vmatprep.subr.mxu0 0.0
    %2101 = vmatpush1.msra.mxu0 %v2066
    %2102 = vmatprep.subr.mxu0 0.0
    %2103 = vmatpush1.msra.mxu0 %v2065
    %2104 = vmatprep.subr.mxu0 0.0
    %2105 = vmatpush1.msra.mxu0 %v2064
    %2106 = vmatprep.subr.mxu0 0.0
    %2107 = vmatpush1.msra.mxu0 %v2063
    %2108 = vmatprep.subr.mxu0 0.0
    %2109 = vmatpush1.msra.mxu0 %v2062
    %2110 = vmatprep.subr.mxu0 0.0
    %2111 = vmatpush2.msra.mxu0 0.0
    %2112 = vmatprep.subr.mxu0 0.0
    %2113 = vmatpush2.msra.mxu0 0.0
    %2114 = vmatprep.subr.mxu0 0.0
    %2115 = vmatpush2.msra.mxu0 0.0
    %2116 = vmatprep.subr.mxu0 0.0
    %2117 = vmatpush2.msra.mxu0 0.0
    %2118 = vmatprep.subr.mxu0 0.0
    %2119 = vmatpush2.msra.mxu0 0.0
    %2120 = vmatprep.subr.mxu0 0.0
    %2121 = vmatpush2.msra.mxu0 0.0
    %2122 = vmatprep.subr.mxu0 0.0
    %2123 = vmatpush2.msra.mxu0 0.0
    %2124 = vmatprep.subr.mxu0 0.0
    %2125 = vmatpush2.msra.mxu0 0.0
    %2126 = vmatprep.subr.mxu0 0.0
    %2127 = vmatpush2.msra.mxu0 0.0
    %2128 = vmatprep.subr.mxu0 0.0
    %2129 = vmatpush2.msra.mxu0 0.0
    %2130 = vmatprep.subr.mxu0 0.0
    %2131 = vmatpush2.msra.mxu0 0.0
    %2132 = vmatprep.subr.mxu0 0.0
    %2133 = vmatpush2.msra.mxu0 0.0
    %2134 = vmatprep.subr.mxu0 0.0
    %2135 = vmatpush2.msra.mxu0 0.0
    %2136 = vmatprep.subr.mxu0 0.0
    %2137 = vmatpush2.msra.mxu0 0.0
    %2138 = vmatprep.subr.mxu0 0.0
    %2139 = vmatpush2.msra.mxu0 0.0
    %2140 = vmatprep.subr.mxu0 0.0
    %2141 = vmatpush2.msra.mxu0 0.0
    %2142 = vmatprep.mubr.f32.mxu0 0.0
    %2143 = vmatmul.mubr.f32.gmra.mxu0 %v2052
    %v2144 = vpop.f32.mrf.mxu0
    %v2145 = vadd.f32 0.0, %v2144
    %v2146 = vpop.f32.mrf.mxu0
    %2147 = vdwg.mxu0
    %2148 = vmatprep.subr.mxu0 0.0
    %2149 = vmatpush1.msra.mxu0 %v2077
    %2150 = vmatprep.subr.mxu0 0.0
    %2151 = vmatpush1.msra.mxu0 %v2076
    %2152 = vmatprep.subr.mxu0 0.0
    %2153 = vmatpush1.msra.mxu0 %v2075
    %2154 = vmatprep.subr.mxu0 0.0
    %2155 = vmatpush1.msra.mxu0 %v2074
    %2156 = vmatprep.subr.mxu0 0.0
    %2157 = vmatpush1.msra.mxu0 %v2073
    %2158 = vmatprep.subr.mxu0 0.0
    %2159 = vmatpush1.msra.mxu0 %v2072
    %2160 = vmatprep.subr.mxu0 0.0
    %2161 = vmatpush1.msra.mxu0 %v2071
    %2162 = vmatprep.subr.mxu0 0.0
    %2163 = vmatpush1.msra.mxu0 %v2070
    %2164 = vmatprep.subr.mxu0 0.0
    %2165 = vmatpush1.msra.mxu0 %v2069
    %2166 = vmatprep.subr.mxu0 0.0
    %2167 = vmatpush1.msra.mxu0 %v2068
    %2168 = vmatprep.subr.mxu0 0.0
    %2169 = vmatpush1.msra.mxu0 %v2067
    %2170 = vmatprep.subr.mxu0 0.0
    %2171 = vmatpush1.msra.mxu0 %v2066
    %2172 = vmatprep.subr.mxu0 0.0
    %2173 = vmatpush1.msra.mxu0 %v2065
    %2174 = vmatprep.subr.mxu0 0.0
    %2175 = vmatpush1.msra.mxu0 %v2064
    %2176 = vmatprep.subr.mxu0 0.0
    %2177 = vmatpush1.msra.mxu0 %v2063
    %2178 = vmatprep.subr.mxu0 0.0
    %2179 = vmatpush1.msra.mxu0 %v2062
    %2180 = vmatprep.subr.mxu0 0.0
    %2181 = vmatpush2.msra.mxu0 0.0
    %2182 = vmatprep.subr.mxu0 0.0
    %2183 = vmatpush2.msra.mxu0 0.0
    %2184 = vmatprep.subr.mxu0 0.0
    %2185 = vmatpush2.msra.mxu0 0.0
    %2186 = vmatprep.subr.mxu0 0.0
    %2187 = vmatpush2.msra.mxu0 0.0
    %2188 = vmatprep.subr.mxu0 0.0
    %2189 = vmatpush2.msra.mxu0 0.0
    %2190 = vmatprep.subr.mxu0 0.0
    %2191 = vmatpush2.msra.mxu0 0.0
    %2192 = vmatprep.subr.mxu0 0.0
    %2193 = vmatpush2.msra.mxu0 0.0
    %2194 = vmatprep.subr.mxu0 0.0
    %2195 = vmatpush2.msra.mxu0 0.0
    %2196 = vmatprep.subr.mxu0 0.0
    %2197 = vmatpush2.msra.mxu0 0.0
    %2198 = vmatprep.subr.mxu0 0.0
    %2199 = vmatpush2.msra.mxu0 0.0
    %2200 = vmatprep.subr.mxu0 0.0
    %2201 = vmatpush2.msra.mxu0 0.0
    %2202 = vmatprep.subr.mxu0 0.0
    %2203 = vmatpush2.msra.mxu0 0.0
    %2204 = vmatprep.subr.mxu0 0.0
    %2205 = vmatpush2.msra.mxu0 0.0
    %2206 = vmatprep.subr.mxu0 0.0
    %2207 = vmatpush2.msra.mxu0 0.0
    %2208 = vmatprep.subr.mxu0 0.0
    %2209 = vmatpush2.msra.mxu0 0.0
    %2210 = vmatprep.subr.mxu0 0.0
    %2211 = vmatpush2.msra.mxu0 0.0
    %2212 = vmatprep.mubr.f32.mxu0 0.0
    %2213 = vmatmul.mubr.f32.gmra.mxu0 %v2061
    %v2214 = vpop.f32.mrf.mxu0
    %v2215 = vadd.f32 0.0, %v2214
    %v2216 = vpop.f32.mrf.mxu0
    %2217 = vdwg.mxu0
    %v2218 = vmul.f32 %v2145, 0.0078125
    %v2219 = vmul.f32 %v2215, 0.0078125
    %v2220 = vmul.f32 %v2218, %v2218
    %v2221 = vsub.f32 %v2219, %v2220
    %v2222 = vadd.f32 %v2221, 1e-05
    %v2223 = vrsqrt.pop %v2222
    %v2224 = vld [vmem:[%s25] sm:$0x1]
    %v2225 = vmul.f32 %v2224, %v2223
    %v2226 = vld [vmem:[#allocation13] sm:$0x1]
    %v2227 = vmul.f32 %v2218, %v2225
    %v2228 = vsub.f32 %v2226, %v2227
    %v2229 = vld [vmem:[#allocation15] sm:$0xff]
    %v2230 = vld [vmem:[#allocation15 + $0x8] sm:$0xff]
    %vm2231 = vcmask 130048
    %v2233 = vsel %vm2231, %v2225, 0
    %2235 = vmatprep.subr.mxu0 0.0
    %2236 = vmatpush1.msra.mxu0 0.0
    %2237 = vmatprep.subr.mxu0 0.0
    %2238 = vmatpush1.msra.mxu0 0.0
    %2239 = vmatprep.subr.mxu0 0.0
    %2240 = vmatpush1.msra.mxu0 0.0
    %2241 = vmatprep.subr.mxu0 0.0
    %2242 = vmatpush1.msra.mxu0 0.0
    %2243 = vmatprep.subr.mxu0 0.0
    %2244 = vmatpush1.msra.mxu0 0.0
    %2245 = vmatprep.subr.mxu0 0.0
    %2246 = vmatpush1.msra.mxu0 0.0
    %2247 = vmatprep.subr.mxu0 0.0
    %2248 = vmatpush1.msra.mxu0 0.0
    %2249 = vmatprep.subr.mxu0 0.0
    %2250 = vmatpush1.msra.mxu0 0.0
    %2251 = vmatprep.subr.mxu0 0.0
    %2252 = vmatpush1.msra.mxu0 0.0
    %2253 = vmatprep.subr.mxu0 0.0
    %2254 = vmatpush1.msra.mxu0 0.0
    %2255 = vmatprep.subr.mxu0 0.0
    %2256 = vmatpush1.msra.mxu0 0.0
    %2257 = vmatprep.subr.mxu0 0.0
    %2258 = vmatpush1.msra.mxu0 0.0
    %2259 = vmatprep.subr.mxu0 0.0
    %2260 = vmatpush1.msra.mxu0 0.0
    %2261 = vmatprep.subr.mxu0 0.0
    %2262 = vmatpush1.msra.mxu0 0.0
    %2263 = vmatprep.subr.mxu0 0.0
    %2264 = vmatpush1.msra.mxu0 %v2230
    %2265 = vmatprep.subr.mxu0 0.0
    %2266 = vmatpush1.msra.mxu0 %v2229
    %2267 = vmatprep.subr.mxu0 0.0
    %2268 = vmatpush2.msra.mxu0 0.0
    %2269 = vmatprep.subr.mxu0 0.0
    %2270 = vmatpush2.msra.mxu0 0.0
    %2271 = vmatprep.subr.mxu0 0.0
    %2272 = vmatpush2.msra.mxu0 0.0
    %2273 = vmatprep.subr.mxu0 0.0
    %2274 = vmatpush2.msra.mxu0 0.0
    %2275 = vmatprep.subr.mxu0 0.0
    %2276 = vmatpush2.msra.mxu0 0.0
    %2277 = vmatprep.subr.mxu0 0.0
    %2278 = vmatpush2.msra.mxu0 0.0
    %2279 = vmatprep.subr.mxu0 0.0
    %2280 = vmatpush2.msra.mxu0 0.0
    %2281 = vmatprep.subr.mxu0 0.0
    %2282 = vmatpush2.msra.mxu0 0.0
    %2283 = vmatprep.subr.mxu0 0.0
    %2284 = vmatpush2.msra.mxu0 0.0
    %2285 = vmatprep.subr.mxu0 0.0
    %2286 = vmatpush2.msra.mxu0 0.0
    %2287 = vmatprep.subr.mxu0 0.0
    %2288 = vmatpush2.msra.mxu0 0.0
    %2289 = vmatprep.subr.mxu0 0.0
    %2290 = vmatpush2.msra.mxu0 0.0
    %2291 = vmatprep.subr.mxu0 0.0
    %2292 = vmatpush2.msra.mxu0 0.0
    %2293 = vmatprep.subr.mxu0 0.0
    %2294 = vmatpush2.msra.mxu0 0.0
    %2295 = vmatprep.subr.mxu0 0.0
    %2296 = vmatpush2.msra.mxu0 0.0
    %2297 = vmatprep.subr.mxu0 0.0
    %2298 = vmatpush2.msra.mxu0 0.0
    %2299 = vmatprep.mubr.f32.mxu0 0.0
    %2300 = vmatmul.mubr.f32.gmra.mxu0 %v2233
    %v2301 = vpop.f32.mrf.mxu0
    %v2302 = vadd.f32 0.0, %v2301
    %v2303 = vpop.f32.mrf.mxu0
    %2304 = vdwg.mxu0
    %v2306 = vsel %vm2231, %v2228, 0
    %2308 = vmatprep.subr.mxu0 0.0
    %2309 = vmatpush1.msra.mxu0 0.0
    %2310 = vmatprep.subr.mxu0 0.0
    %2311 = vmatpush1.msra.mxu0 0.0
    %2312 = vmatprep.subr.mxu0 0.0
    %2313 = vmatpush1.msra.mxu0 0.0
    %2314 = vmatprep.subr.mxu0 0.0
    %2315 = vmatpush1.msra.mxu0 0.0
    %2316 = vmatprep.subr.mxu0 0.0
    %2317 = vmatpush1.msra.mxu0 0.0
    %2318 = vmatprep.subr.mxu0 0.0
    %2319 = vmatpush1.msra.mxu0 0.0
    %2320 = vmatprep.subr.mxu0 0.0
    %2321 = vmatpush1.msra.mxu0 0.0
    %2322 = vmatprep.subr.mxu0 0.0
    %2323 = vmatpush1.msra.mxu0 0.0
    %2324 = vmatprep.subr.mxu0 0.0
    %2325 = vmatpush1.msra.mxu0 0.0
    %2326 = vmatprep.subr.mxu0 0.0
    %2327 = vmatpush1.msra.mxu0 0.0
    %2328 = vmatprep.subr.mxu0 0.0
    %2329 = vmatpush1.msra.mxu0 0.0
    %2330 = vmatprep.subr.mxu0 0.0
    %2331 = vmatpush1.msra.mxu0 0.0
    %2332 = vmatprep.subr.mxu0 0.0
    %2333 = vmatpush1.msra.mxu0 0.0
    %2334 = vmatprep.subr.mxu0 0.0
    %2335 = vmatpush1.msra.mxu0 0.0
    %2336 = vmatprep.subr.mxu0 0.0
    %2337 = vmatpush1.msra.mxu0 %v2230
    %2338 = vmatprep.subr.mxu0 0.0
    %2339 = vmatpush1.msra.mxu0 %v2229
    %2340 = vmatprep.subr.mxu0 0.0
    %2341 = vmatpush2.msra.mxu0 0.0
    %2342 = vmatprep.subr.mxu0 0.0
    %2343 = vmatpush2.msra.mxu0 0.0
    %2344 = vmatprep.subr.mxu0 0.0
    %2345 = vmatpush2.msra.mxu0 0.0
    %2346 = vmatprep.subr.mxu0 0.0
    %2347 = vmatpush2.msra.mxu0 0.0
    %2348 = vmatprep.subr.mxu0 0.0
    %2349 = vmatpush2.msra.mxu0 0.0
    %2350 = vmatprep.subr.mxu0 0.0
    %2351 = vmatpush2.msra.mxu0 0.0
    %2352 = vmatprep.subr.mxu0 0.0
    %2353 = vmatpush2.msra.mxu0 0.0
    %2354 = vmatprep.subr.mxu0 0.0
    %2355 = vmatpush2.msra.mxu0 0.0
    %2356 = vmatprep.subr.mxu0 0.0
    %2357 = vmatpush2.msra.mxu0 0.0
    %2358 = vmatprep.subr.mxu0 0.0
    %2359 = vmatpush2.msra.mxu0 0.0
    %2360 = vmatprep.subr.mxu0 0.0
    %2361 = vmatpush2.msra.mxu0 0.0
    %2362 = vmatprep.subr.mxu0 0.0
    %2363 = vmatpush2.msra.mxu0 0.0
    %2364 = vmatprep.subr.mxu0 0.0
    %2365 = vmatpush2.msra.mxu0 0.0
    %2366 = vmatprep.subr.mxu0 0.0
    %2367 = vmatpush2.msra.mxu0 0.0
    %2368 = vmatprep.subr.mxu0 0.0
    %2369 = vmatpush2.msra.mxu0 0.0
    %2370 = vmatprep.subr.mxu0 0.0
    %2371 = vmatpush2.msra.mxu0 0.0
    %2372 = vmatprep.mubr.f32.mxu0 0.0
    %2373 = vmatmul.mubr.f32.gmra.mxu0 %v2306
    %v2374 = vpop.f32.mrf.mxu0
    %v2375 = vadd.f32 0.0, %v2374
    %v2376 = vpop.f32.mrf.mxu0
    %2377 = vdwg.mxu0
    %v2378 = vlaneseq
    %v2379 = vshrl.u32 %v2378, 7
    %v2380 = vsub.s32 0, %v2379
    %v2381 = vrot.slane %v2302, %v2380
    %v2382 = vmul.f32 %v2044, %v2381
    %v2383 = vmul.f32 %v2045, %v2381
    %v2384 = vlaneseq
    %v2385 = vshrl.u32 %v2384, 7
    %v2386 = vsub.s32 0, %v2385
    %v2387 = vrot.slane %v2375, %v2386
    %v2388 = vadd.f32 %v2382, %v2387
    %v2389 = vadd.f32 %v2383, %v2387
    %vm2390 = vcmp.gt.f32.partialorder %v2388, 0.0
    %vm2391 = vcmp.gt.f32.partialorder %v2389, 0.0
    %v2392 = vmul.f32 %v2388, 0.2
    %v2393 = vmul.f32 %v2389, 0.2
    %v2394 = vsel %vm2390, %v2388, %v2392
    %v2395 = vsel %vm2391, %v2389, %v2393
    %v2396 = vld [vmem:[%s13] sm:$0xff]
    %v2397 = vld [vmem:[%s13 + $0x8] sm:$0xff]
    %v2398 = vld [vmem:[%s13 + $0x10] sm:$0xff]
    %v2399 = vld [vmem:[%s13 + $0x18] sm:$0xff]
    %v2400 = vld [vmem:[%s13 + $0x20] sm:$0xff]
    %v2401 = vld [vmem:[%s13 + $0x28] sm:$0xff]
    %v2402 = vld [vmem:[%s13 + $0x30] sm:$0xff]
    %v2403 = vld [vmem:[%s13 + $0x38] sm:$0xff]
    %v2404 = vld [vmem:[%s13 + $0x40] sm:$0xff]
    %v2405 = vld [vmem:[%s13 + $0x48] sm:$0xff]
    %v2406 = vld [vmem:[%s13 + $0x50] sm:$0xff]
    %v2407 = vld [vmem:[%s13 + $0x58] sm:$0xff]
    %v2408 = vld [vmem:[%s13 + $0x60] sm:$0xff]
    %v2409 = vld [vmem:[%s13 + $0x68] sm:$0xff]
    %v2410 = vld [vmem:[%s13 + $0x70] sm:$0xff]
    %v2411 = vld [vmem:[%s13 + $0x78] sm:$0xff]
    %2412 = vmatprep.subr.mxu0 0.0
    %2413 = vmatpush1.msra.mxu0 %v2411
    %2414 = vmatprep.subr.mxu0 0.0
    %2415 = vmatpush1.msra.mxu0 %v2410
    %2416 = vmatprep.subr.mxu0 0.0
    %2417 = vmatpush1.msra.mxu0 %v2409
    %2418 = vmatprep.subr.mxu0 0.0
    %2419 = vmatpush1.msra.mxu0 %v2408
    %2420 = vmatprep.subr.mxu0 0.0
    %2421 = vmatpush1.msra.mxu0 %v2407
    %2422 = vmatprep.subr.mxu0 0.0
    %2423 = vmatpush1.msra.mxu0 %v2406
    %2424 = vmatprep.subr.mxu0 0.0
    %2425 = vmatpush1.msra.mxu0 %v2405
    %2426 = vmatprep.subr.mxu0 0.0
    %2427 = vmatpush1.msra.mxu0 %v2404
    %2428 = vmatprep.subr.mxu0 0.0
    %2429 = vmatpush1.msra.mxu0 %v2403
    %2430 = vmatprep.subr.mxu0 0.0
    %2431 = vmatpush1.msra.mxu0 %v2402
    %2432 = vmatprep.subr.mxu0 0.0
    %2433 = vmatpush1.msra.mxu0 %v2401
    %2434 = vmatprep.subr.mxu0 0.0
    %2435 = vmatpush1.msra.mxu0 %v2400
    %2436 = vmatprep.subr.mxu0 0.0
    %2437 = vmatpush1.msra.mxu0 %v2399
    %2438 = vmatprep.subr.mxu0 0.0
    %2439 = vmatpush1.msra.mxu0 %v2398
    %2440 = vmatprep.subr.mxu0 0.0
    %2441 = vmatpush1.msra.mxu0 %v2397
    %2442 = vmatprep.subr.mxu0 0.0
    %2443 = vmatpush1.msra.mxu0 %v2396
    %2444 = vmatprep.subr.mxu0 0.0
    %2445 = vmatpush2.msra.mxu0 0.0
    %2446 = vmatprep.subr.mxu0 0.0
    %2447 = vmatpush2.msra.mxu0 0.0
    %2448 = vmatprep.subr.mxu0 0.0
    %2449 = vmatpush2.msra.mxu0 0.0
    %2450 = vmatprep.subr.mxu0 0.0
    %2451 = vmatpush2.msra.mxu0 0.0
    %2452 = vmatprep.subr.mxu0 0.0
    %2453 = vmatpush2.msra.mxu0 0.0
    %2454 = vmatprep.subr.mxu0 0.0
    %2455 = vmatpush2.msra.mxu0 0.0
    %2456 = vmatprep.subr.mxu0 0.0
    %2457 = vmatpush2.msra.mxu0 0.0
    %2458 = vmatprep.subr.mxu0 0.0
    %2459 = vmatpush2.msra.mxu0 0.0
    %2460 = vmatprep.subr.mxu0 0.0
    %2461 = vmatpush2.msra.mxu0 0.0
    %2462 = vmatprep.subr.mxu0 0.0
    %2463 = vmatpush2.msra.mxu0 0.0
    %2464 = vmatprep.subr.mxu0 0.0
    %2465 = vmatpush2.msra.mxu0 0.0
    %2466 = vmatprep.subr.mxu0 0.0
    %2467 = vmatpush2.msra.mxu0 0.0
    %2468 = vmatprep.subr.mxu0 0.0
    %2469 = vmatpush2.msra.mxu0 0.0
    %2470 = vmatprep.subr.mxu0 0.0
    %2471 = vmatpush2.msra.mxu0 0.0
    %2472 = vmatprep.subr.mxu0 0.0
    %2473 = vmatpush2.msra.mxu0 0.0
    %2474 = vmatprep.subr.mxu0 0.0
    %2475 = vmatpush2.msra.mxu0 0.0
    %2476 = vmatprep.mubr.f32.mxu0 0.0
    %2477 = vmatmul.mubr.f32.gmra.mxu0 %v2394
    %v2478 = vpop.f32.mrf.mxu0
    %v2479 = vadd.f32 0.0, %v2478
    %v2480 = vpop.f32.mrf.mxu0
    %2481 = vmatprep.mubr.f32.mxu0 0.0
    %2482 = vmatmul.mubr.f32.gmra.mxu0 %v2395
    %v2483 = vpop.f32.mrf.mxu0
    %v2484 = vadd.f32 0.0, %v2483
    %v2485 = vpop.f32.mrf.mxu0
    %2486 = vdwg.mxu0
    %v2487 = vld [vmem:[#allocation6] sm:$0xff]
    %s2488 = scalar_lea.vmem %s13, 128
    %v2489 = vld [vmem:[%s2488] sm:$0xff]
    %v2490 = vld [vmem:[%s2488 + $0x8] sm:$0xff]
    %v2491 = vld [vmem:[%s2488 + $0x10] sm:$0xff]
    %v2492 = vld [vmem:[%s2488 + $0x18] sm:$0xff]
    %v2493 = vld [vmem:[%s2488 + $0x20] sm:$0xff]
    %v2494 = vld [vmem:[%s2488 + $0x28] sm:$0xff]
    %v2495 = vld [vmem:[%s2488 + $0x30] sm:$0xff]
    %v2496 = vld [vmem:[%s2488 + $0x38] sm:$0xff]
    %v2497 = vld [vmem:[%s2488 + $0x40] sm:$0xff]
    %v2498 = vld [vmem:[%s2488 + $0x48] sm:$0xff]
    %v2499 = vld [vmem:[%s2488 + $0x50] sm:$0xff]
    %v2500 = vld [vmem:[%s2488 + $0x58] sm:$0xff]
    %v2501 = vld [vmem:[%s2488 + $0x60] sm:$0xff]
    %v2502 = vld [vmem:[%s2488 + $0x68] sm:$0xff]
    %v2503 = vld [vmem:[%s2488 + $0x70] sm:$0xff]
    %v2504 = vld [vmem:[%s2488 + $0x78] sm:$0xff]
    %2505 = vmatprep.subr.mxu0 0.0
    %2506 = vmatpush1.msra.mxu0 %v2504
    %2507 = vmatprep.subr.mxu0 0.0
    %2508 = vmatpush1.msra.mxu0 %v2503
    %2509 = vmatprep.subr.mxu0 0.0
    %2510 = vmatpush1.msra.mxu0 %v2502
    %2511 = vmatprep.subr.mxu0 0.0
    %2512 = vmatpush1.msra.mxu0 %v2501
    %2513 = vmatprep.subr.mxu0 0.0
    %2514 = vmatpush1.msra.mxu0 %v2500
    %2515 = vmatprep.subr.mxu0 0.0
    %2516 = vmatpush1.msra.mxu0 %v2499
    %2517 = vmatprep.subr.mxu0 0.0
    %2518 = vmatpush1.msra.mxu0 %v2498
    %2519 = vmatprep.subr.mxu0 0.0
    %2520 = vmatpush1.msra.mxu0 %v2497
    %2521 = vmatprep.subr.mxu0 0.0
    %2522 = vmatpush1.msra.mxu0 %v2496
    %2523 = vmatprep.subr.mxu0 0.0
    %2524 = vmatpush1.msra.mxu0 %v2495
    %2525 = vmatprep.subr.mxu0 0.0
    %2526 = vmatpush1.msra.mxu0 %v2494
    %2527 = vmatprep.subr.mxu0 0.0
    %2528 = vmatpush1.msra.mxu0 %v2493
    %2529 = vmatprep.subr.mxu0 0.0
    %2530 = vmatpush1.msra.mxu0 %v2492
    %2531 = vmatprep.subr.mxu0 0.0
    %2532 = vmatpush1.msra.mxu0 %v2491
    %2533 = vmatprep.subr.mxu0 0.0
    %2534 = vmatpush1.msra.mxu0 %v2490
    %2535 = vmatprep.subr.mxu0 0.0
    %2536 = vmatpush1.msra.mxu0 %v2489
    %2537 = vmatprep.subr.mxu0 0.0
    %2538 = vmatpush2.msra.mxu0 0.0
    %2539 = vmatprep.subr.mxu0 0.0
    %2540 = vmatpush2.msra.mxu0 0.0
    %2541 = vmatprep.subr.mxu0 0.0
    %2542 = vmatpush2.msra.mxu0 0.0
    %2543 = vmatprep.subr.mxu0 0.0
    %2544 = vmatpush2.msra.mxu0 0.0
    %2545 = vmatprep.subr.mxu0 0.0
    %2546 = vmatpush2.msra.mxu0 0.0
    %2547 = vmatprep.subr.mxu0 0.0
    %2548 = vmatpush2.msra.mxu0 0.0
    %2549 = vmatprep.subr.mxu0 0.0
    %2550 = vmatpush2.msra.mxu0 0.0
    %2551 = vmatprep.subr.mxu0 0.0
    %2552 = vmatpush2.msra.mxu0 0.0
    %2553 = vmatprep.subr.mxu0 0.0
    %2554 = vmatpush2.msra.mxu0 0.0
    %2555 = vmatprep.subr.mxu0 0.0
    %2556 = vmatpush2.msra.mxu0 0.0
    %2557 = vmatprep.subr.mxu0 0.0
    %2558 = vmatpush2.msra.mxu0 0.0
    %2559 = vmatprep.subr.mxu0 0.0
    %2560 = vmatpush2.msra.mxu0 0.0
    %2561 = vmatprep.subr.mxu0 0.0
    %2562 = vmatpush2.msra.mxu0 0.0
    %2563 = vmatprep.subr.mxu0 0.0
    %2564 = vmatpush2.msra.mxu0 0.0
    %2565 = vmatprep.subr.mxu0 0.0
    %2566 = vmatpush2.msra.mxu0 0.0
    %2567 = vmatprep.subr.mxu0 0.0
    %2568 = vmatpush2.msra.mxu0 0.0
    %2569 = vmatprep.mubr.f32.mxu0 0.0
    %2570 = vmatmul.mubr.f32.gmra.mxu0 %v2394
    %v2571 = vpop.f32.mrf.mxu0
    %v2572 = vadd.f32 0.0, %v2571
    %v2573 = vpop.f32.mrf.mxu0
    %2574 = vmatprep.mubr.f32.mxu0 0.0
    %2575 = vmatmul.mubr.f32.gmra.mxu0 %v2395
    %v2576 = vpop.f32.mrf.mxu0
    %v2577 = vadd.f32 0.0, %v2576
    %v2578 = vpop.f32.mrf.mxu0
    %2579 = vdwg.mxu0
    %s2580 = scalar_lea.vmem [#allocation6], 8
    %v2581 = vld [vmem:[%s2580] sm:$0xff]
    %v2583 = vsel %vm2231, %v2581, 0
    %2585 = vmatprep.subr.mxu0 0.0
    %2586 = vmatpush1.msra.mxu0 0.0
    %2587 = vmatprep.subr.mxu0 0.0
    %2588 = vmatpush1.msra.mxu0 0.0
    %2589 = vmatprep.subr.mxu0 0.0
    %2590 = vmatpush1.msra.mxu0 0.0
    %2591 = vmatprep.subr.mxu0 0.0
    %2592 = vmatpush1.msra.mxu0 0.0
    %2593 = vmatprep.subr.mxu0 0.0
    %2594 = vmatpush1.msra.mxu0 0.0
    %2595 = vmatprep.subr.mxu0 0.0
    %2596 = vmatpush1.msra.mxu0 0.0
    %2597 = vmatprep.subr.mxu0 0.0
    %2598 = vmatpush1.msra.mxu0 0.0
    %2599 = vmatprep.subr.mxu0 0.0
    %2600 = vmatpush1.msra.mxu0 0.0
    %2601 = vmatprep.subr.mxu0 0.0
    %2602 = vmatpush1.msra.mxu0 0.0
    %2603 = vmatprep.subr.mxu0 0.0
    %2604 = vmatpush1.msra.mxu0 0.0
    %2605 = vmatprep.subr.mxu0 0.0
    %2606 = vmatpush1.msra.mxu0 0.0
    %2607 = vmatprep.subr.mxu0 0.0
    %2608 = vmatpush1.msra.mxu0 0.0
    %2609 = vmatprep.subr.mxu0 0.0
    %2610 = vmatpush1.msra.mxu0 0.0
    %2611 = vmatprep.subr.mxu0 0.0
    %2612 = vmatpush1.msra.mxu0 0.0
    %2613 = vmatprep.subr.mxu0 0.0
    %2614 = vmatpush1.msra.mxu0 %v2577
    %2615 = vmatprep.subr.mxu0 0.0
    %2616 = vmatpush1.msra.mxu0 %v2572
    %2617 = vmatprep.subr.mxu0 0.0
    %2618 = vmatpush2.msra.mxu0 0.0
    %2619 = vmatprep.subr.mxu0 0.0
    %2620 = vmatpush2.msra.mxu0 0.0
    %2621 = vmatprep.subr.mxu0 0.0
    %2622 = vmatpush2.msra.mxu0 0.0
    %2623 = vmatprep.subr.mxu0 0.0
    %2624 = vmatpush2.msra.mxu0 0.0
    %2625 = vmatprep.subr.mxu0 0.0
    %2626 = vmatpush2.msra.mxu0 0.0
    %2627 = vmatprep.subr.mxu0 0.0
    %2628 = vmatpush2.msra.mxu0 0.0
    %2629 = vmatprep.subr.mxu0 0.0
    %2630 = vmatpush2.msra.mxu0 0.0
    %2631 = vmatprep.subr.mxu0 0.0
    %2632 = vmatpush2.msra.mxu0 0.0
    %2633 = vmatprep.subr.mxu0 0.0
    %2634 = vmatpush2.msra.mxu0 0.0
    %2635 = vmatprep.subr.mxu0 0.0
    %2636 = vmatpush2.msra.mxu0 0.0
    %2637 = vmatprep.subr.mxu0 0.0
    %2638 = vmatpush2.msra.mxu0 0.0
    %2639 = vmatprep.subr.mxu0 0.0
    %2640 = vmatpush2.msra.mxu0 0.0
    %2641 = vmatprep.subr.mxu0 0.0
    %2642 = vmatpush2.msra.mxu0 0.0
    %2643 = vmatprep.subr.mxu0 0.0
    %2644 = vmatpush2.msra.mxu0 0.0
    %2645 = vmatprep.subr.mxu0 0.0
    %2646 = vmatpush2.msra.mxu0 0.0
    %2647 = vmatprep.subr.mxu0 0.0
    %2648 = vmatpush2.msra.mxu0 0.0
    %2649 = vmatprep.mubr.f32.mxu0 0.0
    %2650 = vmatmul.mubr.f32.gmra.mxu0 %v2583
    %v2651 = vpop.f32.mrf.mxu0
    %v2652 = vadd.f32 0.0, %v2651
    %v2653 = vpop.f32.mrf.mxu0
    %2654 = vdwg.mxu0
    %v2656 = vsel %vm2231, %v2487, 0
    %2658 = vmatprep.subr.mxu0 0.0
    %2659 = vmatpush1.msra.mxu0 0.0
    %2660 = vmatprep.subr.mxu0 0.0
    %2661 = vmatpush1.msra.mxu0 0.0
    %2662 = vmatprep.subr.mxu0 0.0
    %2663 = vmatpush1.msra.mxu0 0.0
    %2664 = vmatprep.subr.mxu0 0.0
    %2665 = vmatpush1.msra.mxu0 0.0
    %2666 = vmatprep.subr.mxu0 0.0
    %2667 = vmatpush1.msra.mxu0 0.0
    %2668 = vmatprep.subr.mxu0 0.0
    %2669 = vmatpush1.msra.mxu0 0.0
    %2670 = vmatprep.subr.mxu0 0.0
    %2671 = vmatpush1.msra.mxu0 0.0
    %2672 = vmatprep.subr.mxu0 0.0
    %2673 = vmatpush1.msra.mxu0 0.0
    %2674 = vmatprep.subr.mxu0 0.0
    %2675 = vmatpush1.msra.mxu0 0.0
    %2676 = vmatprep.subr.mxu0 0.0
    %2677 = vmatpush1.msra.mxu0 0.0
    %2678 = vmatprep.subr.mxu0 0.0
    %2679 = vmatpush1.msra.mxu0 0.0
    %2680 = vmatprep.subr.mxu0 0.0
    %2681 = vmatpush1.msra.mxu0 0.0
    %2682 = vmatprep.subr.mxu0 0.0
    %2683 = vmatpush1.msra.mxu0 0.0
    %2684 = vmatprep.subr.mxu0 0.0
    %2685 = vmatpush1.msra.mxu0 0.0
    %2686 = vmatprep.subr.mxu0 0.0
    %2687 = vmatpush1.msra.mxu0 %v2484
    %2688 = vmatprep.subr.mxu0 0.0
    %2689 = vmatpush1.msra.mxu0 %v2479
    %2690 = vmatprep.subr.mxu0 0.0
    %2691 = vmatpush2.msra.mxu0 0.0
    %2692 = vmatprep.subr.mxu0 0.0
    %2693 = vmatpush2.msra.mxu0 0.0
    %2694 = vmatprep.subr.mxu0 0.0
    %2695 = vmatpush2.msra.mxu0 0.0
    %2696 = vmatprep.subr.mxu0 0.0
    %2697 = vmatpush2.msra.mxu0 0.0
    %2698 = vmatprep.subr.mxu0 0.0
    %2699 = vmatpush2.msra.mxu0 0.0
    %2700 = vmatprep.subr.mxu0 0.0
    %2701 = vmatpush2.msra.mxu0 0.0
    %2702 = vmatprep.subr.mxu0 0.0
    %2703 = vmatpush2.msra.mxu0 0.0
    %2704 = vmatprep.subr.mxu0 0.0
    %2705 = vmatpush2.msra.mxu0 0.0
    %2706 = vmatprep.subr.mxu0 0.0
    %2707 = vmatpush2.msra.mxu0 0.0
    %2708 = vmatprep.subr.mxu0 0.0
    %2709 = vmatpush2.msra.mxu0 0.0
    %2710 = vmatprep.subr.mxu0 0.0
    %2711 = vmatpush2.msra.mxu0 0.0
    %2712 = vmatprep.subr.mxu0 0.0
    %2713 = vmatpush2.msra.mxu0 0.0
    %2714 = vmatprep.subr.mxu0 0.0
    %2715 = vmatpush2.msra.mxu0 0.0
    %2716 = vmatprep.subr.mxu0 0.0
    %2717 = vmatpush2.msra.mxu0 0.0
    %2718 = vmatprep.subr.mxu0 0.0
    %2719 = vmatpush2.msra.mxu0 0.0
    %2720 = vmatprep.subr.mxu0 0.0
    %2721 = vmatpush2.msra.mxu0 0.0
    %2722 = vmatprep.mubr.f32.mxu0 0.0
    %2723 = vmatmul.mubr.f32.gmra.mxu0 %v2656
    %v2724 = vpop.f32.mrf.mxu0
    %v2725 = vadd.f32 %v2652, %v2724
    %v2726 = vpop.f32.mrf.mxu0
    %2727 = vdwg.mxu0
    %s2728 = scalar_lea.vmem %s13, 256
    %v2729 = vld [vmem:[%s2728] sm:$0xff]
    %v2730 = vld [vmem:[%s2728 + $0x8] sm:$0xff]
    %v2731 = vld [vmem:[%s2728 + $0x10] sm:$0xff]
    %v2732 = vld [vmem:[%s2728 + $0x18] sm:$0xff]
    %v2733 = vld [vmem:[%s2728 + $0x20] sm:$0xff]
    %v2734 = vld [vmem:[%s2728 + $0x28] sm:$0xff]
    %v2735 = vld [vmem:[%s2728 + $0x30] sm:$0xff]
    %v2736 = vld [vmem:[%s2728 + $0x38] sm:$0xff]
    %v2737 = vld [vmem:[%s2728 + $0x40] sm:$0xff]
    %v2738 = vld [vmem:[%s2728 + $0x48] sm:$0xff]
    %v2739 = vld [vmem:[%s2728 + $0x50] sm:$0xff]
    %v2740 = vld [vmem:[%s2728 + $0x58] sm:$0xff]
    %v2741 = vld [vmem:[%s2728 + $0x60] sm:$0xff]
    %v2742 = vld [vmem:[%s2728 + $0x68] sm:$0xff]
    %v2743 = vld [vmem:[%s2728 + $0x70] sm:$0xff]
    %v2744 = vld [vmem:[%s2728 + $0x78] sm:$0xff]
    %2745 = vmatprep.subr.mxu0 0.0
    %2746 = vmatpush1.msra.mxu0 %v2744
    %2747 = vmatprep.subr.mxu0 0.0
    %2748 = vmatpush1.msra.mxu0 %v2743
    %2749 = vmatprep.subr.mxu0 0.0
    %2750 = vmatpush1.msra.mxu0 %v2742
    %2751 = vmatprep.subr.mxu0 0.0
    %2752 = vmatpush1.msra.mxu0 %v2741
    %2753 = vmatprep.subr.mxu0 0.0
    %2754 = vmatpush1.msra.mxu0 %v2740
    %2755 = vmatprep.subr.mxu0 0.0
    %2756 = vmatpush1.msra.mxu0 %v2739
    %2757 = vmatprep.subr.mxu0 0.0
    %2758 = vmatpush1.msra.mxu0 %v2738
    %2759 = vmatprep.subr.mxu0 0.0
    %2760 = vmatpush1.msra.mxu0 %v2737
    %2761 = vmatprep.subr.mxu0 0.0
    %2762 = vmatpush1.msra.mxu0 %v2736
    %2763 = vmatprep.subr.mxu0 0.0
    %2764 = vmatpush1.msra.mxu0 %v2735
    %2765 = vmatprep.subr.mxu0 0.0
    %2766 = vmatpush1.msra.mxu0 %v2734
    %2767 = vmatprep.subr.mxu0 0.0
    %2768 = vmatpush1.msra.mxu0 %v2733
    %2769 = vmatprep.subr.mxu0 0.0
    %2770 = vmatpush1.msra.mxu0 %v2732
    %2771 = vmatprep.subr.mxu0 0.0
    %2772 = vmatpush1.msra.mxu0 %v2731
    %2773 = vmatprep.subr.mxu0 0.0
    %2774 = vmatpush1.msra.mxu0 %v2730
    %2775 = vmatprep.subr.mxu0 0.0
    %2776 = vmatpush1.msra.mxu0 %v2729
    %2777 = vmatprep.subr.mxu0 0.0
    %2778 = vmatpush2.msra.mxu0 0.0
    %2779 = vmatprep.subr.mxu0 0.0
    %2780 = vmatpush2.msra.mxu0 0.0
    %2781 = vmatprep.subr.mxu0 0.0
    %2782 = vmatpush2.msra.mxu0 0.0
    %2783 = vmatprep.subr.mxu0 0.0
    %2784 = vmatpush2.msra.mxu0 0.0
    %2785 = vmatprep.subr.mxu0 0.0
    %2786 = vmatpush2.msra.mxu0 0.0
    %2787 = vmatprep.subr.mxu0 0.0
    %2788 = vmatpush2.msra.mxu0 0.0
    %2789 = vmatprep.subr.mxu0 0.0
    %2790 = vmatpush2.msra.mxu0 0.0
    %2791 = vmatprep.subr.mxu0 0.0
    %2792 = vmatpush2.msra.mxu0 0.0
    %2793 = vmatprep.subr.mxu0 0.0
    %2794 = vmatpush2.msra.mxu0 0.0
    %2795 = vmatprep.subr.mxu0 0.0
    %2796 = vmatpush2.msra.mxu0 0.0
    %2797 = vmatprep.subr.mxu0 0.0
    %2798 = vmatpush2.msra.mxu0 0.0
    %2799 = vmatprep.subr.mxu0 0.0
    %2800 = vmatpush2.msra.mxu0 0.0
    %2801 = vmatprep.subr.mxu0 0.0
    %2802 = vmatpush2.msra.mxu0 0.0
    %2803 = vmatprep.subr.mxu0 0.0
    %2804 = vmatpush2.msra.mxu0 0.0
    %2805 = vmatprep.subr.mxu0 0.0
    %2806 = vmatpush2.msra.mxu0 0.0
    %2807 = vmatprep.subr.mxu0 0.0
    %2808 = vmatpush2.msra.mxu0 0.0
    %2809 = vmatprep.mubr.f32.mxu0 0.0
    %2810 = vmatmul.mubr.f32.gmra.mxu0 %v2394
    %v2811 = vpop.f32.mrf.mxu0
    %v2812 = vadd.f32 0.0, %v2811
    %v2813 = vpop.f32.mrf.mxu0
    %2814 = vmatprep.mubr.f32.mxu0 0.0
    %2815 = vmatmul.mubr.f32.gmra.mxu0 %v2395
    %v2816 = vpop.f32.mrf.mxu0
    %v2817 = vadd.f32 0.0, %v2816
    %v2818 = vpop.f32.mrf.mxu0
    %2819 = vdwg.mxu0
    %s2820 = scalar_lea.vmem [#allocation6], 16
    %v2821 = vld [vmem:[%s2820] sm:$0xff]
    %v2823 = vsel %vm2231, %v2821, 0
    %2825 = vmatprep.subr.mxu0 0.0
    %2826 = vmatpush1.msra.mxu0 0.0
    %2827 = vmatprep.subr.mxu0 0.0
    %2828 = vmatpush1.msra.mxu0 0.0
    %2829 = vmatprep.subr.mxu0 0.0
    %2830 = vmatpush1.msra.mxu0 0.0
    %2831 = vmatprep.subr.mxu0 0.0
    %2832 = vmatpush1.msra.mxu0 0.0
    %2833 = vmatprep.subr.mxu0 0.0
    %2834 = vmatpush1.msra.mxu0 0.0
    %2835 = vmatprep.subr.mxu0 0.0
    %2836 = vmatpush1.msra.mxu0 0.0
    %2837 = vmatprep.subr.mxu0 0.0
    %2838 = vmatpush1.msra.mxu0 0.0
    %2839 = vmatprep.subr.mxu0 0.0
    %2840 = vmatpush1.msra.mxu0 0.0
    %2841 = vmatprep.subr.mxu0 0.0
    %2842 = vmatpush1.msra.mxu0 0.0
    %2843 = vmatprep.subr.mxu0 0.0
    %2844 = vmatpush1.msra.mxu0 0.0
    %2845 = vmatprep.subr.mxu0 0.0
    %2846 = vmatpush1.msra.mxu0 0.0
    %2847 = vmatprep.subr.mxu0 0.0
    %2848 = vmatpush1.msra.mxu0 0.0
    %2849 = vmatprep.subr.mxu0 0.0
    %2850 = vmatpush1.msra.mxu0 0.0
    %2851 = vmatprep.subr.mxu0 0.0
    %2852 = vmatpush1.msra.mxu0 0.0
    %2853 = vmatprep.subr.mxu0 0.0
    %2854 = vmatpush1.msra.mxu0 %v2817
    %2855 = vmatprep.subr.mxu0 0.0
    %2856 = vmatpush1.msra.mxu0 %v2812
    %2857 = vmatprep.subr.mxu0 0.0
    %2858 = vmatpush2.msra.mxu0 0.0
    %2859 = vmatprep.subr.mxu0 0.0
    %2860 = vmatpush2.msra.mxu0 0.0
    %2861 = vmatprep.subr.mxu0 0.0
    %2862 = vmatpush2.msra.mxu0 0.0
    %2863 = vmatprep.subr.mxu0 0.0
    %2864 = vmatpush2.msra.mxu0 0.0
    %2865 = vmatprep.subr.mxu0 0.0
    %2866 = vmatpush2.msra.mxu0 0.0
    %2867 = vmatprep.subr.mxu0 0.0
    %2868 = vmatpush2.msra.mxu0 0.0
    %2869 = vmatprep.subr.mxu0 0.0
    %2870 = vmatpush2.msra.mxu0 0.0
    %2871 = vmatprep.subr.mxu0 0.0
    %2872 = vmatpush2.msra.mxu0 0.0
    %2873 = vmatprep.subr.mxu0 0.0
    %2874 = vmatpush2.msra.mxu0 0.0
    %2875 = vmatprep.subr.mxu0 0.0
    %2876 = vmatpush2.msra.mxu0 0.0
    %2877 = vmatprep.subr.mxu0 0.0
    %2878 = vmatpush2.msra.mxu0 0.0
    %2879 = vmatprep.subr.mxu0 0.0
    %2880 = vmatpush2.msra.mxu0 0.0
    %2881 = vmatprep.subr.mxu0 0.0
    %2882 = vmatpush2.msra.mxu0 0.0
    %2883 = vmatprep.subr.mxu0 0.0
    %2884 = vmatpush2.msra.mxu0 0.0
    %2885 = vmatprep.subr.mxu0 0.0
    %2886 = vmatpush2.msra.mxu0 0.0
    %2887 = vmatprep.subr.mxu0 0.0
    %2888 = vmatpush2.msra.mxu0 0.0
    %2889 = vmatprep.mubr.f32.mxu0 0.0
    %2890 = vmatmul.mubr.f32.gmra.mxu0 %v2823
    %v2891 = vpop.f32.mrf.mxu0
    %v2892 = vadd.f32 0.0, %v2891
    %v2893 = vpop.f32.mrf.mxu0
    %2894 = vdwg.mxu0
    %v2895 = vadd.f32 %v2725, %v2892
    %s2896 = scalar_lea.vmem %s13, 384
    %v2897 = vld [vmem:[%s2896] sm:$0xff]
    %v2898 = vld [vmem:[%s2896 + $0x8] sm:$0xff]
    %v2899 = vld [vmem:[%s2896 + $0x10] sm:$0xff]
    %v2900 = vld [vmem:[%s2896 + $0x18] sm:$0xff]
    %v2901 = vld [vmem:[%s2896 + $0x20] sm:$0xff]
    %v2902 = vld [vmem:[%s2896 + $0x28] sm:$0xff]
    %v2903 = vld [vmem:[%s2896 + $0x30] sm:$0xff]
    %v2904 = vld [vmem:[%s2896 + $0x38] sm:$0xff]
    %v2905 = vld [vmem:[%s2896 + $0x40] sm:$0xff]
    %v2906 = vld [vmem:[%s2896 + $0x48] sm:$0xff]
    %v2907 = vld [vmem:[%s2896 + $0x50] sm:$0xff]
    %v2908 = vld [vmem:[%s2896 + $0x58] sm:$0xff]
    %v2909 = vld [vmem:[%s2896 + $0x60] sm:$0xff]
    %v2910 = vld [vmem:[%s2896 + $0x68] sm:$0xff]
    %v2911 = vld [vmem:[%s2896 + $0x70] sm:$0xff]
    %v2912 = vld [vmem:[%s2896 + $0x78] sm:$0xff]
    %2913 = vmatprep.subr.mxu0 0.0
    %2914 = vmatpush1.msra.mxu0 %v2912
    %2915 = vmatprep.subr.mxu0 0.0
    %2916 = vmatpush1.msra.mxu0 %v2911
    %2917 = vmatprep.subr.mxu0 0.0
    %2918 = vmatpush1.msra.mxu0 %v2910
    %2919 = vmatprep.subr.mxu0 0.0
    %2920 = vmatpush1.msra.mxu0 %v2909
    %2921 = vmatprep.subr.mxu0 0.0
    %2922 = vmatpush1.msra.mxu0 %v2908
    %2923 = vmatprep.subr.mxu0 0.0
    %2924 = vmatpush1.msra.mxu0 %v2907
    %2925 = vmatprep.subr.mxu0 0.0
    %2926 = vmatpush1.msra.mxu0 %v2906
    %2927 = vmatprep.subr.mxu0 0.0
    %2928 = vmatpush1.msra.mxu0 %v2905
    %2929 = vmatprep.subr.mxu0 0.0
    %2930 = vmatpush1.msra.mxu0 %v2904
    %2931 = vmatprep.subr.mxu0 0.0
    %2932 = vmatpush1.msra.mxu0 %v2903
    %2933 = vmatprep.subr.mxu0 0.0
    %2934 = vmatpush1.msra.mxu0 %v2902
    %2935 = vmatprep.subr.mxu0 0.0
    %2936 = vmatpush1.msra.mxu0 %v2901
    %2937 = vmatprep.subr.mxu0 0.0
    %2938 = vmatpush1.msra.mxu0 %v2900
    %2939 = vmatprep.subr.mxu0 0.0
    %2940 = vmatpush1.msra.mxu0 %v2899
    %2941 = vmatprep.subr.mxu0 0.0
    %2942 = vmatpush1.msra.mxu0 %v2898
    %2943 = vmatprep.subr.mxu0 0.0
    %2944 = vmatpush1.msra.mxu0 %v2897
    %2945 = vmatprep.subr.mxu0 0.0
    %2946 = vmatpush2.msra.mxu0 0.0
    %2947 = vmatprep.subr.mxu0 0.0
    %2948 = vmatpush2.msra.mxu0 0.0
    %2949 = vmatprep.subr.mxu0 0.0
    %2950 = vmatpush2.msra.mxu0 0.0
    %2951 = vmatprep.subr.mxu0 0.0
    %2952 = vmatpush2.msra.mxu0 0.0
    %2953 = vmatprep.subr.mxu0 0.0
    %2954 = vmatpush2.msra.mxu0 0.0
    %2955 = vmatprep.subr.mxu0 0.0
    %2956 = vmatpush2.msra.mxu0 0.0
    %2957 = vmatprep.subr.mxu0 0.0
    %2958 = vmatpush2.msra.mxu0 0.0
    %2959 = vmatprep.subr.mxu0 0.0
    %2960 = vmatpush2.msra.mxu0 0.0
    %2961 = vmatprep.subr.mxu0 0.0
    %2962 = vmatpush2.msra.mxu0 0.0
    %2963 = vmatprep.subr.mxu0 0.0
    %2964 = vmatpush2.msra.mxu0 0.0
    %2965 = vmatprep.subr.mxu0 0.0
    %2966 = vmatpush2.msra.mxu0 0.0
    %2967 = vmatprep.subr.mxu0 0.0
    %2968 = vmatpush2.msra.mxu0 0.0
    %2969 = vmatprep.subr.mxu0 0.0
    %2970 = vmatpush2.msra.mxu0 0.0
    %2971 = vmatprep.subr.mxu0 0.0
    %2972 = vmatpush2.msra.mxu0 0.0
    %2973 = vmatprep.subr.mxu0 0.0
    %2974 = vmatpush2.msra.mxu0 0.0
    %2975 = vmatprep.subr.mxu0 0.0
    %2976 = vmatpush2.msra.mxu0 0.0
    %2977 = vmatprep.mubr.f32.mxu0 0.0
    %2978 = vmatmul.mubr.f32.gmra.mxu0 %v2394
    %v2979 = vpop.f32.mrf.mxu0
    %v2980 = vadd.f32 0.0, %v2979
    %v2981 = vpop.f32.mrf.mxu0
    %2982 = vmatprep.mubr.f32.mxu0 0.0
    %2983 = vmatmul.mubr.f32.gmra.mxu0 %v2395
    %v2984 = vpop.f32.mrf.mxu0
    %v2985 = vadd.f32 0.0, %v2984
    %v2986 = vpop.f32.mrf.mxu0
    %2987 = vdwg.mxu0
    %s2988 = scalar_lea.vmem [#allocation6], 24
    %v2989 = vld [vmem:[%s2988] sm:$0xff]
    %v2991 = vsel %vm2231, %v2989, 0
    %2993 = vmatprep.subr.mxu0 0.0
    %2994 = vmatpush1.msra.mxu0 0.0
    %2995 = vmatprep.subr.mxu0 0.0
    %2996 = vmatpush1.msra.mxu0 0.0
    %2997 = vmatprep.subr.mxu0 0.0
    %2998 = vmatpush1.msra.mxu0 0.0
    %2999 = vmatprep.subr.mxu0 0.0
    %3000 = vmatpush1.msra.mxu0 0.0
    %3001 = vmatprep.subr.mxu0 0.0
    %3002 = vmatpush1.msra.mxu0 0.0
    %3003 = vmatprep.subr.mxu0 0.0
    %3004 = vmatpush1.msra.mxu0 0.0
    %3005 = vmatprep.subr.mxu0 0.0
    %3006 = vmatpush1.msra.mxu0 0.0
    %3007 = vmatprep.subr.mxu0 0.0
    %3008 = vmatpush1.msra.mxu0 0.0
    %3009 = vmatprep.subr.mxu0 0.0
    %3010 = vmatpush1.msra.mxu0 0.0
    %3011 = vmatprep.subr.mxu0 0.0
    %3012 = vmatpush1.msra.mxu0 0.0
    %3013 = vmatprep.subr.mxu0 0.0
    %3014 = vmatpush1.msra.mxu0 0.0
    %3015 = vmatprep.subr.mxu0 0.0
    %3016 = vmatpush1.msra.mxu0 0.0
    %3017 = vmatprep.subr.mxu0 0.0
    %3018 = vmatpush1.msra.mxu0 0.0
    %3019 = vmatprep.subr.mxu0 0.0
    %3020 = vmatpush1.msra.mxu0 0.0
    %3021 = vmatprep.subr.mxu0 0.0
    %3022 = vmatpush1.msra.mxu0 %v2985
    %3023 = vmatprep.subr.mxu0 0.0
    %3024 = vmatpush1.msra.mxu0 %v2980
    %3025 = vmatprep.subr.mxu0 0.0
    %3026 = vmatpush2.msra.mxu0 0.0
    %3027 = vmatprep.subr.mxu0 0.0
    %3028 = vmatpush2.msra.mxu0 0.0
    %3029 = vmatprep.subr.mxu0 0.0
    %3030 = vmatpush2.msra.mxu0 0.0
    %3031 = vmatprep.subr.mxu0 0.0
    %3032 = vmatpush2.msra.mxu0 0.0
    %3033 = vmatprep.subr.mxu0 0.0
    %3034 = vmatpush2.msra.mxu0 0.0
    %3035 = vmatprep.subr.mxu0 0.0
    %3036 = vmatpush2.msra.mxu0 0.0
    %3037 = vmatprep.subr.mxu0 0.0
    %3038 = vmatpush2.msra.mxu0 0.0
    %3039 = vmatprep.subr.mxu0 0.0
    %3040 = vmatpush2.msra.mxu0 0.0
    %3041 = vmatprep.subr.mxu0 0.0
    %3042 = vmatpush2.msra.mxu0 0.0
    %3043 = vmatprep.subr.mxu0 0.0
    %3044 = vmatpush2.msra.mxu0 0.0
    %3045 = vmatprep.subr.mxu0 0.0
    %3046 = vmatpush2.msra.mxu0 0.0
    %3047 = vmatprep.subr.mxu0 0.0
    %3048 = vmatpush2.msra.mxu0 0.0
    %3049 = vmatprep.subr.mxu0 0.0
    %3050 = vmatpush2.msra.mxu0 0.0
    %3051 = vmatprep.subr.mxu0 0.0
    %3052 = vmatpush2.msra.mxu0 0.0
    %3053 = vmatprep.subr.mxu0 0.0
    %3054 = vmatpush2.msra.mxu0 0.0
    %3055 = vmatprep.subr.mxu0 0.0
    %3056 = vmatpush2.msra.mxu0 0.0
    %3057 = vmatprep.mubr.f32.mxu0 0.0
    %3058 = vmatmul.mubr.f32.gmra.mxu0 %v2991
    %v3059 = vpop.f32.mrf.mxu0
    %v3060 = vadd.f32 0.0, %v3059
    %v3061 = vpop.f32.mrf.mxu0
    %3062 = vdwg.mxu0
    %v3063 = vadd.f32 %v2895, %v3060
    %v3064 = vrot.slane %v3063, 4
    %v3065 = vadd.f32 %v3063, %v3064
    %v3066 = vrot.slane %v3065, 2
    %v3067 = vadd.f32 %v3065, %v3066
    %v3068 = vrot.slane %v3067, 1
    %v3069 = vadd.f32 %v3067, %v3068
    %v3070 = vmul.f32 %v3063, %v3063
    %v3071 = vrot.slane %v3070, 4
    %v3072 = vadd.f32 %v3070, %v3071
    %v3073 = vrot.slane %v3072, 2
    %v3074 = vadd.f32 %v3072, %v3073
    %v3075 = vrot.slane %v3074, 1
    %v3076 = vadd.f32 %v3074, %v3075
    %v3077 = vld [vmem:[%s37] sm:$0xff]
    %v3078 = vld [vmem:[%s37 + $0x8] sm:$0xff]
    %v3079 = vld [vmem:[%s37 + $0x10] sm:$0xff]
    %v3080 = vld [vmem:[%s37 + $0x18] sm:$0xff]
    %v3081 = vld [vmem:[%s37 + $0x20] sm:$0xff]
    %v3082 = vld [vmem:[%s37 + $0x28] sm:$0xff]
    %v3083 = vld [vmem:[%s37 + $0x30] sm:$0xff]
    %v3084 = vld [vmem:[%s37 + $0x38] sm:$0xff]
    %v3085 = vld [vmem:[%s37 + $0x40] sm:$0xff]
    %v3086 = vld [vmem:[%s37 + $0x48] sm:$0xff]
    %v3087 = vld [vmem:[%s37 + $0x50] sm:$0xff]
    %v3088 = vld [vmem:[%s37 + $0x58] sm:$0xff]
    %v3089 = vld [vmem:[%s37 + $0x60] sm:$0xff]
    %v3090 = vld [vmem:[%s37 + $0x68] sm:$0xff]
    %v3091 = vld [vmem:[%s37 + $0x70] sm:$0xff]
    %v3092 = vld [vmem:[%s37 + $0x78] sm:$0xff]
    %3093 = vmatprep.subr.mxu0 0.0
    %3094 = vmatpush1.msra.mxu0 %v3092
    %3095 = vmatprep.subr.mxu0 0.0
    %3096 = vmatpush1.msra.mxu0 %v3091
    %3097 = vmatprep.subr.mxu0 0.0
    %3098 = vmatpush1.msra.mxu0 %v3090
    %3099 = vmatprep.subr.mxu0 0.0
    %3100 = vmatpush1.msra.mxu0 %v3089
    %3101 = vmatprep.subr.mxu0 0.0
    %3102 = vmatpush1.msra.mxu0 %v3088
    %3103 = vmatprep.subr.mxu0 0.0
    %3104 = vmatpush1.msra.mxu0 %v3087
    %3105 = vmatprep.subr.mxu0 0.0
    %3106 = vmatpush1.msra.mxu0 %v3086
    %3107 = vmatprep.subr.mxu0 0.0
    %3108 = vmatpush1.msra.mxu0 %v3085
    %3109 = vmatprep.subr.mxu0 0.0
    %3110 = vmatpush1.msra.mxu0 %v3084
    %3111 = vmatprep.subr.mxu0 0.0
    %3112 = vmatpush1.msra.mxu0 %v3083
    %3113 = vmatprep.subr.mxu0 0.0
    %3114 = vmatpush1.msra.mxu0 %v3082
    %3115 = vmatprep.subr.mxu0 0.0
    %3116 = vmatpush1.msra.mxu0 %v3081
    %3117 = vmatprep.subr.mxu0 0.0
    %3118 = vmatpush1.msra.mxu0 %v3080
    %3119 = vmatprep.subr.mxu0 0.0
    %3120 = vmatpush1.msra.mxu0 %v3079
    %3121 = vmatprep.subr.mxu0 0.0
    %3122 = vmatpush1.msra.mxu0 %v3078
    %3123 = vmatprep.subr.mxu0 0.0
    %3124 = vmatpush1.msra.mxu0 %v3077
    %3125 = vmatprep.subr.mxu0 0.0
    %3126 = vmatpush2.msra.mxu0 0.0
    %3127 = vmatprep.subr.mxu0 0.0
    %3128 = vmatpush2.msra.mxu0 0.0
    %3129 = vmatprep.subr.mxu0 0.0
    %3130 = vmatpush2.msra.mxu0 0.0
    %3131 = vmatprep.subr.mxu0 0.0
    %3132 = vmatpush2.msra.mxu0 0.0
    %3133 = vmatprep.subr.mxu0 0.0
    %3134 = vmatpush2.msra.mxu0 0.0
    %3135 = vmatprep.subr.mxu0 0.0
    %3136 = vmatpush2.msra.mxu0 0.0
    %3137 = vmatprep.subr.mxu0 0.0
    %3138 = vmatpush2.msra.mxu0 0.0
    %3139 = vmatprep.subr.mxu0 0.0
    %3140 = vmatpush2.msra.mxu0 0.0
    %3141 = vmatprep.subr.mxu0 0.0
    %3142 = vmatpush2.msra.mxu0 0.0
    %3143 = vmatprep.subr.mxu0 0.0
    %3144 = vmatpush2.msra.mxu0 0.0
    %3145 = vmatprep.subr.mxu0 0.0
    %3146 = vmatpush2.msra.mxu0 0.0
    %3147 = vmatprep.subr.mxu0 0.0
    %3148 = vmatpush2.msra.mxu0 0.0
    %3149 = vmatprep.subr.mxu0 0.0
    %3150 = vmatpush2.msra.mxu0 0.0
    %3151 = vmatprep.subr.mxu0 0.0
    %3152 = vmatpush2.msra.mxu0 0.0
    %3153 = vmatprep.subr.mxu0 0.0
    %3154 = vmatpush2.msra.mxu0 0.0
    %3155 = vmatprep.subr.mxu0 0.0
    %3156 = vmatpush2.msra.mxu0 0.0
    %3157 = vmatprep.mubr.f32.mxu0 0.0
    %3158 = vmatmul.mubr.f32.gmra.mxu0 %v3069
    %v3159 = vpop.f32.mrf.mxu0
    %v3160 = vadd.f32 0.0, %v3159
    %v3161 = vpop.f32.mrf.mxu0
    %3162 = vdwg.mxu0
    %3163 = vmatprep.subr.mxu0 0.0
    %3164 = vmatpush1.msra.mxu0 %v3092
    %3165 = vmatprep.subr.mxu0 0.0
    %3166 = vmatpush1.msra.mxu0 %v3091
    %3167 = vmatprep.subr.mxu0 0.0
    %3168 = vmatpush1.msra.mxu0 %v3090
    %3169 = vmatprep.subr.mxu0 0.0
    %3170 = vmatpush1.msra.mxu0 %v3089
    %3171 = vmatprep.subr.mxu0 0.0
    %3172 = vmatpush1.msra.mxu0 %v3088
    %3173 = vmatprep.subr.mxu0 0.0
    %3174 = vmatpush1.msra.mxu0 %v3087
    %3175 = vmatprep.subr.mxu0 0.0
    %3176 = vmatpush1.msra.mxu0 %v3086
    %3177 = vmatprep.subr.mxu0 0.0
    %3178 = vmatpush1.msra.mxu0 %v3085
    %3179 = vmatprep.subr.mxu0 0.0
    %3180 = vmatpush1.msra.mxu0 %v3084
    %3181 = vmatprep.subr.mxu0 0.0
    %3182 = vmatpush1.msra.mxu0 %v3083
    %3183 = vmatprep.subr.mxu0 0.0
    %3184 = vmatpush1.msra.mxu0 %v3082
    %3185 = vmatprep.subr.mxu0 0.0
    %3186 = vmatpush1.msra.mxu0 %v3081
    %3187 = vmatprep.subr.mxu0 0.0
    %3188 = vmatpush1.msra.mxu0 %v3080
    %3189 = vmatprep.subr.mxu0 0.0
    %3190 = vmatpush1.msra.mxu0 %v3079
    %3191 = vmatprep.subr.mxu0 0.0
    %3192 = vmatpush1.msra.mxu0 %v3078
    %3193 = vmatprep.subr.mxu0 0.0
    %3194 = vmatpush1.msra.mxu0 %v3077
    %3195 = vmatprep.subr.mxu0 0.0
    %3196 = vmatpush2.msra.mxu0 0.0
    %3197 = vmatprep.subr.mxu0 0.0
    %3198 = vmatpush2.msra.mxu0 0.0
    %3199 = vmatprep.subr.mxu0 0.0
    %3200 = vmatpush2.msra.mxu0 0.0
    %3201 = vmatprep.subr.mxu0 0.0
    %3202 = vmatpush2.msra.mxu0 0.0
    %3203 = vmatprep.subr.mxu0 0.0
    %3204 = vmatpush2.msra.mxu0 0.0
    %3205 = vmatprep.subr.mxu0 0.0
    %3206 = vmatpush2.msra.mxu0 0.0
    %3207 = vmatprep.subr.mxu0 0.0
    %3208 = vmatpush2.msra.mxu0 0.0
    %3209 = vmatprep.subr.mxu0 0.0
    %3210 = vmatpush2.msra.mxu0 0.0
    %3211 = vmatprep.subr.mxu0 0.0
    %3212 = vmatpush2.msra.mxu0 0.0
    %3213 = vmatprep.subr.mxu0 0.0
    %3214 = vmatpush2.msra.mxu0 0.0
    %3215 = vmatprep.subr.mxu0 0.0
    %3216 = vmatpush2.msra.mxu0 0.0
    %3217 = vmatprep.subr.mxu0 0.0
    %3218 = vmatpush2.msra.mxu0 0.0
    %3219 = vmatprep.subr.mxu0 0.0
    %3220 = vmatpush2.msra.mxu0 0.0
    %3221 = vmatprep.subr.mxu0 0.0
    %3222 = vmatpush2.msra.mxu0 0.0
    %3223 = vmatprep.subr.mxu0 0.0
    %3224 = vmatpush2.msra.mxu0 0.0
    %3225 = vmatprep.subr.mxu0 0.0
    %3226 = vmatpush2.msra.mxu0 0.0
    %3227 = vmatprep.mubr.f32.mxu0 0.0
    %3228 = vmatmul.mubr.f32.gmra.mxu0 %v3076
    %v3229 = vpop.f32.mrf.mxu0
    %v3230 = vadd.f32 0.0, %v3229
    %v3231 = vpop.f32.mrf.mxu0
    %3232 = vdwg.mxu0
    %v3233 = vmul.f32 %v3160, 0.03125
    %v3234 = vmul.f32 %v3230, 0.03125
    %v3235 = vmul.f32 %v3233, %v3233
    %v3236 = vsub.f32 %v3234, %v3235
    %v3237 = vadd.f32 %v3236, 1e-05
    %v3238 = vrsqrt.pop %v3237
    %v3239 = vld [vmem:[#allocation16] sm:$0x1]
    %v3240 = vmul.f32 %v3239, %v3238
    %v3241 = vld [vmem:[#allocation18] sm:$0x1]
    %v3242 = vmul.f32 %v3233, %v3240
    %v3243 = vsub.f32 %v3241, %v3242
    %v3244 = vld [vmem:[#allocation19] sm:$0xff]
    %v3245 = vld [vmem:[#allocation19 + $0x8] sm:$0xff]
    %v3246 = vld [vmem:[#allocation19 + $0x10] sm:$0xff]
    %v3247 = vld [vmem:[#allocation19 + $0x18] sm:$0xff]
    %v3249 = vsel %vm1507, %v3240, 0
    %3251 = vmatprep.subr.mxu0 0.0
    %3252 = vmatpush1.msra.mxu0 0.0
    %3253 = vmatprep.subr.mxu0 0.0
    %3254 = vmatpush1.msra.mxu0 0.0
    %3255 = vmatprep.subr.mxu0 0.0
    %3256 = vmatpush1.msra.mxu0 0.0
    %3257 = vmatprep.subr.mxu0 0.0
    %3258 = vmatpush1.msra.mxu0 0.0
    %3259 = vmatprep.subr.mxu0 0.0
    %3260 = vmatpush1.msra.mxu0 0.0
    %3261 = vmatprep.subr.mxu0 0.0
    %3262 = vmatpush1.msra.mxu0 0.0
    %3263 = vmatprep.subr.mxu0 0.0
    %3264 = vmatpush1.msra.mxu0 0.0
    %3265 = vmatprep.subr.mxu0 0.0
    %3266 = vmatpush1.msra.mxu0 0.0
    %3267 = vmatprep.subr.mxu0 0.0
    %3268 = vmatpush1.msra.mxu0 0.0
    %3269 = vmatprep.subr.mxu0 0.0
    %3270 = vmatpush1.msra.mxu0 0.0
    %3271 = vmatprep.subr.mxu0 0.0
    %3272 = vmatpush1.msra.mxu0 0.0
    %3273 = vmatprep.subr.mxu0 0.0
    %3274 = vmatpush1.msra.mxu0 0.0
    %3275 = vmatprep.subr.mxu0 0.0
    %3276 = vmatpush1.msra.mxu0 %v3247
    %3277 = vmatprep.subr.mxu0 0.0
    %3278 = vmatpush1.msra.mxu0 %v3246
    %3279 = vmatprep.subr.mxu0 0.0
    %3280 = vmatpush1.msra.mxu0 %v3245
    %3281 = vmatprep.subr.mxu0 0.0
    %3282 = vmatpush1.msra.mxu0 %v3244
    %3283 = vmatprep.subr.mxu0 0.0
    %3284 = vmatpush2.msra.mxu0 0.0
    %3285 = vmatprep.subr.mxu0 0.0
    %3286 = vmatpush2.msra.mxu0 0.0
    %3287 = vmatprep.subr.mxu0 0.0
    %3288 = vmatpush2.msra.mxu0 0.0
    %3289 = vmatprep.subr.mxu0 0.0
    %3290 = vmatpush2.msra.mxu0 0.0
    %3291 = vmatprep.subr.mxu0 0.0
    %3292 = vmatpush2.msra.mxu0 0.0
    %3293 = vmatprep.subr.mxu0 0.0
    %3294 = vmatpush2.msra.mxu0 0.0
    %3295 = vmatprep.subr.mxu0 0.0
    %3296 = vmatpush2.msra.mxu0 0.0
    %3297 = vmatprep.subr.mxu0 0.0
    %3298 = vmatpush2.msra.mxu0 0.0
    %3299 = vmatprep.subr.mxu0 0.0
    %3300 = vmatpush2.msra.mxu0 0.0
    %3301 = vmatprep.subr.mxu0 0.0
    %3302 = vmatpush2.msra.mxu0 0.0
    %3303 = vmatprep.subr.mxu0 0.0
    %3304 = vmatpush2.msra.mxu0 0.0
    %3305 = vmatprep.subr.mxu0 0.0
    %3306 = vmatpush2.msra.mxu0 0.0
    %3307 = vmatprep.subr.mxu0 0.0
    %3308 = vmatpush2.msra.mxu0 0.0
    %3309 = vmatprep.subr.mxu0 0.0
    %3310 = vmatpush2.msra.mxu0 0.0
    %3311 = vmatprep.subr.mxu0 0.0
    %3312 = vmatpush2.msra.mxu0 0.0
    %3313 = vmatprep.subr.mxu0 0.0
    %3314 = vmatpush2.msra.mxu0 0.0
    %3315 = vmatprep.mubr.f32.mxu0 0.0
    %3316 = vmatmul.mubr.f32.gmra.mxu0 %v3249
    %v3317 = vpop.f32.mrf.mxu0
    %v3318 = vadd.f32 0.0, %v3317
    %v3319 = vpop.f32.mrf.mxu0
    %3320 = vdwg.mxu0
    %v3322 = vsel %vm1507, %v3243, 0
    %3324 = vmatprep.subr.mxu0 0.0
    %3325 = vmatpush1.msra.mxu0 0.0
    %3326 = vmatprep.subr.mxu0 0.0
    %3327 = vmatpush1.msra.mxu0 0.0
    %3328 = vmatprep.subr.mxu0 0.0
    %3329 = vmatpush1.msra.mxu0 0.0
    %3330 = vmatprep.subr.mxu0 0.0
    %3331 = vmatpush1.msra.mxu0 0.0
    %3332 = vmatprep.subr.mxu0 0.0
    %3333 = vmatpush1.msra.mxu0 0.0
    %3334 = vmatprep.subr.mxu0 0.0
    %3335 = vmatpush1.msra.mxu0 0.0
    %3336 = vmatprep.subr.mxu0 0.0
    %3337 = vmatpush1.msra.mxu0 0.0
    %3338 = vmatprep.subr.mxu0 0.0
    %3339 = vmatpush1.msra.mxu0 0.0
    %3340 = vmatprep.subr.mxu0 0.0
    %3341 = vmatpush1.msra.mxu0 0.0
    %3342 = vmatprep.subr.mxu0 0.0
    %3343 = vmatpush1.msra.mxu0 0.0
    %3344 = vmatprep.subr.mxu0 0.0
    %3345 = vmatpush1.msra.mxu0 0.0
    %3346 = vmatprep.subr.mxu0 0.0
    %3347 = vmatpush1.msra.mxu0 0.0
    %3348 = vmatprep.subr.mxu0 0.0
    %3349 = vmatpush1.msra.mxu0 %v3247
    %3350 = vmatprep.subr.mxu0 0.0
    %3351 = vmatpush1.msra.mxu0 %v3246
    %3352 = vmatprep.subr.mxu0 0.0
    %3353 = vmatpush1.msra.mxu0 %v3245
    %3354 = vmatprep.subr.mxu0 0.0
    %3355 = vmatpush1.msra.mxu0 %v3244
    %3356 = vmatprep.subr.mxu0 0.0
    %3357 = vmatpush2.msra.mxu0 0.0
    %3358 = vmatprep.subr.mxu0 0.0
    %3359 = vmatpush2.msra.mxu0 0.0
    %3360 = vmatprep.subr.mxu0 0.0
    %3361 = vmatpush2.msra.mxu0 0.0
    %3362 = vmatprep.subr.mxu0 0.0
    %3363 = vmatpush2.msra.mxu0 0.0
    %3364 = vmatprep.subr.mxu0 0.0
    %3365 = vmatpush2.msra.mxu0 0.0
    %3366 = vmatprep.subr.mxu0 0.0
    %3367 = vmatpush2.msra.mxu0 0.0
    %3368 = vmatprep.subr.mxu0 0.0
    %3369 = vmatpush2.msra.mxu0 0.0
    %3370 = vmatprep.subr.mxu0 0.0
    %3371 = vmatpush2.msra.mxu0 0.0
    %3372 = vmatprep.subr.mxu0 0.0
    %3373 = vmatpush2.msra.mxu0 0.0
    %3374 = vmatprep.subr.mxu0 0.0
    %3375 = vmatpush2.msra.mxu0 0.0
    %3376 = vmatprep.subr.mxu0 0.0
    %3377 = vmatpush2.msra.mxu0 0.0
    %3378 = vmatprep.subr.mxu0 0.0
    %3379 = vmatpush2.msra.mxu0 0.0
    %3380 = vmatprep.subr.mxu0 0.0
    %3381 = vmatpush2.msra.mxu0 0.0
    %3382 = vmatprep.subr.mxu0 0.0
    %3383 = vmatpush2.msra.mxu0 0.0
    %3384 = vmatprep.subr.mxu0 0.0
    %3385 = vmatpush2.msra.mxu0 0.0
    %3386 = vmatprep.subr.mxu0 0.0
    %3387 = vmatpush2.msra.mxu0 0.0
    %3388 = vmatprep.mubr.f32.mxu0 0.0
    %3389 = vmatmul.mubr.f32.gmra.mxu0 %v3322
    %v3390 = vpop.f32.mrf.mxu0
    %v3391 = vadd.f32 0.0, %v3390
    %v3392 = vpop.f32.mrf.mxu0
    %3393 = vdwg.mxu0
    %v3394 = vlaneseq
    %v3395 = vshrl.u32 %v3394, 7
    %v3396 = vsub.s32 0, %v3395
    %v3397 = vrot.slane %v3318, %v3396
    %v3398 = vmul.f32 %v3063, %v3397
    %v3399 = vlaneseq
    %v3400 = vshrl.u32 %v3399, 7
    %v3401 = vsub.s32 0, %v3400
    %v3402 = vrot.slane %v3391, %v3401
    %v3403 = vadd.f32 %v3398, %v3402
    %vm3404 = vcmp.gt.f32.partialorder %v3403, 0.0
    %v3405 = vmul.f32 %v3403, 0.2
    %v3406 = vsel %vm3404, %v3403, %v3405
    %v3407 = vld [vmem:[#allocation9] sm:$0xff]
    %v3408 = vld [vmem:[#allocation9 + $0x8] sm:$0xff]
    %v3409 = vld [vmem:[#allocation9 + $0x10] sm:$0xff]
    %v3410 = vld [vmem:[#allocation9 + $0x18] sm:$0xff]
    %v3411 = vld [vmem:[#allocation9 + $0x20] sm:$0xff]
    %v3412 = vld [vmem:[#allocation9 + $0x28] sm:$0xff]
    %v3413 = vld [vmem:[#allocation9 + $0x30] sm:$0xff]
    %v3414 = vld [vmem:[#allocation9 + $0x38] sm:$0xff]
    %v3415 = vld [vmem:[#allocation9 + $0x40] sm:$0xff]
    %v3416 = vld [vmem:[#allocation9 + $0x48] sm:$0xff]
    %v3417 = vld [vmem:[#allocation9 + $0x50] sm:$0xff]
    %v3418 = vld [vmem:[#allocation9 + $0x58] sm:$0xff]
    %v3419 = vld [vmem:[#allocation9 + $0x60] sm:$0xff]
    %v3420 = vld [vmem:[#allocation9 + $0x68] sm:$0xff]
    %v3421 = vld [vmem:[#allocation9 + $0x70] sm:$0xff]
    %v3422 = vld [vmem:[#allocation9 + $0x78] sm:$0xff]
    %3423 = vmatprep.subr.mxu0 0.0
    %3424 = vmatpush1.msra.mxu0 %v3422
    %3425 = vmatprep.subr.mxu0 0.0
    %3426 = vmatpush1.msra.mxu0 %v3421
    %3427 = vmatprep.subr.mxu0 0.0
    %3428 = vmatpush1.msra.mxu0 %v3420
    %3429 = vmatprep.subr.mxu0 0.0
    %3430 = vmatpush1.msra.mxu0 %v3419
    %3431 = vmatprep.subr.mxu0 0.0
    %3432 = vmatpush1.msra.mxu0 %v3418
    %3433 = vmatprep.subr.mxu0 0.0
    %3434 = vmatpush1.msra.mxu0 %v3417
    %3435 = vmatprep.subr.mxu0 0.0
    %3436 = vmatpush1.msra.mxu0 %v3416
    %3437 = vmatprep.subr.mxu0 0.0
    %3438 = vmatpush1.msra.mxu0 %v3415
    %3439 = vmatprep.subr.mxu0 0.0
    %3440 = vmatpush1.msra.mxu0 %v3414
    %3441 = vmatprep.subr.mxu0 0.0
    %3442 = vmatpush1.msra.mxu0 %v3413
    %3443 = vmatprep.subr.mxu0 0.0
    %3444 = vmatpush1.msra.mxu0 %v3412
    %3445 = vmatprep.subr.mxu0 0.0
    %3446 = vmatpush1.msra.mxu0 %v3411
    %3447 = vmatprep.subr.mxu0 0.0
    %3448 = vmatpush1.msra.mxu0 %v3410
    %3449 = vmatprep.subr.mxu0 0.0
    %3450 = vmatpush1.msra.mxu0 %v3409
    %3451 = vmatprep.subr.mxu0 0.0
    %3452 = vmatpush1.msra.mxu0 %v3408
    %3453 = vmatprep.subr.mxu0 0.0
    %3454 = vmatpush1.msra.mxu0 %v3407
    %3455 = vmatprep.subr.mxu0 0.0
    %3456 = vmatpush2.msra.mxu0 0.0
    %3457 = vmatprep.subr.mxu0 0.0
    %3458 = vmatpush2.msra.mxu0 0.0
    %3459 = vmatprep.subr.mxu0 0.0
    %3460 = vmatpush2.msra.mxu0 0.0
    %3461 = vmatprep.subr.mxu0 0.0
    %3462 = vmatpush2.msra.mxu0 0.0
    %3463 = vmatprep.subr.mxu0 0.0
    %3464 = vmatpush2.msra.mxu0 0.0
    %3465 = vmatprep.subr.mxu0 0.0
    %3466 = vmatpush2.msra.mxu0 0.0
    %3467 = vmatprep.subr.mxu0 0.0
    %3468 = vmatpush2.msra.mxu0 0.0
    %3469 = vmatprep.subr.mxu0 0.0
    %3470 = vmatpush2.msra.mxu0 0.0
    %3471 = vmatprep.subr.mxu0 0.0
    %3472 = vmatpush2.msra.mxu0 0.0
    %3473 = vmatprep.subr.mxu0 0.0
    %3474 = vmatpush2.msra.mxu0 0.0
    %3475 = vmatprep.subr.mxu0 0.0
    %3476 = vmatpush2.msra.mxu0 0.0
    %3477 = vmatprep.subr.mxu0 0.0
    %3478 = vmatpush2.msra.mxu0 0.0
    %3479 = vmatprep.subr.mxu0 0.0
    %3480 = vmatpush2.msra.mxu0 0.0
    %3481 = vmatprep.subr.mxu0 0.0
    %3482 = vmatpush2.msra.mxu0 0.0
    %3483 = vmatprep.subr.mxu0 0.0
    %3484 = vmatpush2.msra.mxu0 0.0
    %3485 = vmatprep.subr.mxu0 0.0
    %3486 = vmatpush2.msra.mxu0 0.0
    %3487 = vmatprep.mubr.f32.mxu0 0.0
    %3488 = vmatmul.mubr.f32.gmra.mxu0 %v3406
    %v3489 = vpop.f32.mrf.mxu0
    %v3490 = vadd.f32 0.0, %v3489
    %v3491 = vpop.f32.mrf.mxu0
    %3492 = vdwg.mxu0
    %v3493 = vld [vmem:[#allocation7] sm:$0xf]
    %s3494 = scalar_lea.vmem [#allocation9], 128
    %v3495 = vld [vmem:[%s3494] sm:$0xff]
    %v3496 = vld [vmem:[%s3494 + $0x8] sm:$0xff]
    %v3497 = vld [vmem:[%s3494 + $0x10] sm:$0xff]
    %v3498 = vld [vmem:[%s3494 + $0x18] sm:$0xff]
    %v3499 = vld [vmem:[%s3494 + $0x20] sm:$0xff]
    %v3500 = vld [vmem:[%s3494 + $0x28] sm:$0xff]
    %v3501 = vld [vmem:[%s3494 + $0x30] sm:$0xff]
    %v3502 = vld [vmem:[%s3494 + $0x38] sm:$0xff]
    %v3503 = vld [vmem:[%s3494 + $0x40] sm:$0xff]
    %v3504 = vld [vmem:[%s3494 + $0x48] sm:$0xff]
    %v3505 = vld [vmem:[%s3494 + $0x50] sm:$0xff]
    %v3506 = vld [vmem:[%s3494 + $0x58] sm:$0xff]
    %v3507 = vld [vmem:[%s3494 + $0x60] sm:$0xff]
    %v3508 = vld [vmem:[%s3494 + $0x68] sm:$0xff]
    %v3509 = vld [vmem:[%s3494 + $0x70] sm:$0xff]
    %v3510 = vld [vmem:[%s3494 + $0x78] sm:$0xff]
    %3511 = vmatprep.subr.mxu0 0.0
    %3512 = vmatpush1.msra.mxu0 %v3510
    %3513 = vmatprep.subr.mxu0 0.0
    %3514 = vmatpush1.msra.mxu0 %v3509
    %3515 = vmatprep.subr.mxu0 0.0
    %3516 = vmatpush1.msra.mxu0 %v3508
    %3517 = vmatprep.subr.mxu0 0.0
    %3518 = vmatpush1.msra.mxu0 %v3507
    %3519 = vmatprep.subr.mxu0 0.0
    %3520 = vmatpush1.msra.mxu0 %v3506
    %3521 = vmatprep.subr.mxu0 0.0
    %3522 = vmatpush1.msra.mxu0 %v3505
    %3523 = vmatprep.subr.mxu0 0.0
    %3524 = vmatpush1.msra.mxu0 %v3504
    %3525 = vmatprep.subr.mxu0 0.0
    %3526 = vmatpush1.msra.mxu0 %v3503
    %3527 = vmatprep.subr.mxu0 0.0
    %3528 = vmatpush1.msra.mxu0 %v3502
    %3529 = vmatprep.subr.mxu0 0.0
    %3530 = vmatpush1.msra.mxu0 %v3501
    %3531 = vmatprep.subr.mxu0 0.0
    %3532 = vmatpush1.msra.mxu0 %v3500
    %3533 = vmatprep.subr.mxu0 0.0
    %3534 = vmatpush1.msra.mxu0 %v3499
    %3535 = vmatprep.subr.mxu0 0.0
    %3536 = vmatpush1.msra.mxu0 %v3498
    %3537 = vmatprep.subr.mxu0 0.0
    %3538 = vmatpush1.msra.mxu0 %v3497
    %3539 = vmatprep.subr.mxu0 0.0
    %3540 = vmatpush1.msra.mxu0 %v3496
    %3541 = vmatprep.subr.mxu0 0.0
    %3542 = vmatpush1.msra.mxu0 %v3495
    %3543 = vmatprep.subr.mxu0 0.0
    %3544 = vmatpush2.msra.mxu0 0.0
    %3545 = vmatprep.subr.mxu0 0.0
    %3546 = vmatpush2.msra.mxu0 0.0
    %3547 = vmatprep.subr.mxu0 0.0
    %3548 = vmatpush2.msra.mxu0 0.0
    %3549 = vmatprep.subr.mxu0 0.0
    %3550 = vmatpush2.msra.mxu0 0.0
    %3551 = vmatprep.subr.mxu0 0.0
    %3552 = vmatpush2.msra.mxu0 0.0
    %3553 = vmatprep.subr.mxu0 0.0
    %3554 = vmatpush2.msra.mxu0 0.0
    %3555 = vmatprep.subr.mxu0 0.0
    %3556 = vmatpush2.msra.mxu0 0.0
    %3557 = vmatprep.subr.mxu0 0.0
    %3558 = vmatpush2.msra.mxu0 0.0
    %3559 = vmatprep.subr.mxu0 0.0
    %3560 = vmatpush2.msra.mxu0 0.0
    %3561 = vmatprep.subr.mxu0 0.0
    %3562 = vmatpush2.msra.mxu0 0.0
    %3563 = vmatprep.subr.mxu0 0.0
    %3564 = vmatpush2.msra.mxu0 0.0
    %3565 = vmatprep.subr.mxu0 0.0
    %3566 = vmatpush2.msra.mxu0 0.0
    %3567 = vmatprep.subr.mxu0 0.0
    %3568 = vmatpush2.msra.mxu0 0.0
    %3569 = vmatprep.subr.mxu0 0.0
    %3570 = vmatpush2.msra.mxu0 0.0
    %3571 = vmatprep.subr.mxu0 0.0
    %3572 = vmatpush2.msra.mxu0 0.0
    %3573 = vmatprep.subr.mxu0 0.0
    %3574 = vmatpush2.msra.mxu0 0.0
    %3575 = vmatprep.mubr.f32.mxu0 0.0
    %3576 = vmatmul.mubr.f32.gmra.mxu0 %v3406
    %v3577 = vpop.f32.mrf.mxu0
    %v3578 = vadd.f32 0.0, %v3577
    %v3579 = vpop.f32.mrf.mxu0
    %3580 = vdwg.mxu0
    %s3581 = scalar_lea.vmem [#allocation7], 4
    %v3582 = vld [vmem:[%s3581] sm:$0xf]
    %vm3583 = vcmask 64512
    %v3585 = vsel %vm3583, %v3582, 0
    %3587 = vmatprep.subr.mxu0 0.0
    %3588 = vmatpush1.msra.mxu0 0.0
    %3589 = vmatprep.subr.mxu0 0.0
    %3590 = vmatpush1.msra.mxu0 0.0
    %3591 = vmatprep.subr.mxu0 0.0
    %3592 = vmatpush1.msra.mxu0 0.0
    %3593 = vmatprep.subr.mxu0 0.0
    %3594 = vmatpush1.msra.mxu0 0.0
    %3595 = vmatprep.subr.mxu0 0.0
    %3596 = vmatpush1.msra.mxu0 0.0
    %3597 = vmatprep.subr.mxu0 0.0
    %3598 = vmatpush1.msra.mxu0 0.0
    %3599 = vmatprep.subr.mxu0 0.0
    %3600 = vmatpush1.msra.mxu0 0.0
    %3601 = vmatprep.subr.mxu0 0.0
    %3602 = vmatpush1.msra.mxu0 0.0
    %3603 = vmatprep.subr.mxu0 0.0
    %3604 = vmatpush1.msra.mxu0 0.0
    %3605 = vmatprep.subr.mxu0 0.0
    %3606 = vmatpush1.msra.mxu0 0.0
    %3607 = vmatprep.subr.mxu0 0.0
    %3608 = vmatpush1.msra.mxu0 0.0
    %3609 = vmatprep.subr.mxu0 0.0
    %3610 = vmatpush1.msra.mxu0 0.0
    %3611 = vmatprep.subr.mxu0 0.0
    %3612 = vmatpush1.msra.mxu0 0.0
    %3613 = vmatprep.subr.mxu0 0.0
    %3614 = vmatpush1.msra.mxu0 0.0
    %3615 = vmatprep.subr.mxu0 0.0
    %3616 = vmatpush1.msra.mxu0 0.0
    %3617 = vmatprep.subr.mxu0 0.0
    %3618 = vmatpush1.msra.mxu0 %v3578
    %3619 = vmatprep.subr.mxu0 0.0
    %3620 = vmatpush2.msra.mxu0 0.0
    %3621 = vmatprep.subr.mxu0 0.0
    %3622 = vmatpush2.msra.mxu0 0.0
    %3623 = vmatprep.subr.mxu0 0.0
    %3624 = vmatpush2.msra.mxu0 0.0
    %3625 = vmatprep.subr.mxu0 0.0
    %3626 = vmatpush2.msra.mxu0 0.0
    %3627 = vmatprep.subr.mxu0 0.0
    %3628 = vmatpush2.msra.mxu0 0.0
    %3629 = vmatprep.subr.mxu0 0.0
    %3630 = vmatpush2.msra.mxu0 0.0
    %3631 = vmatprep.subr.mxu0 0.0
    %3632 = vmatpush2.msra.mxu0 0.0
    %3633 = vmatprep.subr.mxu0 0.0
    %3634 = vmatpush2.msra.mxu0 0.0
    %3635 = vmatprep.subr.mxu0 0.0
    %3636 = vmatpush2.msra.mxu0 0.0
    %3637 = vmatprep.subr.mxu0 0.0
    %3638 = vmatpush2.msra.mxu0 0.0
    %3639 = vmatprep.subr.mxu0 0.0
    %3640 = vmatpush2.msra.mxu0 0.0
    %3641 = vmatprep.subr.mxu0 0.0
    %3642 = vmatpush2.msra.mxu0 0.0
    %3643 = vmatprep.subr.mxu0 0.0
    %3644 = vmatpush2.msra.mxu0 0.0
    %3645 = vmatprep.subr.mxu0 0.0
    %3646 = vmatpush2.msra.mxu0 0.0
    %3647 = vmatprep.subr.mxu0 0.0
    %3648 = vmatpush2.msra.mxu0 0.0
    %3649 = vmatprep.subr.mxu0 0.0
    %3650 = vmatpush2.msra.mxu0 0.0
    %3651 = vmatprep.mubr.f32.mxu0 0.0
    %3652 = vmatmul.mubr.f32.gmra.mxu0 %v3585
    %v3653 = vpop.f32.mrf.mxu0
    %v3654 = vadd.f32 0.0, %v3653
    %v3655 = vpop.f32.mrf.mxu0
    %3656 = vdwg.mxu0
    %v3658 = vsel %vm3583, %v3493, 0
    %3660 = vmatprep.subr.mxu0 0.0
    %3661 = vmatpush1.msra.mxu0 0.0
    %3662 = vmatprep.subr.mxu0 0.0
    %3663 = vmatpush1.msra.mxu0 0.0
    %3664 = vmatprep.subr.mxu0 0.0
    %3665 = vmatpush1.msra.mxu0 0.0
    %3666 = vmatprep.subr.mxu0 0.0
    %3667 = vmatpush1.msra.mxu0 0.0
    %3668 = vmatprep.subr.mxu0 0.0
    %3669 = vmatpush1.msra.mxu0 0.0
    %3670 = vmatprep.subr.mxu0 0.0
    %3671 = vmatpush1.msra.mxu0 0.0
    %3672 = vmatprep.subr.mxu0 0.0
    %3673 = vmatpush1.msra.mxu0 0.0
    %3674 = vmatprep.subr.mxu0 0.0
    %3675 = vmatpush1.msra.mxu0 0.0
    %3676 = vmatprep.subr.mxu0 0.0
    %3677 = vmatpush1.msra.mxu0 0.0
    %3678 = vmatprep.subr.mxu0 0.0
    %3679 = vmatpush1.msra.mxu0 0.0
    %3680 = vmatprep.subr.mxu0 0.0
    %3681 = vmatpush1.msra.mxu0 0.0
    %3682 = vmatprep.subr.mxu0 0.0
    %3683 = vmatpush1.msra.mxu0 0.0
    %3684 = vmatprep.subr.mxu0 0.0
    %3685 = vmatpush1.msra.mxu0 0.0
    %3686 = vmatprep.subr.mxu0 0.0
    %3687 = vmatpush1.msra.mxu0 0.0
    %3688 = vmatprep.subr.mxu0 0.0
    %3689 = vmatpush1.msra.mxu0 0.0
    %3690 = vmatprep.subr.mxu0 0.0
    %3691 = vmatpush1.msra.mxu0 %v3490
    %3692 = vmatprep.subr.mxu0 0.0
    %3693 = vmatpush2.msra.mxu0 0.0
    %3694 = vmatprep.subr.mxu0 0.0
    %3695 = vmatpush2.msra.mxu0 0.0
    %3696 = vmatprep.subr.mxu0 0.0
    %3697 = vmatpush2.msra.mxu0 0.0
    %3698 = vmatprep.subr.mxu0 0.0
    %3699 = vmatpush2.msra.mxu0 0.0
    %3700 = vmatprep.subr.mxu0 0.0
    %3701 = vmatpush2.msra.mxu0 0.0
    %3702 = vmatprep.subr.mxu0 0.0
    %3703 = vmatpush2.msra.mxu0 0.0
    %3704 = vmatprep.subr.mxu0 0.0
    %3705 = vmatpush2.msra.mxu0 0.0
    %3706 = vmatprep.subr.mxu0 0.0
    %3707 = vmatpush2.msra.mxu0 0.0
    %3708 = vmatprep.subr.mxu0 0.0
    %3709 = vmatpush2.msra.mxu0 0.0
    %3710 = vmatprep.subr.mxu0 0.0
    %3711 = vmatpush2.msra.mxu0 0.0
    %3712 = vmatprep.subr.mxu0 0.0
    %3713 = vmatpush2.msra.mxu0 0.0
    %3714 = vmatprep.subr.mxu0 0.0
    %3715 = vmatpush2.msra.mxu0 0.0
    %3716 = vmatprep.subr.mxu0 0.0
    %3717 = vmatpush2.msra.mxu0 0.0
    %3718 = vmatprep.subr.mxu0 0.0
    %3719 = vmatpush2.msra.mxu0 0.0
    %3720 = vmatprep.subr.mxu0 0.0
    %3721 = vmatpush2.msra.mxu0 0.0
    %3722 = vmatprep.subr.mxu0 0.0
    %3723 = vmatpush2.msra.mxu0 0.0
    %3724 = vmatprep.mubr.f32.mxu0 0.0
    %3725 = vmatmul.mubr.f32.gmra.mxu0 %v3658
    %v3726 = vpop.f32.mrf.mxu0
    %v3727 = vadd.f32 %v3654, %v3726
    %v3728 = vpop.f32.mrf.mxu0
    %3729 = vdwg.mxu0
    %s3730 = scalar_lea.vmem [#allocation9], 256
    %v3731 = vld [vmem:[%s3730] sm:$0xff]
    %v3732 = vld [vmem:[%s3730 + $0x8] sm:$0xff]
    %v3733 = vld [vmem:[%s3730 + $0x10] sm:$0xff]
    %v3734 = vld [vmem:[%s3730 + $0x18] sm:$0xff]
    %v3735 = vld [vmem:[%s3730 + $0x20] sm:$0xff]
    %v3736 = vld [vmem:[%s3730 + $0x28] sm:$0xff]
    %v3737 = vld [vmem:[%s3730 + $0x30] sm:$0xff]
    %v3738 = vld [vmem:[%s3730 + $0x38] sm:$0xff]
    %v3739 = vld [vmem:[%s3730 + $0x40] sm:$0xff]
    %v3740 = vld [vmem:[%s3730 + $0x48] sm:$0xff]
    %v3741 = vld [vmem:[%s3730 + $0x50] sm:$0xff]
    %v3742 = vld [vmem:[%s3730 + $0x58] sm:$0xff]
    %v3743 = vld [vmem:[%s3730 + $0x60] sm:$0xff]
    %v3744 = vld [vmem:[%s3730 + $0x68] sm:$0xff]
    %v3745 = vld [vmem:[%s3730 + $0x70] sm:$0xff]
    %v3746 = vld [vmem:[%s3730 + $0x78] sm:$0xff]
    %3747 = vmatprep.subr.mxu0 0.0
    %3748 = vmatpush1.msra.mxu0 %v3746
    %3749 = vmatprep.subr.mxu0 0.0
    %3750 = vmatpush1.msra.mxu0 %v3745
    %3751 = vmatprep.subr.mxu0 0.0
    %3752 = vmatpush1.msra.mxu0 %v3744
    %3753 = vmatprep.subr.mxu0 0.0
    %3754 = vmatpush1.msra.mxu0 %v3743
    %3755 = vmatprep.subr.mxu0 0.0
    %3756 = vmatpush1.msra.mxu0 %v3742
    %3757 = vmatprep.subr.mxu0 0.0
    %3758 = vmatpush1.msra.mxu0 %v3741
    %3759 = vmatprep.subr.mxu0 0.0
    %3760 = vmatpush1.msra.mxu0 %v3740
    %3761 = vmatprep.subr.mxu0 0.0
    %3762 = vmatpush1.msra.mxu0 %v3739
    %3763 = vmatprep.subr.mxu0 0.0
    %3764 = vmatpush1.msra.mxu0 %v3738
    %3765 = vmatprep.subr.mxu0 0.0
    %3766 = vmatpush1.msra.mxu0 %v3737
    %3767 = vmatprep.subr.mxu0 0.0
    %3768 = vmatpush1.msra.mxu0 %v3736
    %3769 = vmatprep.subr.mxu0 0.0
    %3770 = vmatpush1.msra.mxu0 %v3735
    %3771 = vmatprep.subr.mxu0 0.0
    %3772 = vmatpush1.msra.mxu0 %v3734
    %3773 = vmatprep.subr.mxu0 0.0
    %3774 = vmatpush1.msra.mxu0 %v3733
    %3775 = vmatprep.subr.mxu0 0.0
    %3776 = vmatpush1.msra.mxu0 %v3732
    %3777 = vmatprep.subr.mxu0 0.0
    %3778 = vmatpush1.msra.mxu0 %v3731
    %3779 = vmatprep.subr.mxu0 0.0
    %3780 = vmatpush2.msra.mxu0 0.0
    %3781 = vmatprep.subr.mxu0 0.0
    %3782 = vmatpush2.msra.mxu0 0.0
    %3783 = vmatprep.subr.mxu0 0.0
    %3784 = vmatpush2.msra.mxu0 0.0
    %3785 = vmatprep.subr.mxu0 0.0
    %3786 = vmatpush2.msra.mxu0 0.0
    %3787 = vmatprep.subr.mxu0 0.0
    %3788 = vmatpush2.msra.mxu0 0.0
    %3789 = vmatprep.subr.mxu0 0.0
    %3790 = vmatpush2.msra.mxu0 0.0
    %3791 = vmatprep.subr.mxu0 0.0
    %3792 = vmatpush2.msra.mxu0 0.0
    %3793 = vmatprep.subr.mxu0 0.0
    %3794 = vmatpush2.msra.mxu0 0.0
    %3795 = vmatprep.subr.mxu0 0.0
    %3796 = vmatpush2.msra.mxu0 0.0
    %3797 = vmatprep.subr.mxu0 0.0
    %3798 = vmatpush2.msra.mxu0 0.0
    %3799 = vmatprep.subr.mxu0 0.0
    %3800 = vmatpush2.msra.mxu0 0.0
    %3801 = vmatprep.subr.mxu0 0.0
    %3802 = vmatpush2.msra.mxu0 0.0
    %3803 = vmatprep.subr.mxu0 0.0
    %3804 = vmatpush2.msra.mxu0 0.0
    %3805 = vmatprep.subr.mxu0 0.0
    %3806 = vmatpush2.msra.mxu0 0.0
    %3807 = vmatprep.subr.mxu0 0.0
    %3808 = vmatpush2.msra.mxu0 0.0
    %3809 = vmatprep.subr.mxu0 0.0
    %3810 = vmatpush2.msra.mxu0 0.0
    %3811 = vmatprep.mubr.f32.mxu0 0.0
    %3812 = vmatmul.mubr.f32.gmra.mxu0 %v3406
    %v3813 = vpop.f32.mrf.mxu0
    %v3814 = vadd.f32 0.0, %v3813
    %v3815 = vpop.f32.mrf.mxu0
    %3816 = vdwg.mxu0
    %s3817 = scalar_lea.vmem [#allocation7], 8
    %v3818 = vld [vmem:[%s3817] sm:$0xf]
    %v3820 = vsel %vm3583, %v3818, 0
    %3822 = vmatprep.subr.mxu0 0.0
    %3823 = vmatpush1.msra.mxu0 0.0
    %3824 = vmatprep.subr.mxu0 0.0
    %3825 = vmatpush1.msra.mxu0 0.0
    %3826 = vmatprep.subr.mxu0 0.0
    %3827 = vmatpush1.msra.mxu0 0.0
    %3828 = vmatprep.subr.mxu0 0.0
    %3829 = vmatpush1.msra.mxu0 0.0
    %3830 = vmatprep.subr.mxu0 0.0
    %3831 = vmatpush1.msra.mxu0 0.0
    %3832 = vmatprep.subr.mxu0 0.0
    %3833 = vmatpush1.msra.mxu0 0.0
    %3834 = vmatprep.subr.mxu0 0.0
    %3835 = vmatpush1.msra.mxu0 0.0
    %3836 = vmatprep.subr.mxu0 0.0
    %3837 = vmatpush1.msra.mxu0 0.0
    %3838 = vmatprep.subr.mxu0 0.0
    %3839 = vmatpush1.msra.mxu0 0.0
    %3840 = vmatprep.subr.mxu0 0.0
    %3841 = vmatpush1.msra.mxu0 0.0
    %3842 = vmatprep.subr.mxu0 0.0
    %3843 = vmatpush1.msra.mxu0 0.0
    %3844 = vmatprep.subr.mxu0 0.0
    %3845 = vmatpush1.msra.mxu0 0.0
    %3846 = vmatprep.subr.mxu0 0.0
    %3847 = vmatpush1.msra.mxu0 0.0
    %3848 = vmatprep.subr.mxu0 0.0
    %3849 = vmatpush1.msra.mxu0 0.0
    %3850 = vmatprep.subr.mxu0 0.0
    %3851 = vmatpush1.msra.mxu0 0.0
    %3852 = vmatprep.subr.mxu0 0.0
    %3853 = vmatpush1.msra.mxu0 %v3814
    %3854 = vmatprep.subr.mxu0 0.0
    %3855 = vmatpush2.msra.mxu0 0.0
    %3856 = vmatprep.subr.mxu0 0.0
    %3857 = vmatpush2.msra.mxu0 0.0
    %3858 = vmatprep.subr.mxu0 0.0
    %3859 = vmatpush2.msra.mxu0 0.0
    %3860 = vmatprep.subr.mxu0 0.0
    %3861 = vmatpush2.msra.mxu0 0.0
    %3862 = vmatprep.subr.mxu0 0.0
    %3863 = vmatpush2.msra.mxu0 0.0
    %3864 = vmatprep.subr.mxu0 0.0
    %3865 = vmatpush2.msra.mxu0 0.0
    %3866 = vmatprep.subr.mxu0 0.0
    %3867 = vmatpush2.msra.mxu0 0.0
    %3868 = vmatprep.subr.mxu0 0.0
    %3869 = vmatpush2.msra.mxu0 0.0
    %3870 = vmatprep.subr.mxu0 0.0
    %3871 = vmatpush2.msra.mxu0 0.0
    %3872 = vmatprep.subr.mxu0 0.0
    %3873 = vmatpush2.msra.mxu0 0.0
    %3874 = vmatprep.subr.mxu0 0.0
    %3875 = vmatpush2.msra.mxu0 0.0
    %3876 = vmatprep.subr.mxu0 0.0
    %3877 = vmatpush2.msra.mxu0 0.0
    %3878 = vmatprep.subr.mxu0 0.0
    %3879 = vmatpush2.msra.mxu0 0.0
    %3880 = vmatprep.subr.mxu0 0.0
    %3881 = vmatpush2.msra.mxu0 0.0
    %3882 = vmatprep.subr.mxu0 0.0
    %3883 = vmatpush2.msra.mxu0 0.0
    %3884 = vmatprep.subr.mxu0 0.0
    %3885 = vmatpush2.msra.mxu0 0.0
    %3886 = vmatprep.mubr.f32.mxu0 0.0
    %3887 = vmatmul.mubr.f32.gmra.mxu0 %v3820
    %v3888 = vpop.f32.mrf.mxu0
    %v3889 = vadd.f32 0.0, %v3888
    %v3890 = vpop.f32.mrf.mxu0
    %3891 = vdwg.mxu0
    %v3892 = vadd.f32 %v3727, %v3889
    %s3893 = scalar_lea.vmem [#allocation9], 384
    %v3894 = vld [vmem:[%s3893] sm:$0xff]
    %v3895 = vld [vmem:[%s3893 + $0x8] sm:$0xff]
    %v3896 = vld [vmem:[%s3893 + $0x10] sm:$0xff]
    %v3897 = vld [vmem:[%s3893 + $0x18] sm:$0xff]
    %v3898 = vld [vmem:[%s3893 + $0x20] sm:$0xff]
    %v3899 = vld [vmem:[%s3893 + $0x28] sm:$0xff]
    %v3900 = vld [vmem:[%s3893 + $0x30] sm:$0xff]
    %v3901 = vld [vmem:[%s3893 + $0x38] sm:$0xff]
    %v3902 = vld [vmem:[%s3893 + $0x40] sm:$0xff]
    %v3903 = vld [vmem:[%s3893 + $0x48] sm:$0xff]
    %v3904 = vld [vmem:[%s3893 + $0x50] sm:$0xff]
    %v3905 = vld [vmem:[%s3893 + $0x58] sm:$0xff]
    %v3906 = vld [vmem:[%s3893 + $0x60] sm:$0xff]
    %v3907 = vld [vmem:[%s3893 + $0x68] sm:$0xff]
    %v3908 = vld [vmem:[%s3893 + $0x70] sm:$0xff]
    %v3909 = vld [vmem:[%s3893 + $0x78] sm:$0xff]
    %3910 = vmatprep.subr.mxu0 0.0
    %3911 = vmatpush1.msra.mxu0 %v3909
    %3912 = vmatprep.subr.mxu0 0.0
    %3913 = vmatpush1.msra.mxu0 %v3908
    %3914 = vmatprep.subr.mxu0 0.0
    %3915 = vmatpush1.msra.mxu0 %v3907
    %3916 = vmatprep.subr.mxu0 0.0
    %3917 = vmatpush1.msra.mxu0 %v3906
    %3918 = vmatprep.subr.mxu0 0.0
    %3919 = vmatpush1.msra.mxu0 %v3905
    %3920 = vmatprep.subr.mxu0 0.0
    %3921 = vmatpush1.msra.mxu0 %v3904
    %3922 = vmatprep.subr.mxu0 0.0
    %3923 = vmatpush1.msra.mxu0 %v3903
    %3924 = vmatprep.subr.mxu0 0.0
    %3925 = vmatpush1.msra.mxu0 %v3902
    %3926 = vmatprep.subr.mxu0 0.0
    %3927 = vmatpush1.msra.mxu0 %v3901
    %3928 = vmatprep.subr.mxu0 0.0
    %3929 = vmatpush1.msra.mxu0 %v3900
    %3930 = vmatprep.subr.mxu0 0.0
    %3931 = vmatpush1.msra.mxu0 %v3899
    %3932 = vmatprep.subr.mxu0 0.0
    %3933 = vmatpush1.msra.mxu0 %v3898
    %3934 = vmatprep.subr.mxu0 0.0
    %3935 = vmatpush1.msra.mxu0 %v3897
    %3936 = vmatprep.subr.mxu0 0.0
    %3937 = vmatpush1.msra.mxu0 %v3896
    %3938 = vmatprep.subr.mxu0 0.0
    %3939 = vmatpush1.msra.mxu0 %v3895
    %3940 = vmatprep.subr.mxu0 0.0
    %3941 = vmatpush1.msra.mxu0 %v3894
    %3942 = vmatprep.subr.mxu0 0.0
    %3943 = vmatpush2.msra.mxu0 0.0
    %3944 = vmatprep.subr.mxu0 0.0
    %3945 = vmatpush2.msra.mxu0 0.0
    %3946 = vmatprep.subr.mxu0 0.0
    %3947 = vmatpush2.msra.mxu0 0.0
    %3948 = vmatprep.subr.mxu0 0.0
    %3949 = vmatpush2.msra.mxu0 0.0
    %3950 = vmatprep.subr.mxu0 0.0
    %3951 = vmatpush2.msra.mxu0 0.0
    %3952 = vmatprep.subr.mxu0 0.0
    %3953 = vmatpush2.msra.mxu0 0.0
    %3954 = vmatprep.subr.mxu0 0.0
    %3955 = vmatpush2.msra.mxu0 0.0
    %3956 = vmatprep.subr.mxu0 0.0
    %3957 = vmatpush2.msra.mxu0 0.0
    %3958 = vmatprep.subr.mxu0 0.0
    %3959 = vmatpush2.msra.mxu0 0.0
    %3960 = vmatprep.subr.mxu0 0.0
    %3961 = vmatpush2.msra.mxu0 0.0
    %3962 = vmatprep.subr.mxu0 0.0
    %3963 = vmatpush2.msra.mxu0 0.0
    %3964 = vmatprep.subr.mxu0 0.0
    %3965 = vmatpush2.msra.mxu0 0.0
    %3966 = vmatprep.subr.mxu0 0.0
    %3967 = vmatpush2.msra.mxu0 0.0
    %3968 = vmatprep.subr.mxu0 0.0
    %3969 = vmatpush2.msra.mxu0 0.0
    %3970 = vmatprep.subr.mxu0 0.0
    %3971 = vmatpush2.msra.mxu0 0.0
    %3972 = vmatprep.subr.mxu0 0.0
    %3973 = vmatpush2.msra.mxu0 0.0
    %3974 = vmatprep.mubr.f32.mxu0 0.0
    %3975 = vmatmul.mubr.f32.gmra.mxu0 %v3406
    %v3976 = vpop.f32.mrf.mxu0
    %v3977 = vadd.f32 0.0, %v3976
    %v3978 = vpop.f32.mrf.mxu0
    %3979 = vdwg.mxu0
    %s3980 = scalar_lea.vmem [#allocation7], 12
    %v3981 = vld [vmem:[%s3980] sm:$0xf]
    %v3983 = vsel %vm3583, %v3981, 0
    %3985 = vmatprep.subr.mxu0 0.0
    %3986 = vmatpush1.msra.mxu0 0.0
    %3987 = vmatprep.subr.mxu0 0.0
    %3988 = vmatpush1.msra.mxu0 0.0
    %3989 = vmatprep.subr.mxu0 0.0
    %3990 = vmatpush1.msra.mxu0 0.0
    %3991 = vmatprep.subr.mxu0 0.0
    %3992 = vmatpush1.msra.mxu0 0.0
    %3993 = vmatprep.subr.mxu0 0.0
    %3994 = vmatpush1.msra.mxu0 0.0
    %3995 = vmatprep.subr.mxu0 0.0
    %3996 = vmatpush1.msra.mxu0 0.0
    %3997 = vmatprep.subr.mxu0 0.0
    %3998 = vmatpush1.msra.mxu0 0.0
    %3999 = vmatprep.subr.mxu0 0.0
    %4000 = vmatpush1.msra.mxu0 0.0
    %4001 = vmatprep.subr.mxu0 0.0
    %4002 = vmatpush1.msra.mxu0 0.0
    %4003 = vmatprep.subr.mxu0 0.0
    %4004 = vmatpush1.msra.mxu0 0.0
    %4005 = vmatprep.subr.mxu0 0.0
    %4006 = vmatpush1.msra.mxu0 0.0
    %4007 = vmatprep.subr.mxu0 0.0
    %4008 = vmatpush1.msra.mxu0 0.0
    %4009 = vmatprep.subr.mxu0 0.0
    %4010 = vmatpush1.msra.mxu0 0.0
    %4011 = vmatprep.subr.mxu0 0.0
    %4012 = vmatpush1.msra.mxu0 0.0
    %4013 = vmatprep.subr.mxu0 0.0
    %4014 = vmatpush1.msra.mxu0 0.0
    %4015 = vmatprep.subr.mxu0 0.0
    %4016 = vmatpush1.msra.mxu0 %v3977
    %4017 = vmatprep.subr.mxu0 0.0
    %4018 = vmatpush2.msra.mxu0 0.0
    %4019 = vmatprep.subr.mxu0 0.0
    %4020 = vmatpush2.msra.mxu0 0.0
    %4021 = vmatprep.subr.mxu0 0.0
    %4022 = vmatpush2.msra.mxu0 0.0
    %4023 = vmatprep.subr.mxu0 0.0
    %4024 = vmatpush2.msra.mxu0 0.0
    %4025 = vmatprep.subr.mxu0 0.0
    %4026 = vmatpush2.msra.mxu0 0.0
    %4027 = vmatprep.subr.mxu0 0.0
    %4028 = vmatpush2.msra.mxu0 0.0
    %4029 = vmatprep.subr.mxu0 0.0
    %4030 = vmatpush2.msra.mxu0 0.0
    %4031 = vmatprep.subr.mxu0 0.0
    %4032 = vmatpush2.msra.mxu0 0.0
    %4033 = vmatprep.subr.mxu0 0.0
    %4034 = vmatpush2.msra.mxu0 0.0
    %4035 = vmatprep.subr.mxu0 0.0
    %4036 = vmatpush2.msra.mxu0 0.0
    %4037 = vmatprep.subr.mxu0 0.0
    %4038 = vmatpush2.msra.mxu0 0.0
    %4039 = vmatprep.subr.mxu0 0.0
    %4040 = vmatpush2.msra.mxu0 0.0
    %4041 = vmatprep.subr.mxu0 0.0
    %4042 = vmatpush2.msra.mxu0 0.0
    %4043 = vmatprep.subr.mxu0 0.0
    %4044 = vmatpush2.msra.mxu0 0.0
    %4045 = vmatprep.subr.mxu0 0.0
    %4046 = vmatpush2.msra.mxu0 0.0
    %4047 = vmatprep.subr.mxu0 0.0
    %4048 = vmatpush2.msra.mxu0 0.0
    %4049 = vmatprep.mubr.f32.mxu0 0.0
    %4050 = vmatmul.mubr.f32.gmra.mxu0 %v3983
    %v4051 = vpop.f32.mrf.mxu0
    %v4052 = vadd.f32 0.0, %v4051
    %v4053 = vpop.f32.mrf.mxu0
    %4054 = vdwg.mxu0
    %v4055 = vadd.f32 %v3892, %v4052
    %vm4056 = vcmask 1043456
    %v4057 = vsel %vm4056, %v4055, 0.0
    %v4058 = vrot.slane %v4057, 4
    %v4059 = vadd.f32 %v4057, %v4058
    %v4060 = vrot.slane %v4059, 2
    %v4061 = vadd.f32 %v4059, %v4060
    %v4062 = vrot.slane %v4061, 1
    %v4063 = vadd.f32 %v4061, %v4062
    %v4064 = vmul.f32 %v4055, %v4055
    %v4065 = vsel %vm4056, %v4064, 0.0
    %v4066 = vrot.slane %v4065, 4
    %v4067 = vadd.f32 %v4065, %v4066
    %v4068 = vrot.slane %v4067, 2
    %v4069 = vadd.f32 %v4067, %v4068
    %v4070 = vrot.slane %v4069, 1
    %v4071 = vadd.f32 %v4069, %v4070
    %v4072 = vld [vmem:[%s45] sm:$0xff]
    %v4073 = vld [vmem:[%s45 + $0x8] sm:$0xff]
    %v4074 = vld [vmem:[%s45 + $0x10] sm:$0xff]
    %v4075 = vld [vmem:[%s45 + $0x18] sm:$0xff]
    %v4076 = vld [vmem:[%s45 + $0x20] sm:$0xff]
    %v4077 = vld [vmem:[%s45 + $0x28] sm:$0xff]
    %v4078 = vld [vmem:[%s45 + $0x30] sm:$0xff]
    %v4079 = vld [vmem:[%s45 + $0x38] sm:$0xff]
    %v4080 = vld [vmem:[%s45 + $0x40] sm:$0xff]
    %v4081 = vld [vmem:[%s45 + $0x48] sm:$0xff]
    %v4082 = vld [vmem:[%s45 + $0x50] sm:$0xff]
    %v4083 = vld [vmem:[%s45 + $0x58] sm:$0xff]
    %v4084 = vld [vmem:[%s45 + $0x60] sm:$0xff]
    %v4085 = vld [vmem:[%s45 + $0x68] sm:$0xff]
    %v4086 = vld [vmem:[%s45 + $0x70] sm:$0xff]
    %v4087 = vld [vmem:[%s45 + $0x78] sm:$0xff]
    %4088 = vmatprep.subr.mxu0 0.0
    %4089 = vmatpush1.msra.mxu0 %v4087
    %4090 = vmatprep.subr.mxu0 0.0
    %4091 = vmatpush1.msra.mxu0 %v4086
    %4092 = vmatprep.subr.mxu0 0.0
    %4093 = vmatpush1.msra.mxu0 %v4085
    %4094 = vmatprep.subr.mxu0 0.0
    %4095 = vmatpush1.msra.mxu0 %v4084
    %4096 = vmatprep.subr.mxu0 0.0
    %4097 = vmatpush1.msra.mxu0 %v4083
    %4098 = vmatprep.subr.mxu0 0.0
    %4099 = vmatpush1.msra.mxu0 %v4082
    %4100 = vmatprep.subr.mxu0 0.0
    %4101 = vmatpush1.msra.mxu0 %v4081
    %4102 = vmatprep.subr.mxu0 0.0
    %4103 = vmatpush1.msra.mxu0 %v4080
    %4104 = vmatprep.subr.mxu0 0.0
    %4105 = vmatpush1.msra.mxu0 %v4079
    %4106 = vmatprep.subr.mxu0 0.0
    %4107 = vmatpush1.msra.mxu0 %v4078
    %4108 = vmatprep.subr.mxu0 0.0
    %4109 = vmatpush1.msra.mxu0 %v4077
    %4110 = vmatprep.subr.mxu0 0.0
    %4111 = vmatpush1.msra.mxu0 %v4076
    %4112 = vmatprep.subr.mxu0 0.0
    %4113 = vmatpush1.msra.mxu0 %v4075
    %4114 = vmatprep.subr.mxu0 0.0
    %4115 = vmatpush1.msra.mxu0 %v4074
    %4116 = vmatprep.subr.mxu0 0.0
    %4117 = vmatpush1.msra.mxu0 %v4073
    %4118 = vmatprep.subr.mxu0 0.0
    %4119 = vmatpush1.msra.mxu0 %v4072
    %4120 = vmatprep.subr.mxu0 0.0
    %4121 = vmatpush2.msra.mxu0 0.0
    %4122 = vmatprep.subr.mxu0 0.0
    %4123 = vmatpush2.msra.mxu0 0.0
    %4124 = vmatprep.subr.mxu0 0.0
    %4125 = vmatpush2.msra.mxu0 0.0
    %4126 = vmatprep.subr.mxu0 0.0
    %4127 = vmatpush2.msra.mxu0 0.0
    %4128 = vmatprep.subr.mxu0 0.0
    %4129 = vmatpush2.msra.mxu0 0.0
    %4130 = vmatprep.subr.mxu0 0.0
    %4131 = vmatpush2.msra.mxu0 0.0
    %4132 = vmatprep.subr.mxu0 0.0
    %4133 = vmatpush2.msra.mxu0 0.0
    %4134 = vmatprep.subr.mxu0 0.0
    %4135 = vmatpush2.msra.mxu0 0.0
    %4136 = vmatprep.subr.mxu0 0.0
    %4137 = vmatpush2.msra.mxu0 0.0
    %4138 = vmatprep.subr.mxu0 0.0
    %4139 = vmatpush2.msra.mxu0 0.0
    %4140 = vmatprep.subr.mxu0 0.0
    %4141 = vmatpush2.msra.mxu0 0.0
    %4142 = vmatprep.subr.mxu0 0.0
    %4143 = vmatpush2.msra.mxu0 0.0
    %4144 = vmatprep.subr.mxu0 0.0
    %4145 = vmatpush2.msra.mxu0 0.0
    %4146 = vmatprep.subr.mxu0 0.0
    %4147 = vmatpush2.msra.mxu0 0.0
    %4148 = vmatprep.subr.mxu0 0.0
    %4149 = vmatpush2.msra.mxu0 0.0
    %4150 = vmatprep.subr.mxu0 0.0
    %4151 = vmatpush2.msra.mxu0 0.0
    %4152 = vmatprep.mubr.f32.mxu0 0.0
    %4153 = vmatmul.mubr.f32.gmra.mxu0 %v4063
    %v4154 = vpop.f32.mrf.mxu0
    %v4155 = vadd.f32 0.0, %v4154
    %v4156 = vpop.f32.mrf.mxu0
    %4157 = vdwg.mxu0
    %4158 = vmatprep.subr.mxu0 0.0
    %4159 = vmatpush1.msra.mxu0 %v4087
    %4160 = vmatprep.subr.mxu0 0.0
    %4161 = vmatpush1.msra.mxu0 %v4086
    %4162 = vmatprep.subr.mxu0 0.0
    %4163 = vmatpush1.msra.mxu0 %v4085
    %4164 = vmatprep.subr.mxu0 0.0
    %4165 = vmatpush1.msra.mxu0 %v4084
    %4166 = vmatprep.subr.mxu0 0.0
    %4167 = vmatpush1.msra.mxu0 %v4083
    %4168 = vmatprep.subr.mxu0 0.0
    %4169 = vmatpush1.msra.mxu0 %v4082
    %4170 = vmatprep.subr.mxu0 0.0
    %4171 = vmatpush1.msra.mxu0 %v4081
    %4172 = vmatprep.subr.mxu0 0.0
    %4173 = vmatpush1.msra.mxu0 %v4080
    %4174 = vmatprep.subr.mxu0 0.0
    %4175 = vmatpush1.msra.mxu0 %v4079
    %4176 = vmatprep.subr.mxu0 0.0
    %4177 = vmatpush1.msra.mxu0 %v4078
    %4178 = vmatprep.subr.mxu0 0.0
    %4179 = vmatpush1.msra.mxu0 %v4077
    %4180 = vmatprep.subr.mxu0 0.0
    %4181 = vmatpush1.msra.mxu0 %v4076
    %4182 = vmatprep.subr.mxu0 0.0
    %4183 = vmatpush1.msra.mxu0 %v4075
    %4184 = vmatprep.subr.mxu0 0.0
    %4185 = vmatpush1.msra.mxu0 %v4074
    %4186 = vmatprep.subr.mxu0 0.0
    %4187 = vmatpush1.msra.mxu0 %v4073
    %4188 = vmatprep.subr.mxu0 0.0
    %4189 = vmatpush1.msra.mxu0 %v4072
    %4190 = vmatprep.subr.mxu0 0.0
    %4191 = vmatpush2.msra.mxu0 0.0
    %4192 = vmatprep.subr.mxu0 0.0
    %4193 = vmatpush2.msra.mxu0 0.0
    %4194 = vmatprep.subr.mxu0 0.0
    %4195 = vmatpush2.msra.mxu0 0.0
    %4196 = vmatprep.subr.mxu0 0.0
    %4197 = vmatpush2.msra.mxu0 0.0
    %4198 = vmatprep.subr.mxu0 0.0
    %4199 = vmatpush2.msra.mxu0 0.0
    %4200 = vmatprep.subr.mxu0 0.0
    %4201 = vmatpush2.msra.mxu0 0.0
    %4202 = vmatprep.subr.mxu0 0.0
    %4203 = vmatpush2.msra.mxu0 0.0
    %4204 = vmatprep.subr.mxu0 0.0
    %4205 = vmatpush2.msra.mxu0 0.0
    %4206 = vmatprep.subr.mxu0 0.0
    %4207 = vmatpush2.msra.mxu0 0.0
    %4208 = vmatprep.subr.mxu0 0.0
    %4209 = vmatpush2.msra.mxu0 0.0
    %4210 = vmatprep.subr.mxu0 0.0
    %4211 = vmatpush2.msra.mxu0 0.0
    %4212 = vmatprep.subr.mxu0 0.0
    %4213 = vmatpush2.msra.mxu0 0.0
    %4214 = vmatprep.subr.mxu0 0.0
    %4215 = vmatpush2.msra.mxu0 0.0
    %4216 = vmatprep.subr.mxu0 0.0
    %4217 = vmatpush2.msra.mxu0 0.0
    %4218 = vmatprep.subr.mxu0 0.0
    %4219 = vmatpush2.msra.mxu0 0.0
    %4220 = vmatprep.subr.mxu0 0.0
    %4221 = vmatpush2.msra.mxu0 0.0
    %4222 = vmatprep.mubr.f32.mxu0 0.0
    %4223 = vmatmul.mubr.f32.gmra.mxu0 %v4071
    %v4224 = vpop.f32.mrf.mxu0
    %v4225 = vadd.f32 0.0, %v4224
    %v4226 = vpop.f32.mrf.mxu0
    %4227 = vdwg.mxu0
    %v4228 = vmul.f32 %v4155, 0.125
    %v4229 = vmul.f32 %v4225, 0.125
    %v4230 = vmul.f32 %v4228, %v4228
    %v4231 = vsub.f32 %v4229, %v4230
    %v4232 = vadd.f32 %v4231, 1e-05
    %v4233 = vrsqrt.pop %v4232
    %v4234 = vld [vmem:[#allocation21] sm:$0x1]
    %v4235 = vmul.f32 %v4234, %v4233
    %v4236 = vld [vmem:[#allocation22] sm:$0x1]
    %v4237 = vmul.f32 %v4228, %v4235
    %v4238 = vsub.f32 %v4236, %v4237
    %v4239 = vld [vmem:[#allocation24] sm:$0xff]
    %v4240 = vld [vmem:[#allocation24 + $0x8] sm:$0xff]
    %v4241 = vld [vmem:[#allocation24 + $0x10] sm:$0xff]
    %v4242 = vld [vmem:[#allocation24 + $0x18] sm:$0xff]
    %v4243 = vld [vmem:[#allocation24 + $0x20] sm:$0xff]
    %v4244 = vld [vmem:[#allocation24 + $0x28] sm:$0xff]
    %v4245 = vld [vmem:[#allocation24 + $0x30] sm:$0xff]
    %v4246 = vld [vmem:[#allocation24 + $0x38] sm:$0xff]
    %v4248 = vsel %vm633, %v4235, 0
    %4250 = vmatprep.subr.mxu0 0.0
    %4251 = vmatpush1.msra.mxu0 0.0
    %4252 = vmatprep.subr.mxu0 0.0
    %4253 = vmatpush1.msra.mxu0 0.0
    %4254 = vmatprep.subr.mxu0 0.0
    %4255 = vmatpush1.msra.mxu0 0.0
    %4256 = vmatprep.subr.mxu0 0.0
    %4257 = vmatpush1.msra.mxu0 0.0
    %4258 = vmatprep.subr.mxu0 0.0
    %4259 = vmatpush1.msra.mxu0 0.0
    %4260 = vmatprep.subr.mxu0 0.0
    %4261 = vmatpush1.msra.mxu0 0.0
    %4262 = vmatprep.subr.mxu0 0.0
    %4263 = vmatpush1.msra.mxu0 0.0
    %4264 = vmatprep.subr.mxu0 0.0
    %4265 = vmatpush1.msra.mxu0 0.0
    %4266 = vmatprep.subr.mxu0 0.0
    %4267 = vmatpush1.msra.mxu0 %v4246
    %4268 = vmatprep.subr.mxu0 0.0
    %4269 = vmatpush1.msra.mxu0 %v4245
    %4270 = vmatprep.subr.mxu0 0.0
    %4271 = vmatpush1.msra.mxu0 %v4244
    %4272 = vmatprep.subr.mxu0 0.0
    %4273 = vmatpush1.msra.mxu0 %v4243
    %4274 = vmatprep.subr.mxu0 0.0
    %4275 = vmatpush1.msra.mxu0 %v4242
    %4276 = vmatprep.subr.mxu0 0.0
    %4277 = vmatpush1.msra.mxu0 %v4241
    %4278 = vmatprep.subr.mxu0 0.0
    %4279 = vmatpush1.msra.mxu0 %v4240
    %4280 = vmatprep.subr.mxu0 0.0
    %4281 = vmatpush1.msra.mxu0 %v4239
    %4282 = vmatprep.subr.mxu0 0.0
    %4283 = vmatpush2.msra.mxu0 0.0
    %4284 = vmatprep.subr.mxu0 0.0
    %4285 = vmatpush2.msra.mxu0 0.0
    %4286 = vmatprep.subr.mxu0 0.0
    %4287 = vmatpush2.msra.mxu0 0.0
    %4288 = vmatprep.subr.mxu0 0.0
    %4289 = vmatpush2.msra.mxu0 0.0
    %4290 = vmatprep.subr.mxu0 0.0
    %4291 = vmatpush2.msra.mxu0 0.0
    %4292 = vmatprep.subr.mxu0 0.0
    %4293 = vmatpush2.msra.mxu0 0.0
    %4294 = vmatprep.subr.mxu0 0.0
    %4295 = vmatpush2.msra.mxu0 0.0
    %4296 = vmatprep.subr.mxu0 0.0
    %4297 = vmatpush2.msra.mxu0 0.0
    %4298 = vmatprep.subr.mxu0 0.0
    %4299 = vmatpush2.msra.mxu0 0.0
    %4300 = vmatprep.subr.mxu0 0.0
    %4301 = vmatpush2.msra.mxu0 0.0
    %4302 = vmatprep.subr.mxu0 0.0
    %4303 = vmatpush2.msra.mxu0 0.0
    %4304 = vmatprep.subr.mxu0 0.0
    %4305 = vmatpush2.msra.mxu0 0.0
    %4306 = vmatprep.subr.mxu0 0.0
    %4307 = vmatpush2.msra.mxu0 0.0
    %4308 = vmatprep.subr.mxu0 0.0
    %4309 = vmatpush2.msra.mxu0 0.0
    %4310 = vmatprep.subr.mxu0 0.0
    %4311 = vmatpush2.msra.mxu0 0.0
    %4312 = vmatprep.subr.mxu0 0.0
    %4313 = vmatpush2.msra.mxu0 0.0
    %4314 = vmatprep.mubr.f32.mxu0 0.0
    %4315 = vmatmul.mubr.f32.gmra.mxu0 %v4248
    %v4316 = vpop.f32.mrf.mxu0
    %v4317 = vadd.f32 0.0, %v4316
    %v4318 = vpop.f32.mrf.mxu0
    %4319 = vdwg.mxu0
    %v4321 = vsel %vm633, %v4238, 0
    %4323 = vmatprep.subr.mxu0 0.0
    %4324 = vmatpush1.msra.mxu0 0.0
    %4325 = vmatprep.subr.mxu0 0.0
    %4326 = vmatpush1.msra.mxu0 0.0
    %4327 = vmatprep.subr.mxu0 0.0
    %4328 = vmatpush1.msra.mxu0 0.0
    %4329 = vmatprep.subr.mxu0 0.0
    %4330 = vmatpush1.msra.mxu0 0.0
    %4331 = vmatprep.subr.mxu0 0.0
    %4332 = vmatpush1.msra.mxu0 0.0
    %4333 = vmatprep.subr.mxu0 0.0
    %4334 = vmatpush1.msra.mxu0 0.0
    %4335 = vmatprep.subr.mxu0 0.0
    %4336 = vmatpush1.msra.mxu0 0.0
    %4337 = vmatprep.subr.mxu0 0.0
    %4338 = vmatpush1.msra.mxu0 0.0
    %4339 = vmatprep.subr.mxu0 0.0
    %4340 = vmatpush1.msra.mxu0 %v4246
    %4341 = vmatprep.subr.mxu0 0.0
    %4342 = vmatpush1.msra.mxu0 %v4245
    %4343 = vmatprep.subr.mxu0 0.0
    %4344 = vmatpush1.msra.mxu0 %v4244
    %4345 = vmatprep.subr.mxu0 0.0
    %4346 = vmatpush1.msra.mxu0 %v4243
    %4347 = vmatprep.subr.mxu0 0.0
    %4348 = vmatpush1.msra.mxu0 %v4242
    %4349 = vmatprep.subr.mxu0 0.0
    %4350 = vmatpush1.msra.mxu0 %v4241
    %4351 = vmatprep.subr.mxu0 0.0
    %4352 = vmatpush1.msra.mxu0 %v4240
    %4353 = vmatprep.subr.mxu0 0.0
    %4354 = vmatpush1.msra.mxu0 %v4239
    %4355 = vmatprep.subr.mxu0 0.0
    %4356 = vmatpush2.msra.mxu0 0.0
    %4357 = vmatprep.subr.mxu0 0.0
    %4358 = vmatpush2.msra.mxu0 0.0
    %4359 = vmatprep.subr.mxu0 0.0
    %4360 = vmatpush2.msra.mxu0 0.0
    %4361 = vmatprep.subr.mxu0 0.0
    %4362 = vmatpush2.msra.mxu0 0.0
    %4363 = vmatprep.subr.mxu0 0.0
    %4364 = vmatpush2.msra.mxu0 0.0
    %4365 = vmatprep.subr.mxu0 0.0
    %4366 = vmatpush2.msra.mxu0 0.0
    %4367 = vmatprep.subr.mxu0 0.0
    %4368 = vmatpush2.msra.mxu0 0.0
    %4369 = vmatprep.subr.mxu0 0.0
    %4370 = vmatpush2.msra.mxu0 0.0
    %4371 = vmatprep.subr.mxu0 0.0
    %4372 = vmatpush2.msra.mxu0 0.0
    %4373 = vmatprep.subr.mxu0 0.0
    %4374 = vmatpush2.msra.mxu0 0.0
    %4375 = vmatprep.subr.mxu0 0.0
    %4376 = vmatpush2.msra.mxu0 0.0
    %4377 = vmatprep.subr.mxu0 0.0
    %4378 = vmatpush2.msra.mxu0 0.0
    %4379 = vmatprep.subr.mxu0 0.0
    %4380 = vmatpush2.msra.mxu0 0.0
    %4381 = vmatprep.subr.mxu0 0.0
    %4382 = vmatpush2.msra.mxu0 0.0
    %4383 = vmatprep.subr.mxu0 0.0
    %4384 = vmatpush2.msra.mxu0 0.0
    %4385 = vmatprep.subr.mxu0 0.0
    %4386 = vmatpush2.msra.mxu0 0.0
    %4387 = vmatprep.mubr.f32.mxu0 0.0
    %4388 = vmatmul.mubr.f32.gmra.mxu0 %v4321
    %v4389 = vpop.f32.mrf.mxu0
    %v4390 = vadd.f32 0.0, %v4389
    %v4391 = vpop.f32.mrf.mxu0
    %4392 = vdwg.mxu0
    %v4393 = vlaneseq
    %v4394 = vshrl.u32 %v4393, 7
    %v4395 = vsub.s32 0, %v4394
    %v4396 = vrot.slane %v4317, %v4395
    %v4397 = vmul.f32 %v4055, %v4396
    %v4398 = vlaneseq
    %v4399 = vshrl.u32 %v4398, 7
    %v4400 = vsub.s32 0, %v4399
    %v4401 = vrot.slane %v4390, %v4400
    %v4402 = vadd.f32 %v4397, %v4401
    %vm4403 = vcmp.gt.f32.partialorder %v4402, 0.0
    %v4404 = vmul.f32 %v4402, 0.2
    %v4405 = vsel %vm4403, %v4402, %v4404
    %v4406 = vld [vmem:[#allocation12] sm:$0xff]
    %v4407 = vld [vmem:[#allocation12 + $0x8] sm:$0xff]
    %v4408 = vld [vmem:[#allocation12 + $0x10] sm:$0xff]
    %v4409 = vld [vmem:[#allocation12 + $0x18] sm:$0xff]
    %v4410 = vld [vmem:[#allocation12 + $0x20] sm:$0xff]
    %v4411 = vld [vmem:[#allocation12 + $0x28] sm:$0xff]
    %v4412 = vld [vmem:[#allocation12 + $0x30] sm:$0xff]
    %v4413 = vld [vmem:[#allocation12 + $0x38] sm:$0xff]
    %v4414 = vld [vmem:[#allocation12 + $0x40] sm:$0xff]
    %v4415 = vld [vmem:[#allocation12 + $0x48] sm:$0xff]
    %v4416 = vld [vmem:[#allocation12 + $0x50] sm:$0xff]
    %v4417 = vld [vmem:[#allocation12 + $0x58] sm:$0xff]
    %v4418 = vld [vmem:[#allocation12 + $0x60] sm:$0xff]
    %v4419 = vld [vmem:[#allocation12 + $0x68] sm:$0xff]
    %v4420 = vld [vmem:[#allocation12 + $0x70] sm:$0xff]
    %v4421 = vld [vmem:[#allocation12 + $0x78] sm:$0xff]
    %4422 = vmatprep.subr.mxu0 0.0
    %4423 = vmatpush1.msra.mxu0 %v4421
    %4424 = vmatprep.subr.mxu0 0.0
    %4425 = vmatpush1.msra.mxu0 %v4420
    %4426 = vmatprep.subr.mxu0 0.0
    %4427 = vmatpush1.msra.mxu0 %v4419
    %4428 = vmatprep.subr.mxu0 0.0
    %4429 = vmatpush1.msra.mxu0 %v4418
    %4430 = vmatprep.subr.mxu0 0.0
    %4431 = vmatpush1.msra.mxu0 %v4417
    %4432 = vmatprep.subr.mxu0 0.0
    %4433 = vmatpush1.msra.mxu0 %v4416
    %4434 = vmatprep.subr.mxu0 0.0
    %4435 = vmatpush1.msra.mxu0 %v4415
    %4436 = vmatprep.subr.mxu0 0.0
    %4437 = vmatpush1.msra.mxu0 %v4414
    %4438 = vmatprep.subr.mxu0 0.0
    %4439 = vmatpush1.msra.mxu0 %v4413
    %4440 = vmatprep.subr.mxu0 0.0
    %4441 = vmatpush1.msra.mxu0 %v4412
    %4442 = vmatprep.subr.mxu0 0.0
    %4443 = vmatpush1.msra.mxu0 %v4411
    %4444 = vmatprep.subr.mxu0 0.0
    %4445 = vmatpush1.msra.mxu0 %v4410
    %4446 = vmatprep.subr.mxu0 0.0
    %4447 = vmatpush1.msra.mxu0 %v4409
    %4448 = vmatprep.subr.mxu0 0.0
    %4449 = vmatpush1.msra.mxu0 %v4408
    %4450 = vmatprep.subr.mxu0 0.0
    %4451 = vmatpush1.msra.mxu0 %v4407
    %4452 = vmatprep.subr.mxu0 0.0
    %4453 = vmatpush1.msra.mxu0 %v4406
    %4454 = vmatprep.subr.mxu0 0.0
    %4455 = vmatpush2.msra.mxu0 0.0
    %4456 = vmatprep.subr.mxu0 0.0
    %4457 = vmatpush2.msra.mxu0 0.0
    %4458 = vmatprep.subr.mxu0 0.0
    %4459 = vmatpush2.msra.mxu0 0.0
    %4460 = vmatprep.subr.mxu0 0.0
    %4461 = vmatpush2.msra.mxu0 0.0
    %4462 = vmatprep.subr.mxu0 0.0
    %4463 = vmatpush2.msra.mxu0 0.0
    %4464 = vmatprep.subr.mxu0 0.0
    %4465 = vmatpush2.msra.mxu0 0.0
    %4466 = vmatprep.subr.mxu0 0.0
    %4467 = vmatpush2.msra.mxu0 0.0
    %4468 = vmatprep.subr.mxu0 0.0
    %4469 = vmatpush2.msra.mxu0 0.0
    %4470 = vmatprep.subr.mxu0 0.0
    %4471 = vmatpush2.msra.mxu0 0.0
    %4472 = vmatprep.subr.mxu0 0.0
    %4473 = vmatpush2.msra.mxu0 0.0
    %4474 = vmatprep.subr.mxu0 0.0
    %4475 = vmatpush2.msra.mxu0 0.0
    %4476 = vmatprep.subr.mxu0 0.0
    %4477 = vmatpush2.msra.mxu0 0.0
    %4478 = vmatprep.subr.mxu0 0.0
    %4479 = vmatpush2.msra.mxu0 0.0
    %4480 = vmatprep.subr.mxu0 0.0
    %4481 = vmatpush2.msra.mxu0 0.0
    %4482 = vmatprep.subr.mxu0 0.0
    %4483 = vmatpush2.msra.mxu0 0.0
    %4484 = vmatprep.subr.mxu0 0.0
    %4485 = vmatpush2.msra.mxu0 0.0
    %4486 = vmatprep.mubr.f32.mxu0 0.0
    %4487 = vmatmul.mubr.f32.gmra.mxu0 %v4405
    %v4488 = vpop.f32.mrf.mxu0
    %v4489 = vadd.f32 0.0, %v4488
    %v4490 = vpop.f32.mrf.mxu0
    %4491 = vdwg.mxu0
    %v4492 = vld [vmem:[#allocation10] sm:$0x3]
    %s4493 = scalar_lea.vmem [#allocation12], 128
    %v4494 = vld [vmem:[%s4493] sm:$0xff]
    %v4495 = vld [vmem:[%s4493 + $0x8] sm:$0xff]
    %v4496 = vld [vmem:[%s4493 + $0x10] sm:$0xff]
    %v4497 = vld [vmem:[%s4493 + $0x18] sm:$0xff]
    %v4498 = vld [vmem:[%s4493 + $0x20] sm:$0xff]
    %v4499 = vld [vmem:[%s4493 + $0x28] sm:$0xff]
    %v4500 = vld [vmem:[%s4493 + $0x30] sm:$0xff]
    %v4501 = vld [vmem:[%s4493 + $0x38] sm:$0xff]
    %v4502 = vld [vmem:[%s4493 + $0x40] sm:$0xff]
    %v4503 = vld [vmem:[%s4493 + $0x48] sm:$0xff]
    %v4504 = vld [vmem:[%s4493 + $0x50] sm:$0xff]
    %v4505 = vld [vmem:[%s4493 + $0x58] sm:$0xff]
    %v4506 = vld [vmem:[%s4493 + $0x60] sm:$0xff]
    %v4507 = vld [vmem:[%s4493 + $0x68] sm:$0xff]
    %v4508 = vld [vmem:[%s4493 + $0x70] sm:$0xff]
    %v4509 = vld [vmem:[%s4493 + $0x78] sm:$0xff]
    %4510 = vmatprep.subr.mxu0 0.0
    %4511 = vmatpush1.msra.mxu0 %v4509
    %4512 = vmatprep.subr.mxu0 0.0
    %4513 = vmatpush1.msra.mxu0 %v4508
    %4514 = vmatprep.subr.mxu0 0.0
    %4515 = vmatpush1.msra.mxu0 %v4507
    %4516 = vmatprep.subr.mxu0 0.0
    %4517 = vmatpush1.msra.mxu0 %v4506
    %4518 = vmatprep.subr.mxu0 0.0
    %4519 = vmatpush1.msra.mxu0 %v4505
    %4520 = vmatprep.subr.mxu0 0.0
    %4521 = vmatpush1.msra.mxu0 %v4504
    %4522 = vmatprep.subr.mxu0 0.0
    %4523 = vmatpush1.msra.mxu0 %v4503
    %4524 = vmatprep.subr.mxu0 0.0
    %4525 = vmatpush1.msra.mxu0 %v4502
    %4526 = vmatprep.subr.mxu0 0.0
    %4527 = vmatpush1.msra.mxu0 %v4501
    %4528 = vmatprep.subr.mxu0 0.0
    %4529 = vmatpush1.msra.mxu0 %v4500
    %4530 = vmatprep.subr.mxu0 0.0
    %4531 = vmatpush1.msra.mxu0 %v4499
    %4532 = vmatprep.subr.mxu0 0.0
    %4533 = vmatpush1.msra.mxu0 %v4498
    %4534 = vmatprep.subr.mxu0 0.0
    %4535 = vmatpush1.msra.mxu0 %v4497
    %4536 = vmatprep.subr.mxu0 0.0
    %4537 = vmatpush1.msra.mxu0 %v4496
    %4538 = vmatprep.subr.mxu0 0.0
    %4539 = vmatpush1.msra.mxu0 %v4495
    %4540 = vmatprep.subr.mxu0 0.0
    %4541 = vmatpush1.msra.mxu0 %v4494
    %4542 = vmatprep.subr.mxu0 0.0
    %4543 = vmatpush2.msra.mxu0 0.0
    %4544 = vmatprep.subr.mxu0 0.0
    %4545 = vmatpush2.msra.mxu0 0.0
    %4546 = vmatprep.subr.mxu0 0.0
    %4547 = vmatpush2.msra.mxu0 0.0
    %4548 = vmatprep.subr.mxu0 0.0
    %4549 = vmatpush2.msra.mxu0 0.0
    %4550 = vmatprep.subr.mxu0 0.0
    %4551 = vmatpush2.msra.mxu0 0.0
    %4552 = vmatprep.subr.mxu0 0.0
    %4553 = vmatpush2.msra.mxu0 0.0
    %4554 = vmatprep.subr.mxu0 0.0
    %4555 = vmatpush2.msra.mxu0 0.0
    %4556 = vmatprep.subr.mxu0 0.0
    %4557 = vmatpush2.msra.mxu0 0.0
    %4558 = vmatprep.subr.mxu0 0.0
    %4559 = vmatpush2.msra.mxu0 0.0
    %4560 = vmatprep.subr.mxu0 0.0
    %4561 = vmatpush2.msra.mxu0 0.0
    %4562 = vmatprep.subr.mxu0 0.0
    %4563 = vmatpush2.msra.mxu0 0.0
    %4564 = vmatprep.subr.mxu0 0.0
    %4565 = vmatpush2.msra.mxu0 0.0
    %4566 = vmatprep.subr.mxu0 0.0
    %4567 = vmatpush2.msra.mxu0 0.0
    %4568 = vmatprep.subr.mxu0 0.0
    %4569 = vmatpush2.msra.mxu0 0.0
    %4570 = vmatprep.subr.mxu0 0.0
    %4571 = vmatpush2.msra.mxu0 0.0
    %4572 = vmatprep.subr.mxu0 0.0
    %4573 = vmatpush2.msra.mxu0 0.0
    %4574 = vmatprep.mubr.f32.mxu0 0.0
    %4575 = vmatmul.mubr.f32.gmra.mxu0 %v4405
    %v4576 = vpop.f32.mrf.mxu0
    %v4577 = vadd.f32 0.0, %v4576
    %v4578 = vpop.f32.mrf.mxu0
    %4579 = vdwg.mxu0
    %s4580 = scalar_lea.vmem [#allocation10], 2
    %v4581 = vld [vmem:[%s4580] sm:$0x3]
    %vm4582 = vcmask 31744
    %v4584 = vsel %vm4582, %v4581, 0
    %v4587 = vsel %vm4056, %v4577, 0
    %4589 = vmatprep.subr.mxu0 0.0
    %4590 = vmatpush1.msra.mxu0 0.0
    %4591 = vmatprep.subr.mxu0 0.0
    %4592 = vmatpush1.msra.mxu0 0.0
    %4593 = vmatprep.subr.mxu0 0.0
    %4594 = vmatpush1.msra.mxu0 0.0
    %4595 = vmatprep.subr.mxu0 0.0
    %4596 = vmatpush1.msra.mxu0 0.0
    %4597 = vmatprep.subr.mxu0 0.0
    %4598 = vmatpush1.msra.mxu0 0.0
    %4599 = vmatprep.subr.mxu0 0.0
    %4600 = vmatpush1.msra.mxu0 0.0
    %4601 = vmatprep.subr.mxu0 0.0
    %4602 = vmatpush1.msra.mxu0 0.0
    %4603 = vmatprep.subr.mxu0 0.0
    %4604 = vmatpush1.msra.mxu0 0.0
    %4605 = vmatprep.subr.mxu0 0.0
    %4606 = vmatpush1.msra.mxu0 0.0
    %4607 = vmatprep.subr.mxu0 0.0
    %4608 = vmatpush1.msra.mxu0 0.0
    %4609 = vmatprep.subr.mxu0 0.0
    %4610 = vmatpush1.msra.mxu0 0.0
    %4611 = vmatprep.subr.mxu0 0.0
    %4612 = vmatpush1.msra.mxu0 0.0
    %4613 = vmatprep.subr.mxu0 0.0
    %4614 = vmatpush1.msra.mxu0 0.0
    %4615 = vmatprep.subr.mxu0 0.0
    %4616 = vmatpush1.msra.mxu0 0.0
    %4617 = vmatprep.subr.mxu0 0.0
    %4618 = vmatpush1.msra.mxu0 0.0
    %4619 = vmatprep.subr.mxu0 0.0
    %4620 = vmatpush1.msra.mxu0 %v4587
    %4621 = vmatprep.subr.mxu0 0.0
    %4622 = vmatpush2.msra.mxu0 0.0
    %4623 = vmatprep.subr.mxu0 0.0
    %4624 = vmatpush2.msra.mxu0 0.0
    %4625 = vmatprep.subr.mxu0 0.0
    %4626 = vmatpush2.msra.mxu0 0.0
    %4627 = vmatprep.subr.mxu0 0.0
    %4628 = vmatpush2.msra.mxu0 0.0
    %4629 = vmatprep.subr.mxu0 0.0
    %4630 = vmatpush2.msra.mxu0 0.0
    %4631 = vmatprep.subr.mxu0 0.0
    %4632 = vmatpush2.msra.mxu0 0.0
    %4633 = vmatprep.subr.mxu0 0.0
    %4634 = vmatpush2.msra.mxu0 0.0
    %4635 = vmatprep.subr.mxu0 0.0
    %4636 = vmatpush2.msra.mxu0 0.0
    %4637 = vmatprep.subr.mxu0 0.0
    %4638 = vmatpush2.msra.mxu0 0.0
    %4639 = vmatprep.subr.mxu0 0.0
    %4640 = vmatpush2.msra.mxu0 0.0
    %4641 = vmatprep.subr.mxu0 0.0
    %4642 = vmatpush2.msra.mxu0 0.0
    %4643 = vmatprep.subr.mxu0 0.0
    %4644 = vmatpush2.msra.mxu0 0.0
    %4645 = vmatprep.subr.mxu0 0.0
    %4646 = vmatpush2.msra.mxu0 0.0
    %4647 = vmatprep.subr.mxu0 0.0
    %4648 = vmatpush2.msra.mxu0 0.0
    %4649 = vmatprep.subr.mxu0 0.0
    %4650 = vmatpush2.msra.mxu0 0.0
    %4651 = vmatprep.subr.mxu0 0.0
    %4652 = vmatpush2.msra.mxu0 0.0
    %4653 = vmatprep.mubr.f32.mxu0 0.0
    %4654 = vmatmul.mubr.f32.gmra.mxu0 %v4584
    %v4655 = vpop.f32.mrf.mxu0
    %v4656 = vadd.f32 0.0, %v4655
    %v4657 = vpop.f32.mrf.mxu0
    %4658 = vdwg.mxu0
    %v4660 = vsel %vm4582, %v4492, 0
    %v4663 = vsel %vm4056, %v4489, 0
    %4665 = vmatprep.subr.mxu0 0.0
    %4666 = vmatpush1.msra.mxu0 0.0
    %4667 = vmatprep.subr.mxu0 0.0
    %4668 = vmatpush1.msra.mxu0 0.0
    %4669 = vmatprep.subr.mxu0 0.0
    %4670 = vmatpush1.msra.mxu0 0.0
    %4671 = vmatprep.subr.mxu0 0.0
    %4672 = vmatpush1.msra.mxu0 0.0
    %4673 = vmatprep.subr.mxu0 0.0
    %4674 = vmatpush1.msra.mxu0 0.0
    %4675 = vmatprep.subr.mxu0 0.0
    %4676 = vmatpush1.msra.mxu0 0.0
    %4677 = vmatprep.subr.mxu0 0.0
    %4678 = vmatpush1.msra.mxu0 0.0
    %4679 = vmatprep.subr.mxu0 0.0
    %4680 = vmatpush1.msra.mxu0 0.0
    %4681 = vmatprep.subr.mxu0 0.0
    %4682 = vmatpush1.msra.mxu0 0.0
    %4683 = vmatprep.subr.mxu0 0.0
    %4684 = vmatpush1.msra.mxu0 0.0
    %4685 = vmatprep.subr.mxu0 0.0
    %4686 = vmatpush1.msra.mxu0 0.0
    %4687 = vmatprep.subr.mxu0 0.0
    %4688 = vmatpush1.msra.mxu0 0.0
    %4689 = vmatprep.subr.mxu0 0.0
    %4690 = vmatpush1.msra.mxu0 0.0
    %4691 = vmatprep.subr.mxu0 0.0
    %4692 = vmatpush1.msra.mxu0 0.0
    %4693 = vmatprep.subr.mxu0 0.0
    %4694 = vmatpush1.msra.mxu0 0.0
    %4695 = vmatprep.subr.mxu0 0.0
    %4696 = vmatpush1.msra.mxu0 %v4663
    %4697 = vmatprep.subr.mxu0 0.0
    %4698 = vmatpush2.msra.mxu0 0.0
    %4699 = vmatprep.subr.mxu0 0.0
    %4700 = vmatpush2.msra.mxu0 0.0
    %4701 = vmatprep.subr.mxu0 0.0
    %4702 = vmatpush2.msra.mxu0 0.0
    %4703 = vmatprep.subr.mxu0 0.0
    %4704 = vmatpush2.msra.mxu0 0.0
    %4705 = vmatprep.subr.mxu0 0.0
    %4706 = vmatpush2.msra.mxu0 0.0
    %4707 = vmatprep.subr.mxu0 0.0
    %4708 = vmatpush2.msra.mxu0 0.0
    %4709 = vmatprep.subr.mxu0 0.0
    %4710 = vmatpush2.msra.mxu0 0.0
    %4711 = vmatprep.subr.mxu0 0.0
    %4712 = vmatpush2.msra.mxu0 0.0
    %4713 = vmatprep.subr.mxu0 0.0
    %4714 = vmatpush2.msra.mxu0 0.0
    %4715 = vmatprep.subr.mxu0 0.0
    %4716 = vmatpush2.msra.mxu0 0.0
    %4717 = vmatprep.subr.mxu0 0.0
    %4718 = vmatpush2.msra.mxu0 0.0
    %4719 = vmatprep.subr.mxu0 0.0
    %4720 = vmatpush2.msra.mxu0 0.0
    %4721 = vmatprep.subr.mxu0 0.0
    %4722 = vmatpush2.msra.mxu0 0.0
    %4723 = vmatprep.subr.mxu0 0.0
    %4724 = vmatpush2.msra.mxu0 0.0
    %4725 = vmatprep.subr.mxu0 0.0
    %4726 = vmatpush2.msra.mxu0 0.0
    %4727 = vmatprep.subr.mxu0 0.0
    %4728 = vmatpush2.msra.mxu0 0.0
    %4729 = vmatprep.mubr.f32.mxu0 0.0
    %4730 = vmatmul.mubr.f32.gmra.mxu0 %v4660
    %v4731 = vpop.f32.mrf.mxu0
    %v4732 = vadd.f32 %v4656, %v4731
    %v4733 = vpop.f32.mrf.mxu0
    %4734 = vdwg.mxu0
    %s4735 = scalar_lea.vmem [#allocation12], 256
    %v4736 = vld [vmem:[%s4735] sm:$0xff]
    %v4737 = vld [vmem:[%s4735 + $0x8] sm:$0xff]
    %v4738 = vld [vmem:[%s4735 + $0x10] sm:$0xff]
    %v4739 = vld [vmem:[%s4735 + $0x18] sm:$0xff]
    %v4740 = vld [vmem:[%s4735 + $0x20] sm:$0xff]
    %v4741 = vld [vmem:[%s4735 + $0x28] sm:$0xff]
    %v4742 = vld [vmem:[%s4735 + $0x30] sm:$0xff]
    %v4743 = vld [vmem:[%s4735 + $0x38] sm:$0xff]
    %v4744 = vld [vmem:[%s4735 + $0x40] sm:$0xff]
    %v4745 = vld [vmem:[%s4735 + $0x48] sm:$0xff]
    %v4746 = vld [vmem:[%s4735 + $0x50] sm:$0xff]
    %v4747 = vld [vmem:[%s4735 + $0x58] sm:$0xff]
    %v4748 = vld [vmem:[%s4735 + $0x60] sm:$0xff]
    %v4749 = vld [vmem:[%s4735 + $0x68] sm:$0xff]
    %v4750 = vld [vmem:[%s4735 + $0x70] sm:$0xff]
    %v4751 = vld [vmem:[%s4735 + $0x78] sm:$0xff]
    %4752 = vmatprep.subr.mxu0 0.0
    %4753 = vmatpush1.msra.mxu0 %v4751
    %4754 = vmatprep.subr.mxu0 0.0
    %4755 = vmatpush1.msra.mxu0 %v4750
    %4756 = vmatprep.subr.mxu0 0.0
    %4757 = vmatpush1.msra.mxu0 %v4749
    %4758 = vmatprep.subr.mxu0 0.0
    %4759 = vmatpush1.msra.mxu0 %v4748
    %4760 = vmatprep.subr.mxu0 0.0
    %4761 = vmatpush1.msra.mxu0 %v4747
    %4762 = vmatprep.subr.mxu0 0.0
    %4763 = vmatpush1.msra.mxu0 %v4746
    %4764 = vmatprep.subr.mxu0 0.0
    %4765 = vmatpush1.msra.mxu0 %v4745
    %4766 = vmatprep.subr.mxu0 0.0
    %4767 = vmatpush1.msra.mxu0 %v4744
    %4768 = vmatprep.subr.mxu0 0.0
    %4769 = vmatpush1.msra.mxu0 %v4743
    %4770 = vmatprep.subr.mxu0 0.0
    %4771 = vmatpush1.msra.mxu0 %v4742
    %4772 = vmatprep.subr.mxu0 0.0
    %4773 = vmatpush1.msra.mxu0 %v4741
    %4774 = vmatprep.subr.mxu0 0.0
    %4775 = vmatpush1.msra.mxu0 %v4740
    %4776 = vmatprep.subr.mxu0 0.0
    %4777 = vmatpush1.msra.mxu0 %v4739
    %4778 = vmatprep.subr.mxu0 0.0
    %4779 = vmatpush1.msra.mxu0 %v4738
    %4780 = vmatprep.subr.mxu0 0.0
    %4781 = vmatpush1.msra.mxu0 %v4737
    %4782 = vmatprep.subr.mxu0 0.0
    %4783 = vmatpush1.msra.mxu0 %v4736
    %4784 = vmatprep.subr.mxu0 0.0
    %4785 = vmatpush2.msra.mxu0 0.0
    %4786 = vmatprep.subr.mxu0 0.0
    %4787 = vmatpush2.msra.mxu0 0.0
    %4788 = vmatprep.subr.mxu0 0.0
    %4789 = vmatpush2.msra.mxu0 0.0
    %4790 = vmatprep.subr.mxu0 0.0
    %4791 = vmatpush2.msra.mxu0 0.0
    %4792 = vmatprep.subr.mxu0 0.0
    %4793 = vmatpush2.msra.mxu0 0.0
    %4794 = vmatprep.subr.mxu0 0.0
    %4795 = vmatpush2.msra.mxu0 0.0
    %4796 = vmatprep.subr.mxu0 0.0
    %4797 = vmatpush2.msra.mxu0 0.0
    %4798 = vmatprep.subr.mxu0 0.0
    %4799 = vmatpush2.msra.mxu0 0.0
    %4800 = vmatprep.subr.mxu0 0.0
    %4801 = vmatpush2.msra.mxu0 0.0
    %4802 = vmatprep.subr.mxu0 0.0
    %4803 = vmatpush2.msra.mxu0 0.0
    %4804 = vmatprep.subr.mxu0 0.0
    %4805 = vmatpush2.msra.mxu0 0.0
    %4806 = vmatprep.subr.mxu0 0.0
    %4807 = vmatpush2.msra.mxu0 0.0
    %4808 = vmatprep.subr.mxu0 0.0
    %4809 = vmatpush2.msra.mxu0 0.0
    %4810 = vmatprep.subr.mxu0 0.0
    %4811 = vmatpush2.msra.mxu0 0.0
    %4812 = vmatprep.subr.mxu0 0.0
    %4813 = vmatpush2.msra.mxu0 0.0
    %4814 = vmatprep.subr.mxu0 0.0
    %4815 = vmatpush2.msra.mxu0 0.0
    %4816 = vmatprep.mubr.f32.mxu0 0.0
    %4817 = vmatmul.mubr.f32.gmra.mxu0 %v4405
    %v4818 = vpop.f32.mrf.mxu0
    %v4819 = vadd.f32 0.0, %v4818
    %v4820 = vpop.f32.mrf.mxu0
    %4821 = vdwg.mxu0
    %s4822 = scalar_lea.vmem [#allocation10], 4
    %v4823 = vld [vmem:[%s4822] sm:$0x3]
    %v4825 = vsel %vm4582, %v4823, 0
    %v4828 = vsel %vm4056, %v4819, 0
    %4830 = vmatprep.subr.mxu0 0.0
    %4831 = vmatpush1.msra.mxu0 0.0
    %4832 = vmatprep.subr.mxu0 0.0
    %4833 = vmatpush1.msra.mxu0 0.0
    %4834 = vmatprep.subr.mxu0 0.0
    %4835 = vmatpush1.msra.mxu0 0.0
    %4836 = vmatprep.subr.mxu0 0.0
    %4837 = vmatpush1.msra.mxu0 0.0
    %4838 = vmatprep.subr.mxu0 0.0
    %4839 = vmatpush1.msra.mxu0 0.0
    %4840 = vmatprep.subr.mxu0 0.0
    %4841 = vmatpush1.msra.mxu0 0.0
    %4842 = vmatprep.subr.mxu0 0.0
    %4843 = vmatpush1.msra.mxu0 0.0
    %4844 = vmatprep.subr.mxu0 0.0
    %4845 = vmatpush1.msra.mxu0 0.0
    %4846 = vmatprep.subr.mxu0 0.0
    %4847 = vmatpush1.msra.mxu0 0.0
    %4848 = vmatprep.subr.mxu0 0.0
    %4849 = vmatpush1.msra.mxu0 0.0
    %4850 = vmatprep.subr.mxu0 0.0
    %4851 = vmatpush1.msra.mxu0 0.0
    %4852 = vmatprep.subr.mxu0 0.0
    %4853 = vmatpush1.msra.mxu0 0.0
    %4854 = vmatprep.subr.mxu0 0.0
    %4855 = vmatpush1.msra.mxu0 0.0
    %4856 = vmatprep.subr.mxu0 0.0
    %4857 = vmatpush1.msra.mxu0 0.0
    %4858 = vmatprep.subr.mxu0 0.0
    %4859 = vmatpush1.msra.mxu0 0.0
    %4860 = vmatprep.subr.mxu0 0.0
    %4861 = vmatpush1.msra.mxu0 %v4828
    %4862 = vmatprep.subr.mxu0 0.0
    %4863 = vmatpush2.msra.mxu0 0.0
    %4864 = vmatprep.subr.mxu0 0.0
    %4865 = vmatpush2.msra.mxu0 0.0
    %4866 = vmatprep.subr.mxu0 0.0
    %4867 = vmatpush2.msra.mxu0 0.0
    %4868 = vmatprep.subr.mxu0 0.0
    %4869 = vmatpush2.msra.mxu0 0.0
    %4870 = vmatprep.subr.mxu0 0.0
    %4871 = vmatpush2.msra.mxu0 0.0
    %4872 = vmatprep.subr.mxu0 0.0
    %4873 = vmatpush2.msra.mxu0 0.0
    %4874 = vmatprep.subr.mxu0 0.0
    %4875 = vmatpush2.msra.mxu0 0.0
    %4876 = vmatprep.subr.mxu0 0.0
    %4877 = vmatpush2.msra.mxu0 0.0
    %4878 = vmatprep.subr.mxu0 0.0
    %4879 = vmatpush2.msra.mxu0 0.0
    %4880 = vmatprep.subr.mxu0 0.0
    %4881 = vmatpush2.msra.mxu0 0.0
    %4882 = vmatprep.subr.mxu0 0.0
    %4883 = vmatpush2.msra.mxu0 0.0
    %4884 = vmatprep.subr.mxu0 0.0
    %4885 = vmatpush2.msra.mxu0 0.0
    %4886 = vmatprep.subr.mxu0 0.0
    %4887 = vmatpush2.msra.mxu0 0.0
    %4888 = vmatprep.subr.mxu0 0.0
    %4889 = vmatpush2.msra.mxu0 0.0
    %4890 = vmatprep.subr.mxu0 0.0
    %4891 = vmatpush2.msra.mxu0 0.0
    %4892 = vmatprep.subr.mxu0 0.0
    %4893 = vmatpush2.msra.mxu0 0.0
    %4894 = vmatprep.mubr.f32.mxu0 0.0
    %4895 = vmatmul.mubr.f32.gmra.mxu0 %v4825
    %v4896 = vpop.f32.mrf.mxu0
    %v4897 = vadd.f32 0.0, %v4896
    %v4898 = vpop.f32.mrf.mxu0
    %4899 = vdwg.mxu0
    %v4900 = vadd.f32 %v4732, %v4897
    %s4901 = scalar_lea.vmem [#allocation12], 384
    %v4902 = vld [vmem:[%s4901] sm:$0xff]
    %v4903 = vld [vmem:[%s4901 + $0x8] sm:$0xff]
    %v4904 = vld [vmem:[%s4901 + $0x10] sm:$0xff]
    %v4905 = vld [vmem:[%s4901 + $0x18] sm:$0xff]
    %v4906 = vld [vmem:[%s4901 + $0x20] sm:$0xff]
    %v4907 = vld [vmem:[%s4901 + $0x28] sm:$0xff]
    %v4908 = vld [vmem:[%s4901 + $0x30] sm:$0xff]
    %v4909 = vld [vmem:[%s4901 + $0x38] sm:$0xff]
    %v4910 = vld [vmem:[%s4901 + $0x40] sm:$0xff]
    %v4911 = vld [vmem:[%s4901 + $0x48] sm:$0xff]
    %v4912 = vld [vmem:[%s4901 + $0x50] sm:$0xff]
    %v4913 = vld [vmem:[%s4901 + $0x58] sm:$0xff]
    %v4914 = vld [vmem:[%s4901 + $0x60] sm:$0xff]
    %v4915 = vld [vmem:[%s4901 + $0x68] sm:$0xff]
    %v4916 = vld [vmem:[%s4901 + $0x70] sm:$0xff]
    %v4917 = vld [vmem:[%s4901 + $0x78] sm:$0xff]
    %4918 = vmatprep.subr.mxu0 0.0
    %4919 = vmatpush1.msra.mxu0 %v4917
    %4920 = vmatprep.subr.mxu0 0.0
    %4921 = vmatpush1.msra.mxu0 %v4916
    %4922 = vmatprep.subr.mxu0 0.0
    %4923 = vmatpush1.msra.mxu0 %v4915
    %4924 = vmatprep.subr.mxu0 0.0
    %4925 = vmatpush1.msra.mxu0 %v4914
    %4926 = vmatprep.subr.mxu0 0.0
    %4927 = vmatpush1.msra.mxu0 %v4913
    %4928 = vmatprep.subr.mxu0 0.0
    %4929 = vmatpush1.msra.mxu0 %v4912
    %4930 = vmatprep.subr.mxu0 0.0
    %4931 = vmatpush1.msra.mxu0 %v4911
    %4932 = vmatprep.subr.mxu0 0.0
    %4933 = vmatpush1.msra.mxu0 %v4910
    %4934 = vmatprep.subr.mxu0 0.0
    %4935 = vmatpush1.msra.mxu0 %v4909
    %4936 = vmatprep.subr.mxu0 0.0
    %4937 = vmatpush1.msra.mxu0 %v4908
    %4938 = vmatprep.subr.mxu0 0.0
    %4939 = vmatpush1.msra.mxu0 %v4907
    %4940 = vmatprep.subr.mxu0 0.0
    %4941 = vmatpush1.msra.mxu0 %v4906
    %4942 = vmatprep.subr.mxu0 0.0
    %4943 = vmatpush1.msra.mxu0 %v4905
    %4944 = vmatprep.subr.mxu0 0.0
    %4945 = vmatpush1.msra.mxu0 %v4904
    %4946 = vmatprep.subr.mxu0 0.0
    %4947 = vmatpush1.msra.mxu0 %v4903
    %4948 = vmatprep.subr.mxu0 0.0
    %4949 = vmatpush1.msra.mxu0 %v4902
    %4950 = vmatprep.subr.mxu0 0.0
    %4951 = vmatpush2.msra.mxu0 0.0
    %4952 = vmatprep.subr.mxu0 0.0
    %4953 = vmatpush2.msra.mxu0 0.0
    %4954 = vmatprep.subr.mxu0 0.0
    %4955 = vmatpush2.msra.mxu0 0.0
    %4956 = vmatprep.subr.mxu0 0.0
    %4957 = vmatpush2.msra.mxu0 0.0
    %4958 = vmatprep.subr.mxu0 0.0
    %4959 = vmatpush2.msra.mxu0 0.0
    %4960 = vmatprep.subr.mxu0 0.0
    %4961 = vmatpush2.msra.mxu0 0.0
    %4962 = vmatprep.subr.mxu0 0.0
    %4963 = vmatpush2.msra.mxu0 0.0
    %4964 = vmatprep.subr.mxu0 0.0
    %4965 = vmatpush2.msra.mxu0 0.0
    %4966 = vmatprep.subr.mxu0 0.0
    %4967 = vmatpush2.msra.mxu0 0.0
    %4968 = vmatprep.subr.mxu0 0.0
    %4969 = vmatpush2.msra.mxu0 0.0
    %4970 = vmatprep.subr.mxu0 0.0
    %4971 = vmatpush2.msra.mxu0 0.0
    %4972 = vmatprep.subr.mxu0 0.0
    %4973 = vmatpush2.msra.mxu0 0.0
    %4974 = vmatprep.subr.mxu0 0.0
    %4975 = vmatpush2.msra.mxu0 0.0
    %4976 = vmatprep.subr.mxu0 0.0
    %4977 = vmatpush2.msra.mxu0 0.0
    %4978 = vmatprep.subr.mxu0 0.0
    %4979 = vmatpush2.msra.mxu0 0.0
    %4980 = vmatprep.subr.mxu0 0.0
    %4981 = vmatpush2.msra.mxu0 0.0
    %4982 = vmatprep.mubr.f32.mxu0 0.0
    %4983 = vmatmul.mubr.f32.gmra.mxu0 %v4405
    %v4984 = vpop.f32.mrf.mxu0
    %v4985 = vadd.f32 0.0, %v4984
    %v4986 = vpop.f32.mrf.mxu0
    %4987 = vdwg.mxu0
    %s4988 = scalar_lea.vmem [#allocation10], 6
    %v4989 = vld [vmem:[%s4988] sm:$0x3]
    %v4991 = vsel %vm4582, %v4989, 0
    %v4994 = vsel %vm4056, %v4985, 0
    %4996 = vmatprep.subr.mxu0 0.0
    %4997 = vmatpush1.msra.mxu0 0.0
    %4998 = vmatprep.subr.mxu0 0.0
    %4999 = vmatpush1.msra.mxu0 0.0
    %5000 = vmatprep.subr.mxu0 0.0
    %5001 = vmatpush1.msra.mxu0 0.0
    %5002 = vmatprep.subr.mxu0 0.0
    %5003 = vmatpush1.msra.mxu0 0.0
    %5004 = vmatprep.subr.mxu0 0.0
    %5005 = vmatpush1.msra.mxu0 0.0
    %5006 = vmatprep.subr.mxu0 0.0
    %5007 = vmatpush1.msra.mxu0 0.0
    %5008 = vmatprep.subr.mxu0 0.0
    %5009 = vmatpush1.msra.mxu0 0.0
    %5010 = vmatprep.subr.mxu0 0.0
    %5011 = vmatpush1.msra.mxu0 0.0
    %5012 = vmatprep.subr.mxu0 0.0
    %5013 = vmatpush1.msra.mxu0 0.0
    %5014 = vmatprep.subr.mxu0 0.0
    %5015 = vmatpush1.msra.mxu0 0.0
    %5016 = vmatprep.subr.mxu0 0.0
    %5017 = vmatpush1.msra.mxu0 0.0
    %5018 = vmatprep.subr.mxu0 0.0
    %5019 = vmatpush1.msra.mxu0 0.0
    %5020 = vmatprep.subr.mxu0 0.0
    %5021 = vmatpush1.msra.mxu0 0.0
    %5022 = vmatprep.subr.mxu0 0.0
    %5023 = vmatpush1.msra.mxu0 0.0
    %5024 = vmatprep.subr.mxu0 0.0
    %5025 = vmatpush1.msra.mxu0 0.0
    %5026 = vmatprep.subr.mxu0 0.0
    %5027 = vmatpush1.msra.mxu0 %v4994
    %5028 = vmatprep.subr.mxu0 0.0
    %5029 = vmatpush2.msra.mxu0 0.0
    %5030 = vmatprep.subr.mxu0 0.0
    %5031 = vmatpush2.msra.mxu0 0.0
    %5032 = vmatprep.subr.mxu0 0.0
    %5033 = vmatpush2.msra.mxu0 0.0
    %5034 = vmatprep.subr.mxu0 0.0
    %5035 = vmatpush2.msra.mxu0 0.0
    %5036 = vmatprep.subr.mxu0 0.0
    %5037 = vmatpush2.msra.mxu0 0.0
    %5038 = vmatprep.subr.mxu0 0.0
    %5039 = vmatpush2.msra.mxu0 0.0
    %5040 = vmatprep.subr.mxu0 0.0
    %5041 = vmatpush2.msra.mxu0 0.0
    %5042 = vmatprep.subr.mxu0 0.0
    %5043 = vmatpush2.msra.mxu0 0.0
    %5044 = vmatprep.subr.mxu0 0.0
    %5045 = vmatpush2.msra.mxu0 0.0
    %5046 = vmatprep.subr.mxu0 0.0
    %5047 = vmatpush2.msra.mxu0 0.0
    %5048 = vmatprep.subr.mxu0 0.0
    %5049 = vmatpush2.msra.mxu0 0.0
    %5050 = vmatprep.subr.mxu0 0.0
    %5051 = vmatpush2.msra.mxu0 0.0
    %5052 = vmatprep.subr.mxu0 0.0
    %5053 = vmatpush2.msra.mxu0 0.0
    %5054 = vmatprep.subr.mxu0 0.0
    %5055 = vmatpush2.msra.mxu0 0.0
    %5056 = vmatprep.subr.mxu0 0.0
    %5057 = vmatpush2.msra.mxu0 0.0
    %5058 = vmatprep.subr.mxu0 0.0
    %5059 = vmatpush2.msra.mxu0 0.0
    %5060 = vmatprep.mubr.f32.mxu0 0.0
    %5061 = vmatmul.mubr.f32.gmra.mxu0 %v4991
    %v5062 = vpop.f32.mrf.mxu0
    %v5063 = vadd.f32 0.0, %v5062
    %v5064 = vpop.f32.mrf.mxu0
    %5065 = vdwg.mxu0
    %v5066 = vadd.f32 %v4900, %v5063
    %vm5067 = vcmask 1041408
    %v5068 = vsel %vm5067, %v5066, 0.0
    %v5069 = vrot.slane %v5068, 4
    %v5070 = vadd.f32 %v5068, %v5069
    %v5071 = vrot.slane %v5070, 2
    %v5072 = vadd.f32 %v5070, %v5071
    %v5073 = vrot.slane %v5072, 1
    %v5074 = vadd.f32 %v5072, %v5073
    %v5075 = vmul.f32 %v5066, %v5066
    %v5076 = vsel %vm5067, %v5075, 0.0
    %v5077 = vrot.slane %v5076, 4
    %v5078 = vadd.f32 %v5076, %v5077
    %v5079 = vrot.slane %v5078, 2
    %v5080 = vadd.f32 %v5078, %v5079
    %v5081 = vrot.slane %v5080, 1
    %v5082 = vadd.f32 %v5080, %v5081
    %v5083 = vld [vmem:[%s53] sm:$0xff]
    %v5084 = vld [vmem:[%s53 + $0x8] sm:$0xff]
    %v5085 = vld [vmem:[%s53 + $0x10] sm:$0xff]
    %v5086 = vld [vmem:[%s53 + $0x18] sm:$0xff]
    %v5087 = vld [vmem:[%s53 + $0x20] sm:$0xff]
    %v5088 = vld [vmem:[%s53 + $0x28] sm:$0xff]
    %v5089 = vld [vmem:[%s53 + $0x30] sm:$0xff]
    %v5090 = vld [vmem:[%s53 + $0x38] sm:$0xff]
    %v5091 = vld [vmem:[%s53 + $0x40] sm:$0xff]
    %v5092 = vld [vmem:[%s53 + $0x48] sm:$0xff]
    %v5093 = vld [vmem:[%s53 + $0x50] sm:$0xff]
    %v5094 = vld [vmem:[%s53 + $0x58] sm:$0xff]
    %v5095 = vld [vmem:[%s53 + $0x60] sm:$0xff]
    %v5096 = vld [vmem:[%s53 + $0x68] sm:$0xff]
    %v5097 = vld [vmem:[%s53 + $0x70] sm:$0xff]
    %v5098 = vld [vmem:[%s53 + $0x78] sm:$0xff]
    %5099 = vmatprep.subr.mxu0 0.0
    %5100 = vmatpush1.msra.mxu0 %v5098
    %5101 = vmatprep.subr.mxu0 0.0
    %5102 = vmatpush1.msra.mxu0 %v5097
    %5103 = vmatprep.subr.mxu0 0.0
    %5104 = vmatpush1.msra.mxu0 %v5096
    %5105 = vmatprep.subr.mxu0 0.0
    %5106 = vmatpush1.msra.mxu0 %v5095
    %5107 = vmatprep.subr.mxu0 0.0
    %5108 = vmatpush1.msra.mxu0 %v5094
    %5109 = vmatprep.subr.mxu0 0.0
    %5110 = vmatpush1.msra.mxu0 %v5093
    %5111 = vmatprep.subr.mxu0 0.0
    %5112 = vmatpush1.msra.mxu0 %v5092
    %5113 = vmatprep.subr.mxu0 0.0
    %5114 = vmatpush1.msra.mxu0 %v5091
    %5115 = vmatprep.subr.mxu0 0.0
    %5116 = vmatpush1.msra.mxu0 %v5090
    %5117 = vmatprep.subr.mxu0 0.0
    %5118 = vmatpush1.msra.mxu0 %v5089
    %5119 = vmatprep.subr.mxu0 0.0
    %5120 = vmatpush1.msra.mxu0 %v5088
    %5121 = vmatprep.subr.mxu0 0.0
    %5122 = vmatpush1.msra.mxu0 %v5087
    %5123 = vmatprep.subr.mxu0 0.0
    %5124 = vmatpush1.msra.mxu0 %v5086
    %5125 = vmatprep.subr.mxu0 0.0
    %5126 = vmatpush1.msra.mxu0 %v5085
    %5127 = vmatprep.subr.mxu0 0.0
    %5128 = vmatpush1.msra.mxu0 %v5084
    %5129 = vmatprep.subr.mxu0 0.0
    %5130 = vmatpush1.msra.mxu0 %v5083
    %5131 = vmatprep.subr.mxu0 0.0
    %5132 = vmatpush2.msra.mxu0 0.0
    %5133 = vmatprep.subr.mxu0 0.0
    %5134 = vmatpush2.msra.mxu0 0.0
    %5135 = vmatprep.subr.mxu0 0.0
    %5136 = vmatpush2.msra.mxu0 0.0
    %5137 = vmatprep.subr.mxu0 0.0
    %5138 = vmatpush2.msra.mxu0 0.0
    %5139 = vmatprep.subr.mxu0 0.0
    %5140 = vmatpush2.msra.mxu0 0.0
    %5141 = vmatprep.subr.mxu0 0.0
    %5142 = vmatpush2.msra.mxu0 0.0
    %5143 = vmatprep.subr.mxu0 0.0
    %5144 = vmatpush2.msra.mxu0 0.0
    %5145 = vmatprep.subr.mxu0 0.0
    %5146 = vmatpush2.msra.mxu0 0.0
    %5147 = vmatprep.subr.mxu0 0.0
    %5148 = vmatpush2.msra.mxu0 0.0
    %5149 = vmatprep.subr.mxu0 0.0
    %5150 = vmatpush2.msra.mxu0 0.0
    %5151 = vmatprep.subr.mxu0 0.0
    %5152 = vmatpush2.msra.mxu0 0.0
    %5153 = vmatprep.subr.mxu0 0.0
    %5154 = vmatpush2.msra.mxu0 0.0
    %5155 = vmatprep.subr.mxu0 0.0
    %5156 = vmatpush2.msra.mxu0 0.0
    %5157 = vmatprep.subr.mxu0 0.0
    %5158 = vmatpush2.msra.mxu0 0.0
    %5159 = vmatprep.subr.mxu0 0.0
    %5160 = vmatpush2.msra.mxu0 0.0
    %5161 = vmatprep.subr.mxu0 0.0
    %5162 = vmatpush2.msra.mxu0 0.0
    %5163 = vmatprep.mubr.f32.mxu0 0.0
    %5164 = vmatmul.mubr.f32.gmra.mxu0 %v5074
    %v5165 = vpop.f32.mrf.mxu0
    %v5166 = vadd.f32 0.0, %v5165
    %v5167 = vpop.f32.mrf.mxu0
    %5168 = vdwg.mxu0
    %5169 = vmatprep.subr.mxu0 0.0
    %5170 = vmatpush1.msra.mxu0 %v5098
    %5171 = vmatprep.subr.mxu0 0.0
    %5172 = vmatpush1.msra.mxu0 %v5097
    %5173 = vmatprep.subr.mxu0 0.0
    %5174 = vmatpush1.msra.mxu0 %v5096
    %5175 = vmatprep.subr.mxu0 0.0
    %5176 = vmatpush1.msra.mxu0 %v5095
    %5177 = vmatprep.subr.mxu0 0.0
    %5178 = vmatpush1.msra.mxu0 %v5094
    %5179 = vmatprep.subr.mxu0 0.0
    %5180 = vmatpush1.msra.mxu0 %v5093
    %5181 = vmatprep.subr.mxu0 0.0
    %5182 = vmatpush1.msra.mxu0 %v5092
    %5183 = vmatprep.subr.mxu0 0.0
    %5184 = vmatpush1.msra.mxu0 %v5091
    %5185 = vmatprep.subr.mxu0 0.0
    %5186 = vmatpush1.msra.mxu0 %v5090
    %5187 = vmatprep.subr.mxu0 0.0
    %5188 = vmatpush1.msra.mxu0 %v5089
    %5189 = vmatprep.subr.mxu0 0.0
    %5190 = vmatpush1.msra.mxu0 %v5088
    %5191 = vmatprep.subr.mxu0 0.0
    %5192 = vmatpush1.msra.mxu0 %v5087
    %5193 = vmatprep.subr.mxu0 0.0
    %5194 = vmatpush1.msra.mxu0 %v5086
    %5195 = vmatprep.subr.mxu0 0.0
    %5196 = vmatpush1.msra.mxu0 %v5085
    %5197 = vmatprep.subr.mxu0 0.0
    %5198 = vmatpush1.msra.mxu0 %v5084
    %5199 = vmatprep.subr.mxu0 0.0
    %5200 = vmatpush1.msra.mxu0 %v5083
    %5201 = vmatprep.subr.mxu0 0.0
    %5202 = vmatpush2.msra.mxu0 0.0
    %5203 = vmatprep.subr.mxu0 0.0
    %5204 = vmatpush2.msra.mxu0 0.0
    %5205 = vmatprep.subr.mxu0 0.0
    %5206 = vmatpush2.msra.mxu0 0.0
    %5207 = vmatprep.subr.mxu0 0.0
    %5208 = vmatpush2.msra.mxu0 0.0
    %5209 = vmatprep.subr.mxu0 0.0
    %5210 = vmatpush2.msra.mxu0 0.0
    %5211 = vmatprep.subr.mxu0 0.0
    %5212 = vmatpush2.msra.mxu0 0.0
    %5213 = vmatprep.subr.mxu0 0.0
    %5214 = vmatpush2.msra.mxu0 0.0
    %5215 = vmatprep.subr.mxu0 0.0
    %5216 = vmatpush2.msra.mxu0 0.0
    %5217 = vmatprep.subr.mxu0 0.0
    %5218 = vmatpush2.msra.mxu0 0.0
    %5219 = vmatprep.subr.mxu0 0.0
    %5220 = vmatpush2.msra.mxu0 0.0
    %5221 = vmatprep.subr.mxu0 0.0
    %5222 = vmatpush2.msra.mxu0 0.0
    %5223 = vmatprep.subr.mxu0 0.0
    %5224 = vmatpush2.msra.mxu0 0.0
    %5225 = vmatprep.subr.mxu0 0.0
    %5226 = vmatpush2.msra.mxu0 0.0
    %5227 = vmatprep.subr.mxu0 0.0
    %5228 = vmatpush2.msra.mxu0 0.0
    %5229 = vmatprep.subr.mxu0 0.0
    %5230 = vmatpush2.msra.mxu0 0.0
    %5231 = vmatprep.subr.mxu0 0.0
    %5232 = vmatpush2.msra.mxu0 0.0
    %5233 = vmatprep.mubr.f32.mxu0 0.0
    %5234 = vmatmul.mubr.f32.gmra.mxu0 %v5082
    %v5235 = vpop.f32.mrf.mxu0
    %v5236 = vadd.f32 0.0, %v5235
    %v5237 = vpop.f32.mrf.mxu0
    %5238 = vdwg.mxu0
    %v5239 = vmul.f32 %v5166, 0.5
    %v5240 = vmul.f32 %v5236, 0.5
    %v5241 = vmul.f32 %v5239, %v5239
    %v5242 = vsub.f32 %v5240, %v5241
    %v5243 = vadd.f32 %v5242, 1e-05
    %v5244 = vrsqrt.pop %v5243
    %v5245 = vld [vmem:[#allocation25] sm:$0x1]
    %v5246 = vmul.f32 %v5245, %v5244
    %v5247 = vld [vmem:[#allocation27] sm:$0x1]
    %v5248 = vmul.f32 %v5239, %v5246
    %v5249 = vsub.f32 %v5247, %v5248
    %v5250 = vld [vmem:[#allocation28] sm:$0xff]
    %v5251 = vld [vmem:[#allocation28 + $0x8] sm:$0xff]
    %v5252 = vld [vmem:[#allocation28 + $0x10] sm:$0xff]
    %v5253 = vld [vmem:[#allocation28 + $0x18] sm:$0xff]
    %v5254 = vld [vmem:[#allocation28 + $0x20] sm:$0xff]
    %v5255 = vld [vmem:[#allocation28 + $0x28] sm:$0xff]
    %v5256 = vld [vmem:[#allocation28 + $0x30] sm:$0xff]
    %v5257 = vld [vmem:[#allocation28 + $0x38] sm:$0xff]
    %v5258 = vld [vmem:[#allocation28 + $0x40] sm:$0xff]
    %v5259 = vld [vmem:[#allocation28 + $0x48] sm:$0xff]
    %v5260 = vld [vmem:[#allocation28 + $0x50] sm:$0xff]
    %v5261 = vld [vmem:[#allocation28 + $0x58] sm:$0xff]
    %v5262 = vld [vmem:[#allocation28 + $0x60] sm:$0xff]
    %v5263 = vld [vmem:[#allocation28 + $0x68] sm:$0xff]
    %v5264 = vld [vmem:[#allocation28 + $0x70] sm:$0xff]
    %v5265 = vld [vmem:[#allocation28 + $0x78] sm:$0xff]
    %5266 = vmatprep.subr.mxu0 0.0
    %5267 = vmatpush1.msra.mxu0 %v5265
    %5268 = vmatprep.subr.mxu0 0.0
    %5269 = vmatpush1.msra.mxu0 %v5264
    %5270 = vmatprep.subr.mxu0 0.0
    %5271 = vmatpush1.msra.mxu0 %v5263
    %5272 = vmatprep.subr.mxu0 0.0
    %5273 = vmatpush1.msra.mxu0 %v5262
    %5274 = vmatprep.subr.mxu0 0.0
    %5275 = vmatpush1.msra.mxu0 %v5261
    %5276 = vmatprep.subr.mxu0 0.0
    %5277 = vmatpush1.msra.mxu0 %v5260
    %5278 = vmatprep.subr.mxu0 0.0
    %5279 = vmatpush1.msra.mxu0 %v5259
    %5280 = vmatprep.subr.mxu0 0.0
    %5281 = vmatpush1.msra.mxu0 %v5258
    %5282 = vmatprep.subr.mxu0 0.0
    %5283 = vmatpush1.msra.mxu0 %v5257
    %5284 = vmatprep.subr.mxu0 0.0
    %5285 = vmatpush1.msra.mxu0 %v5256
    %5286 = vmatprep.subr.mxu0 0.0
    %5287 = vmatpush1.msra.mxu0 %v5255
    %5288 = vmatprep.subr.mxu0 0.0
    %5289 = vmatpush1.msra.mxu0 %v5254
    %5290 = vmatprep.subr.mxu0 0.0
    %5291 = vmatpush1.msra.mxu0 %v5253
    %5292 = vmatprep.subr.mxu0 0.0
    %5293 = vmatpush1.msra.mxu0 %v5252
    %5294 = vmatprep.subr.mxu0 0.0
    %5295 = vmatpush1.msra.mxu0 %v5251
    %5296 = vmatprep.subr.mxu0 0.0
    %5297 = vmatpush1.msra.mxu0 %v5250
    %5298 = vmatprep.subr.mxu0 0.0
    %5299 = vmatpush2.msra.mxu0 0.0
    %5300 = vmatprep.subr.mxu0 0.0
    %5301 = vmatpush2.msra.mxu0 0.0
    %5302 = vmatprep.subr.mxu0 0.0
    %5303 = vmatpush2.msra.mxu0 0.0
    %5304 = vmatprep.subr.mxu0 0.0
    %5305 = vmatpush2.msra.mxu0 0.0
    %5306 = vmatprep.subr.mxu0 0.0
    %5307 = vmatpush2.msra.mxu0 0.0
    %5308 = vmatprep.subr.mxu0 0.0
    %5309 = vmatpush2.msra.mxu0 0.0
    %5310 = vmatprep.subr.mxu0 0.0
    %5311 = vmatpush2.msra.mxu0 0.0
    %5312 = vmatprep.subr.mxu0 0.0
    %5313 = vmatpush2.msra.mxu0 0.0
    %5314 = vmatprep.subr.mxu0 0.0
    %5315 = vmatpush2.msra.mxu0 0.0
    %5316 = vmatprep.subr.mxu0 0.0
    %5317 = vmatpush2.msra.mxu0 0.0
    %5318 = vmatprep.subr.mxu0 0.0
    %5319 = vmatpush2.msra.mxu0 0.0
    %5320 = vmatprep.subr.mxu0 0.0
    %5321 = vmatpush2.msra.mxu0 0.0
    %5322 = vmatprep.subr.mxu0 0.0
    %5323 = vmatpush2.msra.mxu0 0.0
    %5324 = vmatprep.subr.mxu0 0.0
    %5325 = vmatpush2.msra.mxu0 0.0
    %5326 = vmatprep.subr.mxu0 0.0
    %5327 = vmatpush2.msra.mxu0 0.0
    %5328 = vmatprep.subr.mxu0 0.0
    %5329 = vmatpush2.msra.mxu0 0.0
    %5330 = vmatprep.mubr.f32.mxu0 0.0
    %5331 = vmatmul.mubr.f32.gmra.mxu0 %v5246
    %v5332 = vpop.f32.mrf.mxu0
    %v5333 = vadd.f32 0.0, %v5332
    %v5334 = vpop.f32.mrf.mxu0
    %5335 = vdwg.mxu0
    %5336 = vmatprep.subr.mxu0 0.0
    %5337 = vmatpush1.msra.mxu0 %v5265
    %5338 = vmatprep.subr.mxu0 0.0
    %5339 = vmatpush1.msra.mxu0 %v5264
    %5340 = vmatprep.subr.mxu0 0.0
    %5341 = vmatpush1.msra.mxu0 %v5263
    %5342 = vmatprep.subr.mxu0 0.0
    %5343 = vmatpush1.msra.mxu0 %v5262
    %5344 = vmatprep.subr.mxu0 0.0
    %5345 = vmatpush1.msra.mxu0 %v5261
    %5346 = vmatprep.subr.mxu0 0.0
    %5347 = vmatpush1.msra.mxu0 %v5260
    %5348 = vmatprep.subr.mxu0 0.0
    %5349 = vmatpush1.msra.mxu0 %v5259
    %5350 = vmatprep.subr.mxu0 0.0
    %5351 = vmatpush1.msra.mxu0 %v5258
    %5352 = vmatprep.subr.mxu0 0.0
    %5353 = vmatpush1.msra.mxu0 %v5257
    %5354 = vmatprep.subr.mxu0 0.0
    %5355 = vmatpush1.msra.mxu0 %v5256
    %5356 = vmatprep.subr.mxu0 0.0
    %5357 = vmatpush1.msra.mxu0 %v5255
    %5358 = vmatprep.subr.mxu0 0.0
    %5359 = vmatpush1.msra.mxu0 %v5254
    %5360 = vmatprep.subr.mxu0 0.0
    %5361 = vmatpush1.msra.mxu0 %v5253
    %5362 = vmatprep.subr.mxu0 0.0
    %5363 = vmatpush1.msra.mxu0 %v5252
    %5364 = vmatprep.subr.mxu0 0.0
    %5365 = vmatpush1.msra.mxu0 %v5251
    %5366 = vmatprep.subr.mxu0 0.0
    %5367 = vmatpush1.msra.mxu0 %v5250
    %5368 = vmatprep.subr.mxu0 0.0
    %5369 = vmatpush2.msra.mxu0 0.0
    %5370 = vmatprep.subr.mxu0 0.0
    %5371 = vmatpush2.msra.mxu0 0.0
    %5372 = vmatprep.subr.mxu0 0.0
    %5373 = vmatpush2.msra.mxu0 0.0
    %5374 = vmatprep.subr.mxu0 0.0
    %5375 = vmatpush2.msra.mxu0 0.0
    %5376 = vmatprep.subr.mxu0 0.0
    %5377 = vmatpush2.msra.mxu0 0.0
    %5378 = vmatprep.subr.mxu0 0.0
    %5379 = vmatpush2.msra.mxu0 0.0
    %5380 = vmatprep.subr.mxu0 0.0
    %5381 = vmatpush2.msra.mxu0 0.0
    %5382 = vmatprep.subr.mxu0 0.0
    %5383 = vmatpush2.msra.mxu0 0.0
    %5384 = vmatprep.subr.mxu0 0.0
    %5385 = vmatpush2.msra.mxu0 0.0
    %5386 = vmatprep.subr.mxu0 0.0
    %5387 = vmatpush2.msra.mxu0 0.0
    %5388 = vmatprep.subr.mxu0 0.0
    %5389 = vmatpush2.msra.mxu0 0.0
    %5390 = vmatprep.subr.mxu0 0.0
    %5391 = vmatpush2.msra.mxu0 0.0
    %5392 = vmatprep.subr.mxu0 0.0
    %5393 = vmatpush2.msra.mxu0 0.0
    %5394 = vmatprep.subr.mxu0 0.0
    %5395 = vmatpush2.msra.mxu0 0.0
    %5396 = vmatprep.subr.mxu0 0.0
    %5397 = vmatpush2.msra.mxu0 0.0
    %5398 = vmatprep.subr.mxu0 0.0
    %5399 = vmatpush2.msra.mxu0 0.0
    %5400 = vmatprep.mubr.f32.mxu0 0.0
    %5401 = vmatmul.mubr.f32.gmra.mxu0 %v5249
    %v5402 = vpop.f32.mrf.mxu0
    %v5403 = vadd.f32 0.0, %v5402
    %v5404 = vpop.f32.mrf.mxu0
    %5405 = vdwg.mxu0
    %v5406 = vlaneseq
    %v5407 = vshrl.u32 %v5406, 7
    %v5408 = vsub.s32 0, %v5407
    %v5409 = vrot.slane %v5333, %v5408
    %v5410 = vmul.f32 %v5066, %v5409
    %v5411 = vlaneseq
    %v5412 = vshrl.u32 %v5411, 7
    %v5413 = vsub.s32 0, %v5412
    %v5414 = vrot.slane %v5403, %v5413
    %v5415 = vadd.f32 %v5410, %v5414
    %vm5416 = vcmp.gt.f32.partialorder %v5415, 0.0
    %v5417 = vmul.f32 %v5415, 0.2
    %v5418 = vsel %vm5416, %v5415, %v5417
    %v5419 = vld [vmem:[%s57] sm:$0x3]
    %v5420 = vmul.f32 %v5418, %v5419
    %v5421 = vsel %vm5067, %v5420, 0.0
    %5422 = vadd.xlane.f32.xlu0 %v5421
    %v5423 = vpop.xlane.xlu0 %5422
    %v5424 = vld [vmem:[%s59] sm:$0x3]
    %vm5425 = vcmask 15360
    %v5427 = vsel %vm5425, %v5424, 0
    %v5430 = vsel %vm5067, %v5423, 0
    %5432 = vmatprep.subr.mxu0 0.0
    %5433 = vmatpush1.msra.mxu0 0.0
    %5434 = vmatprep.subr.mxu0 0.0
    %5435 = vmatpush1.msra.mxu0 0.0
    %5436 = vmatprep.subr.mxu0 0.0
    %5437 = vmatpush1.msra.mxu0 0.0
    %5438 = vmatprep.subr.mxu0 0.0
    %5439 = vmatpush1.msra.mxu0 0.0
    %5440 = vmatprep.subr.mxu0 0.0
    %5441 = vmatpush1.msra.mxu0 0.0
    %5442 = vmatprep.subr.mxu0 0.0
    %5443 = vmatpush1.msra.mxu0 0.0
    %5444 = vmatprep.subr.mxu0 0.0
    %5445 = vmatpush1.msra.mxu0 0.0
    %5446 = vmatprep.subr.mxu0 0.0
    %5447 = vmatpush1.msra.mxu0 0.0
    %5448 = vmatprep.subr.mxu0 0.0
    %5449 = vmatpush1.msra.mxu0 0.0
    %5450 = vmatprep.subr.mxu0 0.0
    %5451 = vmatpush1.msra.mxu0 0.0
    %5452 = vmatprep.subr.mxu0 0.0
    %5453 = vmatpush1.msra.mxu0 0.0
    %5454 = vmatprep.subr.mxu0 0.0
    %5455 = vmatpush1.msra.mxu0 0.0
    %5456 = vmatprep.subr.mxu0 0.0
    %5457 = vmatpush1.msra.mxu0 0.0
    %5458 = vmatprep.subr.mxu0 0.0
    %5459 = vmatpush1.msra.mxu0 0.0
    %5460 = vmatprep.subr.mxu0 0.0
    %5461 = vmatpush1.msra.mxu0 0.0
    %5462 = vmatprep.subr.mxu0 0.0
    %5463 = vmatpush1.msra.mxu0 %v5430
    %5464 = vmatprep.subr.mxu0 0.0
    %5465 = vmatpush2.msra.mxu0 0.0
    %5466 = vmatprep.subr.mxu0 0.0
    %5467 = vmatpush2.msra.mxu0 0.0
    %5468 = vmatprep.subr.mxu0 0.0
    %5469 = vmatpush2.msra.mxu0 0.0
    %5470 = vmatprep.subr.mxu0 0.0
    %5471 = vmatpush2.msra.mxu0 0.0
    %5472 = vmatprep.subr.mxu0 0.0
    %5473 = vmatpush2.msra.mxu0 0.0
    %5474 = vmatprep.subr.mxu0 0.0
    %5475 = vmatpush2.msra.mxu0 0.0
    %5476 = vmatprep.subr.mxu0 0.0
    %5477 = vmatpush2.msra.mxu0 0.0
    %5478 = vmatprep.subr.mxu0 0.0
    %5479 = vmatpush2.msra.mxu0 0.0
    %5480 = vmatprep.subr.mxu0 0.0
    %5481 = vmatpush2.msra.mxu0 0.0
    %5482 = vmatprep.subr.mxu0 0.0
    %5483 = vmatpush2.msra.mxu0 0.0
    %5484 = vmatprep.subr.mxu0 0.0
    %5485 = vmatpush2.msra.mxu0 0.0
    %5486 = vmatprep.subr.mxu0 0.0
    %5487 = vmatpush2.msra.mxu0 0.0
    %5488 = vmatprep.subr.mxu0 0.0
    %5489 = vmatpush2.msra.mxu0 0.0
    %5490 = vmatprep.subr.mxu0 0.0
    %5491 = vmatpush2.msra.mxu0 0.0
    %5492 = vmatprep.subr.mxu0 0.0
    %5493 = vmatpush2.msra.mxu0 0.0
    %5494 = vmatprep.subr.mxu0 0.0
    %5495 = vmatpush2.msra.mxu0 0.0
    %5496 = vmatprep.mubr.f32.mxu0 0.0
    %5497 = vmatmul.mubr.f32.gmra.mxu0 %v5427
    %v5498 = vpop.f32.mrf.mxu0
    %v5499 = vadd.f32 0.0, %v5498
    %v5500 = vpop.f32.mrf.mxu0
    %5501 = vdwg.mxu0
    %v5502 = vsub.f32 0.0, %v5499
    %v5503 = vmul.f32 %v5502, 1.442695
    %v5504 = vpow.pop %v5503
    %v5505 = vadd.f32 %v5504, 1.0
    %v5506 = vrcp.pop %v5505
    %v5507 = vmul.f32 1.0, %v5506
    %vm5508 = vcmask 1024
    %5509 = vst.msk [vmem:[%s61] sm:$0x3] %vm5508, %v5507
    // Predicated region
    $region194: #{forward.1} parent=1 // pred_check
      _
    $region195: #{forward.1} parent=1 // pred_check_branch
      %5511 = sbr.rel (0) target = $region197
    $region196: #{forward.1} parent=1 // pred_region
      _
    $region197: #{forward.1} parent=1 // pred_fallthru
      _
    // Predicated region
    $region198: #{forward.1} parent=1 // pred_check
      _
    $region199: #{forward.1} parent=1 // pred_check_branch
      %5513 = sbr.rel (0) target = $region201
    $region200: #{forward.1} parent=1 // pred_region
      _
    $region201: #{forward.1} parent=1 // pred_fallthru
      _
    %5514 = vsyncpa [#allocation3], 1
    %5515 = vsyncpa [#allocation5], 1
    %5516 = vsyncpa [#allocation8], 1
    %5517 = vsyncpa [#allocation11], 1
    %5518 = vsyncpa [#allocation14], 1
    %5519 = vsyncpa [#allocation17], 1
    %5520 = vsyncpa [#allocation20], 1
    %5521 = vsyncpa [#allocation23], 1
    %5522 = vsyncpa [#allocation26], 1
    %5523 = vsyncpa [#allocation29], 1

</llo_original>
